<compile_context>
chip_gen: v7x
topology: tpu7x:2x2x1
jax: 0.10.0
libtpu: 0.0.40
codegen_flags: <defaults>
</compile_context>

<pallas_src>
import functools

import jax
import jax.numpy as jnp
from jax.experimental import pallas as pl
from jax.experimental.pallas import tpu as pltpu

LRELU_SLOPE = 0.1
BN_EPS = 1e-5

_COMPILER_PARAMS = pltpu.CompilerParams(
    dimension_semantics=("parallel",),
    vmem_limit_bytes=32 * 1024 * 1024,
)


def _lrelu(x):
    return jnp.where(x > 0, x, LRELU_SLOPE * x)


# --------------------------------------------------------------------------
# Fused BasicBlock kernel body (one grid step == one image)
# --------------------------------------------------------------------------
def _block_body(x_ref, scale1_ref, shift1_ref, w1_ref, shift2_ref, w2_ref,
                wsc_ref, o_ref, xp1_ref, p1_ref, xp2_ref, p2_ref, *,
                stride, pre_activate, equal_in_out):
    s = stride
    _, ho, wo, cout = o_ref.shape
    cin = x_ref.shape[-1]
    npix = ho * wo
    # Rows per padded parity plane: ho + max_kh(kh // s)  (s in {1, 2} only).
    hp = ho + (2 // s)

    # Padded scratches: zero so conv windows read zeros at the borders.
    xp1_ref[...] = jnp.zeros_like(xp1_ref)
    xp2_ref[...] = jnp.zeros_like(xp2_ref)

    # ---- bn1 + LeakyReLU prologue (f32 math), written ONCE as bf16 into the
    #      zero-padded, parity-split conv1-input scratch.  Parity planes make
    #      every stride-s conv tap a plain static slice.
    scale1 = scale1_ref[...]
    shift1 = shift1_ref[...]
    for rj in range(s):                      # row parity of the unpadded input
        for cj in range(s):                  # col parity
            xa = x_ref[0, (rj * s + cj) * ho:(rj * s + cj + 1) * ho, :, :]
            if pre_activate:
                xa = _lrelu(xa * scale1 + shift1)
            rp, r0 = (rj + 1) % s, (rj + 1) // s   # parity / offset after +1 pad
            cp, c0 = (cj + 1) % s, (cj + 1) // s
            base = (rp * s + cp) * hp
            xp1_ref[base + r0:base + r0 + ho, c0:c0 + wo, :] = (
                xa.astype(jnp.bfloat16))

    # ---- conv1 (3x3, stride s): (ho*wo, 9*cin) im2col patch in VMEM, then one
    #      deep-K MXU dot.  BN2 scale is already folded into w1.
    for kh in range(3):
        for kw in range(3):
            k = kh * 3 + kw
            base = ((kh % s) * s + (kw % s)) * hp
            win = xp1_ref[base + kh // s:base + kh // s + ho,
                          kw // s:kw // s + wo, :]
            p1_ref[:, k * cin:(k + 1) * cin] = win.reshape(npix, cin)
    y1 = jnp.dot(p1_ref[...], w1_ref[...], preferred_element_type=jnp.float32)
    y1 = y1 + shift2_ref[...]
    h2 = _lrelu(y1)
    # TODO(synk): F.dropout for dropRate > 0 not implemented (identity in eval
    # mode; the module default is dropRate=0.0).

    # ---- conv2 (3x3, stride 1) on the VMEM-resident h2 (never leaves VMEM).
    xp2_ref[1:ho + 1, 1:wo + 1, :] = h2.astype(jnp.bfloat16).reshape(ho, wo, cout)
    for kh in range(3):
        for kw in range(3):
            k = kh * 3 + kw
            win = xp2_ref[kh:kh + ho, kw:kw + wo, :]
            p2_ref[:, k * cout:(k + 1) * cout] = win.reshape(npix, cout)
    y2 = jnp.dot(p2_ref[...], w2_ref[...], preferred_element_type=jnp.float32)

    # ---- residual / 1x1-convShortcut epilogue, fused.
    if equal_in_out:
        xres = x_ref[0].reshape(npix, cin)          # raw x (stride is 1 here)
        out = y2 + xres
    else:
        # x[::s, ::s] (the 1x1 stride-s shortcut input) is exactly the centre
        # tap (kh=kw=1) of the conv1 im2col patch, already resident in VMEM.
        sc_lhs = p1_ref[:, 4 * cin:5 * cin]
        out = y2 + jnp.dot(sc_lhs, wsc_ref[...],
                           preferred_element_type=jnp.float32)
    o_ref[0] = out.reshape(ho, wo, cout).astype(o_ref.dtype)


def _kernel_identity(x_ref, scale1_ref, shift1_ref, w1_ref, shift2_ref, w2_ref,
                     o_ref, xp1_ref, p1_ref, xp2_ref, p2_ref, **statics):
    _block_body(x_ref, scale1_ref, shift1_ref, w1_ref, shift2_ref, w2_ref, None,
                o_ref, xp1_ref, p1_ref, xp2_ref, p2_ref, **statics)


def _kernel_shortcut(x_ref, scale1_ref, shift1_ref, w1_ref, shift2_ref, w2_ref,
                     wsc_ref, o_ref, xp1_ref, p1_ref, xp2_ref, p2_ref, **statics):
    _block_body(x_ref, scale1_ref, shift1_ref, w1_ref, shift2_ref, w2_ref,
                wsc_ref, o_ref, xp1_ref, p1_ref, xp2_ref, p2_ref, **statics)


# --------------------------------------------------------------------------
# BasicBlock forward (inference mode).  Accepts NCHW like the PyTorch module.
# --------------------------------------------------------------------------
def basic_block_forward(x_nchw, params, *, stride, activate_before_residual):
    n, cin, h, w = x_nchw.shape
    cout = params["w1"].shape[-1]
    equal_in_out = (cin == cout)
    assert stride in (1, 2), "kernel supports stride 1 and 2 only"
    if equal_in_out:
        assert stride == 1, "identity residual requires stride 1"
    assert h % stride == 0 and w % stride == 0
    ho, wo = h // stride, w // stride
    pre_activate = equal_in_out or activate_before_residual

    # Single layout op: NCHW -> NHWC with the stride-parity split folded in
    # (parity plane (rj, cj) stacked along the row axis).  No extra padded or
    # strided copies ever hit HBM; padding happens inside the kernel in VMEM.
    xs = x_nchw.reshape(n, cin, ho, stride, wo, stride)
    xs = jnp.transpose(xs, (0, 3, 5, 2, 4, 1)).astype(jnp.float32)
    xs = xs.reshape(n, stride * stride * ho, wo, cin)

    hp = ho + (2 // stride)
    wp = wo + (2 // stride)
    statics = dict(stride=stride, pre_activate=pre_activate,
                   equal_in_out=equal_in_out)

    in_specs = [
        pl.BlockSpec((1, stride * stride * ho, wo, cin), lambda i: (i, 0, 0, 0)),
        pl.BlockSpec((1, cin), lambda i: (0, 0)),
        pl.BlockSpec((1, cin), lambda i: (0, 0)),
        pl.BlockSpec((9 * cin, cout), lambda i: (0, 0)),
        pl.BlockSpec((1, cout), lambda i: (0, 0)),
        pl.BlockSpec((9 * cout, cout), lambda i: (0, 0)),
    ]
    args = [xs, params["scale1"], params["shift1"], params["w1"],
            params["shift2"], params["w2"]]
    if equal_in_out:
        kern = functools.partial(_kernel_identity, **statics)
    else:
        kern = functools.partial(_kernel_shortcut, **statics)
        in_specs.append(pl.BlockSpec((cin, cout), lambda i: (0, 0)))
        args.append(params["wsc"])

    out = pl.pallas_call(
        kern,
        out_shape=jax.ShapeDtypeStruct((n, ho, wo, cout), jnp.float32),
        grid_spec=pltpu.PrefetchScalarGridSpec(
            num_scalar_prefetch=0,
            grid=(n,),
            in_specs=in_specs,
            out_specs=pl.BlockSpec((1, ho, wo, cout), lambda i: (i, 0, 0, 0)),
            scratch_shapes=[
                pltpu.VMEM((stride * stride * hp, wp, cin), jnp.bfloat16),  # padded conv1 in
                pltpu.VMEM((ho * wo, 9 * cin), jnp.bfloat16),               # conv1 im2col
                pltpu.VMEM((ho + 2, wo + 2, cout), jnp.bfloat16),           # padded conv2 in
                pltpu.VMEM((ho * wo, 9 * cout), jnp.bfloat16),              # conv2 im2col
            ],
        ),
        compiler_params=_COMPILER_PARAMS,
    )(*args)
    return jnp.transpose(out, (0, 3, 1, 2))        # NHWC -> NCHW (module contract)


# --------------------------------------------------------------------------
# Parameter folding (host side, once)
# --------------------------------------------------------------------------
def init_raw_params(key, in_planes, out_planes):
    ks = jax.random.split(key, 11)
    p = {
        "bn1_gamma": jax.random.uniform(ks[0], (in_planes,), jnp.float32, 0.8, 1.2),
        "bn1_beta": jax.random.normal(ks[1], (in_planes,), jnp.float32) * 0.1,
        "bn1_mean": jax.random.normal(ks[2], (in_planes,), jnp.float32) * 0.1,
        "bn1_var": jax.random.uniform(ks[3], (in_planes,), jnp.float32, 0.8, 1.2),
        "conv1_w": jax.random.normal(ks[4], (out_planes, in_planes, 3, 3),
                                     jnp.float32) * (1.0 / (3.0 * in_planes ** 0.5)),
        "bn2_gamma": jax.random.uniform(ks[5], (out_planes,), jnp.float32, 0.8, 1.2),
        "bn2_beta": jax.random.normal(ks[6], (out_planes,), jnp.float32) * 0.1,
        "bn2_mean": jax.random.normal(ks[7], (out_planes,), jnp.float32) * 0.1,
        "bn2_var": jax.random.uniform(ks[8], (out_planes,), jnp.float32, 0.8, 1.2),
        "conv2_w": jax.random.normal(ks[9], (out_planes, out_planes, 3, 3),
                                     jnp.float32) * (1.0 / (3.0 * out_planes ** 0.5)),
    }
    if in_planes != out_planes:
        p["conv_sc_w"] = (jax.random.normal(ks[10], (out_planes, in_planes, 1, 1),
                                            jnp.float32) * (1.0 / in_planes ** 0.5))
    return p


def fold_params(raw):
    """Fold running-stat BNs into scale/shift; fold BN2 scale into the conv1
    weights; convert conv weights to (9*Cin, Cout) bf16 im2col layout."""
    def bn_fold(g, b, m, v):
        s = g / jnp.sqrt(v + BN_EPS)
        return s[None, :], (b - m * s)[None, :]

    scale1, shift1 = bn_fold(raw["bn1_gamma"], raw["bn1_beta"],
                             raw["bn1_mean"], raw["bn1_var"])
    scale2, shift2 = bn_fold(raw["bn2_gamma"], raw["bn2_beta"],
                             raw["bn2_mean"], raw["bn2_var"])
    cout, cin = raw["conv1_w"].shape[:2]
    w1 = jnp.transpose(raw["conv1_w"], (2, 3, 1, 0))          # (3,3,Cin,Cout)
    w1 = (w1 * scale2[0]).astype(jnp.bfloat16).reshape(9 * cin, cout)
    w2 = jnp.transpose(raw["conv2_w"], (2, 3, 1, 0)).reshape(9 * cout, cout)
    params = {
        "scale1": scale1.astype(jnp.float32),
        "shift1": shift1.astype(jnp.float32),
        "shift2": shift2.astype(jnp.float32),
        "w1": w1,
        "w2": w2.astype(jnp.bfloat16),
    }
    if "conv_sc_w" in raw:
        params["wsc"] = raw["conv_sc_w"][:, :, 0, 0].T.astype(jnp.bfloat16)
    return params


# --------------------------------------------------------------------------
# Plain-JAX reference (same bf16 quantization at the matmuls) for checking
# --------------------------------------------------------------------------
def _ref_conv3x3(x, w, stride):
    n, h, wd, cin = x.shape
    cout = w.shape[-1]
    w9 = w.astype(jnp.float32).reshape(3, 3, cin, cout)
    xq = x.astype(jnp.bfloat16).astype(jnp.float32)
    xp = jnp.pad(xq, ((0, 0), (1, 1), (1, 1), (0, 0)))
    ho = (h - 1) // stride + 1
    wo = (wd - 1) // stride + 1
    out = jnp.zeros((n, ho, wo, cout), jnp.float32)
    for kh in range(3):
        for kw in range(3):
            win = xp[:, kh:kh + (ho - 1) * stride + 1:stride,
                     kw:kw + (wo - 1) * stride + 1:stride, :]
            out = out + jnp.einsum("nhwc,cd->nhwd", win, w9[kh, kw],
                                   preferred_element_type=jnp.float32)
    return out


def reference_forward(x_nchw, params, *, stride, activate_before_residual):
    x = jnp.transpose(x_nchw, (0, 2, 3, 1)).astype(jnp.float32)
    cin = x.shape[-1]
    cout = params["w1"].shape[-1]
    equal_in_out = (cin == cout)
    if equal_in_out or activate_before_residual:
        conv1_in = _lrelu(x * params["scale1"] + params["shift1"])
    else:
        conv1_in = x
    y1 = _ref_conv3x3(conv1_in, params["w1"], stride) + params["shift2"]
    h2 = _lrelu(y1)
    y2 = _ref_conv3x3(h2, params["w2"], 1)
    if equal_in_out:
        out = x + y2
    else:
        xsc = conv1_in[:, ::stride, ::stride, :]
        xsc = xsc.astype(jnp.bfloat16).astype(jnp.float32)
        sc = jnp.einsum("nhwc,cd->nhwd", xsc, params["wsc"].astype(jnp.float32),
                        preferred_element_type=jnp.float32)
        out = sc + y2
    return jnp.transpose(out, (0, 3, 1, 2))


if __name__ == "__main__":
    key = jax.random.PRNGKey(0)
    key, xkey = jax.random.split(key)
    x = jax.random.normal(xkey, (2, 64, 16, 16), jnp.float32)   # (N, C, H, W)

    configs = [
        # (in_planes, out_planes, stride, activate_before_residual)
        (64, 64, 1, False),    # identity residual
        (64, 128, 2, True),    # 1x1 conv shortcut, pre-activated input
        (64, 128, 2, False),   # 1x1 conv shortcut, raw-x input
    ]
    for idx, (cin, cout, stride, abr) in enumerate(configs):
        key, pkey = jax.random.split(key)
        params = fold_params(init_raw_params(pkey, cin, cout))
        fwd = jax.jit(functools.partial(basic_block_forward, stride=stride,
                                        activate_before_residual=abr))
        out = fwd(x, params)
        jax.block_until_ready(out)

        ho = x.shape[2] // stride
        assert out.shape == (2, cout, ho, ho), out.shape
        assert bool(jnp.all(jnp.isfinite(out)))

        ref = reference_forward(x, params, stride=stride,
                                activate_before_residual=abr)
        max_err = float(jnp.max(jnp.abs(out - ref)))
        assert jnp.allclose(out, ref, rtol=5e-2, atol=5e-2), (
            f"config {idx}: max abs err {max_err}")

    print("KERNEL_OK")
</pallas_src>

<mosaic_0001>
module attributes {stable_mosaic.version = 11 : i64} {
  func.func @_kernel_identity(%arg0: i32, %arg1: memref<1x16x16x64xf32, #tpu.memory_space<vmem>>, %arg2: memref<1x64xf32, #tpu.memory_space<vmem>>, %arg3: memref<1x64xf32, #tpu.memory_space<vmem>>, %arg4: memref<576x64xbf16, #tpu.memory_space<vmem>>, %arg5: memref<1x64xf32, #tpu.memory_space<vmem>>, %arg6: memref<576x64xbf16, #tpu.memory_space<vmem>>, %arg7: memref<1x16x16x64xf32, #tpu.memory_space<vmem>>, %arg8: memref<18x18x64xbf16, #tpu.memory_space<vmem>>, %arg9: memref<256x576xbf16, #tpu.memory_space<vmem>>, %arg10: memref<18x18x64xbf16, #tpu.memory_space<vmem>>, %arg11: memref<256x576xbf16, #tpu.memory_space<vmem>>) attributes {dimension_semantics = [#tpu.dimension_semantics<parallel>], iteration_bounds = array<i64: 2>, scalar_prefetch = 0 : i64, scratch_operands = 4 : i64, tpu.core_type = #tpu.core_type<tc>, window_params = [{transform_indices = @transform_0, window_bounds = array<i64: 1, 16, 16, 64>}, {pipeline_mode = #tpu.pipeline_mode<synchronous>, transform_indices = @transform_1, window_bounds = array<i64: 1, 64>}, {pipeline_mode = #tpu.pipeline_mode<synchronous>, transform_indices = @transform_2, window_bounds = array<i64: 1, 64>}, {pipeline_mode = #tpu.pipeline_mode<synchronous>, transform_indices = @transform_3, window_bounds = array<i64: 576, 64>}, {pipeline_mode = #tpu.pipeline_mode<synchronous>, transform_indices = @transform_4, window_bounds = array<i64: 1, 64>}, {pipeline_mode = #tpu.pipeline_mode<synchronous>, transform_indices = @transform_5, window_bounds = array<i64: 576, 64>}, {transform_indices = @transform_6, window_bounds = array<i64: 1, 16, 16, 64>}]} {
    %cst = arith.constant 0.000000e+00 : bf16
    %0 = vector.broadcast %cst : bf16 to vector<18x18x64xbf16>
    %c0 = arith.constant 0 : index
    %c0_0 = arith.constant 0 : index
    %c0_1 = arith.constant 0 : index
    %1 = vector.load %arg8[%c0, %c0_0, %c0_1] : memref<18x18x64xbf16, #tpu.memory_space<vmem>>, vector<18x18x64xbf16>
    tpu.vector_store %arg8[%c0, %c0_0, %c0_1], %0 {strides = array<i32>} : memref<18x18x64xbf16, #tpu.memory_space<vmem>>, vector<18x18x64xbf16>,
    %cst_2 = arith.constant 0.000000e+00 : bf16
    %2 = vector.broadcast %cst_2 : bf16 to vector<18x18x64xbf16>
    %c0_3 = arith.constant 0 : index
    %c0_4 = arith.constant 0 : index
    %c0_5 = arith.constant 0 : index
    %3 = vector.load %arg10[%c0_3, %c0_4, %c0_5] : memref<18x18x64xbf16, #tpu.memory_space<vmem>>, vector<18x18x64xbf16>
    tpu.vector_store %arg10[%c0_3, %c0_4, %c0_5], %2 {strides = array<i32>} : memref<18x18x64xbf16, #tpu.memory_space<vmem>>, vector<18x18x64xbf16>,
    %c0_6 = arith.constant 0 : index
    %c0_7 = arith.constant 0 : index
    %4 = vector.load %arg2[%c0_6, %c0_7] : memref<1x64xf32, #tpu.memory_space<vmem>>, vector<1x64xf32>
    %c0_8 = arith.constant 0 : index
    %c0_9 = arith.constant 0 : index
    %5 = vector.load %arg3[%c0_8, %c0_9] : memref<1x64xf32, #tpu.memory_space<vmem>>, vector<1x64xf32>
    %c0_10 = arith.constant 0 : index
    %c0_11 = arith.constant 0 : index
    %c0_12 = arith.constant 0 : index
    %c0_13 = arith.constant 0 : index
    %6 = vector.load %arg1[%c0_10, %c0_11, %c0_12, %c0_13] : memref<1x16x16x64xf32, #tpu.memory_space<vmem>>, vector<1x16x16x64xf32>
    %7 = vector.shape_cast %6 : vector<1x16x16x64xf32> to vector<16x16x64xf32>
    %8 = vector.shape_cast %4 : vector<1x64xf32> to vector<1x1x64xf32>
    %9 = vector.broadcast %8 : vector<1x1x64xf32> to vector<16x16x64xf32>
    %10 = arith.mulf %7, %9 : vector<16x16x64xf32>
    %11 = vector.shape_cast %5 : vector<1x64xf32> to vector<1x1x64xf32>
    %12 = vector.broadcast %11 : vector<1x1x64xf32> to vector<16x16x64xf32>
    %13 = arith.addf %10, %12 : vector<16x16x64xf32>
    %cst_14 = arith.constant 0.000000e+00 : f32
    %14 = vector.broadcast %cst_14 : f32 to vector<16x16x64xf32>
    %15 = arith.cmpf ogt, %13, %14 : vector<16x16x64xf32>
    %cst_15 = arith.constant 1.000000e-01 : f32
    %16 = vector.broadcast %cst_15 : f32 to vector<16x16x64xf32>
    %17 = arith.mulf %16, %13 : vector<16x16x64xf32>
    %18 = arith.select %15, %13, %17 : vector<16x16x64xi1>, vector<16x16x64xf32>
    %19 = arith.truncf %18 : vector<16x16x64xf32> to vector<16x16x64xbf16>
    %c1 = arith.constant 1 : index
    %c1_16 = arith.constant 1 : index
    %c0_17 = arith.constant 0 : index
    %20 = vector.load %arg8[%c1, %c1_16, %c0_17] : memref<18x18x64xbf16, #tpu.memory_space<vmem>>, vector<16x16x64xbf16>
    tpu.vector_store %arg8[%c1, %c1_16, %c0_17], %19 {strides = array<i32>} : memref<18x18x64xbf16, #tpu.memory_space<vmem>>, vector<16x16x64xbf16>,
    %c0_18 = arith.constant 0 : index
    %c0_19 = arith.constant 0 : index
    %c0_20 = arith.constant 0 : index
    %21 = vector.load %arg8[%c0_18, %c0_19, %c0_20] : memref<18x18x64xbf16, #tpu.memory_space<vmem>>, vector<16x16x64xbf16>
    %22 = vector.shape_cast %21 : vector<16x16x64xbf16> to vector<256x64xbf16>
    %c0_21 = arith.constant 0 : index
    %c0_22 = arith.constant 0 : index
    %23 = vector.load %arg9[%c0_21, %c0_22] : memref<256x576xbf16, #tpu.memory_space<vmem>>, vector<256x64xbf16>
    tpu.vector_store %arg9[%c0_21, %c0_22], %22 {strides = array<i32>} : memref<256x576xbf16, #tpu.memory_space<vmem>>, vector<256x64xbf16>,
    %c0_23 = arith.constant 0 : index
    %c1_24 = arith.constant 1 : index
    %c0_25 = arith.constant 0 : index
    %24 = vector.load %arg8[%c0_23, %c1_24, %c0_25] : memref<18x18x64xbf16, #tpu.memory_space<vmem>>, vector<16x16x64xbf16>
    %25 = vector.shape_cast %24 : vector<16x16x64xbf16> to vector<256x64xbf16>
    %c0_26 = arith.constant 0 : index
    %c64 = arith.constant 64 : index
    %26 = vector.load %arg9[%c0_26, %c64] : memref<256x576xbf16, #tpu.memory_space<vmem>>, vector<256x64xbf16>
    tpu.vector_store %arg9[%c0_26, %c64], %25 {strides = array<i32>} : memref<256x576xbf16, #tpu.memory_space<vmem>>, vector<256x64xbf16>,
    %c0_27 = arith.constant 0 : index
    %c2 = arith.constant 2 : index
    %c0_28 = arith.constant 0 : index
    %27 = vector.load %arg8[%c0_27, %c2, %c0_28] : memref<18x18x64xbf16, #tpu.memory_space<vmem>>, vector<16x16x64xbf16>
    %28 = vector.shape_cast %27 : vector<16x16x64xbf16> to vector<256x64xbf16>
    %c0_29 = arith.constant 0 : index
    %c128 = arith.constant 128 : index
    %29 = vector.load %arg9[%c0_29, %c128] : memref<256x576xbf16, #tpu.memory_space<vmem>>, vector<256x64xbf16>
    tpu.vector_store %arg9[%c0_29, %c128], %28 {strides = array<i32>} : memref<256x576xbf16, #tpu.memory_space<vmem>>, vector<256x64xbf16>,
    %c1_30 = arith.constant 1 : index
    %c0_31 = arith.constant 0 : index
    %c0_32 = arith.constant 0 : index
    %30 = vector.load %arg8[%c1_30, %c0_31, %c0_32] : memref<18x18x64xbf16, #tpu.memory_space<vmem>>, vector<16x16x64xbf16>
    %31 = vector.shape_cast %30 : vector<16x16x64xbf16> to vector<256x64xbf16>
    %c0_33 = arith.constant 0 : index
    %c192 = arith.constant 192 : index
    %32 = vector.load %arg9[%c0_33, %c192] : memref<256x576xbf16, #tpu.memory_space<vmem>>, vector<256x64xbf16>
    tpu.vector_store %arg9[%c0_33, %c192], %31 {strides = array<i32>} : memref<256x576xbf16, #tpu.memory_space<vmem>>, vector<256x64xbf16>,
    %c1_34 = arith.constant 1 : index
    %c1_35 = arith.constant 1 : index
    %c0_36 = arith.constant 0 : index
    %33 = vector.load %arg8[%c1_34, %c1_35, %c0_36] : memref<18x18x64xbf16, #tpu.memory_space<vmem>>, vector<16x16x64xbf16>
    %34 = vector.shape_cast %33 : vector<16x16x64xbf16> to vector<256x64xbf16>
    %c0_37 = arith.constant 0 : index
    %c256 = arith.constant 256 : index
    %35 = vector.load %arg9[%c0_37, %c256] : memref<256x576xbf16, #tpu.memory_space<vmem>>, vector<256x64xbf16>
    tpu.vector_store %arg9[%c0_37, %c256], %34 {strides = array<i32>} : memref<256x576xbf16, #tpu.memory_space<vmem>>, vector<256x64xbf16>,
    %c1_38 = arith.constant 1 : index
    %c2_39 = arith.constant 2 : index
    %c0_40 = arith.constant 0 : index
    %36 = vector.load %arg8[%c1_38, %c2_39, %c0_40] : memref<18x18x64xbf16, #tpu.memory_space<vmem>>, vector<16x16x64xbf16>
    %37 = vector.shape_cast %36 : vector<16x16x64xbf16> to vector<256x64xbf16>
    %c0_41 = arith.constant 0 : index
    %c320 = arith.constant 320 : index
    %38 = vector.load %arg9[%c0_41, %c320] : memref<256x576xbf16, #tpu.memory_space<vmem>>, vector<256x64xbf16>
    tpu.vector_store %arg9[%c0_41, %c320], %37 {strides = array<i32>} : memref<256x576xbf16, #tpu.memory_space<vmem>>, vector<256x64xbf16>,
    %c2_42 = arith.constant 2 : index
    %c0_43 = arith.constant 0 : index
    %c0_44 = arith.constant 0 : index
    %39 = vector.load %arg8[%c2_42, %c0_43, %c0_44] : memref<18x18x64xbf16, #tpu.memory_space<vmem>>, vector<16x16x64xbf16>
    %40 = vector.shape_cast %39 : vector<16x16x64xbf16> to vector<256x64xbf16>
    %c0_45 = arith.constant 0 : index
    %c384 = arith.constant 384 : index
    %41 = vector.load %arg9[%c0_45, %c384] : memref<256x576xbf16, #tpu.memory_space<vmem>>, vector<256x64xbf16>
    tpu.vector_store %arg9[%c0_45, %c384], %40 {strides = array<i32>} : memref<256x576xbf16, #tpu.memory_space<vmem>>, vector<256x64xbf16>,
    %c2_46 = arith.constant 2 : index
    %c1_47 = arith.constant 1 : index
    %c0_48 = arith.constant 0 : index
    %42 = vector.load %arg8[%c2_46, %c1_47, %c0_48] : memref<18x18x64xbf16, #tpu.memory_space<vmem>>, vector<16x16x64xbf16>
    %43 = vector.shape_cast %42 : vector<16x16x64xbf16> to vector<256x64xbf16>
    %c0_49 = arith.constant 0 : index
    %c448 = arith.constant 448 : index
    %44 = vector.load %arg9[%c0_49, %c448] : memref<256x576xbf16, #tpu.memory_space<vmem>>, vector<256x64xbf16>
    tpu.vector_store %arg9[%c0_49, %c448], %43 {strides = array<i32>} : memref<256x576xbf16, #tpu.memory_space<vmem>>, vector<256x64xbf16>,
    %c2_50 = arith.constant 2 : index
    %c2_51 = arith.constant 2 : index
    %c0_52 = arith.constant 0 : index
    %45 = vector.load %arg8[%c2_50, %c2_51, %c0_52] : memref<18x18x64xbf16, #tpu.memory_space<vmem>>, vector<16x16x64xbf16>
    %46 = vector.shape_cast %45 : vector<16x16x64xbf16> to vector<256x64xbf16>
    %c0_53 = arith.constant 0 : index
    %c512 = arith.constant 512 : index
    %47 = vector.load %arg9[%c0_53, %c512] : memref<256x576xbf16, #tpu.memory_space<vmem>>, vector<256x64xbf16>
    tpu.vector_store %arg9[%c0_53, %c512], %46 {strides = array<i32>} : memref<256x576xbf16, #tpu.memory_space<vmem>>, vector<256x64xbf16>,
    %c0_54 = arith.constant 0 : index
    %c0_55 = arith.constant 0 : index
    %48 = vector.load %arg9[%c0_54, %c0_55] : memref<256x576xbf16, #tpu.memory_space<vmem>>, vector<256x576xbf16>
    %c0_56 = arith.constant 0 : index
    %c0_57 = arith.constant 0 : index
    %49 = vector.load %arg4[%c0_56, %c0_57] : memref<576x64xbf16, #tpu.memory_space<vmem>>, vector<576x64xbf16>
    %cst_58 = arith.constant dense<0.000000e+00> : vector<256x64xf32>
    %50 = tpu.matmul %48, %49, %cst_58 {dimension_numbers = #tpu.dot_dimension_numbers<[1], [0], [0], [1], [0, 0, 1, 1], [], []>} : vector<256x576xbf16>, vector<576x64xbf16>, vector<256x64xf32> -> vector<256x64xf32>
    %c0_59 = arith.constant 0 : index
    %c0_60 = arith.constant 0 : index
    %51 = vector.load %arg5[%c0_59, %c0_60] : memref<1x64xf32, #tpu.memory_space<vmem>>, vector<1x64xf32>
    %52 = vector.broadcast %51 : vector<1x64xf32> to vector<256x64xf32>
    %53 = arith.addf %50, %52 : vector<256x64xf32>
    %cst_61 = arith.constant 0.000000e+00 : f32
    %54 = vector.broadcast %cst_61 : f32 to vector<256x64xf32>
    %55 = arith.cmpf ogt, %53, %54 : vector<256x64xf32>
    %cst_62 = arith.constant 1.000000e-01 : f32
    %56 = vector.broadcast %cst_62 : f32 to vector<256x64xf32>
    %57 = arith.mulf %56, %53 : vector<256x64xf32>
    %58 = arith.select %55, %53, %57 : vector<256x64xi1>, vector<256x64xf32>
    %59 = arith.truncf %58 : vector<256x64xf32> to vector<256x64xbf16>
    %60 = vector.shape_cast %59 : vector<256x64xbf16> to vector<16x16x64xbf16>
    %c1_63 = arith.constant 1 : index
    %c1_64 = arith.constant 1 : index
    %c0_65 = arith.constant 0 : index
    %61 = vector.load %arg10[%c1_63, %c1_64, %c0_65] : memref<18x18x64xbf16, #tpu.memory_space<vmem>>, vector<16x16x64xbf16>
    tpu.vector_store %arg10[%c1_63, %c1_64, %c0_65], %60 {strides = array<i32>} : memref<18x18x64xbf16, #tpu.memory_space<vmem>>, vector<16x16x64xbf16>,
    %c0_66 = arith.constant 0 : index
    %c0_67 = arith.constant 0 : index
    %c0_68 = arith.constant 0 : index
    %62 = vector.load %arg10[%c0_66, %c0_67, %c0_68] : memref<18x18x64xbf16, #tpu.memory_space<vmem>>, vector<16x16x64xbf16>
    %63 = vector.shape_cast %62 : vector<16x16x64xbf16> to vector<256x64xbf16>
    %c0_69 = arith.constant 0 : index
    %c0_70 = arith.constant 0 : index
    %64 = vector.load %arg11[%c0_69, %c0_70] : memref<256x576xbf16, #tpu.memory_space<vmem>>, vector<256x64xbf16>
    tpu.vector_store %arg11[%c0_69, %c0_70], %63 {strides = array<i32>} : memref<256x576xbf16, #tpu.memory_space<vmem>>, vector<256x64xbf16>,
    %c0_71 = arith.constant 0 : index
    %c1_72 = arith.constant 1 : index
    %c0_73 = arith.constant 0 : index
    %65 = vector.load %arg10[%c0_71, %c1_72, %c0_73] : memref<18x18x64xbf16, #tpu.memory_space<vmem>>, vector<16x16x64xbf16>
    %66 = vector.shape_cast %65 : vector<16x16x64xbf16> to vector<256x64xbf16>
    %c0_74 = arith.constant 0 : index
    %c64_75 = arith.constant 64 : index
    %67 = vector.load %arg11[%c0_74, %c64_75] : memref<256x576xbf16, #tpu.memory_space<vmem>>, vector<256x64xbf16>
    tpu.vector_store %arg11[%c0_74, %c64_75], %66 {strides = array<i32>} : memref<256x576xbf16, #tpu.memory_space<vmem>>, vector<256x64xbf16>,
    %c0_76 = arith.constant 0 : index
    %c2_77 = arith.constant 2 : index
    %c0_78 = arith.constant 0 : index
    %68 = vector.load %arg10[%c0_76, %c2_77, %c0_78] : memref<18x18x64xbf16, #tpu.memory_space<vmem>>, vector<16x16x64xbf16>
    %69 = vector.shape_cast %68 : vector<16x16x64xbf16> to vector<256x64xbf16>
    %c0_79 = arith.constant 0 : index
    %c128_80 = arith.constant 128 : index
    %70 = vector.load %arg11[%c0_79, %c128_80] : memref<256x576xbf16, #tpu.memory_space<vmem>>, vector<256x64xbf16>
    tpu.vector_store %arg11[%c0_79, %c128_80], %69 {strides = array<i32>} : memref<256x576xbf16, #tpu.memory_space<vmem>>, vector<256x64xbf16>,
    %c1_81 = arith.constant 1 : index
    %c0_82 = arith.constant 0 : index
    %c0_83 = arith.constant 0 : index
    %71 = vector.load %arg10[%c1_81, %c0_82, %c0_83] : memref<18x18x64xbf16, #tpu.memory_space<vmem>>, vector<16x16x64xbf16>
    %72 = vector.shape_cast %71 : vector<16x16x64xbf16> to vector<256x64xbf16>
    %c0_84 = arith.constant 0 : index
    %c192_85 = arith.constant 192 : index
    %73 = vector.load %arg11[%c0_84, %c192_85] : memref<256x576xbf16, #tpu.memory_space<vmem>>, vector<256x64xbf16>
    tpu.vector_store %arg11[%c0_84, %c192_85], %72 {strides = array<i32>} : memref<256x576xbf16, #tpu.memory_space<vmem>>, vector<256x64xbf16>,
    %c1_86 = arith.constant 1 : index
    %c1_87 = arith.constant 1 : index
    %c0_88 = arith.constant 0 : index
    %74 = vector.load %arg10[%c1_86, %c1_87, %c0_88] : memref<18x18x64xbf16, #tpu.memory_space<vmem>>, vector<16x16x64xbf16>
    %75 = vector.shape_cast %74 : vector<16x16x64xbf16> to vector<256x64xbf16>
    %c0_89 = arith.constant 0 : index
    %c256_90 = arith.constant 256 : index
    %76 = vector.load %arg11[%c0_89, %c256_90] : memref<256x576xbf16, #tpu.memory_space<vmem>>, vector<256x64xbf16>
    tpu.vector_store %arg11[%c0_89, %c256_90], %75 {strides = array<i32>} : memref<256x576xbf16, #tpu.memory_space<vmem>>, vector<256x64xbf16>,
    %c1_91 = arith.constant 1 : index
    %c2_92 = arith.constant 2 : index
    %c0_93 = arith.constant 0 : index
    %77 = vector.load %arg10[%c1_91, %c2_92, %c0_93] : memref<18x18x64xbf16, #tpu.memory_space<vmem>>, vector<16x16x64xbf16>
    %78 = vector.shape_cast %77 : vector<16x16x64xbf16> to vector<256x64xbf16>
    %c0_94 = arith.constant 0 : index
    %c320_95 = arith.constant 320 : index
    %79 = vector.load %arg11[%c0_94, %c320_95] : memref<256x576xbf16, #tpu.memory_space<vmem>>, vector<256x64xbf16>
    tpu.vector_store %arg11[%c0_94, %c320_95], %78 {strides = array<i32>} : memref<256x576xbf16, #tpu.memory_space<vmem>>, vector<256x64xbf16>,
    %c2_96 = arith.constant 2 : index
    %c0_97 = arith.constant 0 : index
    %c0_98 = arith.constant 0 : index
    %80 = vector.load %arg10[%c2_96, %c0_97, %c0_98] : memref<18x18x64xbf16, #tpu.memory_space<vmem>>, vector<16x16x64xbf16>
    %81 = vector.shape_cast %80 : vector<16x16x64xbf16> to vector<256x64xbf16>
    %c0_99 = arith.constant 0 : index
    %c384_100 = arith.constant 384 : index
    %82 = vector.load %arg11[%c0_99, %c384_100] : memref<256x576xbf16, #tpu.memory_space<vmem>>, vector<256x64xbf16>
    tpu.vector_store %arg11[%c0_99, %c384_100], %81 {strides = array<i32>} : memref<256x576xbf16, #tpu.memory_space<vmem>>, vector<256x64xbf16>,
    %c2_101 = arith.constant 2 : index
    %c1_102 = arith.constant 1 : index
    %c0_103 = arith.constant 0 : index
    %83 = vector.load %arg10[%c2_101, %c1_102, %c0_103] : memref<18x18x64xbf16, #tpu.memory_space<vmem>>, vector<16x16x64xbf16>
    %84 = vector.shape_cast %83 : vector<16x16x64xbf16> to vector<256x64xbf16>
    %c0_104 = arith.constant 0 : index
    %c448_105 = arith.constant 448 : index
    %85 = vector.load %arg11[%c0_104, %c448_105] : memref<256x576xbf16, #tpu.memory_space<vmem>>, vector<256x64xbf16>
    tpu.vector_store %arg11[%c0_104, %c448_105], %84 {strides = array<i32>} : memref<256x576xbf16, #tpu.memory_space<vmem>>, vector<256x64xbf16>,
    %c2_106 = arith.constant 2 : index
    %c2_107 = arith.constant 2 : index
    %c0_108 = arith.constant 0 : index
    %86 = vector.load %arg10[%c2_106, %c2_107, %c0_108] : memref<18x18x64xbf16, #tpu.memory_space<vmem>>, vector<16x16x64xbf16>
    %87 = vector.shape_cast %86 : vector<16x16x64xbf16> to vector<256x64xbf16>
    %c0_109 = arith.constant 0 : index
    %c512_110 = arith.constant 512 : index
    %88 = vector.load %arg11[%c0_109, %c512_110] : memref<256x576xbf16, #tpu.memory_space<vmem>>, vector<256x64xbf16>
    tpu.vector_store %arg11[%c0_109, %c512_110], %87 {strides = array<i32>} : memref<256x576xbf16, #tpu.memory_space<vmem>>, vector<256x64xbf16>,
    %c0_111 = arith.constant 0 : index
    %c0_112 = arith.constant 0 : index
    %89 = vector.load %arg11[%c0_111, %c0_112] : memref<256x576xbf16, #tpu.memory_space<vmem>>, vector<256x576xbf16>
    %c0_113 = arith.constant 0 : index
    %c0_114 = arith.constant 0 : index
    %90 = vector.load %arg6[%c0_113, %c0_114] : memref<576x64xbf16, #tpu.memory_space<vmem>>, vector<576x64xbf16>
    %cst_115 = arith.constant dense<0.000000e+00> : vector<256x64xf32>
    %91 = tpu.matmul %89, %90, %cst_115 {dimension_numbers = #tpu.dot_dimension_numbers<[1], [0], [0], [1], [0, 0, 1, 1], [], []>} : vector<256x576xbf16>, vector<576x64xbf16>, vector<256x64xf32> -> vector<256x64xf32>
    %c0_116 = arith.constant 0 : index
    %c0_117 = arith.constant 0 : index
    %c0_118 = arith.constant 0 : index
    %c0_119 = arith.constant 0 : index
    %92 = vector.load %arg1[%c0_116, %c0_117, %c0_118, %c0_119] : memref<1x16x16x64xf32, #tpu.memory_space<vmem>>, vector<1x16x16x64xf32>
    %93 = vector.shape_cast %92 : vector<1x16x16x64xf32> to vector<16x16x64xf32>
    %94 = vector.shape_cast %93 : vector<16x16x64xf32> to vector<256x64xf32>
    %95 = arith.addf %91, %94 : vector<256x64xf32>
    %96 = vector.shape_cast %95 : vector<256x64xf32> to vector<16x16x64xf32>
    %c0_120 = arith.constant 0 : index
    %c0_121 = arith.constant 0 : index
    %c0_122 = arith.constant 0 : index
    %c0_123 = arith.constant 0 : index
    %97 = vector.load %arg7[%c0_120, %c0_121, %c0_122, %c0_123] : memref<1x16x16x64xf32, #tpu.memory_space<vmem>>, vector<1x16x16x64xf32>
    %98 = vector.shape_cast %97 : vector<1x16x16x64xf32> to vector<16x16x64xf32>
    %99 = vector.shape_cast %96 : vector<16x16x64xf32> to vector<1x16x16x64xf32>
    tpu.vector_store %arg7[%c0_120, %c0_121, %c0_122, %c0_123], %99 {strides = array<i32>} : memref<1x16x16x64xf32, #tpu.memory_space<vmem>>, vector<1x16x16x64xf32>,
    return
  }
  func.func @transform_0(%arg0: i32) -> (i32, i32, i32, i32) {
    %c0_i32 = arith.constant 0 : i32
    %c0_i32_0 = arith.constant 0 : i32
    %c0_i32_1 = arith.constant 0 : i32
    %c0_i32_2 = arith.constant 0 : i32
    return %arg0, %c0_i32, %c0_i32_0, %c0_i32_1 : i32, i32, i32, i32
  }
  func.func @transform_1(%arg0: i32) -> (i32, i32) {
    %c0_i32 = arith.constant 0 : i32
    %c0_i32_0 = arith.constant 0 : i32
    %c0_i32_1 = arith.constant 0 : i32
    return %c0_i32, %c0_i32_0 : i32, i32
  }
  func.func @transform_2(%arg0: i32) -> (i32, i32) {
    %c0_i32 = arith.constant 0 : i32
    %c0_i32_0 = arith.constant 0 : i32
    %c0_i32_1 = arith.constant 0 : i32
    return %c0_i32, %c0_i32_0 : i32, i32
  }
  func.func @transform_3(%arg0: i32) -> (i32, i32) {
    %c0_i32 = arith.constant 0 : i32
    %c0_i32_0 = arith.constant 0 : i32
    %c0_i32_1 = arith.constant 0 : i32
    return %c0_i32, %c0_i32_0 : i32, i32
  }
  func.func @transform_4(%arg0: i32) -> (i32, i32) {
    %c0_i32 = arith.constant 0 : i32
    %c0_i32_0 = arith.constant 0 : i32
    %c0_i32_1 = arith.constant 0 : i32
    return %c0_i32, %c0_i32_0 : i32, i32
  }
  func.func @transform_5(%arg0: i32) -> (i32, i32) {
    %c0_i32 = arith.constant 0 : i32
    %c0_i32_0 = arith.constant 0 : i32
    %c0_i32_1 = arith.constant 0 : i32
    return %c0_i32, %c0_i32_0 : i32, i32
  }
  func.func @transform_6(%arg0: i32) -> (i32, i32, i32, i32) {
    %c0_i32 = arith.constant 0 : i32
    %c0_i32_0 = arith.constant 0 : i32
    %c0_i32_1 = arith.constant 0 : i32
    %c0_i32_2 = arith.constant 0 : i32
    return %arg0, %c0_i32, %c0_i32_0, %c0_i32_1 : i32, i32, i32, i32
  }
}

</mosaic_0001>

<llo_original>
// kernel: basic_block_forward.1
$region0: #{basic_block_forward.1}
  #allocation0 [shape = 'u32[]', space=smem, size = 0x4, offset = 0x4, fixed_abs, tag = 'smem constant byte address 0x4 - core index']
  #allocation1 [shape = 'u32[144,128]{1,0:T(1,128)}', space=vmem, size = 0x12000, scoped, tag = 'internal scratch']
  #allocation2 [shape = 'bf16[18,18,64]{2,1,0:T(8,128)(2,1)}', space=vmem, size = 0x1b000, scoped, tag = 'scratch operand']
  #allocation3 [shape = 'bf16[256,576]{1,0:T(16,128)(2,1)}', space=vmem, size = 0x50000, scoped, tag = 'scratch operand']
  #allocation4 [shape = 'bf16[18,18,64]{2,1,0:T(8,128)(2,1)}', space=vmem, size = 0x1b000, scoped, tag = 'scratch operand']
  #allocation5 [shape = 'bf16[256,576]{1,0:T(16,128)(2,1)}', space=vmem, size = 0x50000, scoped, tag = 'scratch operand']
  %s0 = inlined_call_operand.vmem [shape: f32[2,16,16,64], index: 0, kind: input, shape index: {}]
  %s1 = inlined_call_operand.vmem [shape: f32[1,64], index: 1, kind: input, shape index: {}]
  %s2 = inlined_call_operand.vmem [shape: f32[1,64], index: 2, kind: input, shape index: {}]
  %s3 = inlined_call_operand.vmem [shape: bf16[576,64], index: 3, kind: input, shape index: {}]
  %s4 = inlined_call_operand.vmem [shape: f32[1,64], index: 4, kind: input, shape index: {}]
  %s5 = inlined_call_operand.vmem [shape: bf16[576,64], index: 5, kind: input, shape index: {}]
  %s6 = inlined_call_operand.hbm [shape: f32[2,16,16,64], index: 6, kind: output, shape index: {}]
  %s7 = sld [smem:[#allocation0]]
  $region57: #{basic_block_forward.1} parent=0
    _
  %s9 = ssub.s32 1, %s7
  %s10 = scalar_select 0, %s9, %s7
  $region1: #{basic_block_forward.1} parent=0
    #allocation6 [shape = 'u8[262144]{0}', space=vmem, size = 0x40000, scoped, tag = 'output window, operand 0']
    #allocation7 [shape = 's32[2]{0}', space=sflag, size = 0x8, scoped, tag = 'scoped memory for basic_block_forward.1']
    %11 = vsyncpa [#allocation7], 0
    %s12 = scalar_lea.sflag [#allocation7], 1
    %13 = vsyncpa %s12, 0
    loop: start=0, step=1, limit=4
    $region2: #{basic_block_forward.1} parent=1 // loop_pre_header
      _
    $region3: #{basic_block_forward.1} parent=1 // loop_header
      %s15 = sphi 0, %s19
      %p16 = scmp.ge.s32.totalorder %s15, 4
      %s25 = sphi 0, %s27
      %s28 = sphi 0, %s25
      %s29 = sphi 0, %s28
      %s45 = sphi 0, %s29
      %s49 = sphi 0, %s49
      %s51 = sphi 0, %s49
      %s52 = sphi 0, %s51
      %s66 = sphi 0, %s52
      %s70 = sphi 0, %s70
      %s72 = sphi 0, %s70
      %s73 = sphi 0, %s72
      %s87 = sphi 0, %s73
      %s91 = sphi 0, %s91
      %s93 = sphi 0, %s91
      %s94 = sphi 0, %s93
      %s108 = sphi 0, %s94
      %s112 = sphi 0, %s112
      %s114 = sphi 0, %s112
      %s115 = sphi 0, %s114
      %s129 = sphi 0, %s115
      %s133 = sphi 0, %s133
      %s135 = sphi 0, %s133
      %s136 = sphi 0, %s135
      %s150 = sphi 0, %s136
      %s156 = sphi 0, %s158
      %s159 = sphi 0, %s156
      %s160 = sphi 0, %s159
      %s176 = sphi 0, %s160
    $region4: #{basic_block_forward.1} parent=1 // loop_header_branch
      %18 = sbr.rel (%p16) target = $region8
    $region5: #{basic_block_forward.1} parent=1 // loop_body
      %s20 = ssub.s32 %s15, 1
      %s21 = ssub.s32 %s15, 2
      %s22 = sadd.s32 %s15, 1
      %s23 = ssub.s32 %s15, %s22
      %p24 = scmp.eq.s32.totalorder %s23, 0
      %s26 = sadd.s32 %s25, 1
      %s27 = scalar_select %p24, %s25, %s26
      %p30 = pneg %p24
      %p31 = scmp.eq.s32.totalorder %s15, 1
      %p32 = por %p30, %p31
      %p33 = scmp.ne.s32.totalorder %s25, %s28
      %p34 = scmp.eq.s32.totalorder %s15, 0
      %p35 = por %p33, %p34
      %p36 = scmp.ne.s32.totalorder %s25, %s28
      %p37 = scmp.eq.s32.totalorder %s20, 1
      %p38 = por %p36, %p37
      %p39 = scmp.ne.s32.totalorder %s28, %s29
      %p40 = scmp.eq.s32.totalorder %s20, 0
      %p41 = por %p39, %p40
      %p42 = scmp.ne.s32.totalorder %s28, %s29
      %p43 = scmp.eq.s32.totalorder %s21, 1
      %p44 = por %p42, %p43
      %p46 = scmp.ne.s32.totalorder %s29, %s45
      %p47 = scmp.eq.s32.totalorder %s21, 0
      %p48 = por %p46, %p47
      %s50 = sadd.s32 %s49, 1
      %p53 = scmp.eq.s32.totalorder %s15, 1
      %p54 = scmp.ne.s32.totalorder %s49, %s51
      %p55 = scmp.eq.s32.totalorder %s15, 0
      %p56 = por %p54, %p55
      %p57 = scmp.ne.s32.totalorder %s49, %s51
      %p58 = scmp.eq.s32.totalorder %s20, 1
      %p59 = por %p57, %p58
      %p60 = scmp.ne.s32.totalorder %s51, %s52
      %p61 = scmp.eq.s32.totalorder %s20, 0
      %p62 = por %p60, %p61
      %p63 = scmp.ne.s32.totalorder %s51, %s52
      %p64 = scmp.eq.s32.totalorder %s21, 1
      %p65 = por %p63, %p64
      %p67 = scmp.ne.s32.totalorder %s52, %s66
      %p68 = scmp.eq.s32.totalorder %s21, 0
      %p69 = por %p67, %p68
      %s71 = sadd.s32 %s70, 1
      %p74 = scmp.eq.s32.totalorder %s15, 1
      %p75 = scmp.ne.s32.totalorder %s70, %s72
      %p76 = scmp.eq.s32.totalorder %s15, 0
      %p77 = por %p75, %p76
      %p78 = scmp.ne.s32.totalorder %s70, %s72
      %p79 = scmp.eq.s32.totalorder %s20, 1
      %p80 = por %p78, %p79
      %p81 = scmp.ne.s32.totalorder %s72, %s73
      %p82 = scmp.eq.s32.totalorder %s20, 0
      %p83 = por %p81, %p82
      %p84 = scmp.ne.s32.totalorder %s72, %s73
      %p85 = scmp.eq.s32.totalorder %s21, 1
      %p86 = por %p84, %p85
      %p88 = scmp.ne.s32.totalorder %s73, %s87
      %p89 = scmp.eq.s32.totalorder %s21, 0
      %p90 = por %p88, %p89
      %s92 = sadd.s32 %s91, 1
      %p95 = scmp.eq.s32.totalorder %s15, 1
      %p96 = scmp.ne.s32.totalorder %s91, %s93
      %p97 = scmp.eq.s32.totalorder %s15, 0
      %p98 = por %p96, %p97
      %p99 = scmp.ne.s32.totalorder %s91, %s93
      %p100 = scmp.eq.s32.totalorder %s20, 1
      %p101 = por %p99, %p100
      %p102 = scmp.ne.s32.totalorder %s93, %s94
      %p103 = scmp.eq.s32.totalorder %s20, 0
      %p104 = por %p102, %p103
      %p105 = scmp.ne.s32.totalorder %s93, %s94
      %p106 = scmp.eq.s32.totalorder %s21, 1
      %p107 = por %p105, %p106
      %p109 = scmp.ne.s32.totalorder %s94, %s108
      %p110 = scmp.eq.s32.totalorder %s21, 0
      %p111 = por %p109, %p110
      %s113 = sadd.s32 %s112, 1
      %p116 = scmp.eq.s32.totalorder %s15, 1
      %p117 = scmp.ne.s32.totalorder %s112, %s114
      %p118 = scmp.eq.s32.totalorder %s15, 0
      %p119 = por %p117, %p118
      %p120 = scmp.ne.s32.totalorder %s112, %s114
      %p121 = scmp.eq.s32.totalorder %s20, 1
      %p122 = por %p120, %p121
      %p123 = scmp.ne.s32.totalorder %s114, %s115
      %p124 = scmp.eq.s32.totalorder %s20, 0
      %p125 = por %p123, %p124
      %p126 = scmp.ne.s32.totalorder %s114, %s115
      %p127 = scmp.eq.s32.totalorder %s21, 1
      %p128 = por %p126, %p127
      %p130 = scmp.ne.s32.totalorder %s115, %s129
      %p131 = scmp.eq.s32.totalorder %s21, 0
      %p132 = por %p130, %p131
      %s134 = sadd.s32 %s133, 1
      %p137 = scmp.eq.s32.totalorder %s15, 1
      %p138 = scmp.ne.s32.totalorder %s133, %s135
      %p139 = scmp.eq.s32.totalorder %s15, 0
      %p140 = por %p138, %p139
      %p141 = scmp.ne.s32.totalorder %s133, %s135
      %p142 = scmp.eq.s32.totalorder %s20, 1
      %p143 = por %p141, %p142
      %p144 = scmp.ne.s32.totalorder %s135, %s136
      %p145 = scmp.eq.s32.totalorder %s20, 0
      %p146 = por %p144, %p145
      %p147 = scmp.ne.s32.totalorder %s135, %s136
      %p148 = scmp.eq.s32.totalorder %s21, 1
      %p149 = por %p147, %p148
      %p151 = scmp.ne.s32.totalorder %s136, %s150
      %p152 = scmp.eq.s32.totalorder %s21, 0
      %p153 = por %p151, %p152
      %s154 = ssub.s32 %s15, %s22
      %p155 = scmp.eq.s32.totalorder %s154, 0
      %s157 = sadd.s32 %s156, 1
      %s158 = scalar_select %p155, %s156, %s157
      %p161 = pneg %p155
      %p162 = scmp.eq.s32.totalorder %s15, 1
      %p163 = por %p161, %p162
      %p164 = scmp.ne.s32.totalorder %s156, %s159
      %p165 = scmp.eq.s32.totalorder %s15, 0
      %p166 = por %p164, %p165
      %p167 = scmp.ne.s32.totalorder %s156, %s159
      %p168 = scmp.eq.s32.totalorder %s20, 1
      %p169 = por %p167, %p168
      %p170 = scmp.ne.s32.totalorder %s159, %s160
      %p171 = scmp.eq.s32.totalorder %s20, 0
      %p172 = por %p170, %p171
      %p173 = scmp.ne.s32.totalorder %s159, %s160
      %p174 = scmp.eq.s32.totalorder %s21, 1
      %p175 = por %p173, %p174
      %p177 = scmp.ne.s32.totalorder %s160, %s176
      %p178 = scmp.eq.s32.totalorder %s21, 0
      %p179 = por %p177, %p178
      %p180 = scmp.le.s32.totalorder 1, %s15
      %p181 = scmp.lt.s32.totalorder %s15, 3
      %p182 = pnand %p180, %p181
      %p183 = pneg %p182
      // Predicated region
      $region9: #{basic_block_forward.1} parent=5 // pred_check
        _
      $region10: #{basic_block_forward.1} parent=5 // pred_check_branch
        %185 = sbr.rel (%p182) target = $region12
      $region11: #{basic_block_forward.1} parent=5 // pred_region
        %s186 = ssub.s32 %s15, 1
        // Predicated region
        $region13: #{basic_block_forward.1} parent=11 // pred_check
          %p187 = pneg %p62
        $region14: #{basic_block_forward.1} parent=11 // pred_check_branch
          %189 = sbr.rel (%p187) target = $region16
        $region15: #{basic_block_forward.1} parent=11 // pred_region
          _
        $region16: #{basic_block_forward.1} parent=11 // pred_fallthru
          _
        // Predicated region
        $region17: #{basic_block_forward.1} parent=11 // pred_check
          %p190 = pneg %p83
        $region18: #{basic_block_forward.1} parent=11 // pred_check_branch
          %192 = sbr.rel (%p190) target = $region20
        $region19: #{basic_block_forward.1} parent=11 // pred_region
          _
        $region20: #{basic_block_forward.1} parent=11 // pred_fallthru
          _
        // Predicated region
        $region21: #{basic_block_forward.1} parent=11 // pred_check
          %p193 = pneg %p104
        $region22: #{basic_block_forward.1} parent=11 // pred_check_branch
          %195 = sbr.rel (%p193) target = $region24
        $region23: #{basic_block_forward.1} parent=11 // pred_region
          _
        $region24: #{basic_block_forward.1} parent=11 // pred_fallthru
          _
        // Predicated region
        $region25: #{basic_block_forward.1} parent=11 // pred_check
          %p196 = pneg %p125
        $region26: #{basic_block_forward.1} parent=11 // pred_check_branch
          %198 = sbr.rel (%p196) target = $region28
        $region27: #{basic_block_forward.1} parent=11 // pred_region
          _
        $region28: #{basic_block_forward.1} parent=11 // pred_fallthru
          _
        // Predicated region
        $region29: #{basic_block_forward.1} parent=11 // pred_check
          %p199 = pneg %p146
        $region30: #{basic_block_forward.1} parent=11 // pred_check_branch
          %201 = sbr.rel (%p199) target = $region32
        $region31: #{basic_block_forward.1} parent=11 // pred_region
          _
        $region32: #{basic_block_forward.1} parent=11 // pred_fallthru
          _
      $region12: #{basic_block_forward.1} parent=5 // pred_fallthru
        _
      %p202 = scmp.lt.s32.totalorder %s15, 2
      // Predicated region
      $region33: #{basic_block_forward.1} parent=5 // pred_check
        %p203 = pneg %p202
      $region34: #{basic_block_forward.1} parent=5 // pred_check_branch
        %205 = sbr.rel (%p203) target = $region36
      $region35: #{basic_block_forward.1} parent=5 // pred_region
        // Predicated region
        $region37: #{basic_block_forward.1} parent=35 // pred_check
          %p206 = pneg %p35
        $region38: #{basic_block_forward.1} parent=35 // pred_check_branch
          %208 = sbr.rel (%p206) target = $region40
        $region39: #{basic_block_forward.1} parent=35 // pred_region
          %p209 = scmp.lt.s32.totalorder %s15, 1
          %s210 = scalar_select %p209, %s15, 1
          %s211 = smul.addr %s210, 32
          %s212 = smul.addr %s211, 8
          %s213 = scalar_lea.vmem %s0, %s212
        $region40: #{basic_block_forward.1} parent=35 // pred_fallthru
          _
      $region36: #{basic_block_forward.1} parent=5 // pred_fallthru
        _
      %p214 = scmp.le.s32.totalorder 1, %s15
      %p215 = scmp.lt.s32.totalorder %s15, 3
      %p216 = pnand %p214, %p215
      %p217 = pneg %p216
      // Predicated region
      $region41: #{basic_block_forward.1} parent=5 // pred_check
        _
      $region42: #{basic_block_forward.1} parent=5 // pred_check_branch
        %219 = sbr.rel (%p216) target = $region44
      $region43: #{basic_block_forward.1} parent=5 // pred_region
        %s220 = ssub.s32 %s15, 1
        %p221 = scmp.lt.s32.totalorder %s20, 1
        %s222 = scalar_select %p221, %s20, 1
        %s223 = smul.addr %s222, 32
        %s224 = smul.addr %s223, 8
        %s225 = scalar_lea.vmem %s0, %s224
        %p226 = pneg %p41
        %p227 = pneg %p38
        %p228 = pneg %p62
        %p229 = pneg %p59
        %p230 = pneg %p83
        %p231 = pneg %p80
        %p232 = pneg %p104
        %p233 = pneg %p101
        %p234 = pneg %p125
        %p235 = pneg %p122
        %p236 = pneg %p146
        %p237 = pneg %p143
        %p238 = pneg %p172
        %p239 = pneg %p169
        %s240 = sand.u32 %s159, 1
        %s241 = scalar_lea.sflag [#allocation7], %s240
        %s242 = sand.u32 %s159, 1
        %s243 = smul.addr %s242, 256
        %s244 = scalar_lea.vmem [#allocation6], %s243
        %p245 = scmp.lt.s32.totalorder %s20, 1
        %s246 = scalar_select %p245, %s20, 1
        %s247 = smul.addr %s246, 32
        %s248 = smul.addr %s247, 8
        %s249 = scalar_lea.vmem %s0, %s248
        %vm251 = vcmask 519168
        %252 = vst.msk [vmem:[#allocation2] sm:$0xf] %vm251, 0
        %253 = vst.msk [vmem:[#allocation2 + $0x4] sm:$0xf] %vm251, 0
        %vm254 = vcmask 516096
        %255 = vst.msk [vmem:[#allocation2 + $0x8] sm:$0x1] %vm254, 0
        %256 = vst.msk [vmem:[#allocation2 + $0xc] sm:$0xf] %vm251, 0
        %257 = vst.msk [vmem:[#allocation2 + $0x10] sm:$0xf] %vm251, 0
        %258 = vst.msk [vmem:[#allocation2 + $0x14] sm:$0x1] %vm254, 0
        %259 = vst.msk [vmem:[#allocation2 + $0x18] sm:$0xf] %vm251, 0
        %260 = vst.msk [vmem:[#allocation2 + $0x1c] sm:$0xf] %vm251, 0
        %261 = vst.msk [vmem:[#allocation2 + $0x20] sm:$0x1] %vm254, 0
        %262 = vst.msk [vmem:[#allocation2 + $0x24] sm:$0xf] %vm251, 0
        %263 = vst.msk [vmem:[#allocation2 + $0x28] sm:$0xf] %vm251, 0
        %264 = vst.msk [vmem:[#allocation2 + $0x2c] sm:$0x1] %vm254, 0
        %265 = vst.msk [vmem:[#allocation2 + $0x30] sm:$0xf] %vm251, 0
        %266 = vst.msk [vmem:[#allocation2 + $0x34] sm:$0xf] %vm251, 0
        %267 = vst.msk [vmem:[#allocation2 + $0x38] sm:$0x1] %vm254, 0
        %268 = vst.msk [vmem:[#allocation2 + $0x3c] sm:$0xf] %vm251, 0
        %269 = vst.msk [vmem:[#allocation2 + $0x40] sm:$0xf] %vm251, 0
        %270 = vst.msk [vmem:[#allocation2 + $0x44] sm:$0x1] %vm254, 0
        %271 = vst.msk [vmem:[#allocation2 + $0x48] sm:$0xf] %vm251, 0
        %272 = vst.msk [vmem:[#allocation2 + $0x4c] sm:$0xf] %vm251, 0
        %273 = vst.msk [vmem:[#allocation2 + $0x50] sm:$0x1] %vm254, 0
        %274 = vst.msk [vmem:[#allocation2 + $0x54] sm:$0xf] %vm251, 0
        %275 = vst.msk [vmem:[#allocation2 + $0x58] sm:$0xf] %vm251, 0
        %276 = vst.msk [vmem:[#allocation2 + $0x5c] sm:$0x1] %vm254, 0
        %277 = vst.msk [vmem:[#allocation2 + $0x60] sm:$0xf] %vm251, 0
        %278 = vst.msk [vmem:[#allocation2 + $0x64] sm:$0xf] %vm251, 0
        %279 = vst.msk [vmem:[#allocation2 + $0x68] sm:$0x1] %vm254, 0
        %280 = vst.msk [vmem:[#allocation2 + $0x6c] sm:$0xf] %vm251, 0
        %281 = vst.msk [vmem:[#allocation2 + $0x70] sm:$0xf] %vm251, 0
        %282 = vst.msk [vmem:[#allocation2 + $0x74] sm:$0x1] %vm254, 0
        %283 = vst.msk [vmem:[#allocation2 + $0x78] sm:$0xf] %vm251, 0
        %284 = vst.msk [vmem:[#allocation2 + $0x7c] sm:$0xf] %vm251, 0
        %285 = vst.msk [vmem:[#allocation2 + $0x80] sm:$0x1] %vm254, 0
        %286 = vst.msk [vmem:[#allocation2 + $0x84] sm:$0xf] %vm251, 0
        %287 = vst.msk [vmem:[#allocation2 + $0x88] sm:$0xf] %vm251, 0
        %288 = vst.msk [vmem:[#allocation2 + $0x8c] sm:$0x1] %vm254, 0
        %289 = vst.msk [vmem:[#allocation2 + $0x90] sm:$0xf] %vm251, 0
        %290 = vst.msk [vmem:[#allocation2 + $0x94] sm:$0xf] %vm251, 0
        %291 = vst.msk [vmem:[#allocation2 + $0x98] sm:$0x1] %vm254, 0
        %292 = vst.msk [vmem:[#allocation2 + $0x9c] sm:$0xf] %vm251, 0
        %293 = vst.msk [vmem:[#allocation2 + $0xa0] sm:$0xf] %vm251, 0
        %294 = vst.msk [vmem:[#allocation2 + $0xa4] sm:$0x1] %vm254, 0
        %295 = vst.msk [vmem:[#allocation2 + $0xa8] sm:$0xf] %vm251, 0
        %296 = vst.msk [vmem:[#allocation2 + $0xac] sm:$0xf] %vm251, 0
        %297 = vst.msk [vmem:[#allocation2 + $0xb0] sm:$0x1] %vm254, 0
        %298 = vst.msk [vmem:[#allocation2 + $0xb4] sm:$0xf] %vm251, 0
        %299 = vst.msk [vmem:[#allocation2 + $0xb8] sm:$0xf] %vm251, 0
        %300 = vst.msk [vmem:[#allocation2 + $0xbc] sm:$0x1] %vm254, 0
        %301 = vst.msk [vmem:[#allocation2 + $0xc0] sm:$0xf] %vm251, 0
        %302 = vst.msk [vmem:[#allocation2 + $0xc4] sm:$0xf] %vm251, 0
        %303 = vst.msk [vmem:[#allocation2 + $0xc8] sm:$0x1] %vm254, 0
        %304 = vst.msk [vmem:[#allocation2 + $0xcc] sm:$0xf] %vm251, 0
        %305 = vst.msk [vmem:[#allocation2 + $0xd0] sm:$0xf] %vm251, 0
        %306 = vst.msk [vmem:[#allocation2 + $0xd4] sm:$0x1] %vm254, 0
        %307 = vst.msk [vmem:[#allocation4] sm:$0xf] %vm251, 0
        %308 = vst.msk [vmem:[#allocation4 + $0x4] sm:$0xf] %vm251, 0
        %309 = vst.msk [vmem:[#allocation4 + $0x8] sm:$0x1] %vm254, 0
        %310 = vst.msk [vmem:[#allocation4 + $0xc] sm:$0xf] %vm251, 0
        %311 = vst.msk [vmem:[#allocation4 + $0x10] sm:$0xf] %vm251, 0
        %312 = vst.msk [vmem:[#allocation4 + $0x14] sm:$0x1] %vm254, 0
        %313 = vst.msk [vmem:[#allocation4 + $0x18] sm:$0xf] %vm251, 0
        %314 = vst.msk [vmem:[#allocation4 + $0x1c] sm:$0xf] %vm251, 0
        %315 = vst.msk [vmem:[#allocation4 + $0x20] sm:$0x1] %vm254, 0
        %316 = vst.msk [vmem:[#allocation4 + $0x24] sm:$0xf] %vm251, 0
        %317 = vst.msk [vmem:[#allocation4 + $0x28] sm:$0xf] %vm251, 0
        %318 = vst.msk [vmem:[#allocation4 + $0x2c] sm:$0x1] %vm254, 0
        %319 = vst.msk [vmem:[#allocation4 + $0x30] sm:$0xf] %vm251, 0
        %320 = vst.msk [vmem:[#allocation4 + $0x34] sm:$0xf] %vm251, 0
        %321 = vst.msk [vmem:[#allocation4 + $0x38] sm:$0x1] %vm254, 0
        %322 = vst.msk [vmem:[#allocation4 + $0x3c] sm:$0xf] %vm251, 0
        %323 = vst.msk [vmem:[#allocation4 + $0x40] sm:$0xf] %vm251, 0
        %324 = vst.msk [vmem:[#allocation4 + $0x44] sm:$0x1] %vm254, 0
        %325 = vst.msk [vmem:[#allocation4 + $0x48] sm:$0xf] %vm251, 0
        %326 = vst.msk [vmem:[#allocation4 + $0x4c] sm:$0xf] %vm251, 0
        %327 = vst.msk [vmem:[#allocation4 + $0x50] sm:$0x1] %vm254, 0
        %328 = vst.msk [vmem:[#allocation4 + $0x54] sm:$0xf] %vm251, 0
        %329 = vst.msk [vmem:[#allocation4 + $0x58] sm:$0xf] %vm251, 0
        %330 = vst.msk [vmem:[#allocation4 + $0x5c] sm:$0x1] %vm254, 0
        %331 = vst.msk [vmem:[#allocation4 + $0x60] sm:$0xf] %vm251, 0
        %332 = vst.msk [vmem:[#allocation4 + $0x64] sm:$0xf] %vm251, 0
        %333 = vst.msk [vmem:[#allocation4 + $0x68] sm:$0x1] %vm254, 0
        %334 = vst.msk [vmem:[#allocation4 + $0x6c] sm:$0xf] %vm251, 0
        %335 = vst.msk [vmem:[#allocation4 + $0x70] sm:$0xf] %vm251, 0
        %336 = vst.msk [vmem:[#allocation4 + $0x74] sm:$0x1] %vm254, 0
        %337 = vst.msk [vmem:[#allocation4 + $0x78] sm:$0xf] %vm251, 0
        %338 = vst.msk [vmem:[#allocation4 + $0x7c] sm:$0xf] %vm251, 0
        %339 = vst.msk [vmem:[#allocation4 + $0x80] sm:$0x1] %vm254, 0
        %340 = vst.msk [vmem:[#allocation4 + $0x84] sm:$0xf] %vm251, 0
        %341 = vst.msk [vmem:[#allocation4 + $0x88] sm:$0xf] %vm251, 0
        %342 = vst.msk [vmem:[#allocation4 + $0x8c] sm:$0x1] %vm254, 0
        %343 = vst.msk [vmem:[#allocation4 + $0x90] sm:$0xf] %vm251, 0
        %344 = vst.msk [vmem:[#allocation4 + $0x94] sm:$0xf] %vm251, 0
        %345 = vst.msk [vmem:[#allocation4 + $0x98] sm:$0x1] %vm254, 0
        %346 = vst.msk [vmem:[#allocation4 + $0x9c] sm:$0xf] %vm251, 0
        %347 = vst.msk [vmem:[#allocation4 + $0xa0] sm:$0xf] %vm251, 0
        %348 = vst.msk [vmem:[#allocation4 + $0xa4] sm:$0x1] %vm254, 0
        %349 = vst.msk [vmem:[#allocation4 + $0xa8] sm:$0xf] %vm251, 0
        %350 = vst.msk [vmem:[#allocation4 + $0xac] sm:$0xf] %vm251, 0
        %351 = vst.msk [vmem:[#allocation4 + $0xb0] sm:$0x1] %vm254, 0
        %352 = vst.msk [vmem:[#allocation4 + $0xb4] sm:$0xf] %vm251, 0
        %353 = vst.msk [vmem:[#allocation4 + $0xb8] sm:$0xf] %vm251, 0
        %354 = vst.msk [vmem:[#allocation4 + $0xbc] sm:$0x1] %vm254, 0
        %355 = vst.msk [vmem:[#allocation4 + $0xc0] sm:$0xf] %vm251, 0
        %356 = vst.msk [vmem:[#allocation4 + $0xc4] sm:$0xf] %vm251, 0
        %357 = vst.msk [vmem:[#allocation4 + $0xc8] sm:$0x1] %vm254, 0
        %358 = vst.msk [vmem:[#allocation4 + $0xcc] sm:$0xf] %vm251, 0
        %359 = vst.msk [vmem:[#allocation4 + $0xd0] sm:$0xf] %vm251, 0
        %360 = vst.msk [vmem:[#allocation4 + $0xd4] sm:$0x1] %vm254, 0
        %v361 = vld [vmem:[%s1] sm:$0x1]
        %v362 = vld [vmem:[%s2] sm:$0x1]
        %v363 = vld [vmem:[%s249] sm:$0xff]
        %v364 = vld [vmem:[%s249 + $0x8] sm:$0xff]
        %v365 = vld [vmem:[%s249 + $0x10] sm:$0xff]
        %v366 = vld [vmem:[%s249 + $0x18] sm:$0xff]
        %v367 = vld [vmem:[%s249 + $0x20] sm:$0xff]
        %v368 = vld [vmem:[%s249 + $0x28] sm:$0xff]
        %v369 = vld [vmem:[%s249 + $0x30] sm:$0xff]
        %v370 = vld [vmem:[%s249 + $0x38] sm:$0xff]
        %v371 = vld [vmem:[%s249 + $0x40] sm:$0xff]
        %v372 = vld [vmem:[%s249 + $0x48] sm:$0xff]
        %v373 = vld [vmem:[%s249 + $0x50] sm:$0xff]
        %v374 = vld [vmem:[%s249 + $0x58] sm:$0xff]
        %v375 = vld [vmem:[%s249 + $0x60] sm:$0xff]
        %v376 = vld [vmem:[%s249 + $0x68] sm:$0xff]
        %v377 = vld [vmem:[%s249 + $0x70] sm:$0xff]
        %v378 = vld [vmem:[%s249 + $0x78] sm:$0xff]
        %v379 = vld [vmem:[%s249 + $0x80] sm:$0xff]
        %v380 = vld [vmem:[%s249 + $0x88] sm:$0xff]
        %v381 = vld [vmem:[%s249 + $0x90] sm:$0xff]
        %v382 = vld [vmem:[%s249 + $0x98] sm:$0xff]
        %v383 = vld [vmem:[%s249 + $0xa0] sm:$0xff]
        %v384 = vld [vmem:[%s249 + $0xa8] sm:$0xff]
        %v385 = vld [vmem:[%s249 + $0xb0] sm:$0xff]
        %v386 = vld [vmem:[%s249 + $0xb8] sm:$0xff]
        %v387 = vld [vmem:[%s249 + $0xc0] sm:$0xff]
        %v388 = vld [vmem:[%s249 + $0xc8] sm:$0xff]
        %v389 = vld [vmem:[%s249 + $0xd0] sm:$0xff]
        %v390 = vld [vmem:[%s249 + $0xd8] sm:$0xff]
        %v391 = vld [vmem:[%s249 + $0xe0] sm:$0xff]
        %v392 = vld [vmem:[%s249 + $0xe8] sm:$0xff]
        %v393 = vld [vmem:[%s249 + $0xf0] sm:$0xff]
        %v394 = vld [vmem:[%s249 + $0xf8] sm:$0xff]
        %v396 = vlaneseq
        %v397 = vshrl.u32 %v396, 7
        %v398 = vsub.s32 0, %v397
        %v399 = vrot.slane %v361, %v398
        %v401 = vmul.f32 %v363, %v399
        %v402 = vmul.f32 %v364, %v399
        %v403 = vmul.f32 %v365, %v399
        %v404 = vmul.f32 %v366, %v399
        %v405 = vmul.f32 %v367, %v399
        %v406 = vmul.f32 %v368, %v399
        %v407 = vmul.f32 %v369, %v399
        %v408 = vmul.f32 %v370, %v399
        %v409 = vmul.f32 %v371, %v399
        %v410 = vmul.f32 %v372, %v399
        %v411 = vmul.f32 %v373, %v399
        %v412 = vmul.f32 %v374, %v399
        %v413 = vmul.f32 %v375, %v399
        %v414 = vmul.f32 %v376, %v399
        %v415 = vmul.f32 %v377, %v399
        %v416 = vmul.f32 %v378, %v399
        %v417 = vmul.f32 %v379, %v399
        %v418 = vmul.f32 %v380, %v399
        %v419 = vmul.f32 %v381, %v399
        %v420 = vmul.f32 %v382, %v399
        %v421 = vmul.f32 %v383, %v399
        %v422 = vmul.f32 %v384, %v399
        %v423 = vmul.f32 %v385, %v399
        %v424 = vmul.f32 %v386, %v399
        %v425 = vmul.f32 %v387, %v399
        %v426 = vmul.f32 %v388, %v399
        %v427 = vmul.f32 %v389, %v399
        %v428 = vmul.f32 %v390, %v399
        %v429 = vmul.f32 %v391, %v399
        %v430 = vmul.f32 %v392, %v399
        %v431 = vmul.f32 %v393, %v399
        %v432 = vmul.f32 %v394, %v399
        %v434 = vlaneseq
        %v435 = vshrl.u32 %v434, 7
        %v436 = vsub.s32 0, %v435
        %v437 = vrot.slane %v362, %v436
        %v439 = vadd.f32 %v401, %v437
        %v440 = vadd.f32 %v402, %v437
        %v441 = vadd.f32 %v403, %v437
        %v442 = vadd.f32 %v404, %v437
        %v443 = vadd.f32 %v405, %v437
        %v444 = vadd.f32 %v406, %v437
        %v445 = vadd.f32 %v407, %v437
        %v446 = vadd.f32 %v408, %v437
        %v447 = vadd.f32 %v409, %v437
        %v448 = vadd.f32 %v410, %v437
        %v449 = vadd.f32 %v411, %v437
        %v450 = vadd.f32 %v412, %v437
        %v451 = vadd.f32 %v413, %v437
        %v452 = vadd.f32 %v414, %v437
        %v453 = vadd.f32 %v415, %v437
        %v454 = vadd.f32 %v416, %v437
        %v455 = vadd.f32 %v417, %v437
        %v456 = vadd.f32 %v418, %v437
        %v457 = vadd.f32 %v419, %v437
        %v458 = vadd.f32 %v420, %v437
        %v459 = vadd.f32 %v421, %v437
        %v460 = vadd.f32 %v422, %v437
        %v461 = vadd.f32 %v423, %v437
        %v462 = vadd.f32 %v424, %v437
        %v463 = vadd.f32 %v425, %v437
        %v464 = vadd.f32 %v426, %v437
        %v465 = vadd.f32 %v427, %v437
        %v466 = vadd.f32 %v428, %v437
        %v467 = vadd.f32 %v429, %v437
        %v468 = vadd.f32 %v430, %v437
        %v469 = vadd.f32 %v431, %v437
        %v470 = vadd.f32 %v432, %v437
        %vm471 = vcmp.gt.f32.partialorder %v439, 0.0
        %vm472 = vcmp.gt.f32.partialorder %v440, 0.0
        %vm473 = vcmp.gt.f32.partialorder %v441, 0.0
        %vm474 = vcmp.gt.f32.partialorder %v442, 0.0
        %vm475 = vcmp.gt.f32.partialorder %v443, 0.0
        %vm476 = vcmp.gt.f32.partialorder %v444, 0.0
        %vm477 = vcmp.gt.f32.partialorder %v445, 0.0
        %vm478 = vcmp.gt.f32.partialorder %v446, 0.0
        %vm479 = vcmp.gt.f32.partialorder %v447, 0.0
        %vm480 = vcmp.gt.f32.partialorder %v448, 0.0
        %vm481 = vcmp.gt.f32.partialorder %v449, 0.0
        %vm482 = vcmp.gt.f32.partialorder %v450, 0.0
        %vm483 = vcmp.gt.f32.partialorder %v451, 0.0
        %vm484 = vcmp.gt.f32.partialorder %v452, 0.0
        %vm485 = vcmp.gt.f32.partialorder %v453, 0.0
        %vm486 = vcmp.gt.f32.partialorder %v454, 0.0
        %vm487 = vcmp.gt.f32.partialorder %v455, 0.0
        %vm488 = vcmp.gt.f32.partialorder %v456, 0.0
        %vm489 = vcmp.gt.f32.partialorder %v457, 0.0
        %vm490 = vcmp.gt.f32.partialorder %v458, 0.0
        %vm491 = vcmp.gt.f32.partialorder %v459, 0.0
        %vm492 = vcmp.gt.f32.partialorder %v460, 0.0
        %vm493 = vcmp.gt.f32.partialorder %v461, 0.0
        %vm494 = vcmp.gt.f32.partialorder %v462, 0.0
        %vm495 = vcmp.gt.f32.partialorder %v463, 0.0
        %vm496 = vcmp.gt.f32.partialorder %v464, 0.0
        %vm497 = vcmp.gt.f32.partialorder %v465, 0.0
        %vm498 = vcmp.gt.f32.partialorder %v466, 0.0
        %vm499 = vcmp.gt.f32.partialorder %v467, 0.0
        %vm500 = vcmp.gt.f32.partialorder %v468, 0.0
        %vm501 = vcmp.gt.f32.partialorder %v469, 0.0
        %vm502 = vcmp.gt.f32.partialorder %v470, 0.0
        %v503 = vmul.f32 %v439, 0.1
        %v504 = vmul.f32 %v440, 0.1
        %v505 = vmul.f32 %v441, 0.1
        %v506 = vmul.f32 %v442, 0.1
        %v507 = vmul.f32 %v443, 0.1
        %v508 = vmul.f32 %v444, 0.1
        %v509 = vmul.f32 %v445, 0.1
        %v510 = vmul.f32 %v446, 0.1
        %v511 = vmul.f32 %v447, 0.1
        %v512 = vmul.f32 %v448, 0.1
        %v513 = vmul.f32 %v449, 0.1
        %v514 = vmul.f32 %v450, 0.1
        %v515 = vmul.f32 %v451, 0.1
        %v516 = vmul.f32 %v452, 0.1
        %v517 = vmul.f32 %v453, 0.1
        %v518 = vmul.f32 %v454, 0.1
        %v519 = vmul.f32 %v455, 0.1
        %v520 = vmul.f32 %v456, 0.1
        %v521 = vmul.f32 %v457, 0.1
        %v522 = vmul.f32 %v458, 0.1
        %v523 = vmul.f32 %v459, 0.1
        %v524 = vmul.f32 %v460, 0.1
        %v525 = vmul.f32 %v461, 0.1
        %v526 = vmul.f32 %v462, 0.1
        %v527 = vmul.f32 %v463, 0.1
        %v528 = vmul.f32 %v464, 0.1
        %v529 = vmul.f32 %v465, 0.1
        %v530 = vmul.f32 %v466, 0.1
        %v531 = vmul.f32 %v467, 0.1
        %v532 = vmul.f32 %v468, 0.1
        %v533 = vmul.f32 %v469, 0.1
        %v534 = vmul.f32 %v470, 0.1
        %v535 = vsel %vm471, %v439, %v503
        %v536 = vsel %vm472, %v440, %v504
        %v537 = vsel %vm473, %v441, %v505
        %v538 = vsel %vm474, %v442, %v506
        %v539 = vsel %vm475, %v443, %v507
        %v540 = vsel %vm476, %v444, %v508
        %v541 = vsel %vm477, %v445, %v509
        %v542 = vsel %vm478, %v446, %v510
        %v543 = vsel %vm479, %v447, %v511
        %v544 = vsel %vm480, %v448, %v512
        %v545 = vsel %vm481, %v449, %v513
        %v546 = vsel %vm482, %v450, %v514
        %v547 = vsel %vm483, %v451, %v515
        %v548 = vsel %vm484, %v452, %v516
        %v549 = vsel %vm485, %v453, %v517
        %v550 = vsel %vm486, %v454, %v518
        %v551 = vsel %vm487, %v455, %v519
        %v552 = vsel %vm488, %v456, %v520
        %v553 = vsel %vm489, %v457, %v521
        %v554 = vsel %vm490, %v458, %v522
        %v555 = vsel %vm491, %v459, %v523
        %v556 = vsel %vm492, %v460, %v524
        %v557 = vsel %vm493, %v461, %v525
        %v558 = vsel %vm494, %v462, %v526
        %v559 = vsel %vm495, %v463, %v527
        %v560 = vsel %vm496, %v464, %v528
        %v561 = vsel %vm497, %v465, %v529
        %v562 = vsel %vm498, %v466, %v530
        %v563 = vsel %vm499, %v467, %v531
        %v564 = vsel %vm500, %v468, %v532
        %v565 = vsel %vm501, %v469, %v533
        %v566 = vsel %vm502, %v470, %v534
        %v567 = vpack.c.bf16 %v536, %v535
        %v568 = vpack.c.bf16 %v538, %v537
        %v569 = vpack.c.bf16 %v540, %v539
        %v570 = vpack.c.bf16 %v542, %v541
        %v571 = vpack.c.bf16 %v544, %v543
        %v572 = vpack.c.bf16 %v546, %v545
        %v573 = vpack.c.bf16 %v548, %v547
        %v574 = vpack.c.bf16 %v550, %v549
        %v575 = vpack.c.bf16 %v552, %v551
        %v576 = vpack.c.bf16 %v554, %v553
        %v577 = vpack.c.bf16 %v556, %v555
        %v578 = vpack.c.bf16 %v558, %v557
        %v579 = vpack.c.bf16 %v560, %v559
        %v580 = vpack.c.bf16 %v562, %v561
        %v581 = vpack.c.bf16 %v564, %v563
        %v582 = vpack.c.bf16 %v566, %v565
        %v599 = vunpack.c.l.b16 %v567
        %v600 = vunpack.c.h.b16 %v567
        %v601 = vunpack.c.l.b16 %v568
        %v602 = vunpack.c.h.b16 %v568
        %v603 = vunpack.c.l.b16 %v569
        %v604 = vunpack.c.h.b16 %v569
        %v605 = vunpack.c.l.b16 %v570
        %v606 = vunpack.c.h.b16 %v570
        %v607 = vunpack.c.l.b16 %v571
        %v608 = vunpack.c.h.b16 %v571
        %v609 = vunpack.c.l.b16 %v572
        %v610 = vunpack.c.h.b16 %v572
        %v611 = vunpack.c.l.b16 %v573
        %v612 = vunpack.c.h.b16 %v573
        %v613 = vunpack.c.l.b16 %v574
        %v614 = vunpack.c.h.b16 %v574
        %v615 = vunpack.c.l.b16 %v575
        %v616 = vunpack.c.h.b16 %v575
        %v617 = vunpack.c.l.b16 %v576
        %v618 = vunpack.c.h.b16 %v576
        %v619 = vunpack.c.l.b16 %v577
        %v620 = vunpack.c.h.b16 %v577
        %v621 = vunpack.c.l.b16 %v578
        %v622 = vunpack.c.h.b16 %v578
        %v623 = vunpack.c.l.b16 %v579
        %v624 = vunpack.c.h.b16 %v579
        %v625 = vunpack.c.l.b16 %v580
        %v626 = vunpack.c.h.b16 %v580
        %v627 = vunpack.c.l.b16 %v581
        %v628 = vunpack.c.h.b16 %v581
        %v629 = vunpack.c.l.b16 %v582
        %v630 = vunpack.c.h.b16 %v582
        %v631 = vpack.c.b16 %v599, %v599
        %v632 = vpack.c.b16 %v600, %v600
        %v633 = vpack.c.b16 %v601, %v601
        %v634 = vpack.c.b16 %v602, %v602
        %v635 = vpack.c.b16 %v603, %v603
        %v636 = vpack.c.b16 %v604, %v604
        %v637 = vpack.c.b16 %v605, %v605
        %v638 = vpack.c.b16 %v606, %v606
        %v639 = vpack.c.b16 %v607, %v607
        %v640 = vpack.c.b16 %v608, %v608
        %v641 = vpack.c.b16 %v609, %v609
        %v642 = vpack.c.b16 %v610, %v610
        %v643 = vpack.c.b16 %v611, %v611
        %v644 = vpack.c.b16 %v612, %v612
        %v645 = vpack.c.b16 %v613, %v613
        %v646 = vpack.c.b16 %v614, %v614
        %v647 = vpack.c.b16 %v615, %v615
        %v648 = vpack.c.b16 %v616, %v616
        %v649 = vpack.c.b16 %v617, %v617
        %v650 = vpack.c.b16 %v618, %v618
        %v651 = vpack.c.b16 %v619, %v619
        %v652 = vpack.c.b16 %v620, %v620
        %v653 = vpack.c.b16 %v621, %v621
        %v654 = vpack.c.b16 %v622, %v622
        %v655 = vpack.c.b16 %v623, %v623
        %v656 = vpack.c.b16 %v624, %v624
        %v657 = vpack.c.b16 %v625, %v625
        %v658 = vpack.c.b16 %v626, %v626
        %v659 = vpack.c.b16 %v627, %v627
        %v660 = vpack.c.b16 %v628, %v628
        %v661 = vpack.c.b16 %v629, %v629
        %v662 = vpack.c.b16 %v630, %v630
        %vm663 = vsmask.f32 256
        %vm664 = vsmask.f32 4368
        %vm665 = vmor %vm663, %vm664
        %v667 = vshrl.u32 %v631, 16
        %v669 = vrot.slane %v667, 7
        %v670 = vshll.u32 %v631, 16
        %v672 = vor.u32 %v669, %v670
        %v673 = vrot.slane %v669, 4
        %v675 = vshrl.u32 %v632, 16
        %v677 = vrot.slane %v675, 7
        %v678 = vshll.u32 %v632, 16
        %v680 = vor.u32 %v677, %v678
        %v681 = vsel %vm665, %v673, %v680
        %v682 = vrot.slane %v677, 4
        %v684 = vshrl.u32 %v633, 16
        %v686 = vrot.slane %v684, 7
        %v687 = vshll.u32 %v633, 16
        %v689 = vor.u32 %v686, %v687
        %v690 = vrot.slane %v686, 4
        %v692 = vshrl.u32 %v634, 16
        %v694 = vrot.slane %v692, 7
        %v695 = vshll.u32 %v634, 16
        %v697 = vor.u32 %v694, %v695
        %v698 = vsel %vm665, %v690, %v697
        %v699 = vrot.slane %v694, 4
        %v701 = vshrl.u32 %v635, 16
        %v703 = vrot.slane %v701, 7
        %v704 = vshll.u32 %v635, 16
        %v706 = vor.u32 %v703, %v704
        %v707 = vrot.slane %v703, 4
        %v709 = vshrl.u32 %v636, 16
        %v711 = vrot.slane %v709, 7
        %v712 = vshll.u32 %v636, 16
        %v714 = vor.u32 %v711, %v712
        %v715 = vsel %vm665, %v707, %v714
        %v716 = vrot.slane %v711, 4
        %v718 = vshrl.u32 %v637, 16
        %v720 = vrot.slane %v718, 7
        %v721 = vshll.u32 %v637, 16
        %v723 = vor.u32 %v720, %v721
        %v724 = vrot.slane %v720, 4
        %v726 = vshrl.u32 %v638, 16
        %v728 = vrot.slane %v726, 7
        %v729 = vshll.u32 %v638, 16
        %v731 = vor.u32 %v728, %v729
        %v732 = vsel %vm665, %v724, %v731
        %v733 = vrot.slane %v728, 4
        %v735 = vshrl.u32 %v639, 16
        %v737 = vrot.slane %v735, 7
        %v738 = vshll.u32 %v639, 16
        %v740 = vor.u32 %v737, %v738
        %v741 = vrot.slane %v737, 4
        %v743 = vshrl.u32 %v640, 16
        %v745 = vrot.slane %v743, 7
        %v746 = vshll.u32 %v640, 16
        %v748 = vor.u32 %v745, %v746
        %v749 = vsel %vm665, %v741, %v748
        %v750 = vrot.slane %v745, 4
        %v752 = vshrl.u32 %v641, 16
        %v754 = vrot.slane %v752, 7
        %v755 = vshll.u32 %v641, 16
        %v757 = vor.u32 %v754, %v755
        %v758 = vrot.slane %v754, 4
        %v760 = vshrl.u32 %v642, 16
        %v762 = vrot.slane %v760, 7
        %v763 = vshll.u32 %v642, 16
        %v765 = vor.u32 %v762, %v763
        %v766 = vsel %vm665, %v758, %v765
        %v767 = vrot.slane %v762, 4
        %v769 = vshrl.u32 %v643, 16
        %v771 = vrot.slane %v769, 7
        %v772 = vshll.u32 %v643, 16
        %v774 = vor.u32 %v771, %v772
        %v775 = vrot.slane %v771, 4
        %v777 = vshrl.u32 %v644, 16
        %v779 = vrot.slane %v777, 7
        %v780 = vshll.u32 %v644, 16
        %v782 = vor.u32 %v779, %v780
        %v783 = vsel %vm665, %v775, %v782
        %v784 = vrot.slane %v779, 4
        %v786 = vshrl.u32 %v645, 16
        %v788 = vrot.slane %v786, 7
        %v789 = vshll.u32 %v645, 16
        %v791 = vor.u32 %v788, %v789
        %v792 = vrot.slane %v788, 4
        %v794 = vshrl.u32 %v646, 16
        %v796 = vrot.slane %v794, 7
        %v797 = vshll.u32 %v646, 16
        %v799 = vor.u32 %v796, %v797
        %v800 = vsel %vm665, %v792, %v799
        %v801 = vrot.slane %v796, 4
        %v803 = vshrl.u32 %v647, 16
        %v805 = vrot.slane %v803, 7
        %v806 = vshll.u32 %v647, 16
        %v808 = vor.u32 %v805, %v806
        %v809 = vrot.slane %v805, 4
        %v811 = vshrl.u32 %v648, 16
        %v813 = vrot.slane %v811, 7
        %v814 = vshll.u32 %v648, 16
        %v816 = vor.u32 %v813, %v814
        %v817 = vsel %vm665, %v809, %v816
        %v818 = vrot.slane %v813, 4
        %v820 = vshrl.u32 %v649, 16
        %v822 = vrot.slane %v820, 7
        %v823 = vshll.u32 %v649, 16
        %v825 = vor.u32 %v822, %v823
        %v826 = vrot.slane %v822, 4
        %v828 = vshrl.u32 %v650, 16
        %v830 = vrot.slane %v828, 7
        %v831 = vshll.u32 %v650, 16
        %v833 = vor.u32 %v830, %v831
        %v834 = vsel %vm665, %v826, %v833
        %v835 = vrot.slane %v830, 4
        %v837 = vshrl.u32 %v651, 16
        %v839 = vrot.slane %v837, 7
        %v840 = vshll.u32 %v651, 16
        %v842 = vor.u32 %v839, %v840
        %v843 = vrot.slane %v839, 4
        %v845 = vshrl.u32 %v652, 16
        %v847 = vrot.slane %v845, 7
        %v848 = vshll.u32 %v652, 16
        %v850 = vor.u32 %v847, %v848
        %v851 = vsel %vm665, %v843, %v850
        %v852 = vrot.slane %v847, 4
        %v854 = vshrl.u32 %v653, 16
        %v856 = vrot.slane %v854, 7
        %v857 = vshll.u32 %v653, 16
        %v859 = vor.u32 %v856, %v857
        %v860 = vrot.slane %v856, 4
        %v862 = vshrl.u32 %v654, 16
        %v864 = vrot.slane %v862, 7
        %v865 = vshll.u32 %v654, 16
        %v867 = vor.u32 %v864, %v865
        %v868 = vsel %vm665, %v860, %v867
        %v869 = vrot.slane %v864, 4
        %v871 = vshrl.u32 %v655, 16
        %v873 = vrot.slane %v871, 7
        %v874 = vshll.u32 %v655, 16
        %v876 = vor.u32 %v873, %v874
        %v877 = vrot.slane %v873, 4
        %v879 = vshrl.u32 %v656, 16
        %v881 = vrot.slane %v879, 7
        %v882 = vshll.u32 %v656, 16
        %v884 = vor.u32 %v881, %v882
        %v885 = vsel %vm665, %v877, %v884
        %v886 = vrot.slane %v881, 4
        %v888 = vshrl.u32 %v657, 16
        %v890 = vrot.slane %v888, 7
        %v891 = vshll.u32 %v657, 16
        %v893 = vor.u32 %v890, %v891
        %v894 = vrot.slane %v890, 4
        %v896 = vshrl.u32 %v658, 16
        %v898 = vrot.slane %v896, 7
        %v899 = vshll.u32 %v658, 16
        %v901 = vor.u32 %v898, %v899
        %v902 = vsel %vm665, %v894, %v901
        %v903 = vrot.slane %v898, 4
        %v905 = vshrl.u32 %v659, 16
        %v907 = vrot.slane %v905, 7
        %v908 = vshll.u32 %v659, 16
        %v910 = vor.u32 %v907, %v908
        %v911 = vrot.slane %v907, 4
        %v913 = vshrl.u32 %v660, 16
        %v915 = vrot.slane %v913, 7
        %v916 = vshll.u32 %v660, 16
        %v918 = vor.u32 %v915, %v916
        %v919 = vsel %vm665, %v911, %v918
        %v920 = vrot.slane %v915, 4
        %v922 = vshrl.u32 %v661, 16
        %v924 = vrot.slane %v922, 7
        %v925 = vshll.u32 %v661, 16
        %v927 = vor.u32 %v924, %v925
        %v928 = vrot.slane %v924, 4
        %v930 = vshrl.u32 %v662, 16
        %v932 = vrot.slane %v930, 7
        %v933 = vshll.u32 %v662, 16
        %v935 = vor.u32 %v932, %v933
        %v936 = vsel %vm665, %v928, %v935
        %v937 = vrot.slane %v932, 4
        %s986 = scalar_lea.vmem [#allocation2], 12
        %vm987 = vcmask 519168
        %vm988 = vsmask.f32 7938
        %vm989 = vmand %vm987, %vm988
        %v990 = vld [vmem:[%s986] sm:$0xf]
        %v991 = vsel %vm989, %v672, %v990
        %992 = vst [vmem:[%s986] sm:$0xf] %v991
        %993 = vst.msk [vmem:[%s986 + $0x4] sm:$0xf] %vm251, %v681
        %vm994 = vcmask 516096
        %vm995 = vmand %vm994, %vm663
        %v996 = vld [vmem:[%s986 + $0x8] sm:$0x1]
        %v997 = vsel %vm995, %v682, %v996
        %998 = vst [vmem:[%s986 + $0x8] sm:$0x1] %v997
        %v999 = vld [vmem:[%s986 + $0xc] sm:$0xf]
        %v1000 = vsel %vm989, %v689, %v999
        %1001 = vst [vmem:[%s986 + $0xc] sm:$0xf] %v1000
        %1002 = vst.msk [vmem:[%s986 + $0x10] sm:$0xf] %vm251, %v698
        %v1003 = vld [vmem:[%s986 + $0x14] sm:$0x1]
        %v1004 = vsel %vm995, %v699, %v1003
        %1005 = vst [vmem:[%s986 + $0x14] sm:$0x1] %v1004
        %v1006 = vld [vmem:[%s986 + $0x18] sm:$0xf]
        %v1007 = vsel %vm989, %v706, %v1006
        %1008 = vst [vmem:[%s986 + $0x18] sm:$0xf] %v1007
        %1009 = vst.msk [vmem:[%s986 + $0x1c] sm:$0xf] %vm251, %v715
        %v1010 = vld [vmem:[%s986 + $0x20] sm:$0x1]
        %v1011 = vsel %vm995, %v716, %v1010
        %1012 = vst [vmem:[%s986 + $0x20] sm:$0x1] %v1011
        %v1013 = vld [vmem:[%s986 + $0x24] sm:$0xf]
        %v1014 = vsel %vm989, %v723, %v1013
        %1015 = vst [vmem:[%s986 + $0x24] sm:$0xf] %v1014
        %1016 = vst.msk [vmem:[%s986 + $0x28] sm:$0xf] %vm251, %v732
        %v1017 = vld [vmem:[%s986 + $0x2c] sm:$0x1]
        %v1018 = vsel %vm995, %v733, %v1017
        %1019 = vst [vmem:[%s986 + $0x2c] sm:$0x1] %v1018
        %v1020 = vld [vmem:[%s986 + $0x30] sm:$0xf]
        %v1021 = vsel %vm989, %v740, %v1020
        %1022 = vst [vmem:[%s986 + $0x30] sm:$0xf] %v1021
        %1023 = vst.msk [vmem:[%s986 + $0x34] sm:$0xf] %vm251, %v749
        %v1024 = vld [vmem:[%s986 + $0x38] sm:$0x1]
        %v1025 = vsel %vm995, %v750, %v1024
        %1026 = vst [vmem:[%s986 + $0x38] sm:$0x1] %v1025
        %v1027 = vld [vmem:[%s986 + $0x3c] sm:$0xf]
        %v1028 = vsel %vm989, %v757, %v1027
        %1029 = vst [vmem:[%s986 + $0x3c] sm:$0xf] %v1028
        %1030 = vst.msk [vmem:[%s986 + $0x40] sm:$0xf] %vm251, %v766
        %v1031 = vld [vmem:[%s986 + $0x44] sm:$0x1]
        %v1032 = vsel %vm995, %v767, %v1031
        %1033 = vst [vmem:[%s986 + $0x44] sm:$0x1] %v1032
        %v1034 = vld [vmem:[%s986 + $0x48] sm:$0xf]
        %v1035 = vsel %vm989, %v774, %v1034
        %1036 = vst [vmem:[%s986 + $0x48] sm:$0xf] %v1035
        %1037 = vst.msk [vmem:[%s986 + $0x4c] sm:$0xf] %vm251, %v783
        %v1038 = vld [vmem:[%s986 + $0x50] sm:$0x1]
        %v1039 = vsel %vm995, %v784, %v1038
        %1040 = vst [vmem:[%s986 + $0x50] sm:$0x1] %v1039
        %v1041 = vld [vmem:[%s986 + $0x54] sm:$0xf]
        %v1042 = vsel %vm989, %v791, %v1041
        %1043 = vst [vmem:[%s986 + $0x54] sm:$0xf] %v1042
        %1044 = vst.msk [vmem:[%s986 + $0x58] sm:$0xf] %vm251, %v800
        %v1045 = vld [vmem:[%s986 + $0x5c] sm:$0x1]
        %v1046 = vsel %vm995, %v801, %v1045
        %1047 = vst [vmem:[%s986 + $0x5c] sm:$0x1] %v1046
        %v1048 = vld [vmem:[%s986 + $0x60] sm:$0xf]
        %v1049 = vsel %vm989, %v808, %v1048
        %1050 = vst [vmem:[%s986 + $0x60] sm:$0xf] %v1049
        %1051 = vst.msk [vmem:[%s986 + $0x64] sm:$0xf] %vm251, %v817
        %v1052 = vld [vmem:[%s986 + $0x68] sm:$0x1]
        %v1053 = vsel %vm995, %v818, %v1052
        %1054 = vst [vmem:[%s986 + $0x68] sm:$0x1] %v1053
        %v1055 = vld [vmem:[%s986 + $0x6c] sm:$0xf]
        %v1056 = vsel %vm989, %v825, %v1055
        %1057 = vst [vmem:[%s986 + $0x6c] sm:$0xf] %v1056
        %1058 = vst.msk [vmem:[%s986 + $0x70] sm:$0xf] %vm251, %v834
        %v1059 = vld [vmem:[%s986 + $0x74] sm:$0x1]
        %v1060 = vsel %vm995, %v835, %v1059
        %1061 = vst [vmem:[%s986 + $0x74] sm:$0x1] %v1060
        %v1062 = vld [vmem:[%s986 + $0x78] sm:$0xf]
        %v1063 = vsel %vm989, %v842, %v1062
        %1064 = vst [vmem:[%s986 + $0x78] sm:$0xf] %v1063
        %1065 = vst.msk [vmem:[%s986 + $0x7c] sm:$0xf] %vm251, %v851
        %v1066 = vld [vmem:[%s986 + $0x80] sm:$0x1]
        %v1067 = vsel %vm995, %v852, %v1066
        %1068 = vst [vmem:[%s986 + $0x80] sm:$0x1] %v1067
        %v1069 = vld [vmem:[%s986 + $0x84] sm:$0xf]
        %v1070 = vsel %vm989, %v859, %v1069
        %1071 = vst [vmem:[%s986 + $0x84] sm:$0xf] %v1070
        %1072 = vst.msk [vmem:[%s986 + $0x88] sm:$0xf] %vm251, %v868
        %v1073 = vld [vmem:[%s986 + $0x8c] sm:$0x1]
        %v1074 = vsel %vm995, %v869, %v1073
        %1075 = vst [vmem:[%s986 + $0x8c] sm:$0x1] %v1074
        %v1076 = vld [vmem:[%s986 + $0x90] sm:$0xf]
        %v1077 = vsel %vm989, %v876, %v1076
        %1078 = vst [vmem:[%s986 + $0x90] sm:$0xf] %v1077
        %1079 = vst.msk [vmem:[%s986 + $0x94] sm:$0xf] %vm251, %v885
        %v1080 = vld [vmem:[%s986 + $0x98] sm:$0x1]
        %v1081 = vsel %vm995, %v886, %v1080
        %1082 = vst [vmem:[%s986 + $0x98] sm:$0x1] %v1081
        %v1083 = vld [vmem:[%s986 + $0x9c] sm:$0xf]
        %v1084 = vsel %vm989, %v893, %v1083
        %1085 = vst [vmem:[%s986 + $0x9c] sm:$0xf] %v1084
        %1086 = vst.msk [vmem:[%s986 + $0xa0] sm:$0xf] %vm251, %v902
        %v1087 = vld [vmem:[%s986 + $0xa4] sm:$0x1]
        %v1088 = vsel %vm995, %v903, %v1087
        %1089 = vst [vmem:[%s986 + $0xa4] sm:$0x1] %v1088
        %v1090 = vld [vmem:[%s986 + $0xa8] sm:$0xf]
        %v1091 = vsel %vm989, %v910, %v1090
        %1092 = vst [vmem:[%s986 + $0xa8] sm:$0xf] %v1091
        %1093 = vst.msk [vmem:[%s986 + $0xac] sm:$0xf] %vm251, %v919
        %v1094 = vld [vmem:[%s986 + $0xb0] sm:$0x1]
        %v1095 = vsel %vm995, %v920, %v1094
        %1096 = vst [vmem:[%s986 + $0xb0] sm:$0x1] %v1095
        %v1097 = vld [vmem:[%s986 + $0xb4] sm:$0xf]
        %v1098 = vsel %vm989, %v927, %v1097
        %1099 = vst [vmem:[%s986 + $0xb4] sm:$0xf] %v1098
        %1100 = vst.msk [vmem:[%s986 + $0xb8] sm:$0xf] %vm251, %v936
        %v1101 = vld [vmem:[%s986 + $0xbc] sm:$0x1]
        %v1102 = vsel %vm995, %v937, %v1101
        %1103 = vst [vmem:[%s986 + $0xbc] sm:$0x1] %v1102
        %v1104 = vld [vmem:[#allocation2] sm:$0xf]
        %v1105 = vld [vmem:[#allocation2 + $0x4] sm:$0xf]
        %v1106 = vld [vmem:[#allocation2 + $0xc] sm:$0xf]
        %v1107 = vld [vmem:[#allocation2 + $0x10] sm:$0xf]
        %v1108 = vld [vmem:[#allocation2 + $0x18] sm:$0xf]
        %v1109 = vld [vmem:[#allocation2 + $0x1c] sm:$0xf]
        %v1110 = vld [vmem:[#allocation2 + $0x24] sm:$0xf]
        %v1111 = vld [vmem:[#allocation2 + $0x28] sm:$0xf]
        %v1112 = vld [vmem:[#allocation2 + $0x30] sm:$0xf]
        %v1113 = vld [vmem:[#allocation2 + $0x34] sm:$0xf]
        %v1114 = vld [vmem:[#allocation2 + $0x3c] sm:$0xf]
        %v1115 = vld [vmem:[#allocation2 + $0x40] sm:$0xf]
        %v1116 = vld [vmem:[#allocation2 + $0x48] sm:$0xf]
        %v1117 = vld [vmem:[#allocation2 + $0x4c] sm:$0xf]
        %v1118 = vld [vmem:[#allocation2 + $0x54] sm:$0xf]
        %v1119 = vld [vmem:[#allocation2 + $0x58] sm:$0xf]
        %v1120 = vld [vmem:[#allocation2 + $0x60] sm:$0xf]
        %v1121 = vld [vmem:[#allocation2 + $0x64] sm:$0xf]
        %v1122 = vld [vmem:[#allocation2 + $0x6c] sm:$0xf]
        %v1123 = vld [vmem:[#allocation2 + $0x70] sm:$0xf]
        %v1124 = vld [vmem:[#allocation2 + $0x78] sm:$0xf]
        %v1125 = vld [vmem:[#allocation2 + $0x7c] sm:$0xf]
        %v1126 = vld [vmem:[#allocation2 + $0x84] sm:$0xf]
        %v1127 = vld [vmem:[#allocation2 + $0x88] sm:$0xf]
        %v1128 = vld [vmem:[#allocation2 + $0x90] sm:$0xf]
        %v1129 = vld [vmem:[#allocation2 + $0x94] sm:$0xf]
        %v1130 = vld [vmem:[#allocation2 + $0x9c] sm:$0xf]
        %v1131 = vld [vmem:[#allocation2 + $0xa0] sm:$0xf]
        %v1132 = vld [vmem:[#allocation2 + $0xa8] sm:$0xf]
        %v1133 = vld [vmem:[#allocation2 + $0xac] sm:$0xf]
        %v1134 = vld [vmem:[#allocation2 + $0xb4] sm:$0xf]
        %v1135 = vld [vmem:[#allocation2 + $0xb8] sm:$0xf]
        %v1168 = vunpack.c.l.b16 %v1104
        %v1169 = vunpack.c.l.b16 %v1105
        %v1170 = vunpack.c.l.b16 %v1106
        %v1171 = vunpack.c.l.b16 %v1107
        %v1172 = vunpack.c.l.b16 %v1108
        %v1173 = vunpack.c.l.b16 %v1109
        %v1174 = vunpack.c.l.b16 %v1110
        %v1175 = vunpack.c.l.b16 %v1111
        %v1176 = vunpack.c.l.b16 %v1112
        %v1177 = vunpack.c.l.b16 %v1113
        %v1178 = vunpack.c.l.b16 %v1114
        %v1179 = vunpack.c.l.b16 %v1115
        %v1180 = vunpack.c.l.b16 %v1116
        %v1181 = vunpack.c.l.b16 %v1117
        %v1182 = vunpack.c.l.b16 %v1118
        %v1183 = vunpack.c.l.b16 %v1119
        %v1184 = vunpack.c.l.b16 %v1120
        %v1185 = vunpack.c.l.b16 %v1121
        %v1186 = vunpack.c.l.b16 %v1122
        %v1187 = vunpack.c.l.b16 %v1123
        %v1188 = vunpack.c.l.b16 %v1124
        %v1189 = vunpack.c.l.b16 %v1125
        %v1190 = vunpack.c.l.b16 %v1126
        %v1191 = vunpack.c.l.b16 %v1127
        %v1192 = vunpack.c.l.b16 %v1128
        %v1193 = vunpack.c.l.b16 %v1129
        %v1194 = vunpack.c.l.b16 %v1130
        %v1195 = vunpack.c.l.b16 %v1131
        %v1196 = vunpack.c.l.b16 %v1132
        %v1197 = vunpack.c.l.b16 %v1133
        %v1198 = vunpack.c.l.b16 %v1134
        %v1199 = vunpack.c.l.b16 %v1135
        %v1200 = vpack.c.b16 %v1169, %v1168
        %v1201 = vpack.c.b16 %v1171, %v1170
        %v1202 = vpack.c.b16 %v1173, %v1172
        %v1203 = vpack.c.b16 %v1175, %v1174
        %v1204 = vpack.c.b16 %v1177, %v1176
        %v1205 = vpack.c.b16 %v1179, %v1178
        %v1206 = vpack.c.b16 %v1181, %v1180
        %v1207 = vpack.c.b16 %v1183, %v1182
        %v1208 = vpack.c.b16 %v1185, %v1184
        %v1209 = vpack.c.b16 %v1187, %v1186
        %v1210 = vpack.c.b16 %v1189, %v1188
        %v1211 = vpack.c.b16 %v1191, %v1190
        %v1212 = vpack.c.b16 %v1193, %v1192
        %v1213 = vpack.c.b16 %v1195, %v1194
        %v1214 = vpack.c.b16 %v1197, %v1196
        %v1215 = vpack.c.b16 %v1199, %v1198
        %vm1232 = vcmask 523264
        %1233 = vst.msk [vmem:[#allocation3] sm:$0xff] %vm1232, %v1200
        %1234 = vst.msk [vmem:[#allocation3 + $0x28] sm:$0xff] %vm1232, %v1201
        %1235 = vst.msk [vmem:[#allocation3 + $0x50] sm:$0xff] %vm1232, %v1202
        %1236 = vst.msk [vmem:[#allocation3 + $0x78] sm:$0xff] %vm1232, %v1203
        %1237 = vst.msk [vmem:[#allocation3 + $0xa0] sm:$0xff] %vm1232, %v1204
        %1238 = vst.msk [vmem:[#allocation3 + $0xc8] sm:$0xff] %vm1232, %v1205
        %1239 = vst.msk [vmem:[#allocation3 + $0xf0] sm:$0xff] %vm1232, %v1206
        %1240 = vst.msk [vmem:[#allocation3 + $0x118] sm:$0xff] %vm1232, %v1207
        %1241 = vst.msk [vmem:[#allocation3 + $0x140] sm:$0xff] %vm1232, %v1208
        %1242 = vst.msk [vmem:[#allocation3 + $0x168] sm:$0xff] %vm1232, %v1209
        %1243 = vst.msk [vmem:[#allocation3 + $0x190] sm:$0xff] %vm1232, %v1210
        %1244 = vst.msk [vmem:[#allocation3 + $0x1b8] sm:$0xff] %vm1232, %v1211
        %1245 = vst.msk [vmem:[#allocation3 + $0x1e0] sm:$0xff] %vm1232, %v1212
        %1246 = vst.msk [vmem:[#allocation3 + $0x208] sm:$0xff] %vm1232, %v1213
        %1247 = vst.msk [vmem:[#allocation3 + $0x230] sm:$0xff] %vm1232, %v1214
        %1248 = vst.msk [vmem:[#allocation3 + $0x258] sm:$0xff] %vm1232, %v1215
        %v1249 = vld [vmem:[#allocation2] sm:$0xf]
        %v1250 = vld [vmem:[#allocation2 + $0x4] sm:$0xf]
        %v1251 = vld [vmem:[#allocation2 + $0x8] sm:$0x1]
        %v1252 = vld [vmem:[#allocation2 + $0xc] sm:$0xf]
        %v1253 = vld [vmem:[#allocation2 + $0x10] sm:$0xf]
        %v1254 = vld [vmem:[#allocation2 + $0x14] sm:$0x1]
        %v1255 = vld [vmem:[#allocation2 + $0x18] sm:$0xf]
        %v1256 = vld [vmem:[#allocation2 + $0x1c] sm:$0xf]
        %v1257 = vld [vmem:[#allocation2 + $0x20] sm:$0x1]
        %v1258 = vld [vmem:[#allocation2 + $0x24] sm:$0xf]
        %v1259 = vld [vmem:[#allocation2 + $0x28] sm:$0xf]
        %v1260 = vld [vmem:[#allocation2 + $0x2c] sm:$0x1]
        %v1261 = vld [vmem:[#allocation2 + $0x30] sm:$0xf]
        %v1262 = vld [vmem:[#allocation2 + $0x34] sm:$0xf]
        %v1263 = vld [vmem:[#allocation2 + $0x38] sm:$0x1]
        %v1264 = vld [vmem:[#allocation2 + $0x3c] sm:$0xf]
        %v1265 = vld [vmem:[#allocation2 + $0x40] sm:$0xf]
        %v1266 = vld [vmem:[#allocation2 + $0x44] sm:$0x1]
        %v1267 = vld [vmem:[#allocation2 + $0x48] sm:$0xf]
        %v1268 = vld [vmem:[#allocation2 + $0x4c] sm:$0xf]
        %v1269 = vld [vmem:[#allocation2 + $0x50] sm:$0x1]
        %v1270 = vld [vmem:[#allocation2 + $0x54] sm:$0xf]
        %v1271 = vld [vmem:[#allocation2 + $0x58] sm:$0xf]
        %v1272 = vld [vmem:[#allocation2 + $0x5c] sm:$0x1]
        %v1273 = vld [vmem:[#allocation2 + $0x60] sm:$0xf]
        %v1274 = vld [vmem:[#allocation2 + $0x64] sm:$0xf]
        %v1275 = vld [vmem:[#allocation2 + $0x68] sm:$0x1]
        %v1276 = vld [vmem:[#allocation2 + $0x6c] sm:$0xf]
        %v1277 = vld [vmem:[#allocation2 + $0x70] sm:$0xf]
        %v1278 = vld [vmem:[#allocation2 + $0x74] sm:$0x1]
        %v1279 = vld [vmem:[#allocation2 + $0x78] sm:$0xf]
        %v1280 = vld [vmem:[#allocation2 + $0x7c] sm:$0xf]
        %v1281 = vld [vmem:[#allocation2 + $0x80] sm:$0x1]
        %v1282 = vld [vmem:[#allocation2 + $0x84] sm:$0xf]
        %v1283 = vld [vmem:[#allocation2 + $0x88] sm:$0xf]
        %v1284 = vld [vmem:[#allocation2 + $0x8c] sm:$0x1]
        %v1285 = vld [vmem:[#allocation2 + $0x90] sm:$0xf]
        %v1286 = vld [vmem:[#allocation2 + $0x94] sm:$0xf]
        %v1287 = vld [vmem:[#allocation2 + $0x98] sm:$0x1]
        %v1288 = vld [vmem:[#allocation2 + $0x9c] sm:$0xf]
        %v1289 = vld [vmem:[#allocation2 + $0xa0] sm:$0xf]
        %v1290 = vld [vmem:[#allocation2 + $0xa4] sm:$0x1]
        %v1291 = vld [vmem:[#allocation2 + $0xa8] sm:$0xf]
        %v1292 = vld [vmem:[#allocation2 + $0xac] sm:$0xf]
        %v1293 = vld [vmem:[#allocation2 + $0xb0] sm:$0x1]
        %v1294 = vld [vmem:[#allocation2 + $0xb4] sm:$0xf]
        %v1295 = vld [vmem:[#allocation2 + $0xb8] sm:$0xf]
        %v1296 = vld [vmem:[#allocation2 + $0xbc] sm:$0x1]
        %vm1297 = vsmask.f32 3328
        %vm1298 = vsmask.f32 7440
        %vm1299 = vmor %vm1297, %vm1298
        %v1301 = vshrl.u32 %v1249, 16
        %v1303 = vrot.slane %v1301, 4
        %v1304 = vshll.u32 %v1249, 16
        %v1306 = vrot.slane %v1304, 5
        %v1307 = vor.u32 %v1303, %v1306
        %v1308 = vrot.slane %v1307, 4
        %v1310 = vshll.u32 %v1250, 16
        %v1312 = vrot.slane %v1310, 5
        %v1313 = vsel %vm1299, %v1308, %v1312
        %v1314 = vshrl.u32 %v1250, 16
        %v1316 = vrot.slane %v1314, 4
        %v1317 = vor.u32 %v1316, %v1312
        %v1318 = vrot.slane %v1317, 4
        %v1320 = vshll.u32 %v1251, 16
        %v1322 = vrot.slane %v1320, 5
        %v1323 = vsel %vm1299, %v1318, %v1322
        %v1325 = vshrl.u32 %v1252, 16
        %v1327 = vrot.slane %v1325, 4
        %v1328 = vshll.u32 %v1252, 16
        %v1330 = vrot.slane %v1328, 5
        %v1331 = vor.u32 %v1327, %v1330
        %v1332 = vrot.slane %v1331, 4
        %v1334 = vshll.u32 %v1253, 16
        %v1336 = vrot.slane %v1334, 5
        %v1337 = vsel %vm1299, %v1332, %v1336
        %v1338 = vshrl.u32 %v1253, 16
        %v1340 = vrot.slane %v1338, 4
        %v1341 = vor.u32 %v1340, %v1336
        %v1342 = vrot.slane %v1341, 4
        %v1344 = vshll.u32 %v1254, 16
        %v1346 = vrot.slane %v1344, 5
        %v1347 = vsel %vm1299, %v1342, %v1346
        %v1349 = vshrl.u32 %v1255, 16
        %v1351 = vrot.slane %v1349, 4
        %v1352 = vshll.u32 %v1255, 16
        %v1354 = vrot.slane %v1352, 5
        %v1355 = vor.u32 %v1351, %v1354
        %v1356 = vrot.slane %v1355, 4
        %v1358 = vshll.u32 %v1256, 16
        %v1360 = vrot.slane %v1358, 5
        %v1361 = vsel %vm1299, %v1356, %v1360
        %v1362 = vshrl.u32 %v1256, 16
        %v1364 = vrot.slane %v1362, 4
        %v1365 = vor.u32 %v1364, %v1360
        %v1366 = vrot.slane %v1365, 4
        %v1368 = vshll.u32 %v1257, 16
        %v1370 = vrot.slane %v1368, 5
        %v1371 = vsel %vm1299, %v1366, %v1370
        %v1373 = vshrl.u32 %v1258, 16
        %v1375 = vrot.slane %v1373, 4
        %v1376 = vshll.u32 %v1258, 16
        %v1378 = vrot.slane %v1376, 5
        %v1379 = vor.u32 %v1375, %v1378
        %v1380 = vrot.slane %v1379, 4
        %v1382 = vshll.u32 %v1259, 16
        %v1384 = vrot.slane %v1382, 5
        %v1385 = vsel %vm1299, %v1380, %v1384
        %v1386 = vshrl.u32 %v1259, 16
        %v1388 = vrot.slane %v1386, 4
        %v1389 = vor.u32 %v1388, %v1384
        %v1390 = vrot.slane %v1389, 4
        %v1392 = vshll.u32 %v1260, 16
        %v1394 = vrot.slane %v1392, 5
        %v1395 = vsel %vm1299, %v1390, %v1394
        %v1397 = vshrl.u32 %v1261, 16
        %v1399 = vrot.slane %v1397, 4
        %v1400 = vshll.u32 %v1261, 16
        %v1402 = vrot.slane %v1400, 5
        %v1403 = vor.u32 %v1399, %v1402
        %v1404 = vrot.slane %v1403, 4
        %v1406 = vshll.u32 %v1262, 16
        %v1408 = vrot.slane %v1406, 5
        %v1409 = vsel %vm1299, %v1404, %v1408
        %v1410 = vshrl.u32 %v1262, 16
        %v1412 = vrot.slane %v1410, 4
        %v1413 = vor.u32 %v1412, %v1408
        %v1414 = vrot.slane %v1413, 4
        %v1416 = vshll.u32 %v1263, 16
        %v1418 = vrot.slane %v1416, 5
        %v1419 = vsel %vm1299, %v1414, %v1418
        %v1421 = vshrl.u32 %v1264, 16
        %v1423 = vrot.slane %v1421, 4
        %v1424 = vshll.u32 %v1264, 16
        %v1426 = vrot.slane %v1424, 5
        %v1427 = vor.u32 %v1423, %v1426
        %v1428 = vrot.slane %v1427, 4
        %v1430 = vshll.u32 %v1265, 16
        %v1432 = vrot.slane %v1430, 5
        %v1433 = vsel %vm1299, %v1428, %v1432
        %v1434 = vshrl.u32 %v1265, 16
        %v1436 = vrot.slane %v1434, 4
        %v1437 = vor.u32 %v1436, %v1432
        %v1438 = vrot.slane %v1437, 4
        %v1440 = vshll.u32 %v1266, 16
        %v1442 = vrot.slane %v1440, 5
        %v1443 = vsel %vm1299, %v1438, %v1442
        %v1445 = vshrl.u32 %v1267, 16
        %v1447 = vrot.slane %v1445, 4
        %v1448 = vshll.u32 %v1267, 16
        %v1450 = vrot.slane %v1448, 5
        %v1451 = vor.u32 %v1447, %v1450
        %v1452 = vrot.slane %v1451, 4
        %v1454 = vshll.u32 %v1268, 16
        %v1456 = vrot.slane %v1454, 5
        %v1457 = vsel %vm1299, %v1452, %v1456
        %v1458 = vshrl.u32 %v1268, 16
        %v1460 = vrot.slane %v1458, 4
        %v1461 = vor.u32 %v1460, %v1456
        %v1462 = vrot.slane %v1461, 4
        %v1464 = vshll.u32 %v1269, 16
        %v1466 = vrot.slane %v1464, 5
        %v1467 = vsel %vm1299, %v1462, %v1466
        %v1469 = vshrl.u32 %v1270, 16
        %v1471 = vrot.slane %v1469, 4
        %v1472 = vshll.u32 %v1270, 16
        %v1474 = vrot.slane %v1472, 5
        %v1475 = vor.u32 %v1471, %v1474
        %v1476 = vrot.slane %v1475, 4
        %v1478 = vshll.u32 %v1271, 16
        %v1480 = vrot.slane %v1478, 5
        %v1481 = vsel %vm1299, %v1476, %v1480
        %v1482 = vshrl.u32 %v1271, 16
        %v1484 = vrot.slane %v1482, 4
        %v1485 = vor.u32 %v1484, %v1480
        %v1486 = vrot.slane %v1485, 4
        %v1488 = vshll.u32 %v1272, 16
        %v1490 = vrot.slane %v1488, 5
        %v1491 = vsel %vm1299, %v1486, %v1490
        %v1493 = vshrl.u32 %v1273, 16
        %v1495 = vrot.slane %v1493, 4
        %v1496 = vshll.u32 %v1273, 16
        %v1498 = vrot.slane %v1496, 5
        %v1499 = vor.u32 %v1495, %v1498
        %v1500 = vrot.slane %v1499, 4
        %v1502 = vshll.u32 %v1274, 16
        %v1504 = vrot.slane %v1502, 5
        %v1505 = vsel %vm1299, %v1500, %v1504
        %v1506 = vshrl.u32 %v1274, 16
        %v1508 = vrot.slane %v1506, 4
        %v1509 = vor.u32 %v1508, %v1504
        %v1510 = vrot.slane %v1509, 4
        %v1512 = vshll.u32 %v1275, 16
        %v1514 = vrot.slane %v1512, 5
        %v1515 = vsel %vm1299, %v1510, %v1514
        %v1517 = vshrl.u32 %v1276, 16
        %v1519 = vrot.slane %v1517, 4
        %v1520 = vshll.u32 %v1276, 16
        %v1522 = vrot.slane %v1520, 5
        %v1523 = vor.u32 %v1519, %v1522
        %v1524 = vrot.slane %v1523, 4
        %v1526 = vshll.u32 %v1277, 16
        %v1528 = vrot.slane %v1526, 5
        %v1529 = vsel %vm1299, %v1524, %v1528
        %v1530 = vshrl.u32 %v1277, 16
        %v1532 = vrot.slane %v1530, 4
        %v1533 = vor.u32 %v1532, %v1528
        %v1534 = vrot.slane %v1533, 4
        %v1536 = vshll.u32 %v1278, 16
        %v1538 = vrot.slane %v1536, 5
        %v1539 = vsel %vm1299, %v1534, %v1538
        %v1541 = vshrl.u32 %v1279, 16
        %v1543 = vrot.slane %v1541, 4
        %v1544 = vshll.u32 %v1279, 16
        %v1546 = vrot.slane %v1544, 5
        %v1547 = vor.u32 %v1543, %v1546
        %v1548 = vrot.slane %v1547, 4
        %v1550 = vshll.u32 %v1280, 16
        %v1552 = vrot.slane %v1550, 5
        %v1553 = vsel %vm1299, %v1548, %v1552
        %v1554 = vshrl.u32 %v1280, 16
        %v1556 = vrot.slane %v1554, 4
        %v1557 = vor.u32 %v1556, %v1552
        %v1558 = vrot.slane %v1557, 4
        %v1560 = vshll.u32 %v1281, 16
        %v1562 = vrot.slane %v1560, 5
        %v1563 = vsel %vm1299, %v1558, %v1562
        %v1565 = vshrl.u32 %v1282, 16
        %v1567 = vrot.slane %v1565, 4
        %v1568 = vshll.u32 %v1282, 16
        %v1570 = vrot.slane %v1568, 5
        %v1571 = vor.u32 %v1567, %v1570
        %v1572 = vrot.slane %v1571, 4
        %v1574 = vshll.u32 %v1283, 16
        %v1576 = vrot.slane %v1574, 5
        %v1577 = vsel %vm1299, %v1572, %v1576
        %v1578 = vshrl.u32 %v1283, 16
        %v1580 = vrot.slane %v1578, 4
        %v1581 = vor.u32 %v1580, %v1576
        %v1582 = vrot.slane %v1581, 4
        %v1584 = vshll.u32 %v1284, 16
        %v1586 = vrot.slane %v1584, 5
        %v1587 = vsel %vm1299, %v1582, %v1586
        %v1589 = vshrl.u32 %v1285, 16
        %v1591 = vrot.slane %v1589, 4
        %v1592 = vshll.u32 %v1285, 16
        %v1594 = vrot.slane %v1592, 5
        %v1595 = vor.u32 %v1591, %v1594
        %v1596 = vrot.slane %v1595, 4
        %v1598 = vshll.u32 %v1286, 16
        %v1600 = vrot.slane %v1598, 5
        %v1601 = vsel %vm1299, %v1596, %v1600
        %v1602 = vshrl.u32 %v1286, 16
        %v1604 = vrot.slane %v1602, 4
        %v1605 = vor.u32 %v1604, %v1600
        %v1606 = vrot.slane %v1605, 4
        %v1608 = vshll.u32 %v1287, 16
        %v1610 = vrot.slane %v1608, 5
        %v1611 = vsel %vm1299, %v1606, %v1610
        %v1613 = vshrl.u32 %v1288, 16
        %v1615 = vrot.slane %v1613, 4
        %v1616 = vshll.u32 %v1288, 16
        %v1618 = vrot.slane %v1616, 5
        %v1619 = vor.u32 %v1615, %v1618
        %v1620 = vrot.slane %v1619, 4
        %v1622 = vshll.u32 %v1289, 16
        %v1624 = vrot.slane %v1622, 5
        %v1625 = vsel %vm1299, %v1620, %v1624
        %v1626 = vshrl.u32 %v1289, 16
        %v1628 = vrot.slane %v1626, 4
        %v1629 = vor.u32 %v1628, %v1624
        %v1630 = vrot.slane %v1629, 4
        %v1632 = vshll.u32 %v1290, 16
        %v1634 = vrot.slane %v1632, 5
        %v1635 = vsel %vm1299, %v1630, %v1634
        %v1637 = vshrl.u32 %v1291, 16
        %v1639 = vrot.slane %v1637, 4
        %v1640 = vshll.u32 %v1291, 16
        %v1642 = vrot.slane %v1640, 5
        %v1643 = vor.u32 %v1639, %v1642
        %v1644 = vrot.slane %v1643, 4
        %v1646 = vshll.u32 %v1292, 16
        %v1648 = vrot.slane %v1646, 5
        %v1649 = vsel %vm1299, %v1644, %v1648
        %v1650 = vshrl.u32 %v1292, 16
        %v1652 = vrot.slane %v1650, 4
        %v1653 = vor.u32 %v1652, %v1648
        %v1654 = vrot.slane %v1653, 4
        %v1656 = vshll.u32 %v1293, 16
        %v1658 = vrot.slane %v1656, 5
        %v1659 = vsel %vm1299, %v1654, %v1658
        %v1661 = vshrl.u32 %v1294, 16
        %v1663 = vrot.slane %v1661, 4
        %v1664 = vshll.u32 %v1294, 16
        %v1666 = vrot.slane %v1664, 5
        %v1667 = vor.u32 %v1663, %v1666
        %v1668 = vrot.slane %v1667, 4
        %v1670 = vshll.u32 %v1295, 16
        %v1672 = vrot.slane %v1670, 5
        %v1673 = vsel %vm1299, %v1668, %v1672
        %v1674 = vshrl.u32 %v1295, 16
        %v1676 = vrot.slane %v1674, 4
        %v1677 = vor.u32 %v1676, %v1672
        %v1678 = vrot.slane %v1677, 4
        %v1680 = vshll.u32 %v1296, 16
        %v1682 = vrot.slane %v1680, 5
        %v1683 = vsel %vm1299, %v1678, %v1682
        %v1684 = vunpack.c.l.b16 %v1313
        %v1685 = vunpack.c.l.b16 %v1323
        %v1686 = vunpack.c.l.b16 %v1337
        %v1687 = vunpack.c.l.b16 %v1347
        %v1688 = vunpack.c.l.b16 %v1361
        %v1689 = vunpack.c.l.b16 %v1371
        %v1690 = vunpack.c.l.b16 %v1385
        %v1691 = vunpack.c.l.b16 %v1395
        %v1692 = vunpack.c.l.b16 %v1409
        %v1693 = vunpack.c.l.b16 %v1419
        %v1694 = vunpack.c.l.b16 %v1433
        %v1695 = vunpack.c.l.b16 %v1443
        %v1696 = vunpack.c.l.b16 %v1457
        %v1697 = vunpack.c.l.b16 %v1467
        %v1698 = vunpack.c.l.b16 %v1481
        %v1699 = vunpack.c.l.b16 %v1491
        %v1700 = vunpack.c.l.b16 %v1505
        %v1701 = vunpack.c.l.b16 %v1515
        %v1702 = vunpack.c.l.b16 %v1529
        %v1703 = vunpack.c.l.b16 %v1539
        %v1704 = vunpack.c.l.b16 %v1553
        %v1705 = vunpack.c.l.b16 %v1563
        %v1706 = vunpack.c.l.b16 %v1577
        %v1707 = vunpack.c.l.b16 %v1587
        %v1708 = vunpack.c.l.b16 %v1601
        %v1709 = vunpack.c.l.b16 %v1611
        %v1710 = vunpack.c.l.b16 %v1625
        %v1711 = vunpack.c.l.b16 %v1635
        %v1712 = vunpack.c.l.b16 %v1649
        %v1713 = vunpack.c.l.b16 %v1659
        %v1714 = vunpack.c.l.b16 %v1673
        %v1715 = vunpack.c.l.b16 %v1683
        %v1716 = vpack.c.b16 %v1685, %v1684
        %v1717 = vpack.c.b16 %v1687, %v1686
        %v1718 = vpack.c.b16 %v1689, %v1688
        %v1719 = vpack.c.b16 %v1691, %v1690
        %v1720 = vpack.c.b16 %v1693, %v1692
        %v1721 = vpack.c.b16 %v1695, %v1694
        %v1722 = vpack.c.b16 %v1697, %v1696
        %v1723 = vpack.c.b16 %v1699, %v1698
        %v1724 = vpack.c.b16 %v1701, %v1700
        %v1725 = vpack.c.b16 %v1703, %v1702
        %v1726 = vpack.c.b16 %v1705, %v1704
        %v1727 = vpack.c.b16 %v1707, %v1706
        %v1728 = vpack.c.b16 %v1709, %v1708
        %v1729 = vpack.c.b16 %v1711, %v1710
        %v1730 = vpack.c.b16 %v1713, %v1712
        %v1731 = vpack.c.b16 %v1715, %v1714
        %1732 = vrot.lane.b32.xlu0 %v1716, 64
        %v1733 = vpop.permute.xlu0 %1732
        %1734 = vrot.lane.b32.xlu0 %v1717, 64
        %v1735 = vpop.permute.xlu0 %1734
        %1736 = vrot.lane.b32.xlu0 %v1718, 64
        %v1737 = vpop.permute.xlu0 %1736
        %1738 = vrot.lane.b32.xlu0 %v1719, 64
        %v1739 = vpop.permute.xlu0 %1738
        %1740 = vrot.lane.b32.xlu0 %v1720, 64
        %v1741 = vpop.permute.xlu0 %1740
        %1742 = vrot.lane.b32.xlu0 %v1721, 64
        %v1743 = vpop.permute.xlu0 %1742
        %1744 = vrot.lane.b32.xlu0 %v1722, 64
        %v1745 = vpop.permute.xlu0 %1744
        %1746 = vrot.lane.b32.xlu0 %v1723, 64
        %v1747 = vpop.permute.xlu0 %1746
        %1748 = vrot.lane.b32.xlu0 %v1724, 64
        %v1749 = vpop.permute.xlu0 %1748
        %1750 = vrot.lane.b32.xlu0 %v1725, 64
        %v1751 = vpop.permute.xlu0 %1750
        %1752 = vrot.lane.b32.xlu0 %v1726, 64
        %v1753 = vpop.permute.xlu0 %1752
        %1754 = vrot.lane.b32.xlu0 %v1727, 64
        %v1755 = vpop.permute.xlu0 %1754
        %1756 = vrot.lane.b32.xlu0 %v1728, 64
        %v1757 = vpop.permute.xlu0 %1756
        %1758 = vrot.lane.b32.xlu0 %v1729, 64
        %v1759 = vpop.permute.xlu0 %1758
        %1760 = vrot.lane.b32.xlu0 %v1730, 64
        %v1761 = vpop.permute.xlu0 %1760
        %1762 = vrot.lane.b32.xlu0 %v1731, 64
        %v1763 = vpop.permute.xlu0 %1762
        %vm1780 = vcmask 1048064
        %1781 = vst.msk [vmem:[#allocation3] sm:$0xff] %vm1780, %v1733
        %1782 = vst.msk [vmem:[#allocation3 + $0x28] sm:$0xff] %vm1780, %v1735
        %1783 = vst.msk [vmem:[#allocation3 + $0x50] sm:$0xff] %vm1780, %v1737
        %1784 = vst.msk [vmem:[#allocation3 + $0x78] sm:$0xff] %vm1780, %v1739
        %1785 = vst.msk [vmem:[#allocation3 + $0xa0] sm:$0xff] %vm1780, %v1741
        %1786 = vst.msk [vmem:[#allocation3 + $0xc8] sm:$0xff] %vm1780, %v1743
        %1787 = vst.msk [vmem:[#allocation3 + $0xf0] sm:$0xff] %vm1780, %v1745
        %1788 = vst.msk [vmem:[#allocation3 + $0x118] sm:$0xff] %vm1780, %v1747
        %1789 = vst.msk [vmem:[#allocation3 + $0x140] sm:$0xff] %vm1780, %v1749
        %1790 = vst.msk [vmem:[#allocation3 + $0x168] sm:$0xff] %vm1780, %v1751
        %1791 = vst.msk [vmem:[#allocation3 + $0x190] sm:$0xff] %vm1780, %v1753
        %1792 = vst.msk [vmem:[#allocation3 + $0x1b8] sm:$0xff] %vm1780, %v1755
        %1793 = vst.msk [vmem:[#allocation3 + $0x1e0] sm:$0xff] %vm1780, %v1757
        %1794 = vst.msk [vmem:[#allocation3 + $0x208] sm:$0xff] %vm1780, %v1759
        %1795 = vst.msk [vmem:[#allocation3 + $0x230] sm:$0xff] %vm1780, %v1761
        %1796 = vst.msk [vmem:[#allocation3 + $0x258] sm:$0xff] %vm1780, %v1763
        %v1797 = vld [vmem:[#allocation2] sm:$0xe]
        %v1798 = vld [vmem:[#allocation2 + $0x4] sm:$0xf]
        %v1799 = vld [vmem:[#allocation2 + $0x8] sm:$0x1]
        %v1800 = vld [vmem:[#allocation2 + $0xc] sm:$0xe]
        %v1801 = vld [vmem:[#allocation2 + $0x10] sm:$0xf]
        %v1802 = vld [vmem:[#allocation2 + $0x14] sm:$0x1]
        %v1803 = vld [vmem:[#allocation2 + $0x18] sm:$0xe]
        %v1804 = vld [vmem:[#allocation2 + $0x1c] sm:$0xf]
        %v1805 = vld [vmem:[#allocation2 + $0x20] sm:$0x1]
        %v1806 = vld [vmem:[#allocation2 + $0x24] sm:$0xe]
        %v1807 = vld [vmem:[#allocation2 + $0x28] sm:$0xf]
        %v1808 = vld [vmem:[#allocation2 + $0x2c] sm:$0x1]
        %v1809 = vld [vmem:[#allocation2 + $0x30] sm:$0xe]
        %v1810 = vld [vmem:[#allocation2 + $0x34] sm:$0xf]
        %v1811 = vld [vmem:[#allocation2 + $0x38] sm:$0x1]
        %v1812 = vld [vmem:[#allocation2 + $0x3c] sm:$0xe]
        %v1813 = vld [vmem:[#allocation2 + $0x40] sm:$0xf]
        %v1814 = vld [vmem:[#allocation2 + $0x44] sm:$0x1]
        %v1815 = vld [vmem:[#allocation2 + $0x48] sm:$0xe]
        %v1816 = vld [vmem:[#allocation2 + $0x4c] sm:$0xf]
        %v1817 = vld [vmem:[#allocation2 + $0x50] sm:$0x1]
        %v1818 = vld [vmem:[#allocation2 + $0x54] sm:$0xe]
        %v1819 = vld [vmem:[#allocation2 + $0x58] sm:$0xf]
        %v1820 = vld [vmem:[#allocation2 + $0x5c] sm:$0x1]
        %v1821 = vld [vmem:[#allocation2 + $0x60] sm:$0xe]
        %v1822 = vld [vmem:[#allocation2 + $0x64] sm:$0xf]
        %v1823 = vld [vmem:[#allocation2 + $0x68] sm:$0x1]
        %v1824 = vld [vmem:[#allocation2 + $0x6c] sm:$0xe]
        %v1825 = vld [vmem:[#allocation2 + $0x70] sm:$0xf]
        %v1826 = vld [vmem:[#allocation2 + $0x74] sm:$0x1]
        %v1827 = vld [vmem:[#allocation2 + $0x78] sm:$0xe]
        %v1828 = vld [vmem:[#allocation2 + $0x7c] sm:$0xf]
        %v1829 = vld [vmem:[#allocation2 + $0x80] sm:$0x1]
        %v1830 = vld [vmem:[#allocation2 + $0x84] sm:$0xe]
        %v1831 = vld [vmem:[#allocation2 + $0x88] sm:$0xf]
        %v1832 = vld [vmem:[#allocation2 + $0x8c] sm:$0x1]
        %v1833 = vld [vmem:[#allocation2 + $0x90] sm:$0xe]
        %v1834 = vld [vmem:[#allocation2 + $0x94] sm:$0xf]
        %v1835 = vld [vmem:[#allocation2 + $0x98] sm:$0x1]
        %v1836 = vld [vmem:[#allocation2 + $0x9c] sm:$0xe]
        %v1837 = vld [vmem:[#allocation2 + $0xa0] sm:$0xf]
        %v1838 = vld [vmem:[#allocation2 + $0xa4] sm:$0x1]
        %v1839 = vld [vmem:[#allocation2 + $0xa8] sm:$0xe]
        %v1840 = vld [vmem:[#allocation2 + $0xac] sm:$0xf]
        %v1841 = vld [vmem:[#allocation2 + $0xb0] sm:$0x1]
        %v1842 = vld [vmem:[#allocation2 + $0xb4] sm:$0xe]
        %v1843 = vld [vmem:[#allocation2 + $0xb8] sm:$0xf]
        %v1844 = vld [vmem:[#allocation2 + $0xbc] sm:$0x1]
        %vm1893 = vcmask 1042432
        %vm1894 = vcmask 1046532
        %vm1895 = vmor %vm1893, %vm1894
        %v1896 = vrot.slane %v1797, 5
        %v1897 = vrot.slane %v1896, 4
        %v1898 = vrot.slane %v1798, 5
        %v1899 = vsel %vm1895, %v1897, %v1898
        %v1900 = vrot.slane %v1898, 4
        %v1901 = vrot.slane %v1799, 5
        %v1902 = vsel %vm1895, %v1900, %v1901
        %v1903 = vrot.slane %v1800, 5
        %v1904 = vrot.slane %v1903, 4
        %v1905 = vrot.slane %v1801, 5
        %v1906 = vsel %vm1895, %v1904, %v1905
        %v1907 = vrot.slane %v1905, 4
        %v1908 = vrot.slane %v1802, 5
        %v1909 = vsel %vm1895, %v1907, %v1908
        %v1910 = vrot.slane %v1803, 5
        %v1911 = vrot.slane %v1910, 4
        %v1912 = vrot.slane %v1804, 5
        %v1913 = vsel %vm1895, %v1911, %v1912
        %v1914 = vrot.slane %v1912, 4
        %v1915 = vrot.slane %v1805, 5
        %v1916 = vsel %vm1895, %v1914, %v1915
        %v1917 = vrot.slane %v1806, 5
        %v1918 = vrot.slane %v1917, 4
        %v1919 = vrot.slane %v1807, 5
        %v1920 = vsel %vm1895, %v1918, %v1919
        %v1921 = vrot.slane %v1919, 4
        %v1922 = vrot.slane %v1808, 5
        %v1923 = vsel %vm1895, %v1921, %v1922
        %v1924 = vrot.slane %v1809, 5
        %v1925 = vrot.slane %v1924, 4
        %v1926 = vrot.slane %v1810, 5
        %v1927 = vsel %vm1895, %v1925, %v1926
        %v1928 = vrot.slane %v1926, 4
        %v1929 = vrot.slane %v1811, 5
        %v1930 = vsel %vm1895, %v1928, %v1929
        %v1931 = vrot.slane %v1812, 5
        %v1932 = vrot.slane %v1931, 4
        %v1933 = vrot.slane %v1813, 5
        %v1934 = vsel %vm1895, %v1932, %v1933
        %v1935 = vrot.slane %v1933, 4
        %v1936 = vrot.slane %v1814, 5
        %v1937 = vsel %vm1895, %v1935, %v1936
        %v1938 = vrot.slane %v1815, 5
        %v1939 = vrot.slane %v1938, 4
        %v1940 = vrot.slane %v1816, 5
        %v1941 = vsel %vm1895, %v1939, %v1940
        %v1942 = vrot.slane %v1940, 4
        %v1943 = vrot.slane %v1817, 5
        %v1944 = vsel %vm1895, %v1942, %v1943
        %v1945 = vrot.slane %v1818, 5
        %v1946 = vrot.slane %v1945, 4
        %v1947 = vrot.slane %v1819, 5
        %v1948 = vsel %vm1895, %v1946, %v1947
        %v1949 = vrot.slane %v1947, 4
        %v1950 = vrot.slane %v1820, 5
        %v1951 = vsel %vm1895, %v1949, %v1950
        %v1952 = vrot.slane %v1821, 5
        %v1953 = vrot.slane %v1952, 4
        %v1954 = vrot.slane %v1822, 5
        %v1955 = vsel %vm1895, %v1953, %v1954
        %v1956 = vrot.slane %v1954, 4
        %v1957 = vrot.slane %v1823, 5
        %v1958 = vsel %vm1895, %v1956, %v1957
        %v1959 = vrot.slane %v1824, 5
        %v1960 = vrot.slane %v1959, 4
        %v1961 = vrot.slane %v1825, 5
        %v1962 = vsel %vm1895, %v1960, %v1961
        %v1963 = vrot.slane %v1961, 4
        %v1964 = vrot.slane %v1826, 5
        %v1965 = vsel %vm1895, %v1963, %v1964
        %v1966 = vrot.slane %v1827, 5
        %v1967 = vrot.slane %v1966, 4
        %v1968 = vrot.slane %v1828, 5
        %v1969 = vsel %vm1895, %v1967, %v1968
        %v1970 = vrot.slane %v1968, 4
        %v1971 = vrot.slane %v1829, 5
        %v1972 = vsel %vm1895, %v1970, %v1971
        %v1973 = vrot.slane %v1830, 5
        %v1974 = vrot.slane %v1973, 4
        %v1975 = vrot.slane %v1831, 5
        %v1976 = vsel %vm1895, %v1974, %v1975
        %v1977 = vrot.slane %v1975, 4
        %v1978 = vrot.slane %v1832, 5
        %v1979 = vsel %vm1895, %v1977, %v1978
        %v1980 = vrot.slane %v1833, 5
        %v1981 = vrot.slane %v1980, 4
        %v1982 = vrot.slane %v1834, 5
        %v1983 = vsel %vm1895, %v1981, %v1982
        %v1984 = vrot.slane %v1982, 4
        %v1985 = vrot.slane %v1835, 5
        %v1986 = vsel %vm1895, %v1984, %v1985
        %v1987 = vrot.slane %v1836, 5
        %v1988 = vrot.slane %v1987, 4
        %v1989 = vrot.slane %v1837, 5
        %v1990 = vsel %vm1895, %v1988, %v1989
        %v1991 = vrot.slane %v1989, 4
        %v1992 = vrot.slane %v1838, 5
        %v1993 = vsel %vm1895, %v1991, %v1992
        %v1994 = vrot.slane %v1839, 5
        %v1995 = vrot.slane %v1994, 4
        %v1996 = vrot.slane %v1840, 5
        %v1997 = vsel %vm1895, %v1995, %v1996
        %v1998 = vrot.slane %v1996, 4
        %v1999 = vrot.slane %v1841, 5
        %v2000 = vsel %vm1895, %v1998, %v1999
        %v2001 = vrot.slane %v1842, 5
        %v2002 = vrot.slane %v2001, 4
        %v2003 = vrot.slane %v1843, 5
        %v2004 = vsel %vm1895, %v2002, %v2003
        %v2005 = vrot.slane %v2003, 4
        %v2006 = vrot.slane %v1844, 5
        %v2007 = vsel %vm1895, %v2005, %v2006
        %v2008 = vunpack.c.l.b16 %v1899
        %v2009 = vunpack.c.l.b16 %v1902
        %v2010 = vunpack.c.l.b16 %v1906
        %v2011 = vunpack.c.l.b16 %v1909
        %v2012 = vunpack.c.l.b16 %v1913
        %v2013 = vunpack.c.l.b16 %v1916
        %v2014 = vunpack.c.l.b16 %v1920
        %v2015 = vunpack.c.l.b16 %v1923
        %v2016 = vunpack.c.l.b16 %v1927
        %v2017 = vunpack.c.l.b16 %v1930
        %v2018 = vunpack.c.l.b16 %v1934
        %v2019 = vunpack.c.l.b16 %v1937
        %v2020 = vunpack.c.l.b16 %v1941
        %v2021 = vunpack.c.l.b16 %v1944
        %v2022 = vunpack.c.l.b16 %v1948
        %v2023 = vunpack.c.l.b16 %v1951
        %v2024 = vunpack.c.l.b16 %v1955
        %v2025 = vunpack.c.l.b16 %v1958
        %v2026 = vunpack.c.l.b16 %v1962
        %v2027 = vunpack.c.l.b16 %v1965
        %v2028 = vunpack.c.l.b16 %v1969
        %v2029 = vunpack.c.l.b16 %v1972
        %v2030 = vunpack.c.l.b16 %v1976
        %v2031 = vunpack.c.l.b16 %v1979
        %v2032 = vunpack.c.l.b16 %v1983
        %v2033 = vunpack.c.l.b16 %v1986
        %v2034 = vunpack.c.l.b16 %v1990
        %v2035 = vunpack.c.l.b16 %v1993
        %v2036 = vunpack.c.l.b16 %v1997
        %v2037 = vunpack.c.l.b16 %v2000
        %v2038 = vunpack.c.l.b16 %v2004
        %v2039 = vunpack.c.l.b16 %v2007
        %v2040 = vpack.c.b16 %v2009, %v2008
        %v2041 = vpack.c.b16 %v2011, %v2010
        %v2042 = vpack.c.b16 %v2013, %v2012
        %v2043 = vpack.c.b16 %v2015, %v2014
        %v2044 = vpack.c.b16 %v2017, %v2016
        %v2045 = vpack.c.b16 %v2019, %v2018
        %v2046 = vpack.c.b16 %v2021, %v2020
        %v2047 = vpack.c.b16 %v2023, %v2022
        %v2048 = vpack.c.b16 %v2025, %v2024
        %v2049 = vpack.c.b16 %v2027, %v2026
        %v2050 = vpack.c.b16 %v2029, %v2028
        %v2051 = vpack.c.b16 %v2031, %v2030
        %v2052 = vpack.c.b16 %v2033, %v2032
        %v2053 = vpack.c.b16 %v2035, %v2034
        %v2054 = vpack.c.b16 %v2037, %v2036
        %v2055 = vpack.c.b16 %v2039, %v2038
        %2072 = vst.msk [vmem:[#allocation3 + $0x8] sm:$0xff] %vm1232, %v2040
        %2073 = vst.msk [vmem:[#allocation3 + $0x30] sm:$0xff] %vm1232, %v2041
        %2074 = vst.msk [vmem:[#allocation3 + $0x58] sm:$0xff] %vm1232, %v2042
        %2075 = vst.msk [vmem:[#allocation3 + $0x80] sm:$0xff] %vm1232, %v2043
        %2076 = vst.msk [vmem:[#allocation3 + $0xa8] sm:$0xff] %vm1232, %v2044
        %2077 = vst.msk [vmem:[#allocation3 + $0xd0] sm:$0xff] %vm1232, %v2045
        %2078 = vst.msk [vmem:[#allocation3 + $0xf8] sm:$0xff] %vm1232, %v2046
        %2079 = vst.msk [vmem:[#allocation3 + $0x120] sm:$0xff] %vm1232, %v2047
        %2080 = vst.msk [vmem:[#allocation3 + $0x148] sm:$0xff] %vm1232, %v2048
        %2081 = vst.msk [vmem:[#allocation3 + $0x170] sm:$0xff] %vm1232, %v2049
        %2082 = vst.msk [vmem:[#allocation3 + $0x198] sm:$0xff] %vm1232, %v2050
        %2083 = vst.msk [vmem:[#allocation3 + $0x1c0] sm:$0xff] %vm1232, %v2051
        %2084 = vst.msk [vmem:[#allocation3 + $0x1e8] sm:$0xff] %vm1232, %v2052
        %2085 = vst.msk [vmem:[#allocation3 + $0x210] sm:$0xff] %vm1232, %v2053
        %2086 = vst.msk [vmem:[#allocation3 + $0x238] sm:$0xff] %vm1232, %v2054
        %2087 = vst.msk [vmem:[#allocation3 + $0x260] sm:$0xff] %vm1232, %v2055
        %v2088 = vld [vmem:[%s986] sm:$0xf]
        %v2089 = vld [vmem:[%s986 + $0x4] sm:$0xf]
        %v2090 = vld [vmem:[%s986 + $0xc] sm:$0xf]
        %v2091 = vld [vmem:[%s986 + $0x10] sm:$0xf]
        %v2092 = vld [vmem:[%s986 + $0x18] sm:$0xf]
        %v2093 = vld [vmem:[%s986 + $0x1c] sm:$0xf]
        %v2094 = vld [vmem:[%s986 + $0x24] sm:$0xf]
        %v2095 = vld [vmem:[%s986 + $0x28] sm:$0xf]
        %v2096 = vld [vmem:[%s986 + $0x30] sm:$0xf]
        %v2097 = vld [vmem:[%s986 + $0x34] sm:$0xf]
        %v2098 = vld [vmem:[%s986 + $0x3c] sm:$0xf]
        %v2099 = vld [vmem:[%s986 + $0x40] sm:$0xf]
        %v2100 = vld [vmem:[%s986 + $0x48] sm:$0xf]
        %v2101 = vld [vmem:[%s986 + $0x4c] sm:$0xf]
        %v2102 = vld [vmem:[%s986 + $0x54] sm:$0xf]
        %v2103 = vld [vmem:[%s986 + $0x58] sm:$0xf]
        %v2104 = vld [vmem:[%s986 + $0x60] sm:$0xf]
        %v2105 = vld [vmem:[%s986 + $0x64] sm:$0xf]
        %v2106 = vld [vmem:[%s986 + $0x6c] sm:$0xf]
        %v2107 = vld [vmem:[%s986 + $0x70] sm:$0xf]
        %v2108 = vld [vmem:[%s986 + $0x78] sm:$0xf]
        %v2109 = vld [vmem:[%s986 + $0x7c] sm:$0xf]
        %v2110 = vld [vmem:[%s986 + $0x84] sm:$0xf]
        %v2111 = vld [vmem:[%s986 + $0x88] sm:$0xf]
        %v2112 = vld [vmem:[%s986 + $0x90] sm:$0xf]
        %v2113 = vld [vmem:[%s986 + $0x94] sm:$0xf]
        %v2114 = vld [vmem:[%s986 + $0x9c] sm:$0xf]
        %v2115 = vld [vmem:[%s986 + $0xa0] sm:$0xf]
        %v2116 = vld [vmem:[%s986 + $0xa8] sm:$0xf]
        %v2117 = vld [vmem:[%s986 + $0xac] sm:$0xf]
        %v2118 = vld [vmem:[%s986 + $0xb4] sm:$0xf]
        %v2119 = vld [vmem:[%s986 + $0xb8] sm:$0xf]
        %v2152 = vunpack.c.l.b16 %v2088
        %v2153 = vunpack.c.l.b16 %v2089
        %v2154 = vunpack.c.l.b16 %v2090
        %v2155 = vunpack.c.l.b16 %v2091
        %v2156 = vunpack.c.l.b16 %v2092
        %v2157 = vunpack.c.l.b16 %v2093
        %v2158 = vunpack.c.l.b16 %v2094
        %v2159 = vunpack.c.l.b16 %v2095
        %v2160 = vunpack.c.l.b16 %v2096
        %v2161 = vunpack.c.l.b16 %v2097
        %v2162 = vunpack.c.l.b16 %v2098
        %v2163 = vunpack.c.l.b16 %v2099
        %v2164 = vunpack.c.l.b16 %v2100
        %v2165 = vunpack.c.l.b16 %v2101
        %v2166 = vunpack.c.l.b16 %v2102
        %v2167 = vunpack.c.l.b16 %v2103
        %v2168 = vunpack.c.l.b16 %v2104
        %v2169 = vunpack.c.l.b16 %v2105
        %v2170 = vunpack.c.l.b16 %v2106
        %v2171 = vunpack.c.l.b16 %v2107
        %v2172 = vunpack.c.l.b16 %v2108
        %v2173 = vunpack.c.l.b16 %v2109
        %v2174 = vunpack.c.l.b16 %v2110
        %v2175 = vunpack.c.l.b16 %v2111
        %v2176 = vunpack.c.l.b16 %v2112
        %v2177 = vunpack.c.l.b16 %v2113
        %v2178 = vunpack.c.l.b16 %v2114
        %v2179 = vunpack.c.l.b16 %v2115
        %v2180 = vunpack.c.l.b16 %v2116
        %v2181 = vunpack.c.l.b16 %v2117
        %v2182 = vunpack.c.l.b16 %v2118
        %v2183 = vunpack.c.l.b16 %v2119
        %v2184 = vpack.c.b16 %v2153, %v2152
        %v2185 = vpack.c.b16 %v2155, %v2154
        %v2186 = vpack.c.b16 %v2157, %v2156
        %v2187 = vpack.c.b16 %v2159, %v2158
        %v2188 = vpack.c.b16 %v2161, %v2160
        %v2189 = vpack.c.b16 %v2163, %v2162
        %v2190 = vpack.c.b16 %v2165, %v2164
        %v2191 = vpack.c.b16 %v2167, %v2166
        %v2192 = vpack.c.b16 %v2169, %v2168
        %v2193 = vpack.c.b16 %v2171, %v2170
        %v2194 = vpack.c.b16 %v2173, %v2172
        %v2195 = vpack.c.b16 %v2175, %v2174
        %v2196 = vpack.c.b16 %v2177, %v2176
        %v2197 = vpack.c.b16 %v2179, %v2178
        %v2198 = vpack.c.b16 %v2181, %v2180
        %v2199 = vpack.c.b16 %v2183, %v2182
        %2200 = vrot.lane.b32.xlu0 %v2184, 64
        %v2201 = vpop.permute.xlu0 %2200
        %2202 = vrot.lane.b32.xlu0 %v2185, 64
        %v2203 = vpop.permute.xlu0 %2202
        %2204 = vrot.lane.b32.xlu0 %v2186, 64
        %v2205 = vpop.permute.xlu0 %2204
        %2206 = vrot.lane.b32.xlu0 %v2187, 64
        %v2207 = vpop.permute.xlu0 %2206
        %2208 = vrot.lane.b32.xlu0 %v2188, 64
        %v2209 = vpop.permute.xlu0 %2208
        %2210 = vrot.lane.b32.xlu0 %v2189, 64
        %v2211 = vpop.permute.xlu0 %2210
        %2212 = vrot.lane.b32.xlu0 %v2190, 64
        %v2213 = vpop.permute.xlu0 %2212
        %2214 = vrot.lane.b32.xlu0 %v2191, 64
        %v2215 = vpop.permute.xlu0 %2214
        %2216 = vrot.lane.b32.xlu0 %v2192, 64
        %v2217 = vpop.permute.xlu0 %2216
        %2218 = vrot.lane.b32.xlu0 %v2193, 64
        %v2219 = vpop.permute.xlu0 %2218
        %2220 = vrot.lane.b32.xlu0 %v2194, 64
        %v2221 = vpop.permute.xlu0 %2220
        %2222 = vrot.lane.b32.xlu0 %v2195, 64
        %v2223 = vpop.permute.xlu0 %2222
        %2224 = vrot.lane.b32.xlu0 %v2196, 64
        %v2225 = vpop.permute.xlu0 %2224
        %2226 = vrot.lane.b32.xlu0 %v2197, 64
        %v2227 = vpop.permute.xlu0 %2226
        %2228 = vrot.lane.b32.xlu0 %v2198, 64
        %v2229 = vpop.permute.xlu0 %2228
        %2230 = vrot.lane.b32.xlu0 %v2199, 64
        %v2231 = vpop.permute.xlu0 %2230
        %2248 = vst.msk [vmem:[#allocation3 + $0x8] sm:$0xff] %vm1780, %v2201
        %2249 = vst.msk [vmem:[#allocation3 + $0x30] sm:$0xff] %vm1780, %v2203
        %2250 = vst.msk [vmem:[#allocation3 + $0x58] sm:$0xff] %vm1780, %v2205
        %2251 = vst.msk [vmem:[#allocation3 + $0x80] sm:$0xff] %vm1780, %v2207
        %2252 = vst.msk [vmem:[#allocation3 + $0xa8] sm:$0xff] %vm1780, %v2209
        %2253 = vst.msk [vmem:[#allocation3 + $0xd0] sm:$0xff] %vm1780, %v2211
        %2254 = vst.msk [vmem:[#allocation3 + $0xf8] sm:$0xff] %vm1780, %v2213
        %2255 = vst.msk [vmem:[#allocation3 + $0x120] sm:$0xff] %vm1780, %v2215
        %2256 = vst.msk [vmem:[#allocation3 + $0x148] sm:$0xff] %vm1780, %v2217
        %2257 = vst.msk [vmem:[#allocation3 + $0x170] sm:$0xff] %vm1780, %v2219
        %2258 = vst.msk [vmem:[#allocation3 + $0x198] sm:$0xff] %vm1780, %v2221
        %2259 = vst.msk [vmem:[#allocation3 + $0x1c0] sm:$0xff] %vm1780, %v2223
        %2260 = vst.msk [vmem:[#allocation3 + $0x1e8] sm:$0xff] %vm1780, %v2225
        %2261 = vst.msk [vmem:[#allocation3 + $0x210] sm:$0xff] %vm1780, %v2227
        %2262 = vst.msk [vmem:[#allocation3 + $0x238] sm:$0xff] %vm1780, %v2229
        %2263 = vst.msk [vmem:[#allocation3 + $0x260] sm:$0xff] %vm1780, %v2231
        %v2264 = vld [vmem:[%s986] sm:$0xf]
        %v2265 = vld [vmem:[%s986 + $0x4] sm:$0xf]
        %v2266 = vld [vmem:[%s986 + $0x8] sm:$0x1]
        %v2267 = vld [vmem:[%s986 + $0xc] sm:$0xf]
        %v2268 = vld [vmem:[%s986 + $0x10] sm:$0xf]
        %v2269 = vld [vmem:[%s986 + $0x14] sm:$0x1]
        %v2270 = vld [vmem:[%s986 + $0x18] sm:$0xf]
        %v2271 = vld [vmem:[%s986 + $0x1c] sm:$0xf]
        %v2272 = vld [vmem:[%s986 + $0x20] sm:$0x1]
        %v2273 = vld [vmem:[%s986 + $0x24] sm:$0xf]
        %v2274 = vld [vmem:[%s986 + $0x28] sm:$0xf]
        %v2275 = vld [vmem:[%s986 + $0x2c] sm:$0x1]
        %v2276 = vld [vmem:[%s986 + $0x30] sm:$0xf]
        %v2277 = vld [vmem:[%s986 + $0x34] sm:$0xf]
        %v2278 = vld [vmem:[%s986 + $0x38] sm:$0x1]
        %v2279 = vld [vmem:[%s986 + $0x3c] sm:$0xf]
        %v2280 = vld [vmem:[%s986 + $0x40] sm:$0xf]
        %v2281 = vld [vmem:[%s986 + $0x44] sm:$0x1]
        %v2282 = vld [vmem:[%s986 + $0x48] sm:$0xf]
        %v2283 = vld [vmem:[%s986 + $0x4c] sm:$0xf]
        %v2284 = vld [vmem:[%s986 + $0x50] sm:$0x1]
        %v2285 = vld [vmem:[%s986 + $0x54] sm:$0xf]
        %v2286 = vld [vmem:[%s986 + $0x58] sm:$0xf]
        %v2287 = vld [vmem:[%s986 + $0x5c] sm:$0x1]
        %v2288 = vld [vmem:[%s986 + $0x60] sm:$0xf]
        %v2289 = vld [vmem:[%s986 + $0x64] sm:$0xf]
        %v2290 = vld [vmem:[%s986 + $0x68] sm:$0x1]
        %v2291 = vld [vmem:[%s986 + $0x6c] sm:$0xf]
        %v2292 = vld [vmem:[%s986 + $0x70] sm:$0xf]
        %v2293 = vld [vmem:[%s986 + $0x74] sm:$0x1]
        %v2294 = vld [vmem:[%s986 + $0x78] sm:$0xf]
        %v2295 = vld [vmem:[%s986 + $0x7c] sm:$0xf]
        %v2296 = vld [vmem:[%s986 + $0x80] sm:$0x1]
        %v2297 = vld [vmem:[%s986 + $0x84] sm:$0xf]
        %v2298 = vld [vmem:[%s986 + $0x88] sm:$0xf]
        %v2299 = vld [vmem:[%s986 + $0x8c] sm:$0x1]
        %v2300 = vld [vmem:[%s986 + $0x90] sm:$0xf]
        %v2301 = vld [vmem:[%s986 + $0x94] sm:$0xf]
        %v2302 = vld [vmem:[%s986 + $0x98] sm:$0x1]
        %v2303 = vld [vmem:[%s986 + $0x9c] sm:$0xf]
        %v2304 = vld [vmem:[%s986 + $0xa0] sm:$0xf]
        %v2305 = vld [vmem:[%s986 + $0xa4] sm:$0x1]
        %v2306 = vld [vmem:[%s986 + $0xa8] sm:$0xf]
        %v2307 = vld [vmem:[%s986 + $0xac] sm:$0xf]
        %v2308 = vld [vmem:[%s986 + $0xb0] sm:$0x1]
        %v2309 = vld [vmem:[%s986 + $0xb4] sm:$0xf]
        %v2310 = vld [vmem:[%s986 + $0xb8] sm:$0xf]
        %v2311 = vld [vmem:[%s986 + $0xbc] sm:$0x1]
        %v2313 = vshrl.u32 %v2264, 16
        %v2315 = vrot.slane %v2313, 4
        %v2316 = vshll.u32 %v2264, 16
        %v2318 = vrot.slane %v2316, 5
        %v2319 = vor.u32 %v2315, %v2318
        %v2320 = vrot.slane %v2319, 4
        %v2322 = vshll.u32 %v2265, 16
        %v2324 = vrot.slane %v2322, 5
        %v2325 = vsel %vm1299, %v2320, %v2324
        %v2326 = vshrl.u32 %v2265, 16
        %v2328 = vrot.slane %v2326, 4
        %v2329 = vor.u32 %v2328, %v2324
        %v2330 = vrot.slane %v2329, 4
        %v2332 = vshll.u32 %v2266, 16
        %v2334 = vrot.slane %v2332, 5
        %v2335 = vsel %vm1299, %v2330, %v2334
        %v2337 = vshrl.u32 %v2267, 16
        %v2339 = vrot.slane %v2337, 4
        %v2340 = vshll.u32 %v2267, 16
        %v2342 = vrot.slane %v2340, 5
        %v2343 = vor.u32 %v2339, %v2342
        %v2344 = vrot.slane %v2343, 4
        %v2346 = vshll.u32 %v2268, 16
        %v2348 = vrot.slane %v2346, 5
        %v2349 = vsel %vm1299, %v2344, %v2348
        %v2350 = vshrl.u32 %v2268, 16
        %v2352 = vrot.slane %v2350, 4
        %v2353 = vor.u32 %v2352, %v2348
        %v2354 = vrot.slane %v2353, 4
        %v2356 = vshll.u32 %v2269, 16
        %v2358 = vrot.slane %v2356, 5
        %v2359 = vsel %vm1299, %v2354, %v2358
        %v2361 = vshrl.u32 %v2270, 16
        %v2363 = vrot.slane %v2361, 4
        %v2364 = vshll.u32 %v2270, 16
        %v2366 = vrot.slane %v2364, 5
        %v2367 = vor.u32 %v2363, %v2366
        %v2368 = vrot.slane %v2367, 4
        %v2370 = vshll.u32 %v2271, 16
        %v2372 = vrot.slane %v2370, 5
        %v2373 = vsel %vm1299, %v2368, %v2372
        %v2374 = vshrl.u32 %v2271, 16
        %v2376 = vrot.slane %v2374, 4
        %v2377 = vor.u32 %v2376, %v2372
        %v2378 = vrot.slane %v2377, 4
        %v2380 = vshll.u32 %v2272, 16
        %v2382 = vrot.slane %v2380, 5
        %v2383 = vsel %vm1299, %v2378, %v2382
        %v2385 = vshrl.u32 %v2273, 16
        %v2387 = vrot.slane %v2385, 4
        %v2388 = vshll.u32 %v2273, 16
        %v2390 = vrot.slane %v2388, 5
        %v2391 = vor.u32 %v2387, %v2390
        %v2392 = vrot.slane %v2391, 4
        %v2394 = vshll.u32 %v2274, 16
        %v2396 = vrot.slane %v2394, 5
        %v2397 = vsel %vm1299, %v2392, %v2396
        %v2398 = vshrl.u32 %v2274, 16
        %v2400 = vrot.slane %v2398, 4
        %v2401 = vor.u32 %v2400, %v2396
        %v2402 = vrot.slane %v2401, 4
        %v2404 = vshll.u32 %v2275, 16
        %v2406 = vrot.slane %v2404, 5
        %v2407 = vsel %vm1299, %v2402, %v2406
        %v2409 = vshrl.u32 %v2276, 16
        %v2411 = vrot.slane %v2409, 4
        %v2412 = vshll.u32 %v2276, 16
        %v2414 = vrot.slane %v2412, 5
        %v2415 = vor.u32 %v2411, %v2414
        %v2416 = vrot.slane %v2415, 4
        %v2418 = vshll.u32 %v2277, 16
        %v2420 = vrot.slane %v2418, 5
        %v2421 = vsel %vm1299, %v2416, %v2420
        %v2422 = vshrl.u32 %v2277, 16
        %v2424 = vrot.slane %v2422, 4
        %v2425 = vor.u32 %v2424, %v2420
        %v2426 = vrot.slane %v2425, 4
        %v2428 = vshll.u32 %v2278, 16
        %v2430 = vrot.slane %v2428, 5
        %v2431 = vsel %vm1299, %v2426, %v2430
        %v2433 = vshrl.u32 %v2279, 16
        %v2435 = vrot.slane %v2433, 4
        %v2436 = vshll.u32 %v2279, 16
        %v2438 = vrot.slane %v2436, 5
        %v2439 = vor.u32 %v2435, %v2438
        %v2440 = vrot.slane %v2439, 4
        %v2442 = vshll.u32 %v2280, 16
        %v2444 = vrot.slane %v2442, 5
        %v2445 = vsel %vm1299, %v2440, %v2444
        %v2446 = vshrl.u32 %v2280, 16
        %v2448 = vrot.slane %v2446, 4
        %v2449 = vor.u32 %v2448, %v2444
        %v2450 = vrot.slane %v2449, 4
        %v2452 = vshll.u32 %v2281, 16
        %v2454 = vrot.slane %v2452, 5
        %v2455 = vsel %vm1299, %v2450, %v2454
        %v2457 = vshrl.u32 %v2282, 16
        %v2459 = vrot.slane %v2457, 4
        %v2460 = vshll.u32 %v2282, 16
        %v2462 = vrot.slane %v2460, 5
        %v2463 = vor.u32 %v2459, %v2462
        %v2464 = vrot.slane %v2463, 4
        %v2466 = vshll.u32 %v2283, 16
        %v2468 = vrot.slane %v2466, 5
        %v2469 = vsel %vm1299, %v2464, %v2468
        %v2470 = vshrl.u32 %v2283, 16
        %v2472 = vrot.slane %v2470, 4
        %v2473 = vor.u32 %v2472, %v2468
        %v2474 = vrot.slane %v2473, 4
        %v2476 = vshll.u32 %v2284, 16
        %v2478 = vrot.slane %v2476, 5
        %v2479 = vsel %vm1299, %v2474, %v2478
        %v2481 = vshrl.u32 %v2285, 16
        %v2483 = vrot.slane %v2481, 4
        %v2484 = vshll.u32 %v2285, 16
        %v2486 = vrot.slane %v2484, 5
        %v2487 = vor.u32 %v2483, %v2486
        %v2488 = vrot.slane %v2487, 4
        %v2490 = vshll.u32 %v2286, 16
        %v2492 = vrot.slane %v2490, 5
        %v2493 = vsel %vm1299, %v2488, %v2492
        %v2494 = vshrl.u32 %v2286, 16
        %v2496 = vrot.slane %v2494, 4
        %v2497 = vor.u32 %v2496, %v2492
        %v2498 = vrot.slane %v2497, 4
        %v2500 = vshll.u32 %v2287, 16
        %v2502 = vrot.slane %v2500, 5
        %v2503 = vsel %vm1299, %v2498, %v2502
        %v2505 = vshrl.u32 %v2288, 16
        %v2507 = vrot.slane %v2505, 4
        %v2508 = vshll.u32 %v2288, 16
        %v2510 = vrot.slane %v2508, 5
        %v2511 = vor.u32 %v2507, %v2510
        %v2512 = vrot.slane %v2511, 4
        %v2514 = vshll.u32 %v2289, 16
        %v2516 = vrot.slane %v2514, 5
        %v2517 = vsel %vm1299, %v2512, %v2516
        %v2518 = vshrl.u32 %v2289, 16
        %v2520 = vrot.slane %v2518, 4
        %v2521 = vor.u32 %v2520, %v2516
        %v2522 = vrot.slane %v2521, 4
        %v2524 = vshll.u32 %v2290, 16
        %v2526 = vrot.slane %v2524, 5
        %v2527 = vsel %vm1299, %v2522, %v2526
        %v2529 = vshrl.u32 %v2291, 16
        %v2531 = vrot.slane %v2529, 4
        %v2532 = vshll.u32 %v2291, 16
        %v2534 = vrot.slane %v2532, 5
        %v2535 = vor.u32 %v2531, %v2534
        %v2536 = vrot.slane %v2535, 4
        %v2538 = vshll.u32 %v2292, 16
        %v2540 = vrot.slane %v2538, 5
        %v2541 = vsel %vm1299, %v2536, %v2540
        %v2542 = vshrl.u32 %v2292, 16
        %v2544 = vrot.slane %v2542, 4
        %v2545 = vor.u32 %v2544, %v2540
        %v2546 = vrot.slane %v2545, 4
        %v2548 = vshll.u32 %v2293, 16
        %v2550 = vrot.slane %v2548, 5
        %v2551 = vsel %vm1299, %v2546, %v2550
        %v2553 = vshrl.u32 %v2294, 16
        %v2555 = vrot.slane %v2553, 4
        %v2556 = vshll.u32 %v2294, 16
        %v2558 = vrot.slane %v2556, 5
        %v2559 = vor.u32 %v2555, %v2558
        %v2560 = vrot.slane %v2559, 4
        %v2562 = vshll.u32 %v2295, 16
        %v2564 = vrot.slane %v2562, 5
        %v2565 = vsel %vm1299, %v2560, %v2564
        %v2566 = vshrl.u32 %v2295, 16
        %v2568 = vrot.slane %v2566, 4
        %v2569 = vor.u32 %v2568, %v2564
        %v2570 = vrot.slane %v2569, 4
        %v2572 = vshll.u32 %v2296, 16
        %v2574 = vrot.slane %v2572, 5
        %v2575 = vsel %vm1299, %v2570, %v2574
        %v2577 = vshrl.u32 %v2297, 16
        %v2579 = vrot.slane %v2577, 4
        %v2580 = vshll.u32 %v2297, 16
        %v2582 = vrot.slane %v2580, 5
        %v2583 = vor.u32 %v2579, %v2582
        %v2584 = vrot.slane %v2583, 4
        %v2586 = vshll.u32 %v2298, 16
        %v2588 = vrot.slane %v2586, 5
        %v2589 = vsel %vm1299, %v2584, %v2588
        %v2590 = vshrl.u32 %v2298, 16
        %v2592 = vrot.slane %v2590, 4
        %v2593 = vor.u32 %v2592, %v2588
        %v2594 = vrot.slane %v2593, 4
        %v2596 = vshll.u32 %v2299, 16
        %v2598 = vrot.slane %v2596, 5
        %v2599 = vsel %vm1299, %v2594, %v2598
        %v2601 = vshrl.u32 %v2300, 16
        %v2603 = vrot.slane %v2601, 4
        %v2604 = vshll.u32 %v2300, 16
        %v2606 = vrot.slane %v2604, 5
        %v2607 = vor.u32 %v2603, %v2606
        %v2608 = vrot.slane %v2607, 4
        %v2610 = vshll.u32 %v2301, 16
        %v2612 = vrot.slane %v2610, 5
        %v2613 = vsel %vm1299, %v2608, %v2612
        %v2614 = vshrl.u32 %v2301, 16
        %v2616 = vrot.slane %v2614, 4
        %v2617 = vor.u32 %v2616, %v2612
        %v2618 = vrot.slane %v2617, 4
        %v2620 = vshll.u32 %v2302, 16
        %v2622 = vrot.slane %v2620, 5
        %v2623 = vsel %vm1299, %v2618, %v2622
        %v2625 = vshrl.u32 %v2303, 16
        %v2627 = vrot.slane %v2625, 4
        %v2628 = vshll.u32 %v2303, 16
        %v2630 = vrot.slane %v2628, 5
        %v2631 = vor.u32 %v2627, %v2630
        %v2632 = vrot.slane %v2631, 4
        %v2634 = vshll.u32 %v2304, 16
        %v2636 = vrot.slane %v2634, 5
        %v2637 = vsel %vm1299, %v2632, %v2636
        %v2638 = vshrl.u32 %v2304, 16
        %v2640 = vrot.slane %v2638, 4
        %v2641 = vor.u32 %v2640, %v2636
        %v2642 = vrot.slane %v2641, 4
        %v2644 = vshll.u32 %v2305, 16
        %v2646 = vrot.slane %v2644, 5
        %v2647 = vsel %vm1299, %v2642, %v2646
        %v2649 = vshrl.u32 %v2306, 16
        %v2651 = vrot.slane %v2649, 4
        %v2652 = vshll.u32 %v2306, 16
        %v2654 = vrot.slane %v2652, 5
        %v2655 = vor.u32 %v2651, %v2654
        %v2656 = vrot.slane %v2655, 4
        %v2658 = vshll.u32 %v2307, 16
        %v2660 = vrot.slane %v2658, 5
        %v2661 = vsel %vm1299, %v2656, %v2660
        %v2662 = vshrl.u32 %v2307, 16
        %v2664 = vrot.slane %v2662, 4
        %v2665 = vor.u32 %v2664, %v2660
        %v2666 = vrot.slane %v2665, 4
        %v2668 = vshll.u32 %v2308, 16
        %v2670 = vrot.slane %v2668, 5
        %v2671 = vsel %vm1299, %v2666, %v2670
        %v2673 = vshrl.u32 %v2309, 16
        %v2675 = vrot.slane %v2673, 4
        %v2676 = vshll.u32 %v2309, 16
        %v2678 = vrot.slane %v2676, 5
        %v2679 = vor.u32 %v2675, %v2678
        %v2680 = vrot.slane %v2679, 4
        %v2682 = vshll.u32 %v2310, 16
        %v2684 = vrot.slane %v2682, 5
        %v2685 = vsel %vm1299, %v2680, %v2684
        %v2686 = vshrl.u32 %v2310, 16
        %v2688 = vrot.slane %v2686, 4
        %v2689 = vor.u32 %v2688, %v2684
        %v2690 = vrot.slane %v2689, 4
        %v2692 = vshll.u32 %v2311, 16
        %v2694 = vrot.slane %v2692, 5
        %v2695 = vsel %vm1299, %v2690, %v2694
        %v2696 = vunpack.c.l.b16 %v2325
        %v2697 = vunpack.c.l.b16 %v2335
        %v2698 = vunpack.c.l.b16 %v2349
        %v2699 = vunpack.c.l.b16 %v2359
        %v2700 = vunpack.c.l.b16 %v2373
        %v2701 = vunpack.c.l.b16 %v2383
        %v2702 = vunpack.c.l.b16 %v2397
        %v2703 = vunpack.c.l.b16 %v2407
        %v2704 = vunpack.c.l.b16 %v2421
        %v2705 = vunpack.c.l.b16 %v2431
        %v2706 = vunpack.c.l.b16 %v2445
        %v2707 = vunpack.c.l.b16 %v2455
        %v2708 = vunpack.c.l.b16 %v2469
        %v2709 = vunpack.c.l.b16 %v2479
        %v2710 = vunpack.c.l.b16 %v2493
        %v2711 = vunpack.c.l.b16 %v2503
        %v2712 = vunpack.c.l.b16 %v2517
        %v2713 = vunpack.c.l.b16 %v2527
        %v2714 = vunpack.c.l.b16 %v2541
        %v2715 = vunpack.c.l.b16 %v2551
        %v2716 = vunpack.c.l.b16 %v2565
        %v2717 = vunpack.c.l.b16 %v2575
        %v2718 = vunpack.c.l.b16 %v2589
        %v2719 = vunpack.c.l.b16 %v2599
        %v2720 = vunpack.c.l.b16 %v2613
        %v2721 = vunpack.c.l.b16 %v2623
        %v2722 = vunpack.c.l.b16 %v2637
        %v2723 = vunpack.c.l.b16 %v2647
        %v2724 = vunpack.c.l.b16 %v2661
        %v2725 = vunpack.c.l.b16 %v2671
        %v2726 = vunpack.c.l.b16 %v2685
        %v2727 = vunpack.c.l.b16 %v2695
        %v2728 = vpack.c.b16 %v2697, %v2696
        %v2729 = vpack.c.b16 %v2699, %v2698
        %v2730 = vpack.c.b16 %v2701, %v2700
        %v2731 = vpack.c.b16 %v2703, %v2702
        %v2732 = vpack.c.b16 %v2705, %v2704
        %v2733 = vpack.c.b16 %v2707, %v2706
        %v2734 = vpack.c.b16 %v2709, %v2708
        %v2735 = vpack.c.b16 %v2711, %v2710
        %v2736 = vpack.c.b16 %v2713, %v2712
        %v2737 = vpack.c.b16 %v2715, %v2714
        %v2738 = vpack.c.b16 %v2717, %v2716
        %v2739 = vpack.c.b16 %v2719, %v2718
        %v2740 = vpack.c.b16 %v2721, %v2720
        %v2741 = vpack.c.b16 %v2723, %v2722
        %v2742 = vpack.c.b16 %v2725, %v2724
        %v2743 = vpack.c.b16 %v2727, %v2726
        %2760 = vst.msk [vmem:[#allocation3 + $0x10] sm:$0xff] %vm1232, %v2728
        %2761 = vst.msk [vmem:[#allocation3 + $0x38] sm:$0xff] %vm1232, %v2729
        %2762 = vst.msk [vmem:[#allocation3 + $0x60] sm:$0xff] %vm1232, %v2730
        %2763 = vst.msk [vmem:[#allocation3 + $0x88] sm:$0xff] %vm1232, %v2731
        %2764 = vst.msk [vmem:[#allocation3 + $0xb0] sm:$0xff] %vm1232, %v2732
        %2765 = vst.msk [vmem:[#allocation3 + $0xd8] sm:$0xff] %vm1232, %v2733
        %2766 = vst.msk [vmem:[#allocation3 + $0x100] sm:$0xff] %vm1232, %v2734
        %2767 = vst.msk [vmem:[#allocation3 + $0x128] sm:$0xff] %vm1232, %v2735
        %2768 = vst.msk [vmem:[#allocation3 + $0x150] sm:$0xff] %vm1232, %v2736
        %2769 = vst.msk [vmem:[#allocation3 + $0x178] sm:$0xff] %vm1232, %v2737
        %2770 = vst.msk [vmem:[#allocation3 + $0x1a0] sm:$0xff] %vm1232, %v2738
        %2771 = vst.msk [vmem:[#allocation3 + $0x1c8] sm:$0xff] %vm1232, %v2739
        %2772 = vst.msk [vmem:[#allocation3 + $0x1f0] sm:$0xff] %vm1232, %v2740
        %2773 = vst.msk [vmem:[#allocation3 + $0x218] sm:$0xff] %vm1232, %v2741
        %2774 = vst.msk [vmem:[#allocation3 + $0x240] sm:$0xff] %vm1232, %v2742
        %2775 = vst.msk [vmem:[#allocation3 + $0x268] sm:$0xff] %vm1232, %v2743
        %v2776 = vld [vmem:[%s986] sm:$0xe]
        %v2777 = vld [vmem:[%s986 + $0x4] sm:$0xf]
        %v2778 = vld [vmem:[%s986 + $0x8] sm:$0x1]
        %v2779 = vld [vmem:[%s986 + $0xc] sm:$0xe]
        %v2780 = vld [vmem:[%s986 + $0x10] sm:$0xf]
        %v2781 = vld [vmem:[%s986 + $0x14] sm:$0x1]
        %v2782 = vld [vmem:[%s986 + $0x18] sm:$0xe]
        %v2783 = vld [vmem:[%s986 + $0x1c] sm:$0xf]
        %v2784 = vld [vmem:[%s986 + $0x20] sm:$0x1]
        %v2785 = vld [vmem:[%s986 + $0x24] sm:$0xe]
        %v2786 = vld [vmem:[%s986 + $0x28] sm:$0xf]
        %v2787 = vld [vmem:[%s986 + $0x2c] sm:$0x1]
        %v2788 = vld [vmem:[%s986 + $0x30] sm:$0xe]
        %v2789 = vld [vmem:[%s986 + $0x34] sm:$0xf]
        %v2790 = vld [vmem:[%s986 + $0x38] sm:$0x1]
        %v2791 = vld [vmem:[%s986 + $0x3c] sm:$0xe]
        %v2792 = vld [vmem:[%s986 + $0x40] sm:$0xf]
        %v2793 = vld [vmem:[%s986 + $0x44] sm:$0x1]
        %v2794 = vld [vmem:[%s986 + $0x48] sm:$0xe]
        %v2795 = vld [vmem:[%s986 + $0x4c] sm:$0xf]
        %v2796 = vld [vmem:[%s986 + $0x50] sm:$0x1]
        %v2797 = vld [vmem:[%s986 + $0x54] sm:$0xe]
        %v2798 = vld [vmem:[%s986 + $0x58] sm:$0xf]
        %v2799 = vld [vmem:[%s986 + $0x5c] sm:$0x1]
        %v2800 = vld [vmem:[%s986 + $0x60] sm:$0xe]
        %v2801 = vld [vmem:[%s986 + $0x64] sm:$0xf]
        %v2802 = vld [vmem:[%s986 + $0x68] sm:$0x1]
        %v2803 = vld [vmem:[%s986 + $0x6c] sm:$0xe]
        %v2804 = vld [vmem:[%s986 + $0x70] sm:$0xf]
        %v2805 = vld [vmem:[%s986 + $0x74] sm:$0x1]
        %v2806 = vld [vmem:[%s986 + $0x78] sm:$0xe]
        %v2807 = vld [vmem:[%s986 + $0x7c] sm:$0xf]
        %v2808 = vld [vmem:[%s986 + $0x80] sm:$0x1]
        %v2809 = vld [vmem:[%s986 + $0x84] sm:$0xe]
        %v2810 = vld [vmem:[%s986 + $0x88] sm:$0xf]
        %v2811 = vld [vmem:[%s986 + $0x8c] sm:$0x1]
        %v2812 = vld [vmem:[%s986 + $0x90] sm:$0xe]
        %v2813 = vld [vmem:[%s986 + $0x94] sm:$0xf]
        %v2814 = vld [vmem:[%s986 + $0x98] sm:$0x1]
        %v2815 = vld [vmem:[%s986 + $0x9c] sm:$0xe]
        %v2816 = vld [vmem:[%s986 + $0xa0] sm:$0xf]
        %v2817 = vld [vmem:[%s986 + $0xa4] sm:$0x1]
        %v2818 = vld [vmem:[%s986 + $0xa8] sm:$0xe]
        %v2819 = vld [vmem:[%s986 + $0xac] sm:$0xf]
        %v2820 = vld [vmem:[%s986 + $0xb0] sm:$0x1]
        %v2821 = vld [vmem:[%s986 + $0xb4] sm:$0xe]
        %v2822 = vld [vmem:[%s986 + $0xb8] sm:$0xf]
        %v2823 = vld [vmem:[%s986 + $0xbc] sm:$0x1]
        %v2872 = vrot.slane %v2776, 5
        %v2873 = vrot.slane %v2872, 4
        %v2874 = vrot.slane %v2777, 5
        %v2875 = vsel %vm1895, %v2873, %v2874
        %v2876 = vrot.slane %v2874, 4
        %v2877 = vrot.slane %v2778, 5
        %v2878 = vsel %vm1895, %v2876, %v2877
        %v2879 = vrot.slane %v2779, 5
        %v2880 = vrot.slane %v2879, 4
        %v2881 = vrot.slane %v2780, 5
        %v2882 = vsel %vm1895, %v2880, %v2881
        %v2883 = vrot.slane %v2881, 4
        %v2884 = vrot.slane %v2781, 5
        %v2885 = vsel %vm1895, %v2883, %v2884
        %v2886 = vrot.slane %v2782, 5
        %v2887 = vrot.slane %v2886, 4
        %v2888 = vrot.slane %v2783, 5
        %v2889 = vsel %vm1895, %v2887, %v2888
        %v2890 = vrot.slane %v2888, 4
        %v2891 = vrot.slane %v2784, 5
        %v2892 = vsel %vm1895, %v2890, %v2891
        %v2893 = vrot.slane %v2785, 5
        %v2894 = vrot.slane %v2893, 4
        %v2895 = vrot.slane %v2786, 5
        %v2896 = vsel %vm1895, %v2894, %v2895
        %v2897 = vrot.slane %v2895, 4
        %v2898 = vrot.slane %v2787, 5
        %v2899 = vsel %vm1895, %v2897, %v2898
        %v2900 = vrot.slane %v2788, 5
        %v2901 = vrot.slane %v2900, 4
        %v2902 = vrot.slane %v2789, 5
        %v2903 = vsel %vm1895, %v2901, %v2902
        %v2904 = vrot.slane %v2902, 4
        %v2905 = vrot.slane %v2790, 5
        %v2906 = vsel %vm1895, %v2904, %v2905
        %v2907 = vrot.slane %v2791, 5
        %v2908 = vrot.slane %v2907, 4
        %v2909 = vrot.slane %v2792, 5
        %v2910 = vsel %vm1895, %v2908, %v2909
        %v2911 = vrot.slane %v2909, 4
        %v2912 = vrot.slane %v2793, 5
        %v2913 = vsel %vm1895, %v2911, %v2912
        %v2914 = vrot.slane %v2794, 5
        %v2915 = vrot.slane %v2914, 4
        %v2916 = vrot.slane %v2795, 5
        %v2917 = vsel %vm1895, %v2915, %v2916
        %v2918 = vrot.slane %v2916, 4
        %v2919 = vrot.slane %v2796, 5
        %v2920 = vsel %vm1895, %v2918, %v2919
        %v2921 = vrot.slane %v2797, 5
        %v2922 = vrot.slane %v2921, 4
        %v2923 = vrot.slane %v2798, 5
        %v2924 = vsel %vm1895, %v2922, %v2923
        %v2925 = vrot.slane %v2923, 4
        %v2926 = vrot.slane %v2799, 5
        %v2927 = vsel %vm1895, %v2925, %v2926
        %v2928 = vrot.slane %v2800, 5
        %v2929 = vrot.slane %v2928, 4
        %v2930 = vrot.slane %v2801, 5
        %v2931 = vsel %vm1895, %v2929, %v2930
        %v2932 = vrot.slane %v2930, 4
        %v2933 = vrot.slane %v2802, 5
        %v2934 = vsel %vm1895, %v2932, %v2933
        %v2935 = vrot.slane %v2803, 5
        %v2936 = vrot.slane %v2935, 4
        %v2937 = vrot.slane %v2804, 5
        %v2938 = vsel %vm1895, %v2936, %v2937
        %v2939 = vrot.slane %v2937, 4
        %v2940 = vrot.slane %v2805, 5
        %v2941 = vsel %vm1895, %v2939, %v2940
        %v2942 = vrot.slane %v2806, 5
        %v2943 = vrot.slane %v2942, 4
        %v2944 = vrot.slane %v2807, 5
        %v2945 = vsel %vm1895, %v2943, %v2944
        %v2946 = vrot.slane %v2944, 4
        %v2947 = vrot.slane %v2808, 5
        %v2948 = vsel %vm1895, %v2946, %v2947
        %v2949 = vrot.slane %v2809, 5
        %v2950 = vrot.slane %v2949, 4
        %v2951 = vrot.slane %v2810, 5
        %v2952 = vsel %vm1895, %v2950, %v2951
        %v2953 = vrot.slane %v2951, 4
        %v2954 = vrot.slane %v2811, 5
        %v2955 = vsel %vm1895, %v2953, %v2954
        %v2956 = vrot.slane %v2812, 5
        %v2957 = vrot.slane %v2956, 4
        %v2958 = vrot.slane %v2813, 5
        %v2959 = vsel %vm1895, %v2957, %v2958
        %v2960 = vrot.slane %v2958, 4
        %v2961 = vrot.slane %v2814, 5
        %v2962 = vsel %vm1895, %v2960, %v2961
        %v2963 = vrot.slane %v2815, 5
        %v2964 = vrot.slane %v2963, 4
        %v2965 = vrot.slane %v2816, 5
        %v2966 = vsel %vm1895, %v2964, %v2965
        %v2967 = vrot.slane %v2965, 4
        %v2968 = vrot.slane %v2817, 5
        %v2969 = vsel %vm1895, %v2967, %v2968
        %v2970 = vrot.slane %v2818, 5
        %v2971 = vrot.slane %v2970, 4
        %v2972 = vrot.slane %v2819, 5
        %v2973 = vsel %vm1895, %v2971, %v2972
        %v2974 = vrot.slane %v2972, 4
        %v2975 = vrot.slane %v2820, 5
        %v2976 = vsel %vm1895, %v2974, %v2975
        %v2977 = vrot.slane %v2821, 5
        %v2978 = vrot.slane %v2977, 4
        %v2979 = vrot.slane %v2822, 5
        %v2980 = vsel %vm1895, %v2978, %v2979
        %v2981 = vrot.slane %v2979, 4
        %v2982 = vrot.slane %v2823, 5
        %v2983 = vsel %vm1895, %v2981, %v2982
        %v2984 = vunpack.c.l.b16 %v2875
        %v2985 = vunpack.c.l.b16 %v2878
        %v2986 = vunpack.c.l.b16 %v2882
        %v2987 = vunpack.c.l.b16 %v2885
        %v2988 = vunpack.c.l.b16 %v2889
        %v2989 = vunpack.c.l.b16 %v2892
        %v2990 = vunpack.c.l.b16 %v2896
        %v2991 = vunpack.c.l.b16 %v2899
        %v2992 = vunpack.c.l.b16 %v2903
        %v2993 = vunpack.c.l.b16 %v2906
        %v2994 = vunpack.c.l.b16 %v2910
        %v2995 = vunpack.c.l.b16 %v2913
        %v2996 = vunpack.c.l.b16 %v2917
        %v2997 = vunpack.c.l.b16 %v2920
        %v2998 = vunpack.c.l.b16 %v2924
        %v2999 = vunpack.c.l.b16 %v2927
        %v3000 = vunpack.c.l.b16 %v2931
        %v3001 = vunpack.c.l.b16 %v2934
        %v3002 = vunpack.c.l.b16 %v2938
        %v3003 = vunpack.c.l.b16 %v2941
        %v3004 = vunpack.c.l.b16 %v2945
        %v3005 = vunpack.c.l.b16 %v2948
        %v3006 = vunpack.c.l.b16 %v2952
        %v3007 = vunpack.c.l.b16 %v2955
        %v3008 = vunpack.c.l.b16 %v2959
        %v3009 = vunpack.c.l.b16 %v2962
        %v3010 = vunpack.c.l.b16 %v2966
        %v3011 = vunpack.c.l.b16 %v2969
        %v3012 = vunpack.c.l.b16 %v2973
        %v3013 = vunpack.c.l.b16 %v2976
        %v3014 = vunpack.c.l.b16 %v2980
        %v3015 = vunpack.c.l.b16 %v2983
        %v3016 = vpack.c.b16 %v2985, %v2984
        %v3017 = vpack.c.b16 %v2987, %v2986
        %v3018 = vpack.c.b16 %v2989, %v2988
        %v3019 = vpack.c.b16 %v2991, %v2990
        %v3020 = vpack.c.b16 %v2993, %v2992
        %v3021 = vpack.c.b16 %v2995, %v2994
        %v3022 = vpack.c.b16 %v2997, %v2996
        %v3023 = vpack.c.b16 %v2999, %v2998
        %v3024 = vpack.c.b16 %v3001, %v3000
        %v3025 = vpack.c.b16 %v3003, %v3002
        %v3026 = vpack.c.b16 %v3005, %v3004
        %v3027 = vpack.c.b16 %v3007, %v3006
        %v3028 = vpack.c.b16 %v3009, %v3008
        %v3029 = vpack.c.b16 %v3011, %v3010
        %v3030 = vpack.c.b16 %v3013, %v3012
        %v3031 = vpack.c.b16 %v3015, %v3014
        %3032 = vrot.lane.b32.xlu0 %v3016, 64
        %v3033 = vpop.permute.xlu0 %3032
        %3034 = vrot.lane.b32.xlu0 %v3017, 64
        %v3035 = vpop.permute.xlu0 %3034
        %3036 = vrot.lane.b32.xlu0 %v3018, 64
        %v3037 = vpop.permute.xlu0 %3036
        %3038 = vrot.lane.b32.xlu0 %v3019, 64
        %v3039 = vpop.permute.xlu0 %3038
        %3040 = vrot.lane.b32.xlu0 %v3020, 64
        %v3041 = vpop.permute.xlu0 %3040
        %3042 = vrot.lane.b32.xlu0 %v3021, 64
        %v3043 = vpop.permute.xlu0 %3042
        %3044 = vrot.lane.b32.xlu0 %v3022, 64
        %v3045 = vpop.permute.xlu0 %3044
        %3046 = vrot.lane.b32.xlu0 %v3023, 64
        %v3047 = vpop.permute.xlu0 %3046
        %3048 = vrot.lane.b32.xlu0 %v3024, 64
        %v3049 = vpop.permute.xlu0 %3048
        %3050 = vrot.lane.b32.xlu0 %v3025, 64
        %v3051 = vpop.permute.xlu0 %3050
        %3052 = vrot.lane.b32.xlu0 %v3026, 64
        %v3053 = vpop.permute.xlu0 %3052
        %3054 = vrot.lane.b32.xlu0 %v3027, 64
        %v3055 = vpop.permute.xlu0 %3054
        %3056 = vrot.lane.b32.xlu0 %v3028, 64
        %v3057 = vpop.permute.xlu0 %3056
        %3058 = vrot.lane.b32.xlu0 %v3029, 64
        %v3059 = vpop.permute.xlu0 %3058
        %3060 = vrot.lane.b32.xlu0 %v3030, 64
        %v3061 = vpop.permute.xlu0 %3060
        %3062 = vrot.lane.b32.xlu0 %v3031, 64
        %v3063 = vpop.permute.xlu0 %3062
        %3080 = vst.msk [vmem:[#allocation3 + $0x10] sm:$0xff] %vm1780, %v3033
        %3081 = vst.msk [vmem:[#allocation3 + $0x38] sm:$0xff] %vm1780, %v3035
        %3082 = vst.msk [vmem:[#allocation3 + $0x60] sm:$0xff] %vm1780, %v3037
        %3083 = vst.msk [vmem:[#allocation3 + $0x88] sm:$0xff] %vm1780, %v3039
        %3084 = vst.msk [vmem:[#allocation3 + $0xb0] sm:$0xff] %vm1780, %v3041
        %3085 = vst.msk [vmem:[#allocation3 + $0xd8] sm:$0xff] %vm1780, %v3043
        %3086 = vst.msk [vmem:[#allocation3 + $0x100] sm:$0xff] %vm1780, %v3045
        %3087 = vst.msk [vmem:[#allocation3 + $0x128] sm:$0xff] %vm1780, %v3047
        %3088 = vst.msk [vmem:[#allocation3 + $0x150] sm:$0xff] %vm1780, %v3049
        %3089 = vst.msk [vmem:[#allocation3 + $0x178] sm:$0xff] %vm1780, %v3051
        %3090 = vst.msk [vmem:[#allocation3 + $0x1a0] sm:$0xff] %vm1780, %v3053
        %3091 = vst.msk [vmem:[#allocation3 + $0x1c8] sm:$0xff] %vm1780, %v3055
        %3092 = vst.msk [vmem:[#allocation3 + $0x1f0] sm:$0xff] %vm1780, %v3057
        %3093 = vst.msk [vmem:[#allocation3 + $0x218] sm:$0xff] %vm1780, %v3059
        %3094 = vst.msk [vmem:[#allocation3 + $0x240] sm:$0xff] %vm1780, %v3061
        %3095 = vst.msk [vmem:[#allocation3 + $0x268] sm:$0xff] %vm1780, %v3063
        %s3096 = scalar_lea.vmem [#allocation2], 24
        %v3097 = vld [vmem:[%s3096] sm:$0xf]
        %v3098 = vld [vmem:[%s3096 + $0x4] sm:$0xf]
        %v3099 = vld [vmem:[%s3096 + $0xc] sm:$0xf]
        %v3100 = vld [vmem:[%s3096 + $0x10] sm:$0xf]
        %v3101 = vld [vmem:[%s3096 + $0x18] sm:$0xf]
        %v3102 = vld [vmem:[%s3096 + $0x1c] sm:$0xf]
        %v3103 = vld [vmem:[%s3096 + $0x24] sm:$0xf]
        %v3104 = vld [vmem:[%s3096 + $0x28] sm:$0xf]
        %v3105 = vld [vmem:[%s3096 + $0x30] sm:$0xf]
        %v3106 = vld [vmem:[%s3096 + $0x34] sm:$0xf]
        %v3107 = vld [vmem:[%s3096 + $0x3c] sm:$0xf]
        %v3108 = vld [vmem:[%s3096 + $0x40] sm:$0xf]
        %v3109 = vld [vmem:[%s3096 + $0x48] sm:$0xf]
        %v3110 = vld [vmem:[%s3096 + $0x4c] sm:$0xf]
        %v3111 = vld [vmem:[%s3096 + $0x54] sm:$0xf]
        %v3112 = vld [vmem:[%s3096 + $0x58] sm:$0xf]
        %v3113 = vld [vmem:[%s3096 + $0x60] sm:$0xf]
        %v3114 = vld [vmem:[%s3096 + $0x64] sm:$0xf]
        %v3115 = vld [vmem:[%s3096 + $0x6c] sm:$0xf]
        %v3116 = vld [vmem:[%s3096 + $0x70] sm:$0xf]
        %v3117 = vld [vmem:[%s3096 + $0x78] sm:$0xf]
        %v3118 = vld [vmem:[%s3096 + $0x7c] sm:$0xf]
        %v3119 = vld [vmem:[%s3096 + $0x84] sm:$0xf]
        %v3120 = vld [vmem:[%s3096 + $0x88] sm:$0xf]
        %v3121 = vld [vmem:[%s3096 + $0x90] sm:$0xf]
        %v3122 = vld [vmem:[%s3096 + $0x94] sm:$0xf]
        %v3123 = vld [vmem:[%s3096 + $0x9c] sm:$0xf]
        %v3124 = vld [vmem:[%s3096 + $0xa0] sm:$0xf]
        %v3125 = vld [vmem:[%s3096 + $0xa8] sm:$0xf]
        %v3126 = vld [vmem:[%s3096 + $0xac] sm:$0xf]
        %v3127 = vld [vmem:[%s3096 + $0xb4] sm:$0xf]
        %v3128 = vld [vmem:[%s3096 + $0xb8] sm:$0xf]
        %v3161 = vunpack.c.l.b16 %v3097
        %v3162 = vunpack.c.l.b16 %v3098
        %v3163 = vunpack.c.l.b16 %v3099
        %v3164 = vunpack.c.l.b16 %v3100
        %v3165 = vunpack.c.l.b16 %v3101
        %v3166 = vunpack.c.l.b16 %v3102
        %v3167 = vunpack.c.l.b16 %v3103
        %v3168 = vunpack.c.l.b16 %v3104
        %v3169 = vunpack.c.l.b16 %v3105
        %v3170 = vunpack.c.l.b16 %v3106
        %v3171 = vunpack.c.l.b16 %v3107
        %v3172 = vunpack.c.l.b16 %v3108
        %v3173 = vunpack.c.l.b16 %v3109
        %v3174 = vunpack.c.l.b16 %v3110
        %v3175 = vunpack.c.l.b16 %v3111
        %v3176 = vunpack.c.l.b16 %v3112
        %v3177 = vunpack.c.l.b16 %v3113
        %v3178 = vunpack.c.l.b16 %v3114
        %v3179 = vunpack.c.l.b16 %v3115
        %v3180 = vunpack.c.l.b16 %v3116
        %v3181 = vunpack.c.l.b16 %v3117
        %v3182 = vunpack.c.l.b16 %v3118
        %v3183 = vunpack.c.l.b16 %v3119
        %v3184 = vunpack.c.l.b16 %v3120
        %v3185 = vunpack.c.l.b16 %v3121
        %v3186 = vunpack.c.l.b16 %v3122
        %v3187 = vunpack.c.l.b16 %v3123
        %v3188 = vunpack.c.l.b16 %v3124
        %v3189 = vunpack.c.l.b16 %v3125
        %v3190 = vunpack.c.l.b16 %v3126
        %v3191 = vunpack.c.l.b16 %v3127
        %v3192 = vunpack.c.l.b16 %v3128
        %v3193 = vpack.c.b16 %v3162, %v3161
        %v3194 = vpack.c.b16 %v3164, %v3163
        %v3195 = vpack.c.b16 %v3166, %v3165
        %v3196 = vpack.c.b16 %v3168, %v3167
        %v3197 = vpack.c.b16 %v3170, %v3169
        %v3198 = vpack.c.b16 %v3172, %v3171
        %v3199 = vpack.c.b16 %v3174, %v3173
        %v3200 = vpack.c.b16 %v3176, %v3175
        %v3201 = vpack.c.b16 %v3178, %v3177
        %v3202 = vpack.c.b16 %v3180, %v3179
        %v3203 = vpack.c.b16 %v3182, %v3181
        %v3204 = vpack.c.b16 %v3184, %v3183
        %v3205 = vpack.c.b16 %v3186, %v3185
        %v3206 = vpack.c.b16 %v3188, %v3187
        %v3207 = vpack.c.b16 %v3190, %v3189
        %v3208 = vpack.c.b16 %v3192, %v3191
        %3225 = vst.msk [vmem:[#allocation3 + $0x18] sm:$0xff] %vm1232, %v3193
        %3226 = vst.msk [vmem:[#allocation3 + $0x40] sm:$0xff] %vm1232, %v3194
        %3227 = vst.msk [vmem:[#allocation3 + $0x68] sm:$0xff] %vm1232, %v3195
        %3228 = vst.msk [vmem:[#allocation3 + $0x90] sm:$0xff] %vm1232, %v3196
        %3229 = vst.msk [vmem:[#allocation3 + $0xb8] sm:$0xff] %vm1232, %v3197
        %3230 = vst.msk [vmem:[#allocation3 + $0xe0] sm:$0xff] %vm1232, %v3198
        %3231 = vst.msk [vmem:[#allocation3 + $0x108] sm:$0xff] %vm1232, %v3199
        %3232 = vst.msk [vmem:[#allocation3 + $0x130] sm:$0xff] %vm1232, %v3200
        %3233 = vst.msk [vmem:[#allocation3 + $0x158] sm:$0xff] %vm1232, %v3201
        %3234 = vst.msk [vmem:[#allocation3 + $0x180] sm:$0xff] %vm1232, %v3202
        %3235 = vst.msk [vmem:[#allocation3 + $0x1a8] sm:$0xff] %vm1232, %v3203
        %3236 = vst.msk [vmem:[#allocation3 + $0x1d0] sm:$0xff] %vm1232, %v3204
        %3237 = vst.msk [vmem:[#allocation3 + $0x1f8] sm:$0xff] %vm1232, %v3205
        %3238 = vst.msk [vmem:[#allocation3 + $0x220] sm:$0xff] %vm1232, %v3206
        %3239 = vst.msk [vmem:[#allocation3 + $0x248] sm:$0xff] %vm1232, %v3207
        %3240 = vst.msk [vmem:[#allocation3 + $0x270] sm:$0xff] %vm1232, %v3208
        %v3241 = vld [vmem:[%s3096] sm:$0xf]
        %v3242 = vld [vmem:[%s3096 + $0x4] sm:$0xf]
        %v3243 = vld [vmem:[%s3096 + $0x8] sm:$0x1]
        %v3244 = vld [vmem:[%s3096 + $0xc] sm:$0xf]
        %v3245 = vld [vmem:[%s3096 + $0x10] sm:$0xf]
        %v3246 = vld [vmem:[%s3096 + $0x14] sm:$0x1]
        %v3247 = vld [vmem:[%s3096 + $0x18] sm:$0xf]
        %v3248 = vld [vmem:[%s3096 + $0x1c] sm:$0xf]
        %v3249 = vld [vmem:[%s3096 + $0x20] sm:$0x1]
        %v3250 = vld [vmem:[%s3096 + $0x24] sm:$0xf]
        %v3251 = vld [vmem:[%s3096 + $0x28] sm:$0xf]
        %v3252 = vld [vmem:[%s3096 + $0x2c] sm:$0x1]
        %v3253 = vld [vmem:[%s3096 + $0x30] sm:$0xf]
        %v3254 = vld [vmem:[%s3096 + $0x34] sm:$0xf]
        %v3255 = vld [vmem:[%s3096 + $0x38] sm:$0x1]
        %v3256 = vld [vmem:[%s3096 + $0x3c] sm:$0xf]
        %v3257 = vld [vmem:[%s3096 + $0x40] sm:$0xf]
        %v3258 = vld [vmem:[%s3096 + $0x44] sm:$0x1]
        %v3259 = vld [vmem:[%s3096 + $0x48] sm:$0xf]
        %v3260 = vld [vmem:[%s3096 + $0x4c] sm:$0xf]
        %v3261 = vld [vmem:[%s3096 + $0x50] sm:$0x1]
        %v3262 = vld [vmem:[%s3096 + $0x54] sm:$0xf]
        %v3263 = vld [vmem:[%s3096 + $0x58] sm:$0xf]
        %v3264 = vld [vmem:[%s3096 + $0x5c] sm:$0x1]
        %v3265 = vld [vmem:[%s3096 + $0x60] sm:$0xf]
        %v3266 = vld [vmem:[%s3096 + $0x64] sm:$0xf]
        %v3267 = vld [vmem:[%s3096 + $0x68] sm:$0x1]
        %v3268 = vld [vmem:[%s3096 + $0x6c] sm:$0xf]
        %v3269 = vld [vmem:[%s3096 + $0x70] sm:$0xf]
        %v3270 = vld [vmem:[%s3096 + $0x74] sm:$0x1]
        %v3271 = vld [vmem:[%s3096 + $0x78] sm:$0xf]
        %v3272 = vld [vmem:[%s3096 + $0x7c] sm:$0xf]
        %v3273 = vld [vmem:[%s3096 + $0x80] sm:$0x1]
        %v3274 = vld [vmem:[%s3096 + $0x84] sm:$0xf]
        %v3275 = vld [vmem:[%s3096 + $0x88] sm:$0xf]
        %v3276 = vld [vmem:[%s3096 + $0x8c] sm:$0x1]
        %v3277 = vld [vmem:[%s3096 + $0x90] sm:$0xf]
        %v3278 = vld [vmem:[%s3096 + $0x94] sm:$0xf]
        %v3279 = vld [vmem:[%s3096 + $0x98] sm:$0x1]
        %v3280 = vld [vmem:[%s3096 + $0x9c] sm:$0xf]
        %v3281 = vld [vmem:[%s3096 + $0xa0] sm:$0xf]
        %v3282 = vld [vmem:[%s3096 + $0xa4] sm:$0x1]
        %v3283 = vld [vmem:[%s3096 + $0xa8] sm:$0xf]
        %v3284 = vld [vmem:[%s3096 + $0xac] sm:$0xf]
        %v3285 = vld [vmem:[%s3096 + $0xb0] sm:$0x1]
        %v3286 = vld [vmem:[%s3096 + $0xb4] sm:$0xf]
        %v3287 = vld [vmem:[%s3096 + $0xb8] sm:$0xf]
        %v3288 = vld [vmem:[%s3096 + $0xbc] sm:$0x1]
        %v3290 = vshrl.u32 %v3241, 16
        %v3292 = vrot.slane %v3290, 4
        %v3293 = vshll.u32 %v3241, 16
        %v3295 = vrot.slane %v3293, 5
        %v3296 = vor.u32 %v3292, %v3295
        %v3297 = vrot.slane %v3296, 4
        %v3299 = vshll.u32 %v3242, 16
        %v3301 = vrot.slane %v3299, 5
        %v3302 = vsel %vm1299, %v3297, %v3301
        %v3303 = vshrl.u32 %v3242, 16
        %v3305 = vrot.slane %v3303, 4
        %v3306 = vor.u32 %v3305, %v3301
        %v3307 = vrot.slane %v3306, 4
        %v3309 = vshll.u32 %v3243, 16
        %v3311 = vrot.slane %v3309, 5
        %v3312 = vsel %vm1299, %v3307, %v3311
        %v3314 = vshrl.u32 %v3244, 16
        %v3316 = vrot.slane %v3314, 4
        %v3317 = vshll.u32 %v3244, 16
        %v3319 = vrot.slane %v3317, 5
        %v3320 = vor.u32 %v3316, %v3319
        %v3321 = vrot.slane %v3320, 4
        %v3323 = vshll.u32 %v3245, 16
        %v3325 = vrot.slane %v3323, 5
        %v3326 = vsel %vm1299, %v3321, %v3325
        %v3327 = vshrl.u32 %v3245, 16
        %v3329 = vrot.slane %v3327, 4
        %v3330 = vor.u32 %v3329, %v3325
        %v3331 = vrot.slane %v3330, 4
        %v3333 = vshll.u32 %v3246, 16
        %v3335 = vrot.slane %v3333, 5
        %v3336 = vsel %vm1299, %v3331, %v3335
        %v3338 = vshrl.u32 %v3247, 16
        %v3340 = vrot.slane %v3338, 4
        %v3341 = vshll.u32 %v3247, 16
        %v3343 = vrot.slane %v3341, 5
        %v3344 = vor.u32 %v3340, %v3343
        %v3345 = vrot.slane %v3344, 4
        %v3347 = vshll.u32 %v3248, 16
        %v3349 = vrot.slane %v3347, 5
        %v3350 = vsel %vm1299, %v3345, %v3349
        %v3351 = vshrl.u32 %v3248, 16
        %v3353 = vrot.slane %v3351, 4
        %v3354 = vor.u32 %v3353, %v3349
        %v3355 = vrot.slane %v3354, 4
        %v3357 = vshll.u32 %v3249, 16
        %v3359 = vrot.slane %v3357, 5
        %v3360 = vsel %vm1299, %v3355, %v3359
        %v3362 = vshrl.u32 %v3250, 16
        %v3364 = vrot.slane %v3362, 4
        %v3365 = vshll.u32 %v3250, 16
        %v3367 = vrot.slane %v3365, 5
        %v3368 = vor.u32 %v3364, %v3367
        %v3369 = vrot.slane %v3368, 4
        %v3371 = vshll.u32 %v3251, 16
        %v3373 = vrot.slane %v3371, 5
        %v3374 = vsel %vm1299, %v3369, %v3373
        %v3375 = vshrl.u32 %v3251, 16
        %v3377 = vrot.slane %v3375, 4
        %v3378 = vor.u32 %v3377, %v3373
        %v3379 = vrot.slane %v3378, 4
        %v3381 = vshll.u32 %v3252, 16
        %v3383 = vrot.slane %v3381, 5
        %v3384 = vsel %vm1299, %v3379, %v3383
        %v3386 = vshrl.u32 %v3253, 16
        %v3388 = vrot.slane %v3386, 4
        %v3389 = vshll.u32 %v3253, 16
        %v3391 = vrot.slane %v3389, 5
        %v3392 = vor.u32 %v3388, %v3391
        %v3393 = vrot.slane %v3392, 4
        %v3395 = vshll.u32 %v3254, 16
        %v3397 = vrot.slane %v3395, 5
        %v3398 = vsel %vm1299, %v3393, %v3397
        %v3399 = vshrl.u32 %v3254, 16
        %v3401 = vrot.slane %v3399, 4
        %v3402 = vor.u32 %v3401, %v3397
        %v3403 = vrot.slane %v3402, 4
        %v3405 = vshll.u32 %v3255, 16
        %v3407 = vrot.slane %v3405, 5
        %v3408 = vsel %vm1299, %v3403, %v3407
        %v3410 = vshrl.u32 %v3256, 16
        %v3412 = vrot.slane %v3410, 4
        %v3413 = vshll.u32 %v3256, 16
        %v3415 = vrot.slane %v3413, 5
        %v3416 = vor.u32 %v3412, %v3415
        %v3417 = vrot.slane %v3416, 4
        %v3419 = vshll.u32 %v3257, 16
        %v3421 = vrot.slane %v3419, 5
        %v3422 = vsel %vm1299, %v3417, %v3421
        %v3423 = vshrl.u32 %v3257, 16
        %v3425 = vrot.slane %v3423, 4
        %v3426 = vor.u32 %v3425, %v3421
        %v3427 = vrot.slane %v3426, 4
        %v3429 = vshll.u32 %v3258, 16
        %v3431 = vrot.slane %v3429, 5
        %v3432 = vsel %vm1299, %v3427, %v3431
        %v3434 = vshrl.u32 %v3259, 16
        %v3436 = vrot.slane %v3434, 4
        %v3437 = vshll.u32 %v3259, 16
        %v3439 = vrot.slane %v3437, 5
        %v3440 = vor.u32 %v3436, %v3439
        %v3441 = vrot.slane %v3440, 4
        %v3443 = vshll.u32 %v3260, 16
        %v3445 = vrot.slane %v3443, 5
        %v3446 = vsel %vm1299, %v3441, %v3445
        %v3447 = vshrl.u32 %v3260, 16
        %v3449 = vrot.slane %v3447, 4
        %v3450 = vor.u32 %v3449, %v3445
        %v3451 = vrot.slane %v3450, 4
        %v3453 = vshll.u32 %v3261, 16
        %v3455 = vrot.slane %v3453, 5
        %v3456 = vsel %vm1299, %v3451, %v3455
        %v3458 = vshrl.u32 %v3262, 16
        %v3460 = vrot.slane %v3458, 4
        %v3461 = vshll.u32 %v3262, 16
        %v3463 = vrot.slane %v3461, 5
        %v3464 = vor.u32 %v3460, %v3463
        %v3465 = vrot.slane %v3464, 4
        %v3467 = vshll.u32 %v3263, 16
        %v3469 = vrot.slane %v3467, 5
        %v3470 = vsel %vm1299, %v3465, %v3469
        %v3471 = vshrl.u32 %v3263, 16
        %v3473 = vrot.slane %v3471, 4
        %v3474 = vor.u32 %v3473, %v3469
        %v3475 = vrot.slane %v3474, 4
        %v3477 = vshll.u32 %v3264, 16
        %v3479 = vrot.slane %v3477, 5
        %v3480 = vsel %vm1299, %v3475, %v3479
        %v3482 = vshrl.u32 %v3265, 16
        %v3484 = vrot.slane %v3482, 4
        %v3485 = vshll.u32 %v3265, 16
        %v3487 = vrot.slane %v3485, 5
        %v3488 = vor.u32 %v3484, %v3487
        %v3489 = vrot.slane %v3488, 4
        %v3491 = vshll.u32 %v3266, 16
        %v3493 = vrot.slane %v3491, 5
        %v3494 = vsel %vm1299, %v3489, %v3493
        %v3495 = vshrl.u32 %v3266, 16
        %v3497 = vrot.slane %v3495, 4
        %v3498 = vor.u32 %v3497, %v3493
        %v3499 = vrot.slane %v3498, 4
        %v3501 = vshll.u32 %v3267, 16
        %v3503 = vrot.slane %v3501, 5
        %v3504 = vsel %vm1299, %v3499, %v3503
        %v3506 = vshrl.u32 %v3268, 16
        %v3508 = vrot.slane %v3506, 4
        %v3509 = vshll.u32 %v3268, 16
        %v3511 = vrot.slane %v3509, 5
        %v3512 = vor.u32 %v3508, %v3511
        %v3513 = vrot.slane %v3512, 4
        %v3515 = vshll.u32 %v3269, 16
        %v3517 = vrot.slane %v3515, 5
        %v3518 = vsel %vm1299, %v3513, %v3517
        %v3519 = vshrl.u32 %v3269, 16
        %v3521 = vrot.slane %v3519, 4
        %v3522 = vor.u32 %v3521, %v3517
        %v3523 = vrot.slane %v3522, 4
        %v3525 = vshll.u32 %v3270, 16
        %v3527 = vrot.slane %v3525, 5
        %v3528 = vsel %vm1299, %v3523, %v3527
        %v3530 = vshrl.u32 %v3271, 16
        %v3532 = vrot.slane %v3530, 4
        %v3533 = vshll.u32 %v3271, 16
        %v3535 = vrot.slane %v3533, 5
        %v3536 = vor.u32 %v3532, %v3535
        %v3537 = vrot.slane %v3536, 4
        %v3539 = vshll.u32 %v3272, 16
        %v3541 = vrot.slane %v3539, 5
        %v3542 = vsel %vm1299, %v3537, %v3541
        %v3543 = vshrl.u32 %v3272, 16
        %v3545 = vrot.slane %v3543, 4
        %v3546 = vor.u32 %v3545, %v3541
        %v3547 = vrot.slane %v3546, 4
        %v3549 = vshll.u32 %v3273, 16
        %v3551 = vrot.slane %v3549, 5
        %v3552 = vsel %vm1299, %v3547, %v3551
        %v3554 = vshrl.u32 %v3274, 16
        %v3556 = vrot.slane %v3554, 4
        %v3557 = vshll.u32 %v3274, 16
        %v3559 = vrot.slane %v3557, 5
        %v3560 = vor.u32 %v3556, %v3559
        %v3561 = vrot.slane %v3560, 4
        %v3563 = vshll.u32 %v3275, 16
        %v3565 = vrot.slane %v3563, 5
        %v3566 = vsel %vm1299, %v3561, %v3565
        %v3567 = vshrl.u32 %v3275, 16
        %v3569 = vrot.slane %v3567, 4
        %v3570 = vor.u32 %v3569, %v3565
        %v3571 = vrot.slane %v3570, 4
        %v3573 = vshll.u32 %v3276, 16
        %v3575 = vrot.slane %v3573, 5
        %v3576 = vsel %vm1299, %v3571, %v3575
        %v3578 = vshrl.u32 %v3277, 16
        %v3580 = vrot.slane %v3578, 4
        %v3581 = vshll.u32 %v3277, 16
        %v3583 = vrot.slane %v3581, 5
        %v3584 = vor.u32 %v3580, %v3583
        %v3585 = vrot.slane %v3584, 4
        %v3587 = vshll.u32 %v3278, 16
        %v3589 = vrot.slane %v3587, 5
        %v3590 = vsel %vm1299, %v3585, %v3589
        %v3591 = vshrl.u32 %v3278, 16
        %v3593 = vrot.slane %v3591, 4
        %v3594 = vor.u32 %v3593, %v3589
        %v3595 = vrot.slane %v3594, 4
        %v3597 = vshll.u32 %v3279, 16
        %v3599 = vrot.slane %v3597, 5
        %v3600 = vsel %vm1299, %v3595, %v3599
        %v3602 = vshrl.u32 %v3280, 16
        %v3604 = vrot.slane %v3602, 4
        %v3605 = vshll.u32 %v3280, 16
        %v3607 = vrot.slane %v3605, 5
        %v3608 = vor.u32 %v3604, %v3607
        %v3609 = vrot.slane %v3608, 4
        %v3611 = vshll.u32 %v3281, 16
        %v3613 = vrot.slane %v3611, 5
        %v3614 = vsel %vm1299, %v3609, %v3613
        %v3615 = vshrl.u32 %v3281, 16
        %v3617 = vrot.slane %v3615, 4
        %v3618 = vor.u32 %v3617, %v3613
        %v3619 = vrot.slane %v3618, 4
        %v3621 = vshll.u32 %v3282, 16
        %v3623 = vrot.slane %v3621, 5
        %v3624 = vsel %vm1299, %v3619, %v3623
        %v3626 = vshrl.u32 %v3283, 16
        %v3628 = vrot.slane %v3626, 4
        %v3629 = vshll.u32 %v3283, 16
        %v3631 = vrot.slane %v3629, 5
        %v3632 = vor.u32 %v3628, %v3631
        %v3633 = vrot.slane %v3632, 4
        %v3635 = vshll.u32 %v3284, 16
        %v3637 = vrot.slane %v3635, 5
        %v3638 = vsel %vm1299, %v3633, %v3637
        %v3639 = vshrl.u32 %v3284, 16
        %v3641 = vrot.slane %v3639, 4
        %v3642 = vor.u32 %v3641, %v3637
        %v3643 = vrot.slane %v3642, 4
        %v3645 = vshll.u32 %v3285, 16
        %v3647 = vrot.slane %v3645, 5
        %v3648 = vsel %vm1299, %v3643, %v3647
        %v3650 = vshrl.u32 %v3286, 16
        %v3652 = vrot.slane %v3650, 4
        %v3653 = vshll.u32 %v3286, 16
        %v3655 = vrot.slane %v3653, 5
        %v3656 = vor.u32 %v3652, %v3655
        %v3657 = vrot.slane %v3656, 4
        %v3659 = vshll.u32 %v3287, 16
        %v3661 = vrot.slane %v3659, 5
        %v3662 = vsel %vm1299, %v3657, %v3661
        %v3663 = vshrl.u32 %v3287, 16
        %v3665 = vrot.slane %v3663, 4
        %v3666 = vor.u32 %v3665, %v3661
        %v3667 = vrot.slane %v3666, 4
        %v3669 = vshll.u32 %v3288, 16
        %v3671 = vrot.slane %v3669, 5
        %v3672 = vsel %vm1299, %v3667, %v3671
        %v3673 = vunpack.c.l.b16 %v3302
        %v3674 = vunpack.c.l.b16 %v3312
        %v3675 = vunpack.c.l.b16 %v3326
        %v3676 = vunpack.c.l.b16 %v3336
        %v3677 = vunpack.c.l.b16 %v3350
        %v3678 = vunpack.c.l.b16 %v3360
        %v3679 = vunpack.c.l.b16 %v3374
        %v3680 = vunpack.c.l.b16 %v3384
        %v3681 = vunpack.c.l.b16 %v3398
        %v3682 = vunpack.c.l.b16 %v3408
        %v3683 = vunpack.c.l.b16 %v3422
        %v3684 = vunpack.c.l.b16 %v3432
        %v3685 = vunpack.c.l.b16 %v3446
        %v3686 = vunpack.c.l.b16 %v3456
        %v3687 = vunpack.c.l.b16 %v3470
        %v3688 = vunpack.c.l.b16 %v3480
        %v3689 = vunpack.c.l.b16 %v3494
        %v3690 = vunpack.c.l.b16 %v3504
        %v3691 = vunpack.c.l.b16 %v3518
        %v3692 = vunpack.c.l.b16 %v3528
        %v3693 = vunpack.c.l.b16 %v3542
        %v3694 = vunpack.c.l.b16 %v3552
        %v3695 = vunpack.c.l.b16 %v3566
        %v3696 = vunpack.c.l.b16 %v3576
        %v3697 = vunpack.c.l.b16 %v3590
        %v3698 = vunpack.c.l.b16 %v3600
        %v3699 = vunpack.c.l.b16 %v3614
        %v3700 = vunpack.c.l.b16 %v3624
        %v3701 = vunpack.c.l.b16 %v3638
        %v3702 = vunpack.c.l.b16 %v3648
        %v3703 = vunpack.c.l.b16 %v3662
        %v3704 = vunpack.c.l.b16 %v3672
        %v3705 = vpack.c.b16 %v3674, %v3673
        %v3706 = vpack.c.b16 %v3676, %v3675
        %v3707 = vpack.c.b16 %v3678, %v3677
        %v3708 = vpack.c.b16 %v3680, %v3679
        %v3709 = vpack.c.b16 %v3682, %v3681
        %v3710 = vpack.c.b16 %v3684, %v3683
        %v3711 = vpack.c.b16 %v3686, %v3685
        %v3712 = vpack.c.b16 %v3688, %v3687
        %v3713 = vpack.c.b16 %v3690, %v3689
        %v3714 = vpack.c.b16 %v3692, %v3691
        %v3715 = vpack.c.b16 %v3694, %v3693
        %v3716 = vpack.c.b16 %v3696, %v3695
        %v3717 = vpack.c.b16 %v3698, %v3697
        %v3718 = vpack.c.b16 %v3700, %v3699
        %v3719 = vpack.c.b16 %v3702, %v3701
        %v3720 = vpack.c.b16 %v3704, %v3703
        %3721 = vrot.lane.b32.xlu0 %v3705, 64
        %v3722 = vpop.permute.xlu0 %3721
        %3723 = vrot.lane.b32.xlu0 %v3706, 64
        %v3724 = vpop.permute.xlu0 %3723
        %3725 = vrot.lane.b32.xlu0 %v3707, 64
        %v3726 = vpop.permute.xlu0 %3725
        %3727 = vrot.lane.b32.xlu0 %v3708, 64
        %v3728 = vpop.permute.xlu0 %3727
        %3729 = vrot.lane.b32.xlu0 %v3709, 64
        %v3730 = vpop.permute.xlu0 %3729
        %3731 = vrot.lane.b32.xlu0 %v3710, 64
        %v3732 = vpop.permute.xlu0 %3731
        %3733 = vrot.lane.b32.xlu0 %v3711, 64
        %v3734 = vpop.permute.xlu0 %3733
        %3735 = vrot.lane.b32.xlu0 %v3712, 64
        %v3736 = vpop.permute.xlu0 %3735
        %3737 = vrot.lane.b32.xlu0 %v3713, 64
        %v3738 = vpop.permute.xlu0 %3737
        %3739 = vrot.lane.b32.xlu0 %v3714, 64
        %v3740 = vpop.permute.xlu0 %3739
        %3741 = vrot.lane.b32.xlu0 %v3715, 64
        %v3742 = vpop.permute.xlu0 %3741
        %3743 = vrot.lane.b32.xlu0 %v3716, 64
        %v3744 = vpop.permute.xlu0 %3743
        %3745 = vrot.lane.b32.xlu0 %v3717, 64
        %v3746 = vpop.permute.xlu0 %3745
        %3747 = vrot.lane.b32.xlu0 %v3718, 64
        %v3748 = vpop.permute.xlu0 %3747
        %3749 = vrot.lane.b32.xlu0 %v3719, 64
        %v3750 = vpop.permute.xlu0 %3749
        %3751 = vrot.lane.b32.xlu0 %v3720, 64
        %v3752 = vpop.permute.xlu0 %3751
        %3769 = vst.msk [vmem:[#allocation3 + $0x18] sm:$0xff] %vm1780, %v3722
        %3770 = vst.msk [vmem:[#allocation3 + $0x40] sm:$0xff] %vm1780, %v3724
        %3771 = vst.msk [vmem:[#allocation3 + $0x68] sm:$0xff] %vm1780, %v3726
        %3772 = vst.msk [vmem:[#allocation3 + $0x90] sm:$0xff] %vm1780, %v3728
        %3773 = vst.msk [vmem:[#allocation3 + $0xb8] sm:$0xff] %vm1780, %v3730
        %3774 = vst.msk [vmem:[#allocation3 + $0xe0] sm:$0xff] %vm1780, %v3732
        %3775 = vst.msk [vmem:[#allocation3 + $0x108] sm:$0xff] %vm1780, %v3734
        %3776 = vst.msk [vmem:[#allocation3 + $0x130] sm:$0xff] %vm1780, %v3736
        %3777 = vst.msk [vmem:[#allocation3 + $0x158] sm:$0xff] %vm1780, %v3738
        %3778 = vst.msk [vmem:[#allocation3 + $0x180] sm:$0xff] %vm1780, %v3740
        %3779 = vst.msk [vmem:[#allocation3 + $0x1a8] sm:$0xff] %vm1780, %v3742
        %3780 = vst.msk [vmem:[#allocation3 + $0x1d0] sm:$0xff] %vm1780, %v3744
        %3781 = vst.msk [vmem:[#allocation3 + $0x1f8] sm:$0xff] %vm1780, %v3746
        %3782 = vst.msk [vmem:[#allocation3 + $0x220] sm:$0xff] %vm1780, %v3748
        %3783 = vst.msk [vmem:[#allocation3 + $0x248] sm:$0xff] %vm1780, %v3750
        %3784 = vst.msk [vmem:[#allocation3 + $0x270] sm:$0xff] %vm1780, %v3752
        %v3785 = vld [vmem:[%s3096] sm:$0xe]
        %v3786 = vld [vmem:[%s3096 + $0x4] sm:$0xf]
        %v3787 = vld [vmem:[%s3096 + $0x8] sm:$0x1]
        %v3788 = vld [vmem:[%s3096 + $0xc] sm:$0xe]
        %v3789 = vld [vmem:[%s3096 + $0x10] sm:$0xf]
        %v3790 = vld [vmem:[%s3096 + $0x14] sm:$0x1]
        %v3791 = vld [vmem:[%s3096 + $0x18] sm:$0xe]
        %v3792 = vld [vmem:[%s3096 + $0x1c] sm:$0xf]
        %v3793 = vld [vmem:[%s3096 + $0x20] sm:$0x1]
        %v3794 = vld [vmem:[%s3096 + $0x24] sm:$0xe]
        %v3795 = vld [vmem:[%s3096 + $0x28] sm:$0xf]
        %v3796 = vld [vmem:[%s3096 + $0x2c] sm:$0x1]
        %v3797 = vld [vmem:[%s3096 + $0x30] sm:$0xe]
        %v3798 = vld [vmem:[%s3096 + $0x34] sm:$0xf]
        %v3799 = vld [vmem:[%s3096 + $0x38] sm:$0x1]
        %v3800 = vld [vmem:[%s3096 + $0x3c] sm:$0xe]
        %v3801 = vld [vmem:[%s3096 + $0x40] sm:$0xf]
        %v3802 = vld [vmem:[%s3096 + $0x44] sm:$0x1]
        %v3803 = vld [vmem:[%s3096 + $0x48] sm:$0xe]
        %v3804 = vld [vmem:[%s3096 + $0x4c] sm:$0xf]
        %v3805 = vld [vmem:[%s3096 + $0x50] sm:$0x1]
        %v3806 = vld [vmem:[%s3096 + $0x54] sm:$0xe]
        %v3807 = vld [vmem:[%s3096 + $0x58] sm:$0xf]
        %v3808 = vld [vmem:[%s3096 + $0x5c] sm:$0x1]
        %v3809 = vld [vmem:[%s3096 + $0x60] sm:$0xe]
        %v3810 = vld [vmem:[%s3096 + $0x64] sm:$0xf]
        %v3811 = vld [vmem:[%s3096 + $0x68] sm:$0x1]
        %v3812 = vld [vmem:[%s3096 + $0x6c] sm:$0xe]
        %v3813 = vld [vmem:[%s3096 + $0x70] sm:$0xf]
        %v3814 = vld [vmem:[%s3096 + $0x74] sm:$0x1]
        %v3815 = vld [vmem:[%s3096 + $0x78] sm:$0xe]
        %v3816 = vld [vmem:[%s3096 + $0x7c] sm:$0xf]
        %v3817 = vld [vmem:[%s3096 + $0x80] sm:$0x1]
        %v3818 = vld [vmem:[%s3096 + $0x84] sm:$0xe]
        %v3819 = vld [vmem:[%s3096 + $0x88] sm:$0xf]
        %v3820 = vld [vmem:[%s3096 + $0x8c] sm:$0x1]
        %v3821 = vld [vmem:[%s3096 + $0x90] sm:$0xe]
        %v3822 = vld [vmem:[%s3096 + $0x94] sm:$0xf]
        %v3823 = vld [vmem:[%s3096 + $0x98] sm:$0x1]
        %v3824 = vld [vmem:[%s3096 + $0x9c] sm:$0xe]
        %v3825 = vld [vmem:[%s3096 + $0xa0] sm:$0xf]
        %v3826 = vld [vmem:[%s3096 + $0xa4] sm:$0x1]
        %v3827 = vld [vmem:[%s3096 + $0xa8] sm:$0xe]
        %v3828 = vld [vmem:[%s3096 + $0xac] sm:$0xf]
        %v3829 = vld [vmem:[%s3096 + $0xb0] sm:$0x1]
        %v3830 = vld [vmem:[%s3096 + $0xb4] sm:$0xe]
        %v3831 = vld [vmem:[%s3096 + $0xb8] sm:$0xf]
        %v3832 = vld [vmem:[%s3096 + $0xbc] sm:$0x1]
        %v3881 = vrot.slane %v3785, 5
        %v3882 = vrot.slane %v3881, 4
        %v3883 = vrot.slane %v3786, 5
        %v3884 = vsel %vm1895, %v3882, %v3883
        %v3885 = vrot.slane %v3883, 4
        %v3886 = vrot.slane %v3787, 5
        %v3887 = vsel %vm1895, %v3885, %v3886
        %v3888 = vrot.slane %v3788, 5
        %v3889 = vrot.slane %v3888, 4
        %v3890 = vrot.slane %v3789, 5
        %v3891 = vsel %vm1895, %v3889, %v3890
        %v3892 = vrot.slane %v3890, 4
        %v3893 = vrot.slane %v3790, 5
        %v3894 = vsel %vm1895, %v3892, %v3893
        %v3895 = vrot.slane %v3791, 5
        %v3896 = vrot.slane %v3895, 4
        %v3897 = vrot.slane %v3792, 5
        %v3898 = vsel %vm1895, %v3896, %v3897
        %v3899 = vrot.slane %v3897, 4
        %v3900 = vrot.slane %v3793, 5
        %v3901 = vsel %vm1895, %v3899, %v3900
        %v3902 = vrot.slane %v3794, 5
        %v3903 = vrot.slane %v3902, 4
        %v3904 = vrot.slane %v3795, 5
        %v3905 = vsel %vm1895, %v3903, %v3904
        %v3906 = vrot.slane %v3904, 4
        %v3907 = vrot.slane %v3796, 5
        %v3908 = vsel %vm1895, %v3906, %v3907
        %v3909 = vrot.slane %v3797, 5
        %v3910 = vrot.slane %v3909, 4
        %v3911 = vrot.slane %v3798, 5
        %v3912 = vsel %vm1895, %v3910, %v3911
        %v3913 = vrot.slane %v3911, 4
        %v3914 = vrot.slane %v3799, 5
        %v3915 = vsel %vm1895, %v3913, %v3914
        %v3916 = vrot.slane %v3800, 5
        %v3917 = vrot.slane %v3916, 4
        %v3918 = vrot.slane %v3801, 5
        %v3919 = vsel %vm1895, %v3917, %v3918
        %v3920 = vrot.slane %v3918, 4
        %v3921 = vrot.slane %v3802, 5
        %v3922 = vsel %vm1895, %v3920, %v3921
        %v3923 = vrot.slane %v3803, 5
        %v3924 = vrot.slane %v3923, 4
        %v3925 = vrot.slane %v3804, 5
        %v3926 = vsel %vm1895, %v3924, %v3925
        %v3927 = vrot.slane %v3925, 4
        %v3928 = vrot.slane %v3805, 5
        %v3929 = vsel %vm1895, %v3927, %v3928
        %v3930 = vrot.slane %v3806, 5
        %v3931 = vrot.slane %v3930, 4
        %v3932 = vrot.slane %v3807, 5
        %v3933 = vsel %vm1895, %v3931, %v3932
        %v3934 = vrot.slane %v3932, 4
        %v3935 = vrot.slane %v3808, 5
        %v3936 = vsel %vm1895, %v3934, %v3935
        %v3937 = vrot.slane %v3809, 5
        %v3938 = vrot.slane %v3937, 4
        %v3939 = vrot.slane %v3810, 5
        %v3940 = vsel %vm1895, %v3938, %v3939
        %v3941 = vrot.slane %v3939, 4
        %v3942 = vrot.slane %v3811, 5
        %v3943 = vsel %vm1895, %v3941, %v3942
        %v3944 = vrot.slane %v3812, 5
        %v3945 = vrot.slane %v3944, 4
        %v3946 = vrot.slane %v3813, 5
        %v3947 = vsel %vm1895, %v3945, %v3946
        %v3948 = vrot.slane %v3946, 4
        %v3949 = vrot.slane %v3814, 5
        %v3950 = vsel %vm1895, %v3948, %v3949
        %v3951 = vrot.slane %v3815, 5
        %v3952 = vrot.slane %v3951, 4
        %v3953 = vrot.slane %v3816, 5
        %v3954 = vsel %vm1895, %v3952, %v3953
        %v3955 = vrot.slane %v3953, 4
        %v3956 = vrot.slane %v3817, 5
        %v3957 = vsel %vm1895, %v3955, %v3956
        %v3958 = vrot.slane %v3818, 5
        %v3959 = vrot.slane %v3958, 4
        %v3960 = vrot.slane %v3819, 5
        %v3961 = vsel %vm1895, %v3959, %v3960
        %v3962 = vrot.slane %v3960, 4
        %v3963 = vrot.slane %v3820, 5
        %v3964 = vsel %vm1895, %v3962, %v3963
        %v3965 = vrot.slane %v3821, 5
        %v3966 = vrot.slane %v3965, 4
        %v3967 = vrot.slane %v3822, 5
        %v3968 = vsel %vm1895, %v3966, %v3967
        %v3969 = vrot.slane %v3967, 4
        %v3970 = vrot.slane %v3823, 5
        %v3971 = vsel %vm1895, %v3969, %v3970
        %v3972 = vrot.slane %v3824, 5
        %v3973 = vrot.slane %v3972, 4
        %v3974 = vrot.slane %v3825, 5
        %v3975 = vsel %vm1895, %v3973, %v3974
        %v3976 = vrot.slane %v3974, 4
        %v3977 = vrot.slane %v3826, 5
        %v3978 = vsel %vm1895, %v3976, %v3977
        %v3979 = vrot.slane %v3827, 5
        %v3980 = vrot.slane %v3979, 4
        %v3981 = vrot.slane %v3828, 5
        %v3982 = vsel %vm1895, %v3980, %v3981
        %v3983 = vrot.slane %v3981, 4
        %v3984 = vrot.slane %v3829, 5
        %v3985 = vsel %vm1895, %v3983, %v3984
        %v3986 = vrot.slane %v3830, 5
        %v3987 = vrot.slane %v3986, 4
        %v3988 = vrot.slane %v3831, 5
        %v3989 = vsel %vm1895, %v3987, %v3988
        %v3990 = vrot.slane %v3988, 4
        %v3991 = vrot.slane %v3832, 5
        %v3992 = vsel %vm1895, %v3990, %v3991
        %v3993 = vunpack.c.l.b16 %v3884
        %v3994 = vunpack.c.l.b16 %v3887
        %v3995 = vunpack.c.l.b16 %v3891
        %v3996 = vunpack.c.l.b16 %v3894
        %v3997 = vunpack.c.l.b16 %v3898
        %v3998 = vunpack.c.l.b16 %v3901
        %v3999 = vunpack.c.l.b16 %v3905
        %v4000 = vunpack.c.l.b16 %v3908
        %v4001 = vunpack.c.l.b16 %v3912
        %v4002 = vunpack.c.l.b16 %v3915
        %v4003 = vunpack.c.l.b16 %v3919
        %v4004 = vunpack.c.l.b16 %v3922
        %v4005 = vunpack.c.l.b16 %v3926
        %v4006 = vunpack.c.l.b16 %v3929
        %v4007 = vunpack.c.l.b16 %v3933
        %v4008 = vunpack.c.l.b16 %v3936
        %v4009 = vunpack.c.l.b16 %v3940
        %v4010 = vunpack.c.l.b16 %v3943
        %v4011 = vunpack.c.l.b16 %v3947
        %v4012 = vunpack.c.l.b16 %v3950
        %v4013 = vunpack.c.l.b16 %v3954
        %v4014 = vunpack.c.l.b16 %v3957
        %v4015 = vunpack.c.l.b16 %v3961
        %v4016 = vunpack.c.l.b16 %v3964
        %v4017 = vunpack.c.l.b16 %v3968
        %v4018 = vunpack.c.l.b16 %v3971
        %v4019 = vunpack.c.l.b16 %v3975
        %v4020 = vunpack.c.l.b16 %v3978
        %v4021 = vunpack.c.l.b16 %v3982
        %v4022 = vunpack.c.l.b16 %v3985
        %v4023 = vunpack.c.l.b16 %v3989
        %v4024 = vunpack.c.l.b16 %v3992
        %v4025 = vpack.c.b16 %v3994, %v3993
        %v4026 = vpack.c.b16 %v3996, %v3995
        %v4027 = vpack.c.b16 %v3998, %v3997
        %v4028 = vpack.c.b16 %v4000, %v3999
        %v4029 = vpack.c.b16 %v4002, %v4001
        %v4030 = vpack.c.b16 %v4004, %v4003
        %v4031 = vpack.c.b16 %v4006, %v4005
        %v4032 = vpack.c.b16 %v4008, %v4007
        %v4033 = vpack.c.b16 %v4010, %v4009
        %v4034 = vpack.c.b16 %v4012, %v4011
        %v4035 = vpack.c.b16 %v4014, %v4013
        %v4036 = vpack.c.b16 %v4016, %v4015
        %v4037 = vpack.c.b16 %v4018, %v4017
        %v4038 = vpack.c.b16 %v4020, %v4019
        %v4039 = vpack.c.b16 %v4022, %v4021
        %v4040 = vpack.c.b16 %v4024, %v4023
        %4057 = vst.msk [vmem:[#allocation3 + $0x20] sm:$0xff] %vm1232, %v4025
        %4058 = vst.msk [vmem:[#allocation3 + $0x48] sm:$0xff] %vm1232, %v4026
        %4059 = vst.msk [vmem:[#allocation3 + $0x70] sm:$0xff] %vm1232, %v4027
        %4060 = vst.msk [vmem:[#allocation3 + $0x98] sm:$0xff] %vm1232, %v4028
        %4061 = vst.msk [vmem:[#allocation3 + $0xc0] sm:$0xff] %vm1232, %v4029
        %4062 = vst.msk [vmem:[#allocation3 + $0xe8] sm:$0xff] %vm1232, %v4030
        %4063 = vst.msk [vmem:[#allocation3 + $0x110] sm:$0xff] %vm1232, %v4031
        %4064 = vst.msk [vmem:[#allocation3 + $0x138] sm:$0xff] %vm1232, %v4032
        %4065 = vst.msk [vmem:[#allocation3 + $0x160] sm:$0xff] %vm1232, %v4033
        %4066 = vst.msk [vmem:[#allocation3 + $0x188] sm:$0xff] %vm1232, %v4034
        %4067 = vst.msk [vmem:[#allocation3 + $0x1b0] sm:$0xff] %vm1232, %v4035
        %4068 = vst.msk [vmem:[#allocation3 + $0x1d8] sm:$0xff] %vm1232, %v4036
        %4069 = vst.msk [vmem:[#allocation3 + $0x200] sm:$0xff] %vm1232, %v4037
        %4070 = vst.msk [vmem:[#allocation3 + $0x228] sm:$0xff] %vm1232, %v4038
        %4071 = vst.msk [vmem:[#allocation3 + $0x250] sm:$0xff] %vm1232, %v4039
        %4072 = vst.msk [vmem:[#allocation3 + $0x278] sm:$0xff] %vm1232, %v4040
        %v4073 = vld [vmem:[#allocation3] sm:$0xff]
        %v4074 = vld [vmem:[#allocation3 + $0x8] sm:$0xff]
        %v4075 = vld [vmem:[#allocation3 + $0x10] sm:$0xff]
        %v4076 = vld [vmem:[#allocation3 + $0x18] sm:$0xff]
        %v4077 = vld [vmem:[#allocation3 + $0x20] sm:$0xff]
        %v4078 = vld [vmem:[#allocation3 + $0x28] sm:$0xff]
        %v4079 = vld [vmem:[#allocation3 + $0x30] sm:$0xff]
        %v4080 = vld [vmem:[#allocation3 + $0x38] sm:$0xff]
        %v4081 = vld [vmem:[#allocation3 + $0x40] sm:$0xff]
        %v4082 = vld [vmem:[#allocation3 + $0x48] sm:$0xff]
        %v4083 = vld [vmem:[#allocation3 + $0x50] sm:$0xff]
        %v4084 = vld [vmem:[#allocation3 + $0x58] sm:$0xff]
        %v4085 = vld [vmem:[#allocation3 + $0x60] sm:$0xff]
        %v4086 = vld [vmem:[#allocation3 + $0x68] sm:$0xff]
        %v4087 = vld [vmem:[#allocation3 + $0x70] sm:$0xff]
        %v4088 = vld [vmem:[#allocation3 + $0x78] sm:$0xff]
        %v4089 = vld [vmem:[#allocation3 + $0x80] sm:$0xff]
        %v4090 = vld [vmem:[#allocation3 + $0x88] sm:$0xff]
        %v4091 = vld [vmem:[#allocation3 + $0x90] sm:$0xff]
        %v4092 = vld [vmem:[#allocation3 + $0x98] sm:$0xff]
        %v4093 = vld [vmem:[#allocation3 + $0xa0] sm:$0xff]
        %v4094 = vld [vmem:[#allocation3 + $0xa8] sm:$0xff]
        %v4095 = vld [vmem:[#allocation3 + $0xb0] sm:$0xff]
        %v4096 = vld [vmem:[#allocation3 + $0xb8] sm:$0xff]
        %v4097 = vld [vmem:[#allocation3 + $0xc0] sm:$0xff]
        %v4098 = vld [vmem:[#allocation3 + $0xc8] sm:$0xff]
        %v4099 = vld [vmem:[#allocation3 + $0xd0] sm:$0xff]
        %v4100 = vld [vmem:[#allocation3 + $0xd8] sm:$0xff]
        %v4101 = vld [vmem:[#allocation3 + $0xe0] sm:$0xff]
        %v4102 = vld [vmem:[#allocation3 + $0xe8] sm:$0xff]
        %v4103 = vld [vmem:[#allocation3 + $0xf0] sm:$0xff]
        %v4104 = vld [vmem:[#allocation3 + $0xf8] sm:$0xff]
        %v4105 = vld [vmem:[#allocation3 + $0x100] sm:$0xff]
        %v4106 = vld [vmem:[#allocation3 + $0x108] sm:$0xff]
        %v4107 = vld [vmem:[#allocation3 + $0x110] sm:$0xff]
        %v4108 = vld [vmem:[#allocation3 + $0x118] sm:$0xff]
        %v4109 = vld [vmem:[#allocation3 + $0x120] sm:$0xff]
        %v4110 = vld [vmem:[#allocation3 + $0x128] sm:$0xff]
        %v4111 = vld [vmem:[#allocation3 + $0x130] sm:$0xff]
        %v4112 = vld [vmem:[#allocation3 + $0x138] sm:$0xff]
        %v4113 = vld [vmem:[#allocation3 + $0x140] sm:$0xff]
        %v4114 = vld [vmem:[#allocation3 + $0x148] sm:$0xff]
        %v4115 = vld [vmem:[#allocation3 + $0x150] sm:$0xff]
        %v4116 = vld [vmem:[#allocation3 + $0x158] sm:$0xff]
        %v4117 = vld [vmem:[#allocation3 + $0x160] sm:$0xff]
        %v4118 = vld [vmem:[#allocation3 + $0x168] sm:$0xff]
        %v4119 = vld [vmem:[#allocation3 + $0x170] sm:$0xff]
        %v4120 = vld [vmem:[#allocation3 + $0x178] sm:$0xff]
        %v4121 = vld [vmem:[#allocation3 + $0x180] sm:$0xff]
        %v4122 = vld [vmem:[#allocation3 + $0x188] sm:$0xff]
        %v4123 = vld [vmem:[#allocation3 + $0x190] sm:$0xff]
        %v4124 = vld [vmem:[#allocation3 + $0x198] sm:$0xff]
        %v4125 = vld [vmem:[#allocation3 + $0x1a0] sm:$0xff]
        %v4126 = vld [vmem:[#allocation3 + $0x1a8] sm:$0xff]
        %v4127 = vld [vmem:[#allocation3 + $0x1b0] sm:$0xff]
        %v4128 = vld [vmem:[#allocation3 + $0x1b8] sm:$0xff]
        %v4129 = vld [vmem:[#allocation3 + $0x1c0] sm:$0xff]
        %v4130 = vld [vmem:[#allocation3 + $0x1c8] sm:$0xff]
        %v4131 = vld [vmem:[#allocation3 + $0x1d0] sm:$0xff]
        %v4132 = vld [vmem:[#allocation3 + $0x1d8] sm:$0xff]
        %v4133 = vld [vmem:[#allocation3 + $0x1e0] sm:$0xff]
        %v4134 = vld [vmem:[#allocation3 + $0x1e8] sm:$0xff]
        %v4135 = vld [vmem:[#allocation3 + $0x1f0] sm:$0xff]
        %v4136 = vld [vmem:[#allocation3 + $0x1f8] sm:$0xff]
        %v4137 = vld [vmem:[#allocation3 + $0x200] sm:$0xff]
        %v4138 = vld [vmem:[#allocation3 + $0x208] sm:$0xff]
        %v4139 = vld [vmem:[#allocation3 + $0x210] sm:$0xff]
        %v4140 = vld [vmem:[#allocation3 + $0x218] sm:$0xff]
        %v4141 = vld [vmem:[#allocation3 + $0x220] sm:$0xff]
        %v4142 = vld [vmem:[#allocation3 + $0x228] sm:$0xff]
        %v4143 = vld [vmem:[#allocation3 + $0x230] sm:$0xff]
        %v4144 = vld [vmem:[#allocation3 + $0x238] sm:$0xff]
        %v4145 = vld [vmem:[#allocation3 + $0x240] sm:$0xff]
        %v4146 = vld [vmem:[#allocation3 + $0x248] sm:$0xff]
        %v4147 = vld [vmem:[#allocation3 + $0x250] sm:$0xff]
        %v4148 = vld [vmem:[#allocation3 + $0x258] sm:$0xff]
        %v4149 = vld [vmem:[#allocation3 + $0x260] sm:$0xff]
        %v4150 = vld [vmem:[#allocation3 + $0x268] sm:$0xff]
        %v4151 = vld [vmem:[#allocation3 + $0x270] sm:$0xff]
        %v4152 = vld [vmem:[#allocation3 + $0x278] sm:$0xff]
        %v4153 = vld [vmem:[%s3] sm:$0xf]
        %v4154 = vld [vmem:[%s3 + $0x4] sm:$0xf]
        %v4155 = vld [vmem:[%s3 + $0x8] sm:$0xf]
        %v4156 = vld [vmem:[%s3 + $0xc] sm:$0xf]
        %v4157 = vld [vmem:[%s3 + $0x10] sm:$0xf]
        %v4158 = vld [vmem:[%s3 + $0x14] sm:$0xf]
        %v4159 = vld [vmem:[%s3 + $0x18] sm:$0xf]
        %v4160 = vld [vmem:[%s3 + $0x1c] sm:$0xf]
        %v4161 = vld [vmem:[%s3 + $0x20] sm:$0xf]
        %v4162 = vld [vmem:[%s3 + $0x24] sm:$0xf]
        %v4163 = vld [vmem:[%s3 + $0x28] sm:$0xf]
        %v4164 = vld [vmem:[%s3 + $0x2c] sm:$0xf]
        %v4165 = vld [vmem:[%s3 + $0x30] sm:$0xf]
        %v4166 = vld [vmem:[%s3 + $0x34] sm:$0xf]
        %v4167 = vld [vmem:[%s3 + $0x38] sm:$0xf]
        %v4168 = vld [vmem:[%s3 + $0x3c] sm:$0xf]
        %v4169 = vld [vmem:[%s3 + $0x40] sm:$0xf]
        %v4170 = vld [vmem:[%s3 + $0x44] sm:$0xf]
        %v4171 = vld [vmem:[%s3 + $0x48] sm:$0xf]
        %v4172 = vld [vmem:[%s3 + $0x4c] sm:$0xf]
        %v4173 = vld [vmem:[%s3 + $0x50] sm:$0xf]
        %v4174 = vld [vmem:[%s3 + $0x54] sm:$0xf]
        %v4175 = vld [vmem:[%s3 + $0x58] sm:$0xf]
        %v4176 = vld [vmem:[%s3 + $0x5c] sm:$0xf]
        %v4177 = vld [vmem:[%s3 + $0x60] sm:$0xf]
        %v4178 = vld [vmem:[%s3 + $0x64] sm:$0xf]
        %v4179 = vld [vmem:[%s3 + $0x68] sm:$0xf]
        %v4180 = vld [vmem:[%s3 + $0x6c] sm:$0xf]
        %v4181 = vld [vmem:[%s3 + $0x70] sm:$0xf]
        %v4182 = vld [vmem:[%s3 + $0x74] sm:$0xf]
        %v4183 = vld [vmem:[%s3 + $0x78] sm:$0xf]
        %v4184 = vld [vmem:[%s3 + $0x7c] sm:$0xf]
        %v4185 = vld [vmem:[%s3 + $0x80] sm:$0xf]
        %v4186 = vld [vmem:[%s3 + $0x84] sm:$0xf]
        %v4187 = vld [vmem:[%s3 + $0x88] sm:$0xf]
        %v4188 = vld [vmem:[%s3 + $0x8c] sm:$0xf]
        %v4189 = vld [vmem:[%s3 + $0x90] sm:$0xf]
        %v4190 = vld [vmem:[%s3 + $0x94] sm:$0xf]
        %v4191 = vld [vmem:[%s3 + $0x98] sm:$0xf]
        %v4192 = vld [vmem:[%s3 + $0x9c] sm:$0xf]
        %v4193 = vld [vmem:[%s3 + $0xa0] sm:$0xf]
        %v4194 = vld [vmem:[%s3 + $0xa4] sm:$0xf]
        %v4195 = vld [vmem:[%s3 + $0xa8] sm:$0xf]
        %v4196 = vld [vmem:[%s3 + $0xac] sm:$0xf]
        %v4197 = vld [vmem:[%s3 + $0xb0] sm:$0xf]
        %v4198 = vld [vmem:[%s3 + $0xb4] sm:$0xf]
        %v4199 = vld [vmem:[%s3 + $0xb8] sm:$0xf]
        %v4200 = vld [vmem:[%s3 + $0xbc] sm:$0xf]
        %v4201 = vld [vmem:[%s3 + $0xc0] sm:$0xf]
        %v4202 = vld [vmem:[%s3 + $0xc4] sm:$0xf]
        %v4203 = vld [vmem:[%s3 + $0xc8] sm:$0xf]
        %v4204 = vld [vmem:[%s3 + $0xcc] sm:$0xf]
        %v4205 = vld [vmem:[%s3 + $0xd0] sm:$0xf]
        %v4206 = vld [vmem:[%s3 + $0xd4] sm:$0xf]
        %v4207 = vld [vmem:[%s3 + $0xd8] sm:$0xf]
        %v4208 = vld [vmem:[%s3 + $0xdc] sm:$0xf]
        %v4209 = vld [vmem:[%s3 + $0xe0] sm:$0xf]
        %v4210 = vld [vmem:[%s3 + $0xe4] sm:$0xf]
        %v4211 = vld [vmem:[%s3 + $0xe8] sm:$0xf]
        %v4212 = vld [vmem:[%s3 + $0xec] sm:$0xf]
        %v4213 = vld [vmem:[%s3 + $0xf0] sm:$0xf]
        %v4214 = vld [vmem:[%s3 + $0xf4] sm:$0xf]
        %v4215 = vld [vmem:[%s3 + $0xf8] sm:$0xf]
        %v4216 = vld [vmem:[%s3 + $0xfc] sm:$0xf]
        %v4217 = vld [vmem:[%s3 + $0x100] sm:$0xf]
        %v4218 = vld [vmem:[%s3 + $0x104] sm:$0xf]
        %v4219 = vld [vmem:[%s3 + $0x108] sm:$0xf]
        %v4220 = vld [vmem:[%s3 + $0x10c] sm:$0xf]
        %v4221 = vld [vmem:[%s3 + $0x110] sm:$0xf]
        %v4222 = vld [vmem:[%s3 + $0x114] sm:$0xf]
        %v4223 = vld [vmem:[%s3 + $0x118] sm:$0xf]
        %v4224 = vld [vmem:[%s3 + $0x11c] sm:$0xf]
        %v4225 = vld [vmem:[%s4] sm:$0x1]
        %v4227 = vlaneseq
        %v4228 = vshrl.u32 %v4227, 7
        %v4229 = vsub.s32 0, %v4228
        %v4230 = vrot.slane %v4225, %v4229
        %v4304 = vunpack.c.l.b16 %v4153
        %v4305 = vunpack.c.l.b16 %v4154
        %v4306 = vunpack.c.l.b16 %v4155
        %v4307 = vunpack.c.l.b16 %v4156
        %v4308 = vunpack.c.l.b16 %v4157
        %v4309 = vunpack.c.l.b16 %v4158
        %v4310 = vunpack.c.l.b16 %v4159
        %v4311 = vunpack.c.l.b16 %v4160
        %v4312 = vunpack.c.l.b16 %v4161
        %v4313 = vunpack.c.l.b16 %v4162
        %v4314 = vunpack.c.l.b16 %v4163
        %v4315 = vunpack.c.l.b16 %v4164
        %v4316 = vunpack.c.l.b16 %v4165
        %v4317 = vunpack.c.l.b16 %v4166
        %v4318 = vunpack.c.l.b16 %v4167
        %v4319 = vunpack.c.l.b16 %v4168
        %v4320 = vunpack.c.l.b16 %v4169
        %v4321 = vunpack.c.l.b16 %v4170
        %v4322 = vunpack.c.l.b16 %v4171
        %v4323 = vunpack.c.l.b16 %v4172
        %v4324 = vunpack.c.l.b16 %v4173
        %v4325 = vunpack.c.l.b16 %v4174
        %v4326 = vunpack.c.l.b16 %v4175
        %v4327 = vunpack.c.l.b16 %v4176
        %v4328 = vunpack.c.l.b16 %v4177
        %v4329 = vunpack.c.l.b16 %v4178
        %v4330 = vunpack.c.l.b16 %v4179
        %v4331 = vunpack.c.l.b16 %v4180
        %v4332 = vunpack.c.l.b16 %v4181
        %v4333 = vunpack.c.l.b16 %v4182
        %v4334 = vunpack.c.l.b16 %v4183
        %v4335 = vunpack.c.l.b16 %v4184
        %v4336 = vunpack.c.l.b16 %v4185
        %v4337 = vunpack.c.l.b16 %v4186
        %v4338 = vunpack.c.l.b16 %v4187
        %v4339 = vunpack.c.l.b16 %v4188
        %v4340 = vunpack.c.l.b16 %v4189
        %v4341 = vunpack.c.l.b16 %v4190
        %v4342 = vunpack.c.l.b16 %v4191
        %v4343 = vunpack.c.l.b16 %v4192
        %v4344 = vunpack.c.l.b16 %v4193
        %v4345 = vunpack.c.l.b16 %v4194
        %v4346 = vunpack.c.l.b16 %v4195
        %v4347 = vunpack.c.l.b16 %v4196
        %v4348 = vunpack.c.l.b16 %v4197
        %v4349 = vunpack.c.l.b16 %v4198
        %v4350 = vunpack.c.l.b16 %v4199
        %v4351 = vunpack.c.l.b16 %v4200
        %v4352 = vunpack.c.l.b16 %v4201
        %v4353 = vunpack.c.l.b16 %v4202
        %v4354 = vunpack.c.l.b16 %v4203
        %v4355 = vunpack.c.l.b16 %v4204
        %v4356 = vunpack.c.l.b16 %v4205
        %v4357 = vunpack.c.l.b16 %v4206
        %v4358 = vunpack.c.l.b16 %v4207
        %v4359 = vunpack.c.l.b16 %v4208
        %v4360 = vunpack.c.l.b16 %v4209
        %v4361 = vunpack.c.l.b16 %v4210
        %v4362 = vunpack.c.l.b16 %v4211
        %v4363 = vunpack.c.l.b16 %v4212
        %v4364 = vunpack.c.l.b16 %v4213
        %v4365 = vunpack.c.l.b16 %v4214
        %v4366 = vunpack.c.l.b16 %v4215
        %v4367 = vunpack.c.l.b16 %v4216
        %v4368 = vunpack.c.l.b16 %v4217
        %v4369 = vunpack.c.l.b16 %v4218
        %v4370 = vunpack.c.l.b16 %v4219
        %v4371 = vunpack.c.l.b16 %v4220
        %v4372 = vunpack.c.l.b16 %v4221
        %v4373 = vunpack.c.l.b16 %v4222
        %v4374 = vunpack.c.l.b16 %v4223
        %v4375 = vunpack.c.l.b16 %v4224
        %v4376 = vpack.c.b16 %v4305, %v4304
        %v4377 = vpack.c.b16 %v4307, %v4306
        %v4378 = vpack.c.b16 %v4309, %v4308
        %v4379 = vpack.c.b16 %v4311, %v4310
        %v4380 = vpack.c.b16 %v4313, %v4312
        %v4381 = vpack.c.b16 %v4315, %v4314
        %v4382 = vpack.c.b16 %v4317, %v4316
        %v4383 = vpack.c.b16 %v4319, %v4318
        %v4384 = vpack.c.b16 %v4321, %v4320
        %v4385 = vpack.c.b16 %v4323, %v4322
        %v4386 = vpack.c.b16 %v4325, %v4324
        %v4387 = vpack.c.b16 %v4327, %v4326
        %v4388 = vpack.c.b16 %v4329, %v4328
        %v4389 = vpack.c.b16 %v4331, %v4330
        %v4390 = vpack.c.b16 %v4333, %v4332
        %v4391 = vpack.c.b16 %v4335, %v4334
        %v4392 = vpack.c.b16 %v4337, %v4336
        %v4393 = vpack.c.b16 %v4339, %v4338
        %v4394 = vpack.c.b16 %v4341, %v4340
        %v4395 = vpack.c.b16 %v4343, %v4342
        %v4396 = vpack.c.b16 %v4345, %v4344
        %v4397 = vpack.c.b16 %v4347, %v4346
        %v4398 = vpack.c.b16 %v4349, %v4348
        %v4399 = vpack.c.b16 %v4351, %v4350
        %v4400 = vpack.c.b16 %v4353, %v4352
        %v4401 = vpack.c.b16 %v4355, %v4354
        %v4402 = vpack.c.b16 %v4357, %v4356
        %v4403 = vpack.c.b16 %v4359, %v4358
        %v4404 = vpack.c.b16 %v4361, %v4360
        %v4405 = vpack.c.b16 %v4363, %v4362
        %v4406 = vpack.c.b16 %v4365, %v4364
        %v4407 = vpack.c.b16 %v4367, %v4366
        %v4408 = vpack.c.b16 %v4369, %v4368
        %v4409 = vpack.c.b16 %v4371, %v4370
        %v4410 = vpack.c.b16 %v4373, %v4372
        %v4411 = vpack.c.b16 %v4375, %v4374
        %v4449 = vsel %vm1232, %v4077, 0
        %v4452 = vsel %vm1232, %v4082, 0
        %v4455 = vsel %vm1232, %v4087, 0
        %v4458 = vsel %vm1232, %v4092, 0
        %v4461 = vsel %vm1232, %v4097, 0
        %v4464 = vsel %vm1232, %v4102, 0
        %v4467 = vsel %vm1232, %v4107, 0
        %v4470 = vsel %vm1232, %v4112, 0
        %v4473 = vsel %vm1232, %v4117, 0
        %v4476 = vsel %vm1232, %v4122, 0
        %v4479 = vsel %vm1232, %v4127, 0
        %v4482 = vsel %vm1232, %v4132, 0
        %v4485 = vsel %vm1232, %v4137, 0
        %v4488 = vsel %vm1232, %v4142, 0
        %v4491 = vsel %vm1232, %v4147, 0
        %v4494 = vsel %vm1232, %v4152, 0
        %4496 = vmatprep.subr.bf16.mxu0 0
        %4497 = vmatpush1.bf16.msra.mxu0 %v4376
        %4498 = vmatprep.subr.bf16.mxu0 0
        %4499 = vmatpush1.bf16.msra.mxu0 %v4377
        %4500 = vmatprep.subr.bf16.mxu0 0
        %4501 = vmatpush1.bf16.msra.mxu0 %v4378
        %4502 = vmatprep.subr.bf16.mxu0 0
        %4503 = vmatpush1.bf16.msra.mxu0 %v4379
        %4504 = vmatprep.subr.bf16.mxu0 0
        %4505 = vmatpush1.bf16.msra.mxu0 %v4380
        %4506 = vmatprep.subr.bf16.mxu0 0
        %4507 = vmatpush1.bf16.msra.mxu0 %v4381
        %4508 = vmatprep.subr.bf16.mxu0 0
        %4509 = vmatpush1.bf16.msra.mxu0 %v4382
        %4510 = vmatprep.subr.bf16.mxu0 0
        %4511 = vmatpush1.bf16.msra.mxu0 %v4383
        %4512 = vmatprep.subr.bf16.mxu0 0
        %4513 = vmatpush1.bf16.msra.mxu0 %v4384
        %4514 = vmatprep.subr.bf16.mxu0 0
        %4515 = vmatpush1.bf16.msra.mxu0 %v4385
        %4516 = vmatprep.subr.bf16.mxu0 0
        %4517 = vmatpush1.bf16.msra.mxu0 %v4386
        %4518 = vmatprep.subr.bf16.mxu0 0
        %4519 = vmatpush1.bf16.msra.mxu0 %v4387
        %4520 = vmatprep.subr.bf16.mxu0 0
        %4521 = vmatpush1.bf16.msra.mxu0 %v4388
        %4522 = vmatprep.subr.bf16.mxu0 0
        %4523 = vmatpush1.bf16.msra.mxu0 %v4389
        %4524 = vmatprep.subr.bf16.mxu0 0
        %4525 = vmatpush1.bf16.msra.mxu0 %v4390
        %4526 = vmatprep.subr.bf16.mxu0 0
        %4527 = vmatpush1.bf16.msra.mxu0 %v4391
        %4528 = vmatprep.mubr.bf16.mxu0 %v4074
        %4529 = vmatmul.mubr.bf16.gmra.mrb[0].mxu0 %v4073
        %v4530 = vpop.f32.mrb[0].mxu0
        %v4531 = vadd.f32 %v4230, %v4530
        %v4532 = vpop.f32.mrb[0].mxu0
        %v4533 = vpop.f32.mrb[0].mxu0
        %v4534 = vadd.f32 %v4230, %v4533
        %v4535 = vpop.f32.mrb[0].mxu0
        %4536 = vmatprep.mubr.bf16.mxu0 %v4079
        %4537 = vmatmul.mubr.bf16.gmra.mrb[0].mxu0 %v4078
        %v4538 = vpop.f32.mrb[0].mxu0
        %v4539 = vadd.f32 %v4230, %v4538
        %v4540 = vpop.f32.mrb[0].mxu0
        %v4541 = vpop.f32.mrb[0].mxu0
        %v4542 = vadd.f32 %v4230, %v4541
        %v4543 = vpop.f32.mrb[0].mxu0
        %4544 = vmatprep.mubr.bf16.mxu0 %v4084
        %4545 = vmatmul.mubr.bf16.gmra.mrb[0].mxu0 %v4083
        %v4546 = vpop.f32.mrb[0].mxu0
        %v4547 = vadd.f32 %v4230, %v4546
        %v4548 = vpop.f32.mrb[0].mxu0
        %v4549 = vpop.f32.mrb[0].mxu0
        %v4550 = vadd.f32 %v4230, %v4549
        %v4551 = vpop.f32.mrb[0].mxu0
        %4552 = vmatprep.mubr.bf16.mxu0 %v4089
        %4553 = vmatmul.mubr.bf16.gmra.mrb[0].mxu0 %v4088
        %v4554 = vpop.f32.mrb[0].mxu0
        %v4555 = vadd.f32 %v4230, %v4554
        %v4556 = vpop.f32.mrb[0].mxu0
        %v4557 = vpop.f32.mrb[0].mxu0
        %v4558 = vadd.f32 %v4230, %v4557
        %v4559 = vpop.f32.mrb[0].mxu0
        %4560 = vmatprep.mubr.bf16.mxu0 %v4094
        %4561 = vmatmul.mubr.bf16.gmra.mrb[0].mxu0 %v4093
        %v4562 = vpop.f32.mrb[0].mxu0
        %v4563 = vadd.f32 %v4230, %v4562
        %v4564 = vpop.f32.mrb[0].mxu0
        %v4565 = vpop.f32.mrb[0].mxu0
        %v4566 = vadd.f32 %v4230, %v4565
        %v4567 = vpop.f32.mrb[0].mxu0
        %4568 = vmatprep.mubr.bf16.mxu0 %v4099
        %4569 = vmatmul.mubr.bf16.gmra.mrb[0].mxu0 %v4098
        %v4570 = vpop.f32.mrb[0].mxu0
        %v4571 = vadd.f32 %v4230, %v4570
        %v4572 = vpop.f32.mrb[0].mxu0
        %v4573 = vpop.f32.mrb[0].mxu0
        %v4574 = vadd.f32 %v4230, %v4573
        %v4575 = vpop.f32.mrb[0].mxu0
        %4576 = vmatprep.mubr.bf16.mxu0 %v4104
        %4577 = vmatmul.mubr.bf16.gmra.mrb[0].mxu0 %v4103
        %v4578 = vpop.f32.mrb[0].mxu0
        %v4579 = vadd.f32 %v4230, %v4578
        %v4580 = vpop.f32.mrb[0].mxu0
        %v4581 = vpop.f32.mrb[0].mxu0
        %v4582 = vadd.f32 %v4230, %v4581
        %v4583 = vpop.f32.mrb[0].mxu0
        %4584 = vmatprep.mubr.bf16.mxu0 %v4109
        %4585 = vmatmul.mubr.bf16.gmra.mrb[0].mxu0 %v4108
        %v4586 = vpop.f32.mrb[0].mxu0
        %v4587 = vadd.f32 %v4230, %v4586
        %v4588 = vpop.f32.mrb[0].mxu0
        %v4589 = vpop.f32.mrb[0].mxu0
        %v4590 = vadd.f32 %v4230, %v4589
        %v4591 = vpop.f32.mrb[0].mxu0
        %4592 = vmatprep.mubr.bf16.mxu0 %v4114
        %4593 = vmatmul.mubr.bf16.gmra.mrb[0].mxu0 %v4113
        %v4594 = vpop.f32.mrb[0].mxu0
        %v4595 = vadd.f32 %v4230, %v4594
        %v4596 = vpop.f32.mrb[0].mxu0
        %v4597 = vpop.f32.mrb[0].mxu0
        %v4598 = vadd.f32 %v4230, %v4597
        %v4599 = vpop.f32.mrb[0].mxu0
        %4600 = vmatprep.mubr.bf16.mxu0 %v4119
        %4601 = vmatmul.mubr.bf16.gmra.mrb[0].mxu0 %v4118
        %v4602 = vpop.f32.mrb[0].mxu0
        %v4603 = vadd.f32 %v4230, %v4602
        %v4604 = vpop.f32.mrb[0].mxu0
        %v4605 = vpop.f32.mrb[0].mxu0
        %v4606 = vadd.f32 %v4230, %v4605
        %v4607 = vpop.f32.mrb[0].mxu0
        %4608 = vmatprep.mubr.bf16.mxu0 %v4124
        %4609 = vmatmul.mubr.bf16.gmra.mrb[0].mxu0 %v4123
        %v4610 = vpop.f32.mrb[0].mxu0
        %v4611 = vadd.f32 %v4230, %v4610
        %v4612 = vpop.f32.mrb[0].mxu0
        %v4613 = vpop.f32.mrb[0].mxu0
        %v4614 = vadd.f32 %v4230, %v4613
        %v4615 = vpop.f32.mrb[0].mxu0
        %4616 = vmatprep.mubr.bf16.mxu0 %v4129
        %4617 = vmatmul.mubr.bf16.gmra.mrb[0].mxu0 %v4128
        %v4618 = vpop.f32.mrb[0].mxu0
        %v4619 = vadd.f32 %v4230, %v4618
        %v4620 = vpop.f32.mrb[0].mxu0
        %v4621 = vpop.f32.mrb[0].mxu0
        %v4622 = vadd.f32 %v4230, %v4621
        %v4623 = vpop.f32.mrb[0].mxu0
        %4624 = vmatprep.mubr.bf16.mxu0 %v4134
        %4625 = vmatmul.mubr.bf16.gmra.mrb[0].mxu0 %v4133
        %v4626 = vpop.f32.mrb[0].mxu0
        %v4627 = vadd.f32 %v4230, %v4626
        %v4628 = vpop.f32.mrb[0].mxu0
        %v4629 = vpop.f32.mrb[0].mxu0
        %v4630 = vadd.f32 %v4230, %v4629
        %v4631 = vpop.f32.mrb[0].mxu0
        %4632 = vmatprep.mubr.bf16.mxu0 %v4139
        %4633 = vmatmul.mubr.bf16.gmra.mrb[0].mxu0 %v4138
        %v4634 = vpop.f32.mrb[0].mxu0
        %v4635 = vadd.f32 %v4230, %v4634
        %v4636 = vpop.f32.mrb[0].mxu0
        %v4637 = vpop.f32.mrb[0].mxu0
        %v4638 = vadd.f32 %v4230, %v4637
        %v4639 = vpop.f32.mrb[0].mxu0
        %4640 = vmatprep.mubr.bf16.mxu0 %v4144
        %4641 = vmatmul.mubr.bf16.gmra.mrb[0].mxu0 %v4143
        %v4642 = vpop.f32.mrb[0].mxu0
        %v4643 = vadd.f32 %v4230, %v4642
        %v4644 = vpop.f32.mrb[0].mxu0
        %v4645 = vpop.f32.mrb[0].mxu0
        %v4646 = vadd.f32 %v4230, %v4645
        %v4647 = vpop.f32.mrb[0].mxu0
        %4648 = vmatprep.mubr.bf16.mxu0 %v4149
        %4649 = vmatmul.mubr.bf16.gmra.mrb[0].mxu0 %v4148
        %v4650 = vpop.f32.mrb[0].mxu0
        %v4651 = vadd.f32 %v4230, %v4650
        %v4652 = vpop.f32.mrb[0].mxu0
        %v4653 = vpop.f32.mrb[0].mxu0
        %v4654 = vadd.f32 %v4230, %v4653
        %v4655 = vpop.f32.mrb[0].mxu0
        %4656 = vdwg.mxu0
        %4657 = vmatprep.subr.bf16.mxu0 0
        %4658 = vmatpush1.bf16.msra.mxu0 %v4392
        %4659 = vmatprep.subr.bf16.mxu0 0
        %4660 = vmatpush1.bf16.msra.mxu0 %v4393
        %4661 = vmatprep.subr.bf16.mxu0 0
        %4662 = vmatpush1.bf16.msra.mxu0 %v4394
        %4663 = vmatprep.subr.bf16.mxu0 0
        %4664 = vmatpush1.bf16.msra.mxu0 %v4395
        %4665 = vmatprep.subr.bf16.mxu0 0
        %4666 = vmatpush1.bf16.msra.mxu0 %v4396
        %4667 = vmatprep.subr.bf16.mxu0 0
        %4668 = vmatpush1.bf16.msra.mxu0 %v4397
        %4669 = vmatprep.subr.bf16.mxu0 0
        %4670 = vmatpush1.bf16.msra.mxu0 %v4398
        %4671 = vmatprep.subr.bf16.mxu0 0
        %4672 = vmatpush1.bf16.msra.mxu0 %v4399
        %4673 = vmatprep.subr.bf16.mxu0 0
        %4674 = vmatpush1.bf16.msra.mxu0 %v4400
        %4675 = vmatprep.subr.bf16.mxu0 0
        %4676 = vmatpush1.bf16.msra.mxu0 %v4401
        %4677 = vmatprep.subr.bf16.mxu0 0
        %4678 = vmatpush1.bf16.msra.mxu0 %v4402
        %4679 = vmatprep.subr.bf16.mxu0 0
        %4680 = vmatpush1.bf16.msra.mxu0 %v4403
        %4681 = vmatprep.subr.bf16.mxu0 0
        %4682 = vmatpush1.bf16.msra.mxu0 %v4404
        %4683 = vmatprep.subr.bf16.mxu0 0
        %4684 = vmatpush1.bf16.msra.mxu0 %v4405
        %4685 = vmatprep.subr.bf16.mxu0 0
        %4686 = vmatpush1.bf16.msra.mxu0 %v4406
        %4687 = vmatprep.subr.bf16.mxu0 0
        %4688 = vmatpush1.bf16.msra.mxu0 %v4407
        %4689 = vmatprep.mubr.bf16.mxu0 %v4076
        %4690 = vmatmul.mubr.bf16.gmra.mrb[0].mxu0 %v4075
        %v4691 = vpop.f32.mrb[0].mxu0
        %v4692 = vadd.f32 %v4531, %v4691
        %v4693 = vpop.f32.mrb[0].mxu0
        %v4694 = vpop.f32.mrb[0].mxu0
        %v4695 = vadd.f32 %v4534, %v4694
        %v4696 = vpop.f32.mrb[0].mxu0
        %4697 = vmatprep.mubr.bf16.mxu0 %v4081
        %4698 = vmatmul.mubr.bf16.gmra.mrb[0].mxu0 %v4080
        %v4699 = vpop.f32.mrb[0].mxu0
        %v4700 = vadd.f32 %v4539, %v4699
        %v4701 = vpop.f32.mrb[0].mxu0
        %v4702 = vpop.f32.mrb[0].mxu0
        %v4703 = vadd.f32 %v4542, %v4702
        %v4704 = vpop.f32.mrb[0].mxu0
        %4705 = vmatprep.mubr.bf16.mxu0 %v4086
        %4706 = vmatmul.mubr.bf16.gmra.mrb[0].mxu0 %v4085
        %v4707 = vpop.f32.mrb[0].mxu0
        %v4708 = vadd.f32 %v4547, %v4707
        %v4709 = vpop.f32.mrb[0].mxu0
        %v4710 = vpop.f32.mrb[0].mxu0
        %v4711 = vadd.f32 %v4550, %v4710
        %v4712 = vpop.f32.mrb[0].mxu0
        %4713 = vmatprep.mubr.bf16.mxu0 %v4091
        %4714 = vmatmul.mubr.bf16.gmra.mrb[0].mxu0 %v4090
        %v4715 = vpop.f32.mrb[0].mxu0
        %v4716 = vadd.f32 %v4555, %v4715
        %v4717 = vpop.f32.mrb[0].mxu0
        %v4718 = vpop.f32.mrb[0].mxu0
        %v4719 = vadd.f32 %v4558, %v4718
        %v4720 = vpop.f32.mrb[0].mxu0
        %4721 = vmatprep.mubr.bf16.mxu0 %v4096
        %4722 = vmatmul.mubr.bf16.gmra.mrb[0].mxu0 %v4095
        %v4723 = vpop.f32.mrb[0].mxu0
        %v4724 = vadd.f32 %v4563, %v4723
        %v4725 = vpop.f32.mrb[0].mxu0
        %v4726 = vpop.f32.mrb[0].mxu0
        %v4727 = vadd.f32 %v4566, %v4726
        %v4728 = vpop.f32.mrb[0].mxu0
        %4729 = vmatprep.mubr.bf16.mxu0 %v4101
        %4730 = vmatmul.mubr.bf16.gmra.mrb[0].mxu0 %v4100
        %v4731 = vpop.f32.mrb[0].mxu0
        %v4732 = vadd.f32 %v4571, %v4731
        %v4733 = vpop.f32.mrb[0].mxu0
        %v4734 = vpop.f32.mrb[0].mxu0
        %v4735 = vadd.f32 %v4574, %v4734
        %v4736 = vpop.f32.mrb[0].mxu0
        %4737 = vmatprep.mubr.bf16.mxu0 %v4106
        %4738 = vmatmul.mubr.bf16.gmra.mrb[0].mxu0 %v4105
        %v4739 = vpop.f32.mrb[0].mxu0
        %v4740 = vadd.f32 %v4579, %v4739
        %v4741 = vpop.f32.mrb[0].mxu0
        %v4742 = vpop.f32.mrb[0].mxu0
        %v4743 = vadd.f32 %v4582, %v4742
        %v4744 = vpop.f32.mrb[0].mxu0
        %4745 = vmatprep.mubr.bf16.mxu0 %v4111
        %4746 = vmatmul.mubr.bf16.gmra.mrb[0].mxu0 %v4110
        %v4747 = vpop.f32.mrb[0].mxu0
        %v4748 = vadd.f32 %v4587, %v4747
        %v4749 = vpop.f32.mrb[0].mxu0
        %v4750 = vpop.f32.mrb[0].mxu0
        %v4751 = vadd.f32 %v4590, %v4750
        %v4752 = vpop.f32.mrb[0].mxu0
        %4753 = vmatprep.mubr.bf16.mxu0 %v4116
        %4754 = vmatmul.mubr.bf16.gmra.mrb[0].mxu0 %v4115
        %v4755 = vpop.f32.mrb[0].mxu0
        %v4756 = vadd.f32 %v4595, %v4755
        %v4757 = vpop.f32.mrb[0].mxu0
        %v4758 = vpop.f32.mrb[0].mxu0
        %v4759 = vadd.f32 %v4598, %v4758
        %v4760 = vpop.f32.mrb[0].mxu0
        %4761 = vmatprep.mubr.bf16.mxu0 %v4121
        %4762 = vmatmul.mubr.bf16.gmra.mrb[0].mxu0 %v4120
        %v4763 = vpop.f32.mrb[0].mxu0
        %v4764 = vadd.f32 %v4603, %v4763
        %v4765 = vpop.f32.mrb[0].mxu0
        %v4766 = vpop.f32.mrb[0].mxu0
        %v4767 = vadd.f32 %v4606, %v4766
        %v4768 = vpop.f32.mrb[0].mxu0
        %4769 = vmatprep.mubr.bf16.mxu0 %v4126
        %4770 = vmatmul.mubr.bf16.gmra.mrb[0].mxu0 %v4125
        %v4771 = vpop.f32.mrb[0].mxu0
        %v4772 = vadd.f32 %v4611, %v4771
        %v4773 = vpop.f32.mrb[0].mxu0
        %v4774 = vpop.f32.mrb[0].mxu0
        %v4775 = vadd.f32 %v4614, %v4774
        %v4776 = vpop.f32.mrb[0].mxu0
        %4777 = vmatprep.mubr.bf16.mxu0 %v4131
        %4778 = vmatmul.mubr.bf16.gmra.mrb[0].mxu0 %v4130
        %v4779 = vpop.f32.mrb[0].mxu0
        %v4780 = vadd.f32 %v4619, %v4779
        %v4781 = vpop.f32.mrb[0].mxu0
        %v4782 = vpop.f32.mrb[0].mxu0
        %v4783 = vadd.f32 %v4622, %v4782
        %v4784 = vpop.f32.mrb[0].mxu0
        %4785 = vmatprep.mubr.bf16.mxu0 %v4136
        %4786 = vmatmul.mubr.bf16.gmra.mrb[0].mxu0 %v4135
        %v4787 = vpop.f32.mrb[0].mxu0
        %v4788 = vadd.f32 %v4627, %v4787
        %v4789 = vpop.f32.mrb[0].mxu0
        %v4790 = vpop.f32.mrb[0].mxu0
        %v4791 = vadd.f32 %v4630, %v4790
        %v4792 = vpop.f32.mrb[0].mxu0
        %4793 = vmatprep.mubr.bf16.mxu0 %v4141
        %4794 = vmatmul.mubr.bf16.gmra.mrb[0].mxu0 %v4140
        %v4795 = vpop.f32.mrb[0].mxu0
        %v4796 = vadd.f32 %v4635, %v4795
        %v4797 = vpop.f32.mrb[0].mxu0
        %v4798 = vpop.f32.mrb[0].mxu0
        %v4799 = vadd.f32 %v4638, %v4798
        %v4800 = vpop.f32.mrb[0].mxu0
        %4801 = vmatprep.mubr.bf16.mxu0 %v4146
        %4802 = vmatmul.mubr.bf16.gmra.mrb[0].mxu0 %v4145
        %v4803 = vpop.f32.mrb[0].mxu0
        %v4804 = vadd.f32 %v4643, %v4803
        %v4805 = vpop.f32.mrb[0].mxu0
        %v4806 = vpop.f32.mrb[0].mxu0
        %v4807 = vadd.f32 %v4646, %v4806
        %v4808 = vpop.f32.mrb[0].mxu0
        %4809 = vmatprep.mubr.bf16.mxu0 %v4151
        %4810 = vmatmul.mubr.bf16.gmra.mrb[0].mxu0 %v4150
        %v4811 = vpop.f32.mrb[0].mxu0
        %v4812 = vadd.f32 %v4651, %v4811
        %v4813 = vpop.f32.mrb[0].mxu0
        %v4814 = vpop.f32.mrb[0].mxu0
        %v4815 = vadd.f32 %v4654, %v4814
        %v4816 = vpop.f32.mrb[0].mxu0
        %4817 = vdwg.mxu0
        %4818 = vmatprep.subr.bf16.mxu0 0
        %4819 = vmatpush1.bf16.msra.mxu0 %v4408
        %4820 = vmatprep.subr.bf16.mxu0 0
        %4821 = vmatpush1.bf16.msra.mxu0 %v4409
        %4822 = vmatprep.subr.bf16.mxu0 0
        %4823 = vmatpush1.bf16.msra.mxu0 %v4410
        %4824 = vmatprep.subr.bf16.mxu0 0
        %4825 = vmatpush1.bf16.msra.mxu0 %v4411
        %4826 = vmatprep.subr.bf16.mxu0 0
        %4827 = vmatpush1.bf16.msra.mxu0 0
        %4828 = vmatprep.subr.bf16.mxu0 0
        %4829 = vmatpush1.bf16.msra.mxu0 0
        %4830 = vmatprep.subr.bf16.mxu0 0
        %4831 = vmatpush1.bf16.msra.mxu0 0
        %4832 = vmatprep.subr.bf16.mxu0 0
        %4833 = vmatpush1.bf16.msra.mxu0 0
        %4834 = vmatprep.subr.bf16.mxu0 0
        %4835 = vmatpush1.bf16.msra.mxu0 0
        %4836 = vmatprep.subr.bf16.mxu0 0
        %4837 = vmatpush1.bf16.msra.mxu0 0
        %4838 = vmatprep.subr.bf16.mxu0 0
        %4839 = vmatpush1.bf16.msra.mxu0 0
        %4840 = vmatprep.subr.bf16.mxu0 0
        %4841 = vmatpush1.bf16.msra.mxu0 0
        %4842 = vmatprep.subr.bf16.mxu0 0
        %4843 = vmatpush1.bf16.msra.mxu0 0
        %4844 = vmatprep.subr.bf16.mxu0 0
        %4845 = vmatpush1.bf16.msra.mxu0 0
        %4846 = vmatprep.subr.bf16.mxu0 0
        %4847 = vmatpush1.bf16.msra.mxu0 0
        %4848 = vmatprep.subr.bf16.mxu0 0
        %4849 = vmatpush1.bf16.msra.mxu0 0
        %4850 = vmatprep.mubr.bf16.mxu0 0
        %4851 = vmatmul.mubr.bf16.gmra.mrb[0].mxu0 %v4449
        %v4852 = vpop.f32.mrb[0].mxu0
        %v4853 = vadd.f32 %v4692, %v4852
        %v4854 = vpop.f32.mrb[0].mxu0
        %v4855 = vpop.f32.mrb[0].mxu0
        %v4856 = vadd.f32 %v4695, %v4855
        %v4857 = vpop.f32.mrb[0].mxu0
        %4858 = vmatprep.mubr.bf16.mxu0 0
        %4859 = vmatmul.mubr.bf16.gmra.mrb[0].mxu0 %v4452
        %v4860 = vpop.f32.mrb[0].mxu0
        %v4861 = vadd.f32 %v4700, %v4860
        %v4862 = vpop.f32.mrb[0].mxu0
        %v4863 = vpop.f32.mrb[0].mxu0
        %v4864 = vadd.f32 %v4703, %v4863
        %v4865 = vpop.f32.mrb[0].mxu0
        %4866 = vmatprep.mubr.bf16.mxu0 0
        %4867 = vmatmul.mubr.bf16.gmra.mrb[0].mxu0 %v4455
        %v4868 = vpop.f32.mrb[0].mxu0
        %v4869 = vadd.f32 %v4708, %v4868
        %v4870 = vpop.f32.mrb[0].mxu0
        %v4871 = vpop.f32.mrb[0].mxu0
        %v4872 = vadd.f32 %v4711, %v4871
        %v4873 = vpop.f32.mrb[0].mxu0
        %4874 = vmatprep.mubr.bf16.mxu0 0
        %4875 = vmatmul.mubr.bf16.gmra.mrb[0].mxu0 %v4458
        %v4876 = vpop.f32.mrb[0].mxu0
        %v4877 = vadd.f32 %v4716, %v4876
        %v4878 = vpop.f32.mrb[0].mxu0
        %v4879 = vpop.f32.mrb[0].mxu0
        %v4880 = vadd.f32 %v4719, %v4879
        %v4881 = vpop.f32.mrb[0].mxu0
        %4882 = vmatprep.mubr.bf16.mxu0 0
        %4883 = vmatmul.mubr.bf16.gmra.mrb[0].mxu0 %v4461
        %v4884 = vpop.f32.mrb[0].mxu0
        %v4885 = vadd.f32 %v4724, %v4884
        %v4886 = vpop.f32.mrb[0].mxu0
        %v4887 = vpop.f32.mrb[0].mxu0
        %v4888 = vadd.f32 %v4727, %v4887
        %v4889 = vpop.f32.mrb[0].mxu0
        %4890 = vmatprep.mubr.bf16.mxu0 0
        %4891 = vmatmul.mubr.bf16.gmra.mrb[0].mxu0 %v4464
        %v4892 = vpop.f32.mrb[0].mxu0
        %v4893 = vadd.f32 %v4732, %v4892
        %v4894 = vpop.f32.mrb[0].mxu0
        %v4895 = vpop.f32.mrb[0].mxu0
        %v4896 = vadd.f32 %v4735, %v4895
        %v4897 = vpop.f32.mrb[0].mxu0
        %4898 = vmatprep.mubr.bf16.mxu0 0
        %4899 = vmatmul.mubr.bf16.gmra.mrb[0].mxu0 %v4467
        %v4900 = vpop.f32.mrb[0].mxu0
        %v4901 = vadd.f32 %v4740, %v4900
        %v4902 = vpop.f32.mrb[0].mxu0
        %v4903 = vpop.f32.mrb[0].mxu0
        %v4904 = vadd.f32 %v4743, %v4903
        %v4905 = vpop.f32.mrb[0].mxu0
        %4906 = vmatprep.mubr.bf16.mxu0 0
        %4907 = vmatmul.mubr.bf16.gmra.mrb[0].mxu0 %v4470
        %v4908 = vpop.f32.mrb[0].mxu0
        %v4909 = vadd.f32 %v4748, %v4908
        %v4910 = vpop.f32.mrb[0].mxu0
        %v4911 = vpop.f32.mrb[0].mxu0
        %v4912 = vadd.f32 %v4751, %v4911
        %v4913 = vpop.f32.mrb[0].mxu0
        %4914 = vmatprep.mubr.bf16.mxu0 0
        %4915 = vmatmul.mubr.bf16.gmra.mrb[0].mxu0 %v4473
        %v4916 = vpop.f32.mrb[0].mxu0
        %v4917 = vadd.f32 %v4756, %v4916
        %v4918 = vpop.f32.mrb[0].mxu0
        %v4919 = vpop.f32.mrb[0].mxu0
        %v4920 = vadd.f32 %v4759, %v4919
        %v4921 = vpop.f32.mrb[0].mxu0
        %4922 = vmatprep.mubr.bf16.mxu0 0
        %4923 = vmatmul.mubr.bf16.gmra.mrb[0].mxu0 %v4476
        %v4924 = vpop.f32.mrb[0].mxu0
        %v4925 = vadd.f32 %v4764, %v4924
        %v4926 = vpop.f32.mrb[0].mxu0
        %v4927 = vpop.f32.mrb[0].mxu0
        %v4928 = vadd.f32 %v4767, %v4927
        %v4929 = vpop.f32.mrb[0].mxu0
        %4930 = vmatprep.mubr.bf16.mxu0 0
        %4931 = vmatmul.mubr.bf16.gmra.mrb[0].mxu0 %v4479
        %v4932 = vpop.f32.mrb[0].mxu0
        %v4933 = vadd.f32 %v4772, %v4932
        %v4934 = vpop.f32.mrb[0].mxu0
        %v4935 = vpop.f32.mrb[0].mxu0
        %v4936 = vadd.f32 %v4775, %v4935
        %v4937 = vpop.f32.mrb[0].mxu0
        %4938 = vmatprep.mubr.bf16.mxu0 0
        %4939 = vmatmul.mubr.bf16.gmra.mrb[0].mxu0 %v4482
        %v4940 = vpop.f32.mrb[0].mxu0
        %v4941 = vadd.f32 %v4780, %v4940
        %v4942 = vpop.f32.mrb[0].mxu0
        %v4943 = vpop.f32.mrb[0].mxu0
        %v4944 = vadd.f32 %v4783, %v4943
        %v4945 = vpop.f32.mrb[0].mxu0
        %4946 = vmatprep.mubr.bf16.mxu0 0
        %4947 = vmatmul.mubr.bf16.gmra.mrb[0].mxu0 %v4485
        %v4948 = vpop.f32.mrb[0].mxu0
        %v4949 = vadd.f32 %v4788, %v4948
        %v4950 = vpop.f32.mrb[0].mxu0
        %v4951 = vpop.f32.mrb[0].mxu0
        %v4952 = vadd.f32 %v4791, %v4951
        %v4953 = vpop.f32.mrb[0].mxu0
        %4954 = vmatprep.mubr.bf16.mxu0 0
        %4955 = vmatmul.mubr.bf16.gmra.mrb[0].mxu0 %v4488
        %v4956 = vpop.f32.mrb[0].mxu0
        %v4957 = vadd.f32 %v4796, %v4956
        %v4958 = vpop.f32.mrb[0].mxu0
        %v4959 = vpop.f32.mrb[0].mxu0
        %v4960 = vadd.f32 %v4799, %v4959
        %v4961 = vpop.f32.mrb[0].mxu0
        %4962 = vmatprep.mubr.bf16.mxu0 0
        %4963 = vmatmul.mubr.bf16.gmra.mrb[0].mxu0 %v4491
        %v4964 = vpop.f32.mrb[0].mxu0
        %v4965 = vadd.f32 %v4804, %v4964
        %v4966 = vpop.f32.mrb[0].mxu0
        %v4967 = vpop.f32.mrb[0].mxu0
        %v4968 = vadd.f32 %v4807, %v4967
        %v4969 = vpop.f32.mrb[0].mxu0
        %4970 = vmatprep.mubr.bf16.mxu0 0
        %4971 = vmatmul.mubr.bf16.gmra.mrb[0].mxu0 %v4494
        %v4972 = vpop.f32.mrb[0].mxu0
        %v4973 = vadd.f32 %v4812, %v4972
        %v4974 = vpop.f32.mrb[0].mxu0
        %v4975 = vpop.f32.mrb[0].mxu0
        %v4976 = vadd.f32 %v4815, %v4975
        %v4977 = vpop.f32.mrb[0].mxu0
        %4978 = vdwg.mxu0
        %vm4979 = vcmp.gt.f32.partialorder %v4853, 0.0
        %vm4980 = vcmp.gt.f32.partialorder %v4856, 0.0
        %vm4981 = vcmp.gt.f32.partialorder %v4861, 0.0
        %vm4982 = vcmp.gt.f32.partialorder %v4864, 0.0
        %vm4983 = vcmp.gt.f32.partialorder %v4869, 0.0
        %vm4984 = vcmp.gt.f32.partialorder %v4872, 0.0
        %vm4985 = vcmp.gt.f32.partialorder %v4877, 0.0
        %vm4986 = vcmp.gt.f32.partialorder %v4880, 0.0
        %vm4987 = vcmp.gt.f32.partialorder %v4885, 0.0
        %vm4988 = vcmp.gt.f32.partialorder %v4888, 0.0
        %vm4989 = vcmp.gt.f32.partialorder %v4893, 0.0
        %vm4990 = vcmp.gt.f32.partialorder %v4896, 0.0
        %vm4991 = vcmp.gt.f32.partialorder %v4901, 0.0
        %vm4992 = vcmp.gt.f32.partialorder %v4904, 0.0
        %vm4993 = vcmp.gt.f32.partialorder %v4909, 0.0
        %vm4994 = vcmp.gt.f32.partialorder %v4912, 0.0
        %vm4995 = vcmp.gt.f32.partialorder %v4917, 0.0
        %vm4996 = vcmp.gt.f32.partialorder %v4920, 0.0
        %vm4997 = vcmp.gt.f32.partialorder %v4925, 0.0
        %vm4998 = vcmp.gt.f32.partialorder %v4928, 0.0
        %vm4999 = vcmp.gt.f32.partialorder %v4933, 0.0
        %vm5000 = vcmp.gt.f32.partialorder %v4936, 0.0
        %vm5001 = vcmp.gt.f32.partialorder %v4941, 0.0
        %vm5002 = vcmp.gt.f32.partialorder %v4944, 0.0
        %vm5003 = vcmp.gt.f32.partialorder %v4949, 0.0
        %vm5004 = vcmp.gt.f32.partialorder %v4952, 0.0
        %vm5005 = vcmp.gt.f32.partialorder %v4957, 0.0
        %vm5006 = vcmp.gt.f32.partialorder %v4960, 0.0
        %vm5007 = vcmp.gt.f32.partialorder %v4965, 0.0
        %vm5008 = vcmp.gt.f32.partialorder %v4968, 0.0
        %vm5009 = vcmp.gt.f32.partialorder %v4973, 0.0
        %vm5010 = vcmp.gt.f32.partialorder %v4976, 0.0
        %v5011 = vmul.f32 %v4853, 0.1
        %v5012 = vmul.f32 %v4856, 0.1
        %v5013 = vmul.f32 %v4861, 0.1
        %v5014 = vmul.f32 %v4864, 0.1
        %v5015 = vmul.f32 %v4869, 0.1
        %v5016 = vmul.f32 %v4872, 0.1
        %v5017 = vmul.f32 %v4877, 0.1
        %v5018 = vmul.f32 %v4880, 0.1
        %v5019 = vmul.f32 %v4885, 0.1
        %v5020 = vmul.f32 %v4888, 0.1
        %v5021 = vmul.f32 %v4893, 0.1
        %v5022 = vmul.f32 %v4896, 0.1
        %v5023 = vmul.f32 %v4901, 0.1
        %v5024 = vmul.f32 %v4904, 0.1
        %v5025 = vmul.f32 %v4909, 0.1
        %v5026 = vmul.f32 %v4912, 0.1
        %v5027 = vmul.f32 %v4917, 0.1
        %v5028 = vmul.f32 %v4920, 0.1
        %v5029 = vmul.f32 %v4925, 0.1
        %v5030 = vmul.f32 %v4928, 0.1
        %v5031 = vmul.f32 %v4933, 0.1
        %v5032 = vmul.f32 %v4936, 0.1
        %v5033 = vmul.f32 %v4941, 0.1
        %v5034 = vmul.f32 %v4944, 0.1
        %v5035 = vmul.f32 %v4949, 0.1
        %v5036 = vmul.f32 %v4952, 0.1
        %v5037 = vmul.f32 %v4957, 0.1
        %v5038 = vmul.f32 %v4960, 0.1
        %v5039 = vmul.f32 %v4965, 0.1
        %v5040 = vmul.f32 %v4968, 0.1
        %v5041 = vmul.f32 %v4973, 0.1
        %v5042 = vmul.f32 %v4976, 0.1
        %v5043 = vsel %vm4979, %v4853, %v5011
        %v5044 = vsel %vm4980, %v4856, %v5012
        %v5045 = vsel %vm4981, %v4861, %v5013
        %v5046 = vsel %vm4982, %v4864, %v5014
        %v5047 = vsel %vm4983, %v4869, %v5015
        %v5048 = vsel %vm4984, %v4872, %v5016
        %v5049 = vsel %vm4985, %v4877, %v5017
        %v5050 = vsel %vm4986, %v4880, %v5018
        %v5051 = vsel %vm4987, %v4885, %v5019
        %v5052 = vsel %vm4988, %v4888, %v5020
        %v5053 = vsel %vm4989, %v4893, %v5021
        %v5054 = vsel %vm4990, %v4896, %v5022
        %v5055 = vsel %vm4991, %v4901, %v5023
        %v5056 = vsel %vm4992, %v4904, %v5024
        %v5057 = vsel %vm4993, %v4909, %v5025
        %v5058 = vsel %vm4994, %v4912, %v5026
        %v5059 = vsel %vm4995, %v4917, %v5027
        %v5060 = vsel %vm4996, %v4920, %v5028
        %v5061 = vsel %vm4997, %v4925, %v5029
        %v5062 = vsel %vm4998, %v4928, %v5030
        %v5063 = vsel %vm4999, %v4933, %v5031
        %v5064 = vsel %vm5000, %v4936, %v5032
        %v5065 = vsel %vm5001, %v4941, %v5033
        %v5066 = vsel %vm5002, %v4944, %v5034
        %v5067 = vsel %vm5003, %v4949, %v5035
        %v5068 = vsel %vm5004, %v4952, %v5036
        %v5069 = vsel %vm5005, %v4957, %v5037
        %v5070 = vsel %vm5006, %v4960, %v5038
        %v5071 = vsel %vm5007, %v4965, %v5039
        %v5072 = vsel %vm5008, %v4968, %v5040
        %v5073 = vsel %vm5009, %v4973, %v5041
        %v5074 = vsel %vm5010, %v4976, %v5042
        %v5075 = vpack.c.bf16 %v5044, %v5043
        %v5076 = vpack.c.bf16 %v5046, %v5045
        %v5077 = vpack.c.bf16 %v5048, %v5047
        %v5078 = vpack.c.bf16 %v5050, %v5049
        %v5079 = vpack.c.bf16 %v5052, %v5051
        %v5080 = vpack.c.bf16 %v5054, %v5053
        %v5081 = vpack.c.bf16 %v5056, %v5055
        %v5082 = vpack.c.bf16 %v5058, %v5057
        %v5083 = vpack.c.bf16 %v5060, %v5059
        %v5084 = vpack.c.bf16 %v5062, %v5061
        %v5085 = vpack.c.bf16 %v5064, %v5063
        %v5086 = vpack.c.bf16 %v5066, %v5065
        %v5087 = vpack.c.bf16 %v5068, %v5067
        %v5088 = vpack.c.bf16 %v5070, %v5069
        %v5089 = vpack.c.bf16 %v5072, %v5071
        %v5090 = vpack.c.bf16 %v5074, %v5073
        %v5107 = vunpack.c.l.b16 %v5075
        %v5108 = vunpack.c.h.b16 %v5075
        %v5109 = vunpack.c.l.b16 %v5076
        %v5110 = vunpack.c.h.b16 %v5076
        %v5111 = vunpack.c.l.b16 %v5077
        %v5112 = vunpack.c.h.b16 %v5077
        %v5113 = vunpack.c.l.b16 %v5078
        %v5114 = vunpack.c.h.b16 %v5078
        %v5115 = vunpack.c.l.b16 %v5079
        %v5116 = vunpack.c.h.b16 %v5079
        %v5117 = vunpack.c.l.b16 %v5080
        %v5118 = vunpack.c.h.b16 %v5080
        %v5119 = vunpack.c.l.b16 %v5081
        %v5120 = vunpack.c.h.b16 %v5081
        %v5121 = vunpack.c.l.b16 %v5082
        %v5122 = vunpack.c.h.b16 %v5082
        %v5123 = vunpack.c.l.b16 %v5083
        %v5124 = vunpack.c.h.b16 %v5083
        %v5125 = vunpack.c.l.b16 %v5084
        %v5126 = vunpack.c.h.b16 %v5084
        %v5127 = vunpack.c.l.b16 %v5085
        %v5128 = vunpack.c.h.b16 %v5085
        %v5129 = vunpack.c.l.b16 %v5086
        %v5130 = vunpack.c.h.b16 %v5086
        %v5131 = vunpack.c.l.b16 %v5087
        %v5132 = vunpack.c.h.b16 %v5087
        %v5133 = vunpack.c.l.b16 %v5088
        %v5134 = vunpack.c.h.b16 %v5088
        %v5135 = vunpack.c.l.b16 %v5089
        %v5136 = vunpack.c.h.b16 %v5089
        %v5137 = vunpack.c.l.b16 %v5090
        %v5138 = vunpack.c.h.b16 %v5090
        %v5139 = vpack.c.b16 %v5107, %v5107
        %v5140 = vpack.c.b16 %v5108, %v5108
        %v5141 = vpack.c.b16 %v5109, %v5109
        %v5142 = vpack.c.b16 %v5110, %v5110
        %v5143 = vpack.c.b16 %v5111, %v5111
        %v5144 = vpack.c.b16 %v5112, %v5112
        %v5145 = vpack.c.b16 %v5113, %v5113
        %v5146 = vpack.c.b16 %v5114, %v5114
        %v5147 = vpack.c.b16 %v5115, %v5115
        %v5148 = vpack.c.b16 %v5116, %v5116
        %v5149 = vpack.c.b16 %v5117, %v5117
        %v5150 = vpack.c.b16 %v5118, %v5118
        %v5151 = vpack.c.b16 %v5119, %v5119
        %v5152 = vpack.c.b16 %v5120, %v5120
        %v5153 = vpack.c.b16 %v5121, %v5121
        %v5154 = vpack.c.b16 %v5122, %v5122
        %v5155 = vpack.c.b16 %v5123, %v5123
        %v5156 = vpack.c.b16 %v5124, %v5124
        %v5157 = vpack.c.b16 %v5125, %v5125
        %v5158 = vpack.c.b16 %v5126, %v5126
        %v5159 = vpack.c.b16 %v5127, %v5127
        %v5160 = vpack.c.b16 %v5128, %v5128
        %v5161 = vpack.c.b16 %v5129, %v5129
        %v5162 = vpack.c.b16 %v5130, %v5130
        %v5163 = vpack.c.b16 %v5131, %v5131
        %v5164 = vpack.c.b16 %v5132, %v5132
        %v5165 = vpack.c.b16 %v5133, %v5133
        %v5166 = vpack.c.b16 %v5134, %v5134
        %v5167 = vpack.c.b16 %v5135, %v5135
        %v5168 = vpack.c.b16 %v5136, %v5136
        %v5169 = vpack.c.b16 %v5137, %v5137
        %v5170 = vpack.c.b16 %v5138, %v5138
        %v5172 = vshrl.u32 %v5139, 16
        %v5174 = vrot.slane %v5172, 7
        %v5175 = vshll.u32 %v5139, 16
        %v5177 = vor.u32 %v5174, %v5175
        %v5178 = vrot.slane %v5174, 4
        %v5180 = vshrl.u32 %v5140, 16
        %v5182 = vrot.slane %v5180, 7
        %v5183 = vshll.u32 %v5140, 16
        %v5185 = vor.u32 %v5182, %v5183
        %v5186 = vsel %vm665, %v5178, %v5185
        %v5187 = vrot.slane %v5182, 4
        %v5189 = vshrl.u32 %v5141, 16
        %v5191 = vrot.slane %v5189, 7
        %v5192 = vshll.u32 %v5141, 16
        %v5194 = vor.u32 %v5191, %v5192
        %v5195 = vrot.slane %v5191, 4
        %v5197 = vshrl.u32 %v5142, 16
        %v5199 = vrot.slane %v5197, 7
        %v5200 = vshll.u32 %v5142, 16
        %v5202 = vor.u32 %v5199, %v5200
        %v5203 = vsel %vm665, %v5195, %v5202
        %v5204 = vrot.slane %v5199, 4
        %v5206 = vshrl.u32 %v5143, 16
        %v5208 = vrot.slane %v5206, 7
        %v5209 = vshll.u32 %v5143, 16
        %v5211 = vor.u32 %v5208, %v5209
        %v5212 = vrot.slane %v5208, 4
        %v5214 = vshrl.u32 %v5144, 16
        %v5216 = vrot.slane %v5214, 7
        %v5217 = vshll.u32 %v5144, 16
        %v5219 = vor.u32 %v5216, %v5217
        %v5220 = vsel %vm665, %v5212, %v5219
        %v5221 = vrot.slane %v5216, 4
        %v5223 = vshrl.u32 %v5145, 16
        %v5225 = vrot.slane %v5223, 7
        %v5226 = vshll.u32 %v5145, 16
        %v5228 = vor.u32 %v5225, %v5226
        %v5229 = vrot.slane %v5225, 4
        %v5231 = vshrl.u32 %v5146, 16
        %v5233 = vrot.slane %v5231, 7
        %v5234 = vshll.u32 %v5146, 16
        %v5236 = vor.u32 %v5233, %v5234
        %v5237 = vsel %vm665, %v5229, %v5236
        %v5238 = vrot.slane %v5233, 4
        %v5240 = vshrl.u32 %v5147, 16
        %v5242 = vrot.slane %v5240, 7
        %v5243 = vshll.u32 %v5147, 16
        %v5245 = vor.u32 %v5242, %v5243
        %v5246 = vrot.slane %v5242, 4
        %v5248 = vshrl.u32 %v5148, 16
        %v5250 = vrot.slane %v5248, 7
        %v5251 = vshll.u32 %v5148, 16
        %v5253 = vor.u32 %v5250, %v5251
        %v5254 = vsel %vm665, %v5246, %v5253
        %v5255 = vrot.slane %v5250, 4
        %v5257 = vshrl.u32 %v5149, 16
        %v5259 = vrot.slane %v5257, 7
        %v5260 = vshll.u32 %v5149, 16
        %v5262 = vor.u32 %v5259, %v5260
        %v5263 = vrot.slane %v5259, 4
        %v5265 = vshrl.u32 %v5150, 16
        %v5267 = vrot.slane %v5265, 7
        %v5268 = vshll.u32 %v5150, 16
        %v5270 = vor.u32 %v5267, %v5268
        %v5271 = vsel %vm665, %v5263, %v5270
        %v5272 = vrot.slane %v5267, 4
        %v5274 = vshrl.u32 %v5151, 16
        %v5276 = vrot.slane %v5274, 7
        %v5277 = vshll.u32 %v5151, 16
        %v5279 = vor.u32 %v5276, %v5277
        %v5280 = vrot.slane %v5276, 4
        %v5282 = vshrl.u32 %v5152, 16
        %v5284 = vrot.slane %v5282, 7
        %v5285 = vshll.u32 %v5152, 16
        %v5287 = vor.u32 %v5284, %v5285
        %v5288 = vsel %vm665, %v5280, %v5287
        %v5289 = vrot.slane %v5284, 4
        %v5291 = vshrl.u32 %v5153, 16
        %v5293 = vrot.slane %v5291, 7
        %v5294 = vshll.u32 %v5153, 16
        %v5296 = vor.u32 %v5293, %v5294
        %v5297 = vrot.slane %v5293, 4
        %v5299 = vshrl.u32 %v5154, 16
        %v5301 = vrot.slane %v5299, 7
        %v5302 = vshll.u32 %v5154, 16
        %v5304 = vor.u32 %v5301, %v5302
        %v5305 = vsel %vm665, %v5297, %v5304
        %v5306 = vrot.slane %v5301, 4
        %v5308 = vshrl.u32 %v5155, 16
        %v5310 = vrot.slane %v5308, 7
        %v5311 = vshll.u32 %v5155, 16
        %v5313 = vor.u32 %v5310, %v5311
        %v5314 = vrot.slane %v5310, 4
        %v5316 = vshrl.u32 %v5156, 16
        %v5318 = vrot.slane %v5316, 7
        %v5319 = vshll.u32 %v5156, 16
        %v5321 = vor.u32 %v5318, %v5319
        %v5322 = vsel %vm665, %v5314, %v5321
        %v5323 = vrot.slane %v5318, 4
        %v5325 = vshrl.u32 %v5157, 16
        %v5327 = vrot.slane %v5325, 7
        %v5328 = vshll.u32 %v5157, 16
        %v5330 = vor.u32 %v5327, %v5328
        %v5331 = vrot.slane %v5327, 4
        %v5333 = vshrl.u32 %v5158, 16
        %v5335 = vrot.slane %v5333, 7
        %v5336 = vshll.u32 %v5158, 16
        %v5338 = vor.u32 %v5335, %v5336
        %v5339 = vsel %vm665, %v5331, %v5338
        %v5340 = vrot.slane %v5335, 4
        %v5342 = vshrl.u32 %v5159, 16
        %v5344 = vrot.slane %v5342, 7
        %v5345 = vshll.u32 %v5159, 16
        %v5347 = vor.u32 %v5344, %v5345
        %v5348 = vrot.slane %v5344, 4
        %v5350 = vshrl.u32 %v5160, 16
        %v5352 = vrot.slane %v5350, 7
        %v5353 = vshll.u32 %v5160, 16
        %v5355 = vor.u32 %v5352, %v5353
        %v5356 = vsel %vm665, %v5348, %v5355
        %v5357 = vrot.slane %v5352, 4
        %v5359 = vshrl.u32 %v5161, 16
        %v5361 = vrot.slane %v5359, 7
        %v5362 = vshll.u32 %v5161, 16
        %v5364 = vor.u32 %v5361, %v5362
        %v5365 = vrot.slane %v5361, 4
        %v5367 = vshrl.u32 %v5162, 16
        %v5369 = vrot.slane %v5367, 7
        %v5370 = vshll.u32 %v5162, 16
        %v5372 = vor.u32 %v5369, %v5370
        %v5373 = vsel %vm665, %v5365, %v5372
        %v5374 = vrot.slane %v5369, 4
        %v5376 = vshrl.u32 %v5163, 16
        %v5378 = vrot.slane %v5376, 7
        %v5379 = vshll.u32 %v5163, 16
        %v5381 = vor.u32 %v5378, %v5379
        %v5382 = vrot.slane %v5378, 4
        %v5384 = vshrl.u32 %v5164, 16
        %v5386 = vrot.slane %v5384, 7
        %v5387 = vshll.u32 %v5164, 16
        %v5389 = vor.u32 %v5386, %v5387
        %v5390 = vsel %vm665, %v5382, %v5389
        %v5391 = vrot.slane %v5386, 4
        %v5393 = vshrl.u32 %v5165, 16
        %v5395 = vrot.slane %v5393, 7
        %v5396 = vshll.u32 %v5165, 16
        %v5398 = vor.u32 %v5395, %v5396
        %v5399 = vrot.slane %v5395, 4
        %v5401 = vshrl.u32 %v5166, 16
        %v5403 = vrot.slane %v5401, 7
        %v5404 = vshll.u32 %v5166, 16
        %v5406 = vor.u32 %v5403, %v5404
        %v5407 = vsel %vm665, %v5399, %v5406
        %v5408 = vrot.slane %v5403, 4
        %v5410 = vshrl.u32 %v5167, 16
        %v5412 = vrot.slane %v5410, 7
        %v5413 = vshll.u32 %v5167, 16
        %v5415 = vor.u32 %v5412, %v5413
        %v5416 = vrot.slane %v5412, 4
        %v5418 = vshrl.u32 %v5168, 16
        %v5420 = vrot.slane %v5418, 7
        %v5421 = vshll.u32 %v5168, 16
        %v5423 = vor.u32 %v5420, %v5421
        %v5424 = vsel %vm665, %v5416, %v5423
        %v5425 = vrot.slane %v5420, 4
        %v5427 = vshrl.u32 %v5169, 16
        %v5429 = vrot.slane %v5427, 7
        %v5430 = vshll.u32 %v5169, 16
        %v5432 = vor.u32 %v5429, %v5430
        %v5433 = vrot.slane %v5429, 4
        %v5435 = vshrl.u32 %v5170, 16
        %v5437 = vrot.slane %v5435, 7
        %v5438 = vshll.u32 %v5170, 16
        %v5440 = vor.u32 %v5437, %v5438
        %v5441 = vsel %vm665, %v5433, %v5440
        %v5442 = vrot.slane %v5437, 4
        %s5491 = scalar_lea.vmem [#allocation4], 12
        %v5492 = vld [vmem:[%s5491] sm:$0xf]
        %v5493 = vsel %vm989, %v5177, %v5492
        %5494 = vst [vmem:[%s5491] sm:$0xf] %v5493
        %5495 = vst.msk [vmem:[%s5491 + $0x4] sm:$0xf] %vm251, %v5186
        %v5496 = vld [vmem:[%s5491 + $0x8] sm:$0x1]
        %v5497 = vsel %vm995, %v5187, %v5496
        %5498 = vst [vmem:[%s5491 + $0x8] sm:$0x1] %v5497
        %v5499 = vld [vmem:[%s5491 + $0xc] sm:$0xf]
        %v5500 = vsel %vm989, %v5194, %v5499
        %5501 = vst [vmem:[%s5491 + $0xc] sm:$0xf] %v5500
        %5502 = vst.msk [vmem:[%s5491 + $0x10] sm:$0xf] %vm251, %v5203
        %v5503 = vld [vmem:[%s5491 + $0x14] sm:$0x1]
        %v5504 = vsel %vm995, %v5204, %v5503
        %5505 = vst [vmem:[%s5491 + $0x14] sm:$0x1] %v5504
        %v5506 = vld [vmem:[%s5491 + $0x18] sm:$0xf]
        %v5507 = vsel %vm989, %v5211, %v5506
        %5508 = vst [vmem:[%s5491 + $0x18] sm:$0xf] %v5507
        %5509 = vst.msk [vmem:[%s5491 + $0x1c] sm:$0xf] %vm251, %v5220
        %v5510 = vld [vmem:[%s5491 + $0x20] sm:$0x1]
        %v5511 = vsel %vm995, %v5221, %v5510
        %5512 = vst [vmem:[%s5491 + $0x20] sm:$0x1] %v5511
        %v5513 = vld [vmem:[%s5491 + $0x24] sm:$0xf]
        %v5514 = vsel %vm989, %v5228, %v5513
        %5515 = vst [vmem:[%s5491 + $0x24] sm:$0xf] %v5514
        %5516 = vst.msk [vmem:[%s5491 + $0x28] sm:$0xf] %vm251, %v5237
        %v5517 = vld [vmem:[%s5491 + $0x2c] sm:$0x1]
        %v5518 = vsel %vm995, %v5238, %v5517
        %5519 = vst [vmem:[%s5491 + $0x2c] sm:$0x1] %v5518
        %v5520 = vld [vmem:[%s5491 + $0x30] sm:$0xf]
        %v5521 = vsel %vm989, %v5245, %v5520
        %5522 = vst [vmem:[%s5491 + $0x30] sm:$0xf] %v5521
        %5523 = vst.msk [vmem:[%s5491 + $0x34] sm:$0xf] %vm251, %v5254
        %v5524 = vld [vmem:[%s5491 + $0x38] sm:$0x1]
        %v5525 = vsel %vm995, %v5255, %v5524
        %5526 = vst [vmem:[%s5491 + $0x38] sm:$0x1] %v5525
        %v5527 = vld [vmem:[%s5491 + $0x3c] sm:$0xf]
        %v5528 = vsel %vm989, %v5262, %v5527
        %5529 = vst [vmem:[%s5491 + $0x3c] sm:$0xf] %v5528
        %5530 = vst.msk [vmem:[%s5491 + $0x40] sm:$0xf] %vm251, %v5271
        %v5531 = vld [vmem:[%s5491 + $0x44] sm:$0x1]
        %v5532 = vsel %vm995, %v5272, %v5531
        %5533 = vst [vmem:[%s5491 + $0x44] sm:$0x1] %v5532
        %v5534 = vld [vmem:[%s5491 + $0x48] sm:$0xf]
        %v5535 = vsel %vm989, %v5279, %v5534
        %5536 = vst [vmem:[%s5491 + $0x48] sm:$0xf] %v5535
        %5537 = vst.msk [vmem:[%s5491 + $0x4c] sm:$0xf] %vm251, %v5288
        %v5538 = vld [vmem:[%s5491 + $0x50] sm:$0x1]
        %v5539 = vsel %vm995, %v5289, %v5538
        %5540 = vst [vmem:[%s5491 + $0x50] sm:$0x1] %v5539
        %v5541 = vld [vmem:[%s5491 + $0x54] sm:$0xf]
        %v5542 = vsel %vm989, %v5296, %v5541
        %5543 = vst [vmem:[%s5491 + $0x54] sm:$0xf] %v5542
        %5544 = vst.msk [vmem:[%s5491 + $0x58] sm:$0xf] %vm251, %v5305
        %v5545 = vld [vmem:[%s5491 + $0x5c] sm:$0x1]
        %v5546 = vsel %vm995, %v5306, %v5545
        %5547 = vst [vmem:[%s5491 + $0x5c] sm:$0x1] %v5546
        %v5548 = vld [vmem:[%s5491 + $0x60] sm:$0xf]
        %v5549 = vsel %vm989, %v5313, %v5548
        %5550 = vst [vmem:[%s5491 + $0x60] sm:$0xf] %v5549
        %5551 = vst.msk [vmem:[%s5491 + $0x64] sm:$0xf] %vm251, %v5322
        %v5552 = vld [vmem:[%s5491 + $0x68] sm:$0x1]
        %v5553 = vsel %vm995, %v5323, %v5552
        %5554 = vst [vmem:[%s5491 + $0x68] sm:$0x1] %v5553
        %v5555 = vld [vmem:[%s5491 + $0x6c] sm:$0xf]
        %v5556 = vsel %vm989, %v5330, %v5555
        %5557 = vst [vmem:[%s5491 + $0x6c] sm:$0xf] %v5556
        %5558 = vst.msk [vmem:[%s5491 + $0x70] sm:$0xf] %vm251, %v5339
        %v5559 = vld [vmem:[%s5491 + $0x74] sm:$0x1]
        %v5560 = vsel %vm995, %v5340, %v5559
        %5561 = vst [vmem:[%s5491 + $0x74] sm:$0x1] %v5560
        %v5562 = vld [vmem:[%s5491 + $0x78] sm:$0xf]
        %v5563 = vsel %vm989, %v5347, %v5562
        %5564 = vst [vmem:[%s5491 + $0x78] sm:$0xf] %v5563
        %5565 = vst.msk [vmem:[%s5491 + $0x7c] sm:$0xf] %vm251, %v5356
        %v5566 = vld [vmem:[%s5491 + $0x80] sm:$0x1]
        %v5567 = vsel %vm995, %v5357, %v5566
        %5568 = vst [vmem:[%s5491 + $0x80] sm:$0x1] %v5567
        %v5569 = vld [vmem:[%s5491 + $0x84] sm:$0xf]
        %v5570 = vsel %vm989, %v5364, %v5569
        %5571 = vst [vmem:[%s5491 + $0x84] sm:$0xf] %v5570
        %5572 = vst.msk [vmem:[%s5491 + $0x88] sm:$0xf] %vm251, %v5373
        %v5573 = vld [vmem:[%s5491 + $0x8c] sm:$0x1]
        %v5574 = vsel %vm995, %v5374, %v5573
        %5575 = vst [vmem:[%s5491 + $0x8c] sm:$0x1] %v5574
        %v5576 = vld [vmem:[%s5491 + $0x90] sm:$0xf]
        %v5577 = vsel %vm989, %v5381, %v5576
        %5578 = vst [vmem:[%s5491 + $0x90] sm:$0xf] %v5577
        %5579 = vst.msk [vmem:[%s5491 + $0x94] sm:$0xf] %vm251, %v5390
        %v5580 = vld [vmem:[%s5491 + $0x98] sm:$0x1]
        %v5581 = vsel %vm995, %v5391, %v5580
        %5582 = vst [vmem:[%s5491 + $0x98] sm:$0x1] %v5581
        %v5583 = vld [vmem:[%s5491 + $0x9c] sm:$0xf]
        %v5584 = vsel %vm989, %v5398, %v5583
        %5585 = vst [vmem:[%s5491 + $0x9c] sm:$0xf] %v5584
        %5586 = vst.msk [vmem:[%s5491 + $0xa0] sm:$0xf] %vm251, %v5407
        %v5587 = vld [vmem:[%s5491 + $0xa4] sm:$0x1]
        %v5588 = vsel %vm995, %v5408, %v5587
        %5589 = vst [vmem:[%s5491 + $0xa4] sm:$0x1] %v5588
        %v5590 = vld [vmem:[%s5491 + $0xa8] sm:$0xf]
        %v5591 = vsel %vm989, %v5415, %v5590
        %5592 = vst [vmem:[%s5491 + $0xa8] sm:$0xf] %v5591
        %5593 = vst.msk [vmem:[%s5491 + $0xac] sm:$0xf] %vm251, %v5424
        %v5594 = vld [vmem:[%s5491 + $0xb0] sm:$0x1]
        %v5595 = vsel %vm995, %v5425, %v5594
        %5596 = vst [vmem:[%s5491 + $0xb0] sm:$0x1] %v5595
        %v5597 = vld [vmem:[%s5491 + $0xb4] sm:$0xf]
        %v5598 = vsel %vm989, %v5432, %v5597
        %5599 = vst [vmem:[%s5491 + $0xb4] sm:$0xf] %v5598
        %5600 = vst.msk [vmem:[%s5491 + $0xb8] sm:$0xf] %vm251, %v5441
        %v5601 = vld [vmem:[%s5491 + $0xbc] sm:$0x1]
        %v5602 = vsel %vm995, %v5442, %v5601
        %5603 = vst [vmem:[%s5491 + $0xbc] sm:$0x1] %v5602
        %v5604 = vld [vmem:[#allocation4] sm:$0xf]
        %v5605 = vld [vmem:[#allocation4 + $0x4] sm:$0xf]
        %v5606 = vld [vmem:[#allocation4 + $0xc] sm:$0xf]
        %v5607 = vld [vmem:[#allocation4 + $0x10] sm:$0xf]
        %v5608 = vld [vmem:[#allocation4 + $0x18] sm:$0xf]
        %v5609 = vld [vmem:[#allocation4 + $0x1c] sm:$0xf]
        %v5610 = vld [vmem:[#allocation4 + $0x24] sm:$0xf]
        %v5611 = vld [vmem:[#allocation4 + $0x28] sm:$0xf]
        %v5612 = vld [vmem:[#allocation4 + $0x30] sm:$0xf]
        %v5613 = vld [vmem:[#allocation4 + $0x34] sm:$0xf]
        %v5614 = vld [vmem:[#allocation4 + $0x3c] sm:$0xf]
        %v5615 = vld [vmem:[#allocation4 + $0x40] sm:$0xf]
        %v5616 = vld [vmem:[#allocation4 + $0x48] sm:$0xf]
        %v5617 = vld [vmem:[#allocation4 + $0x4c] sm:$0xf]
        %v5618 = vld [vmem:[#allocation4 + $0x54] sm:$0xf]
        %v5619 = vld [vmem:[#allocation4 + $0x58] sm:$0xf]
        %v5620 = vld [vmem:[#allocation4 + $0x60] sm:$0xf]
        %v5621 = vld [vmem:[#allocation4 + $0x64] sm:$0xf]
        %v5622 = vld [vmem:[#allocation4 + $0x6c] sm:$0xf]
        %v5623 = vld [vmem:[#allocation4 + $0x70] sm:$0xf]
        %v5624 = vld [vmem:[#allocation4 + $0x78] sm:$0xf]
        %v5625 = vld [vmem:[#allocation4 + $0x7c] sm:$0xf]
        %v5626 = vld [vmem:[#allocation4 + $0x84] sm:$0xf]
        %v5627 = vld [vmem:[#allocation4 + $0x88] sm:$0xf]
        %v5628 = vld [vmem:[#allocation4 + $0x90] sm:$0xf]
        %v5629 = vld [vmem:[#allocation4 + $0x94] sm:$0xf]
        %v5630 = vld [vmem:[#allocation4 + $0x9c] sm:$0xf]
        %v5631 = vld [vmem:[#allocation4 + $0xa0] sm:$0xf]
        %v5632 = vld [vmem:[#allocation4 + $0xa8] sm:$0xf]
        %v5633 = vld [vmem:[#allocation4 + $0xac] sm:$0xf]
        %v5634 = vld [vmem:[#allocation4 + $0xb4] sm:$0xf]
        %v5635 = vld [vmem:[#allocation4 + $0xb8] sm:$0xf]
        %v5668 = vunpack.c.l.b16 %v5604
        %v5669 = vunpack.c.l.b16 %v5605
        %v5670 = vunpack.c.l.b16 %v5606
        %v5671 = vunpack.c.l.b16 %v5607
        %v5672 = vunpack.c.l.b16 %v5608
        %v5673 = vunpack.c.l.b16 %v5609
        %v5674 = vunpack.c.l.b16 %v5610
        %v5675 = vunpack.c.l.b16 %v5611
        %v5676 = vunpack.c.l.b16 %v5612
        %v5677 = vunpack.c.l.b16 %v5613
        %v5678 = vunpack.c.l.b16 %v5614
        %v5679 = vunpack.c.l.b16 %v5615
        %v5680 = vunpack.c.l.b16 %v5616
        %v5681 = vunpack.c.l.b16 %v5617
        %v5682 = vunpack.c.l.b16 %v5618
        %v5683 = vunpack.c.l.b16 %v5619
        %v5684 = vunpack.c.l.b16 %v5620
        %v5685 = vunpack.c.l.b16 %v5621
        %v5686 = vunpack.c.l.b16 %v5622
        %v5687 = vunpack.c.l.b16 %v5623
        %v5688 = vunpack.c.l.b16 %v5624
        %v5689 = vunpack.c.l.b16 %v5625
        %v5690 = vunpack.c.l.b16 %v5626
        %v5691 = vunpack.c.l.b16 %v5627
        %v5692 = vunpack.c.l.b16 %v5628
        %v5693 = vunpack.c.l.b16 %v5629
        %v5694 = vunpack.c.l.b16 %v5630
        %v5695 = vunpack.c.l.b16 %v5631
        %v5696 = vunpack.c.l.b16 %v5632
        %v5697 = vunpack.c.l.b16 %v5633
        %v5698 = vunpack.c.l.b16 %v5634
        %v5699 = vunpack.c.l.b16 %v5635
        %v5700 = vpack.c.b16 %v5669, %v5668
        %v5701 = vpack.c.b16 %v5671, %v5670
        %v5702 = vpack.c.b16 %v5673, %v5672
        %v5703 = vpack.c.b16 %v5675, %v5674
        %v5704 = vpack.c.b16 %v5677, %v5676
        %v5705 = vpack.c.b16 %v5679, %v5678
        %v5706 = vpack.c.b16 %v5681, %v5680
        %v5707 = vpack.c.b16 %v5683, %v5682
        %v5708 = vpack.c.b16 %v5685, %v5684
        %v5709 = vpack.c.b16 %v5687, %v5686
        %v5710 = vpack.c.b16 %v5689, %v5688
        %v5711 = vpack.c.b16 %v5691, %v5690
        %v5712 = vpack.c.b16 %v5693, %v5692
        %v5713 = vpack.c.b16 %v5695, %v5694
        %v5714 = vpack.c.b16 %v5697, %v5696
        %v5715 = vpack.c.b16 %v5699, %v5698
        %5732 = vst.msk [vmem:[#allocation5] sm:$0xff] %vm1232, %v5700
        %5733 = vst.msk [vmem:[#allocation5 + $0x28] sm:$0xff] %vm1232, %v5701
        %5734 = vst.msk [vmem:[#allocation5 + $0x50] sm:$0xff] %vm1232, %v5702
        %5735 = vst.msk [vmem:[#allocation5 + $0x78] sm:$0xff] %vm1232, %v5703
        %5736 = vst.msk [vmem:[#allocation5 + $0xa0] sm:$0xff] %vm1232, %v5704
        %5737 = vst.msk [vmem:[#allocation5 + $0xc8] sm:$0xff] %vm1232, %v5705
        %5738 = vst.msk [vmem:[#allocation5 + $0xf0] sm:$0xff] %vm1232, %v5706
        %5739 = vst.msk [vmem:[#allocation5 + $0x118] sm:$0xff] %vm1232, %v5707
        %5740 = vst.msk [vmem:[#allocation5 + $0x140] sm:$0xff] %vm1232, %v5708
        %5741 = vst.msk [vmem:[#allocation5 + $0x168] sm:$0xff] %vm1232, %v5709
        %5742 = vst.msk [vmem:[#allocation5 + $0x190] sm:$0xff] %vm1232, %v5710
        %5743 = vst.msk [vmem:[#allocation5 + $0x1b8] sm:$0xff] %vm1232, %v5711
        %5744 = vst.msk [vmem:[#allocation5 + $0x1e0] sm:$0xff] %vm1232, %v5712
        %5745 = vst.msk [vmem:[#allocation5 + $0x208] sm:$0xff] %vm1232, %v5713
        %5746 = vst.msk [vmem:[#allocation5 + $0x230] sm:$0xff] %vm1232, %v5714
        %5747 = vst.msk [vmem:[#allocation5 + $0x258] sm:$0xff] %vm1232, %v5715
        %v5748 = vld [vmem:[#allocation4] sm:$0xf]
        %v5749 = vld [vmem:[#allocation4 + $0x4] sm:$0xf]
        %v5750 = vld [vmem:[#allocation4 + $0x8] sm:$0x1]
        %v5751 = vld [vmem:[#allocation4 + $0xc] sm:$0xf]
        %v5752 = vld [vmem:[#allocation4 + $0x10] sm:$0xf]
        %v5753 = vld [vmem:[#allocation4 + $0x14] sm:$0x1]
        %v5754 = vld [vmem:[#allocation4 + $0x18] sm:$0xf]
        %v5755 = vld [vmem:[#allocation4 + $0x1c] sm:$0xf]
        %v5756 = vld [vmem:[#allocation4 + $0x20] sm:$0x1]
        %v5757 = vld [vmem:[#allocation4 + $0x24] sm:$0xf]
        %v5758 = vld [vmem:[#allocation4 + $0x28] sm:$0xf]
        %v5759 = vld [vmem:[#allocation4 + $0x2c] sm:$0x1]
        %v5760 = vld [vmem:[#allocation4 + $0x30] sm:$0xf]
        %v5761 = vld [vmem:[#allocation4 + $0x34] sm:$0xf]
        %v5762 = vld [vmem:[#allocation4 + $0x38] sm:$0x1]
        %v5763 = vld [vmem:[#allocation4 + $0x3c] sm:$0xf]
        %v5764 = vld [vmem:[#allocation4 + $0x40] sm:$0xf]
        %v5765 = vld [vmem:[#allocation4 + $0x44] sm:$0x1]
        %v5766 = vld [vmem:[#allocation4 + $0x48] sm:$0xf]
        %v5767 = vld [vmem:[#allocation4 + $0x4c] sm:$0xf]
        %v5768 = vld [vmem:[#allocation4 + $0x50] sm:$0x1]
        %v5769 = vld [vmem:[#allocation4 + $0x54] sm:$0xf]
        %v5770 = vld [vmem:[#allocation4 + $0x58] sm:$0xf]
        %v5771 = vld [vmem:[#allocation4 + $0x5c] sm:$0x1]
        %v5772 = vld [vmem:[#allocation4 + $0x60] sm:$0xf]
        %v5773 = vld [vmem:[#allocation4 + $0x64] sm:$0xf]
        %v5774 = vld [vmem:[#allocation4 + $0x68] sm:$0x1]
        %v5775 = vld [vmem:[#allocation4 + $0x6c] sm:$0xf]
        %v5776 = vld [vmem:[#allocation4 + $0x70] sm:$0xf]
        %v5777 = vld [vmem:[#allocation4 + $0x74] sm:$0x1]
        %v5778 = vld [vmem:[#allocation4 + $0x78] sm:$0xf]
        %v5779 = vld [vmem:[#allocation4 + $0x7c] sm:$0xf]
        %v5780 = vld [vmem:[#allocation4 + $0x80] sm:$0x1]
        %v5781 = vld [vmem:[#allocation4 + $0x84] sm:$0xf]
        %v5782 = vld [vmem:[#allocation4 + $0x88] sm:$0xf]
        %v5783 = vld [vmem:[#allocation4 + $0x8c] sm:$0x1]
        %v5784 = vld [vmem:[#allocation4 + $0x90] sm:$0xf]
        %v5785 = vld [vmem:[#allocation4 + $0x94] sm:$0xf]
        %v5786 = vld [vmem:[#allocation4 + $0x98] sm:$0x1]
        %v5787 = vld [vmem:[#allocation4 + $0x9c] sm:$0xf]
        %v5788 = vld [vmem:[#allocation4 + $0xa0] sm:$0xf]
        %v5789 = vld [vmem:[#allocation4 + $0xa4] sm:$0x1]
        %v5790 = vld [vmem:[#allocation4 + $0xa8] sm:$0xf]
        %v5791 = vld [vmem:[#allocation4 + $0xac] sm:$0xf]
        %v5792 = vld [vmem:[#allocation4 + $0xb0] sm:$0x1]
        %v5793 = vld [vmem:[#allocation4 + $0xb4] sm:$0xf]
        %v5794 = vld [vmem:[#allocation4 + $0xb8] sm:$0xf]
        %v5795 = vld [vmem:[#allocation4 + $0xbc] sm:$0x1]
        %v5797 = vshrl.u32 %v5748, 16
        %v5799 = vrot.slane %v5797, 4
        %v5800 = vshll.u32 %v5748, 16
        %v5802 = vrot.slane %v5800, 5
        %v5803 = vor.u32 %v5799, %v5802
        %v5804 = vrot.slane %v5803, 4
        %v5806 = vshll.u32 %v5749, 16
        %v5808 = vrot.slane %v5806, 5
        %v5809 = vsel %vm1299, %v5804, %v5808
        %v5810 = vshrl.u32 %v5749, 16
        %v5812 = vrot.slane %v5810, 4
        %v5813 = vor.u32 %v5812, %v5808
        %v5814 = vrot.slane %v5813, 4
        %v5816 = vshll.u32 %v5750, 16
        %v5818 = vrot.slane %v5816, 5
        %v5819 = vsel %vm1299, %v5814, %v5818
        %v5821 = vshrl.u32 %v5751, 16
        %v5823 = vrot.slane %v5821, 4
        %v5824 = vshll.u32 %v5751, 16
        %v5826 = vrot.slane %v5824, 5
        %v5827 = vor.u32 %v5823, %v5826
        %v5828 = vrot.slane %v5827, 4
        %v5830 = vshll.u32 %v5752, 16
        %v5832 = vrot.slane %v5830, 5
        %v5833 = vsel %vm1299, %v5828, %v5832
        %v5834 = vshrl.u32 %v5752, 16
        %v5836 = vrot.slane %v5834, 4
        %v5837 = vor.u32 %v5836, %v5832
        %v5838 = vrot.slane %v5837, 4
        %v5840 = vshll.u32 %v5753, 16
        %v5842 = vrot.slane %v5840, 5
        %v5843 = vsel %vm1299, %v5838, %v5842
        %v5845 = vshrl.u32 %v5754, 16
        %v5847 = vrot.slane %v5845, 4
        %v5848 = vshll.u32 %v5754, 16
        %v5850 = vrot.slane %v5848, 5
        %v5851 = vor.u32 %v5847, %v5850
        %v5852 = vrot.slane %v5851, 4
        %v5854 = vshll.u32 %v5755, 16
        %v5856 = vrot.slane %v5854, 5
        %v5857 = vsel %vm1299, %v5852, %v5856
        %v5858 = vshrl.u32 %v5755, 16
        %v5860 = vrot.slane %v5858, 4
        %v5861 = vor.u32 %v5860, %v5856
        %v5862 = vrot.slane %v5861, 4
        %v5864 = vshll.u32 %v5756, 16
        %v5866 = vrot.slane %v5864, 5
        %v5867 = vsel %vm1299, %v5862, %v5866
        %v5869 = vshrl.u32 %v5757, 16
        %v5871 = vrot.slane %v5869, 4
        %v5872 = vshll.u32 %v5757, 16
        %v5874 = vrot.slane %v5872, 5
        %v5875 = vor.u32 %v5871, %v5874
        %v5876 = vrot.slane %v5875, 4
        %v5878 = vshll.u32 %v5758, 16
        %v5880 = vrot.slane %v5878, 5
        %v5881 = vsel %vm1299, %v5876, %v5880
        %v5882 = vshrl.u32 %v5758, 16
        %v5884 = vrot.slane %v5882, 4
        %v5885 = vor.u32 %v5884, %v5880
        %v5886 = vrot.slane %v5885, 4
        %v5888 = vshll.u32 %v5759, 16
        %v5890 = vrot.slane %v5888, 5
        %v5891 = vsel %vm1299, %v5886, %v5890
        %v5893 = vshrl.u32 %v5760, 16
        %v5895 = vrot.slane %v5893, 4
        %v5896 = vshll.u32 %v5760, 16
        %v5898 = vrot.slane %v5896, 5
        %v5899 = vor.u32 %v5895, %v5898
        %v5900 = vrot.slane %v5899, 4
        %v5902 = vshll.u32 %v5761, 16
        %v5904 = vrot.slane %v5902, 5
        %v5905 = vsel %vm1299, %v5900, %v5904
        %v5906 = vshrl.u32 %v5761, 16
        %v5908 = vrot.slane %v5906, 4
        %v5909 = vor.u32 %v5908, %v5904
        %v5910 = vrot.slane %v5909, 4
        %v5912 = vshll.u32 %v5762, 16
        %v5914 = vrot.slane %v5912, 5
        %v5915 = vsel %vm1299, %v5910, %v5914
        %v5917 = vshrl.u32 %v5763, 16
        %v5919 = vrot.slane %v5917, 4
        %v5920 = vshll.u32 %v5763, 16
        %v5922 = vrot.slane %v5920, 5
        %v5923 = vor.u32 %v5919, %v5922
        %v5924 = vrot.slane %v5923, 4
        %v5926 = vshll.u32 %v5764, 16
        %v5928 = vrot.slane %v5926, 5
        %v5929 = vsel %vm1299, %v5924, %v5928
        %v5930 = vshrl.u32 %v5764, 16
        %v5932 = vrot.slane %v5930, 4
        %v5933 = vor.u32 %v5932, %v5928
        %v5934 = vrot.slane %v5933, 4
        %v5936 = vshll.u32 %v5765, 16
        %v5938 = vrot.slane %v5936, 5
        %v5939 = vsel %vm1299, %v5934, %v5938
        %v5941 = vshrl.u32 %v5766, 16
        %v5943 = vrot.slane %v5941, 4
        %v5944 = vshll.u32 %v5766, 16
        %v5946 = vrot.slane %v5944, 5
        %v5947 = vor.u32 %v5943, %v5946
        %v5948 = vrot.slane %v5947, 4
        %v5950 = vshll.u32 %v5767, 16
        %v5952 = vrot.slane %v5950, 5
        %v5953 = vsel %vm1299, %v5948, %v5952
        %v5954 = vshrl.u32 %v5767, 16
        %v5956 = vrot.slane %v5954, 4
        %v5957 = vor.u32 %v5956, %v5952
        %v5958 = vrot.slane %v5957, 4
        %v5960 = vshll.u32 %v5768, 16
        %v5962 = vrot.slane %v5960, 5
        %v5963 = vsel %vm1299, %v5958, %v5962
        %v5965 = vshrl.u32 %v5769, 16
        %v5967 = vrot.slane %v5965, 4
        %v5968 = vshll.u32 %v5769, 16
        %v5970 = vrot.slane %v5968, 5
        %v5971 = vor.u32 %v5967, %v5970
        %v5972 = vrot.slane %v5971, 4
        %v5974 = vshll.u32 %v5770, 16
        %v5976 = vrot.slane %v5974, 5
        %v5977 = vsel %vm1299, %v5972, %v5976
        %v5978 = vshrl.u32 %v5770, 16
        %v5980 = vrot.slane %v5978, 4
        %v5981 = vor.u32 %v5980, %v5976
        %v5982 = vrot.slane %v5981, 4
        %v5984 = vshll.u32 %v5771, 16
        %v5986 = vrot.slane %v5984, 5
        %v5987 = vsel %vm1299, %v5982, %v5986
        %v5989 = vshrl.u32 %v5772, 16
        %v5991 = vrot.slane %v5989, 4
        %v5992 = vshll.u32 %v5772, 16
        %v5994 = vrot.slane %v5992, 5
        %v5995 = vor.u32 %v5991, %v5994
        %v5996 = vrot.slane %v5995, 4
        %v5998 = vshll.u32 %v5773, 16
        %v6000 = vrot.slane %v5998, 5
        %v6001 = vsel %vm1299, %v5996, %v6000
        %v6002 = vshrl.u32 %v5773, 16
        %v6004 = vrot.slane %v6002, 4
        %v6005 = vor.u32 %v6004, %v6000
        %v6006 = vrot.slane %v6005, 4
        %v6008 = vshll.u32 %v5774, 16
        %v6010 = vrot.slane %v6008, 5
        %v6011 = vsel %vm1299, %v6006, %v6010
        %v6013 = vshrl.u32 %v5775, 16
        %v6015 = vrot.slane %v6013, 4
        %v6016 = vshll.u32 %v5775, 16
        %v6018 = vrot.slane %v6016, 5
        %v6019 = vor.u32 %v6015, %v6018
        %v6020 = vrot.slane %v6019, 4
        %v6022 = vshll.u32 %v5776, 16
        %v6024 = vrot.slane %v6022, 5
        %v6025 = vsel %vm1299, %v6020, %v6024
        %v6026 = vshrl.u32 %v5776, 16
        %v6028 = vrot.slane %v6026, 4
        %v6029 = vor.u32 %v6028, %v6024
        %v6030 = vrot.slane %v6029, 4
        %v6032 = vshll.u32 %v5777, 16
        %v6034 = vrot.slane %v6032, 5
        %v6035 = vsel %vm1299, %v6030, %v6034
        %v6037 = vshrl.u32 %v5778, 16
        %v6039 = vrot.slane %v6037, 4
        %v6040 = vshll.u32 %v5778, 16
        %v6042 = vrot.slane %v6040, 5
        %v6043 = vor.u32 %v6039, %v6042
        %v6044 = vrot.slane %v6043, 4
        %v6046 = vshll.u32 %v5779, 16
        %v6048 = vrot.slane %v6046, 5
        %v6049 = vsel %vm1299, %v6044, %v6048
        %v6050 = vshrl.u32 %v5779, 16
        %v6052 = vrot.slane %v6050, 4
        %v6053 = vor.u32 %v6052, %v6048
        %v6054 = vrot.slane %v6053, 4
        %v6056 = vshll.u32 %v5780, 16
        %v6058 = vrot.slane %v6056, 5
        %v6059 = vsel %vm1299, %v6054, %v6058
        %v6061 = vshrl.u32 %v5781, 16
        %v6063 = vrot.slane %v6061, 4
        %v6064 = vshll.u32 %v5781, 16
        %v6066 = vrot.slane %v6064, 5
        %v6067 = vor.u32 %v6063, %v6066
        %v6068 = vrot.slane %v6067, 4
        %v6070 = vshll.u32 %v5782, 16
        %v6072 = vrot.slane %v6070, 5
        %v6073 = vsel %vm1299, %v6068, %v6072
        %v6074 = vshrl.u32 %v5782, 16
        %v6076 = vrot.slane %v6074, 4
        %v6077 = vor.u32 %v6076, %v6072
        %v6078 = vrot.slane %v6077, 4
        %v6080 = vshll.u32 %v5783, 16
        %v6082 = vrot.slane %v6080, 5
        %v6083 = vsel %vm1299, %v6078, %v6082
        %v6085 = vshrl.u32 %v5784, 16
        %v6087 = vrot.slane %v6085, 4
        %v6088 = vshll.u32 %v5784, 16
        %v6090 = vrot.slane %v6088, 5
        %v6091 = vor.u32 %v6087, %v6090
        %v6092 = vrot.slane %v6091, 4
        %v6094 = vshll.u32 %v5785, 16
        %v6096 = vrot.slane %v6094, 5
        %v6097 = vsel %vm1299, %v6092, %v6096
        %v6098 = vshrl.u32 %v5785, 16
        %v6100 = vrot.slane %v6098, 4
        %v6101 = vor.u32 %v6100, %v6096
        %v6102 = vrot.slane %v6101, 4
        %v6104 = vshll.u32 %v5786, 16
        %v6106 = vrot.slane %v6104, 5
        %v6107 = vsel %vm1299, %v6102, %v6106
        %v6109 = vshrl.u32 %v5787, 16
        %v6111 = vrot.slane %v6109, 4
        %v6112 = vshll.u32 %v5787, 16
        %v6114 = vrot.slane %v6112, 5
        %v6115 = vor.u32 %v6111, %v6114
        %v6116 = vrot.slane %v6115, 4
        %v6118 = vshll.u32 %v5788, 16
        %v6120 = vrot.slane %v6118, 5
        %v6121 = vsel %vm1299, %v6116, %v6120
        %v6122 = vshrl.u32 %v5788, 16
        %v6124 = vrot.slane %v6122, 4
        %v6125 = vor.u32 %v6124, %v6120
        %v6126 = vrot.slane %v6125, 4
        %v6128 = vshll.u32 %v5789, 16
        %v6130 = vrot.slane %v6128, 5
        %v6131 = vsel %vm1299, %v6126, %v6130
        %v6133 = vshrl.u32 %v5790, 16
        %v6135 = vrot.slane %v6133, 4
        %v6136 = vshll.u32 %v5790, 16
        %v6138 = vrot.slane %v6136, 5
        %v6139 = vor.u32 %v6135, %v6138
        %v6140 = vrot.slane %v6139, 4
        %v6142 = vshll.u32 %v5791, 16
        %v6144 = vrot.slane %v6142, 5
        %v6145 = vsel %vm1299, %v6140, %v6144
        %v6146 = vshrl.u32 %v5791, 16
        %v6148 = vrot.slane %v6146, 4
        %v6149 = vor.u32 %v6148, %v6144
        %v6150 = vrot.slane %v6149, 4
        %v6152 = vshll.u32 %v5792, 16
        %v6154 = vrot.slane %v6152, 5
        %v6155 = vsel %vm1299, %v6150, %v6154
        %v6157 = vshrl.u32 %v5793, 16
        %v6159 = vrot.slane %v6157, 4
        %v6160 = vshll.u32 %v5793, 16
        %v6162 = vrot.slane %v6160, 5
        %v6163 = vor.u32 %v6159, %v6162
        %v6164 = vrot.slane %v6163, 4
        %v6166 = vshll.u32 %v5794, 16
        %v6168 = vrot.slane %v6166, 5
        %v6169 = vsel %vm1299, %v6164, %v6168
        %v6170 = vshrl.u32 %v5794, 16
        %v6172 = vrot.slane %v6170, 4
        %v6173 = vor.u32 %v6172, %v6168
        %v6174 = vrot.slane %v6173, 4
        %v6176 = vshll.u32 %v5795, 16
        %v6178 = vrot.slane %v6176, 5
        %v6179 = vsel %vm1299, %v6174, %v6178
        %v6180 = vunpack.c.l.b16 %v5809
        %v6181 = vunpack.c.l.b16 %v5819
        %v6182 = vunpack.c.l.b16 %v5833
        %v6183 = vunpack.c.l.b16 %v5843
        %v6184 = vunpack.c.l.b16 %v5857
        %v6185 = vunpack.c.l.b16 %v5867
        %v6186 = vunpack.c.l.b16 %v5881
        %v6187 = vunpack.c.l.b16 %v5891
        %v6188 = vunpack.c.l.b16 %v5905
        %v6189 = vunpack.c.l.b16 %v5915
        %v6190 = vunpack.c.l.b16 %v5929
        %v6191 = vunpack.c.l.b16 %v5939
        %v6192 = vunpack.c.l.b16 %v5953
        %v6193 = vunpack.c.l.b16 %v5963
        %v6194 = vunpack.c.l.b16 %v5977
        %v6195 = vunpack.c.l.b16 %v5987
        %v6196 = vunpack.c.l.b16 %v6001
        %v6197 = vunpack.c.l.b16 %v6011
        %v6198 = vunpack.c.l.b16 %v6025
        %v6199 = vunpack.c.l.b16 %v6035
        %v6200 = vunpack.c.l.b16 %v6049
        %v6201 = vunpack.c.l.b16 %v6059
        %v6202 = vunpack.c.l.b16 %v6073
        %v6203 = vunpack.c.l.b16 %v6083
        %v6204 = vunpack.c.l.b16 %v6097
        %v6205 = vunpack.c.l.b16 %v6107
        %v6206 = vunpack.c.l.b16 %v6121
        %v6207 = vunpack.c.l.b16 %v6131
        %v6208 = vunpack.c.l.b16 %v6145
        %v6209 = vunpack.c.l.b16 %v6155
        %v6210 = vunpack.c.l.b16 %v6169
        %v6211 = vunpack.c.l.b16 %v6179
        %v6212 = vpack.c.b16 %v6181, %v6180
        %v6213 = vpack.c.b16 %v6183, %v6182
        %v6214 = vpack.c.b16 %v6185, %v6184
        %v6215 = vpack.c.b16 %v6187, %v6186
        %v6216 = vpack.c.b16 %v6189, %v6188
        %v6217 = vpack.c.b16 %v6191, %v6190
        %v6218 = vpack.c.b16 %v6193, %v6192
        %v6219 = vpack.c.b16 %v6195, %v6194
        %v6220 = vpack.c.b16 %v6197, %v6196
        %v6221 = vpack.c.b16 %v6199, %v6198
        %v6222 = vpack.c.b16 %v6201, %v6200
        %v6223 = vpack.c.b16 %v6203, %v6202
        %v6224 = vpack.c.b16 %v6205, %v6204
        %v6225 = vpack.c.b16 %v6207, %v6206
        %v6226 = vpack.c.b16 %v6209, %v6208
        %v6227 = vpack.c.b16 %v6211, %v6210
        %6228 = vrot.lane.b32.xlu0 %v6212, 64
        %v6229 = vpop.permute.xlu0 %6228
        %6230 = vrot.lane.b32.xlu0 %v6213, 64
        %v6231 = vpop.permute.xlu0 %6230
        %6232 = vrot.lane.b32.xlu0 %v6214, 64
        %v6233 = vpop.permute.xlu0 %6232
        %6234 = vrot.lane.b32.xlu0 %v6215, 64
        %v6235 = vpop.permute.xlu0 %6234
        %6236 = vrot.lane.b32.xlu0 %v6216, 64
        %v6237 = vpop.permute.xlu0 %6236
        %6238 = vrot.lane.b32.xlu0 %v6217, 64
        %v6239 = vpop.permute.xlu0 %6238
        %6240 = vrot.lane.b32.xlu0 %v6218, 64
        %v6241 = vpop.permute.xlu0 %6240
        %6242 = vrot.lane.b32.xlu0 %v6219, 64
        %v6243 = vpop.permute.xlu0 %6242
        %6244 = vrot.lane.b32.xlu0 %v6220, 64
        %v6245 = vpop.permute.xlu0 %6244
        %6246 = vrot.lane.b32.xlu0 %v6221, 64
        %v6247 = vpop.permute.xlu0 %6246
        %6248 = vrot.lane.b32.xlu0 %v6222, 64
        %v6249 = vpop.permute.xlu0 %6248
        %6250 = vrot.lane.b32.xlu0 %v6223, 64
        %v6251 = vpop.permute.xlu0 %6250
        %6252 = vrot.lane.b32.xlu0 %v6224, 64
        %v6253 = vpop.permute.xlu0 %6252
        %6254 = vrot.lane.b32.xlu0 %v6225, 64
        %v6255 = vpop.permute.xlu0 %6254
        %6256 = vrot.lane.b32.xlu0 %v6226, 64
        %v6257 = vpop.permute.xlu0 %6256
        %6258 = vrot.lane.b32.xlu0 %v6227, 64
        %v6259 = vpop.permute.xlu0 %6258
        %6276 = vst.msk [vmem:[#allocation5] sm:$0xff] %vm1780, %v6229
        %6277 = vst.msk [vmem:[#allocation5 + $0x28] sm:$0xff] %vm1780, %v6231
        %6278 = vst.msk [vmem:[#allocation5 + $0x50] sm:$0xff] %vm1780, %v6233
        %6279 = vst.msk [vmem:[#allocation5 + $0x78] sm:$0xff] %vm1780, %v6235
        %6280 = vst.msk [vmem:[#allocation5 + $0xa0] sm:$0xff] %vm1780, %v6237
        %6281 = vst.msk [vmem:[#allocation5 + $0xc8] sm:$0xff] %vm1780, %v6239
        %6282 = vst.msk [vmem:[#allocation5 + $0xf0] sm:$0xff] %vm1780, %v6241
        %6283 = vst.msk [vmem:[#allocation5 + $0x118] sm:$0xff] %vm1780, %v6243
        %6284 = vst.msk [vmem:[#allocation5 + $0x140] sm:$0xff] %vm1780, %v6245
        %6285 = vst.msk [vmem:[#allocation5 + $0x168] sm:$0xff] %vm1780, %v6247
        %6286 = vst.msk [vmem:[#allocation5 + $0x190] sm:$0xff] %vm1780, %v6249
        %6287 = vst.msk [vmem:[#allocation5 + $0x1b8] sm:$0xff] %vm1780, %v6251
        %6288 = vst.msk [vmem:[#allocation5 + $0x1e0] sm:$0xff] %vm1780, %v6253
        %6289 = vst.msk [vmem:[#allocation5 + $0x208] sm:$0xff] %vm1780, %v6255
        %6290 = vst.msk [vmem:[#allocation5 + $0x230] sm:$0xff] %vm1780, %v6257
        %6291 = vst.msk [vmem:[#allocation5 + $0x258] sm:$0xff] %vm1780, %v6259
        %v6292 = vld [vmem:[#allocation4] sm:$0xe]
        %v6293 = vld [vmem:[#allocation4 + $0x4] sm:$0xf]
        %v6294 = vld [vmem:[#allocation4 + $0x8] sm:$0x1]
        %v6295 = vld [vmem:[#allocation4 + $0xc] sm:$0xe]
        %v6296 = vld [vmem:[#allocation4 + $0x10] sm:$0xf]
        %v6297 = vld [vmem:[#allocation4 + $0x14] sm:$0x1]
        %v6298 = vld [vmem:[#allocation4 + $0x18] sm:$0xe]
        %v6299 = vld [vmem:[#allocation4 + $0x1c] sm:$0xf]
        %v6300 = vld [vmem:[#allocation4 + $0x20] sm:$0x1]
        %v6301 = vld [vmem:[#allocation4 + $0x24] sm:$0xe]
        %v6302 = vld [vmem:[#allocation4 + $0x28] sm:$0xf]
        %v6303 = vld [vmem:[#allocation4 + $0x2c] sm:$0x1]
        %v6304 = vld [vmem:[#allocation4 + $0x30] sm:$0xe]
        %v6305 = vld [vmem:[#allocation4 + $0x34] sm:$0xf]
        %v6306 = vld [vmem:[#allocation4 + $0x38] sm:$0x1]
        %v6307 = vld [vmem:[#allocation4 + $0x3c] sm:$0xe]
        %v6308 = vld [vmem:[#allocation4 + $0x40] sm:$0xf]
        %v6309 = vld [vmem:[#allocation4 + $0x44] sm:$0x1]
        %v6310 = vld [vmem:[#allocation4 + $0x48] sm:$0xe]
        %v6311 = vld [vmem:[#allocation4 + $0x4c] sm:$0xf]
        %v6312 = vld [vmem:[#allocation4 + $0x50] sm:$0x1]
        %v6313 = vld [vmem:[#allocation4 + $0x54] sm:$0xe]
        %v6314 = vld [vmem:[#allocation4 + $0x58] sm:$0xf]
        %v6315 = vld [vmem:[#allocation4 + $0x5c] sm:$0x1]
        %v6316 = vld [vmem:[#allocation4 + $0x60] sm:$0xe]
        %v6317 = vld [vmem:[#allocation4 + $0x64] sm:$0xf]
        %v6318 = vld [vmem:[#allocation4 + $0x68] sm:$0x1]
        %v6319 = vld [vmem:[#allocation4 + $0x6c] sm:$0xe]
        %v6320 = vld [vmem:[#allocation4 + $0x70] sm:$0xf]
        %v6321 = vld [vmem:[#allocation4 + $0x74] sm:$0x1]
        %v6322 = vld [vmem:[#allocation4 + $0x78] sm:$0xe]
        %v6323 = vld [vmem:[#allocation4 + $0x7c] sm:$0xf]
        %v6324 = vld [vmem:[#allocation4 + $0x80] sm:$0x1]
        %v6325 = vld [vmem:[#allocation4 + $0x84] sm:$0xe]
        %v6326 = vld [vmem:[#allocation4 + $0x88] sm:$0xf]
        %v6327 = vld [vmem:[#allocation4 + $0x8c] sm:$0x1]
        %v6328 = vld [vmem:[#allocation4 + $0x90] sm:$0xe]
        %v6329 = vld [vmem:[#allocation4 + $0x94] sm:$0xf]
        %v6330 = vld [vmem:[#allocation4 + $0x98] sm:$0x1]
        %v6331 = vld [vmem:[#allocation4 + $0x9c] sm:$0xe]
        %v6332 = vld [vmem:[#allocation4 + $0xa0] sm:$0xf]
        %v6333 = vld [vmem:[#allocation4 + $0xa4] sm:$0x1]
        %v6334 = vld [vmem:[#allocation4 + $0xa8] sm:$0xe]
        %v6335 = vld [vmem:[#allocation4 + $0xac] sm:$0xf]
        %v6336 = vld [vmem:[#allocation4 + $0xb0] sm:$0x1]
        %v6337 = vld [vmem:[#allocation4 + $0xb4] sm:$0xe]
        %v6338 = vld [vmem:[#allocation4 + $0xb8] sm:$0xf]
        %v6339 = vld [vmem:[#allocation4 + $0xbc] sm:$0x1]
        %v6388 = vrot.slane %v6292, 5
        %v6389 = vrot.slane %v6388, 4
        %v6390 = vrot.slane %v6293, 5
        %v6391 = vsel %vm1895, %v6389, %v6390
        %v6392 = vrot.slane %v6390, 4
        %v6393 = vrot.slane %v6294, 5
        %v6394 = vsel %vm1895, %v6392, %v6393
        %v6395 = vrot.slane %v6295, 5
        %v6396 = vrot.slane %v6395, 4
        %v6397 = vrot.slane %v6296, 5
        %v6398 = vsel %vm1895, %v6396, %v6397
        %v6399 = vrot.slane %v6397, 4
        %v6400 = vrot.slane %v6297, 5
        %v6401 = vsel %vm1895, %v6399, %v6400
        %v6402 = vrot.slane %v6298, 5
        %v6403 = vrot.slane %v6402, 4
        %v6404 = vrot.slane %v6299, 5
        %v6405 = vsel %vm1895, %v6403, %v6404
        %v6406 = vrot.slane %v6404, 4
        %v6407 = vrot.slane %v6300, 5
        %v6408 = vsel %vm1895, %v6406, %v6407
        %v6409 = vrot.slane %v6301, 5
        %v6410 = vrot.slane %v6409, 4
        %v6411 = vrot.slane %v6302, 5
        %v6412 = vsel %vm1895, %v6410, %v6411
        %v6413 = vrot.slane %v6411, 4
        %v6414 = vrot.slane %v6303, 5
        %v6415 = vsel %vm1895, %v6413, %v6414
        %v6416 = vrot.slane %v6304, 5
        %v6417 = vrot.slane %v6416, 4
        %v6418 = vrot.slane %v6305, 5
        %v6419 = vsel %vm1895, %v6417, %v6418
        %v6420 = vrot.slane %v6418, 4
        %v6421 = vrot.slane %v6306, 5
        %v6422 = vsel %vm1895, %v6420, %v6421
        %v6423 = vrot.slane %v6307, 5
        %v6424 = vrot.slane %v6423, 4
        %v6425 = vrot.slane %v6308, 5
        %v6426 = vsel %vm1895, %v6424, %v6425
        %v6427 = vrot.slane %v6425, 4
        %v6428 = vrot.slane %v6309, 5
        %v6429 = vsel %vm1895, %v6427, %v6428
        %v6430 = vrot.slane %v6310, 5
        %v6431 = vrot.slane %v6430, 4
        %v6432 = vrot.slane %v6311, 5
        %v6433 = vsel %vm1895, %v6431, %v6432
        %v6434 = vrot.slane %v6432, 4
        %v6435 = vrot.slane %v6312, 5
        %v6436 = vsel %vm1895, %v6434, %v6435
        %v6437 = vrot.slane %v6313, 5
        %v6438 = vrot.slane %v6437, 4
        %v6439 = vrot.slane %v6314, 5
        %v6440 = vsel %vm1895, %v6438, %v6439
        %v6441 = vrot.slane %v6439, 4
        %v6442 = vrot.slane %v6315, 5
        %v6443 = vsel %vm1895, %v6441, %v6442
        %v6444 = vrot.slane %v6316, 5
        %v6445 = vrot.slane %v6444, 4
        %v6446 = vrot.slane %v6317, 5
        %v6447 = vsel %vm1895, %v6445, %v6446
        %v6448 = vrot.slane %v6446, 4
        %v6449 = vrot.slane %v6318, 5
        %v6450 = vsel %vm1895, %v6448, %v6449
        %v6451 = vrot.slane %v6319, 5
        %v6452 = vrot.slane %v6451, 4
        %v6453 = vrot.slane %v6320, 5
        %v6454 = vsel %vm1895, %v6452, %v6453
        %v6455 = vrot.slane %v6453, 4
        %v6456 = vrot.slane %v6321, 5
        %v6457 = vsel %vm1895, %v6455, %v6456
        %v6458 = vrot.slane %v6322, 5
        %v6459 = vrot.slane %v6458, 4
        %v6460 = vrot.slane %v6323, 5
        %v6461 = vsel %vm1895, %v6459, %v6460
        %v6462 = vrot.slane %v6460, 4
        %v6463 = vrot.slane %v6324, 5
        %v6464 = vsel %vm1895, %v6462, %v6463
        %v6465 = vrot.slane %v6325, 5
        %v6466 = vrot.slane %v6465, 4
        %v6467 = vrot.slane %v6326, 5
        %v6468 = vsel %vm1895, %v6466, %v6467
        %v6469 = vrot.slane %v6467, 4
        %v6470 = vrot.slane %v6327, 5
        %v6471 = vsel %vm1895, %v6469, %v6470
        %v6472 = vrot.slane %v6328, 5
        %v6473 = vrot.slane %v6472, 4
        %v6474 = vrot.slane %v6329, 5
        %v6475 = vsel %vm1895, %v6473, %v6474
        %v6476 = vrot.slane %v6474, 4
        %v6477 = vrot.slane %v6330, 5
        %v6478 = vsel %vm1895, %v6476, %v6477
        %v6479 = vrot.slane %v6331, 5
        %v6480 = vrot.slane %v6479, 4
        %v6481 = vrot.slane %v6332, 5
        %v6482 = vsel %vm1895, %v6480, %v6481
        %v6483 = vrot.slane %v6481, 4
        %v6484 = vrot.slane %v6333, 5
        %v6485 = vsel %vm1895, %v6483, %v6484
        %v6486 = vrot.slane %v6334, 5
        %v6487 = vrot.slane %v6486, 4
        %v6488 = vrot.slane %v6335, 5
        %v6489 = vsel %vm1895, %v6487, %v6488
        %v6490 = vrot.slane %v6488, 4
        %v6491 = vrot.slane %v6336, 5
        %v6492 = vsel %vm1895, %v6490, %v6491
        %v6493 = vrot.slane %v6337, 5
        %v6494 = vrot.slane %v6493, 4
        %v6495 = vrot.slane %v6338, 5
        %v6496 = vsel %vm1895, %v6494, %v6495
        %v6497 = vrot.slane %v6495, 4
        %v6498 = vrot.slane %v6339, 5
        %v6499 = vsel %vm1895, %v6497, %v6498
        %v6500 = vunpack.c.l.b16 %v6391
        %v6501 = vunpack.c.l.b16 %v6394
        %v6502 = vunpack.c.l.b16 %v6398
        %v6503 = vunpack.c.l.b16 %v6401
        %v6504 = vunpack.c.l.b16 %v6405
        %v6505 = vunpack.c.l.b16 %v6408
        %v6506 = vunpack.c.l.b16 %v6412
        %v6507 = vunpack.c.l.b16 %v6415
        %v6508 = vunpack.c.l.b16 %v6419
        %v6509 = vunpack.c.l.b16 %v6422
        %v6510 = vunpack.c.l.b16 %v6426
        %v6511 = vunpack.c.l.b16 %v6429
        %v6512 = vunpack.c.l.b16 %v6433
        %v6513 = vunpack.c.l.b16 %v6436
        %v6514 = vunpack.c.l.b16 %v6440
        %v6515 = vunpack.c.l.b16 %v6443
        %v6516 = vunpack.c.l.b16 %v6447
        %v6517 = vunpack.c.l.b16 %v6450
        %v6518 = vunpack.c.l.b16 %v6454
        %v6519 = vunpack.c.l.b16 %v6457
        %v6520 = vunpack.c.l.b16 %v6461
        %v6521 = vunpack.c.l.b16 %v6464
        %v6522 = vunpack.c.l.b16 %v6468
        %v6523 = vunpack.c.l.b16 %v6471
        %v6524 = vunpack.c.l.b16 %v6475
        %v6525 = vunpack.c.l.b16 %v6478
        %v6526 = vunpack.c.l.b16 %v6482
        %v6527 = vunpack.c.l.b16 %v6485
        %v6528 = vunpack.c.l.b16 %v6489
        %v6529 = vunpack.c.l.b16 %v6492
        %v6530 = vunpack.c.l.b16 %v6496
        %v6531 = vunpack.c.l.b16 %v6499
        %v6532 = vpack.c.b16 %v6501, %v6500
        %v6533 = vpack.c.b16 %v6503, %v6502
        %v6534 = vpack.c.b16 %v6505, %v6504
        %v6535 = vpack.c.b16 %v6507, %v6506
        %v6536 = vpack.c.b16 %v6509, %v6508
        %v6537 = vpack.c.b16 %v6511, %v6510
        %v6538 = vpack.c.b16 %v6513, %v6512
        %v6539 = vpack.c.b16 %v6515, %v6514
        %v6540 = vpack.c.b16 %v6517, %v6516
        %v6541 = vpack.c.b16 %v6519, %v6518
        %v6542 = vpack.c.b16 %v6521, %v6520
        %v6543 = vpack.c.b16 %v6523, %v6522
        %v6544 = vpack.c.b16 %v6525, %v6524
        %v6545 = vpack.c.b16 %v6527, %v6526
        %v6546 = vpack.c.b16 %v6529, %v6528
        %v6547 = vpack.c.b16 %v6531, %v6530
        %6564 = vst.msk [vmem:[#allocation5 + $0x8] sm:$0xff] %vm1232, %v6532
        %6565 = vst.msk [vmem:[#allocation5 + $0x30] sm:$0xff] %vm1232, %v6533
        %6566 = vst.msk [vmem:[#allocation5 + $0x58] sm:$0xff] %vm1232, %v6534
        %6567 = vst.msk [vmem:[#allocation5 + $0x80] sm:$0xff] %vm1232, %v6535
        %6568 = vst.msk [vmem:[#allocation5 + $0xa8] sm:$0xff] %vm1232, %v6536
        %6569 = vst.msk [vmem:[#allocation5 + $0xd0] sm:$0xff] %vm1232, %v6537
        %6570 = vst.msk [vmem:[#allocation5 + $0xf8] sm:$0xff] %vm1232, %v6538
        %6571 = vst.msk [vmem:[#allocation5 + $0x120] sm:$0xff] %vm1232, %v6539
        %6572 = vst.msk [vmem:[#allocation5 + $0x148] sm:$0xff] %vm1232, %v6540
        %6573 = vst.msk [vmem:[#allocation5 + $0x170] sm:$0xff] %vm1232, %v6541
        %6574 = vst.msk [vmem:[#allocation5 + $0x198] sm:$0xff] %vm1232, %v6542
        %6575 = vst.msk [vmem:[#allocation5 + $0x1c0] sm:$0xff] %vm1232, %v6543
        %6576 = vst.msk [vmem:[#allocation5 + $0x1e8] sm:$0xff] %vm1232, %v6544
        %6577 = vst.msk [vmem:[#allocation5 + $0x210] sm:$0xff] %vm1232, %v6545
        %6578 = vst.msk [vmem:[#allocation5 + $0x238] sm:$0xff] %vm1232, %v6546
        %6579 = vst.msk [vmem:[#allocation5 + $0x260] sm:$0xff] %vm1232, %v6547
        %v6580 = vld [vmem:[%s5491] sm:$0xf]
        %v6581 = vld [vmem:[%s5491 + $0x4] sm:$0xf]
        %v6582 = vld [vmem:[%s5491 + $0xc] sm:$0xf]
        %v6583 = vld [vmem:[%s5491 + $0x10] sm:$0xf]
        %v6584 = vld [vmem:[%s5491 + $0x18] sm:$0xf]
        %v6585 = vld [vmem:[%s5491 + $0x1c] sm:$0xf]
        %v6586 = vld [vmem:[%s5491 + $0x24] sm:$0xf]
        %v6587 = vld [vmem:[%s5491 + $0x28] sm:$0xf]
        %v6588 = vld [vmem:[%s5491 + $0x30] sm:$0xf]
        %v6589 = vld [vmem:[%s5491 + $0x34] sm:$0xf]
        %v6590 = vld [vmem:[%s5491 + $0x3c] sm:$0xf]
        %v6591 = vld [vmem:[%s5491 + $0x40] sm:$0xf]
        %v6592 = vld [vmem:[%s5491 + $0x48] sm:$0xf]
        %v6593 = vld [vmem:[%s5491 + $0x4c] sm:$0xf]
        %v6594 = vld [vmem:[%s5491 + $0x54] sm:$0xf]
        %v6595 = vld [vmem:[%s5491 + $0x58] sm:$0xf]
        %v6596 = vld [vmem:[%s5491 + $0x60] sm:$0xf]
        %v6597 = vld [vmem:[%s5491 + $0x64] sm:$0xf]
        %v6598 = vld [vmem:[%s5491 + $0x6c] sm:$0xf]
        %v6599 = vld [vmem:[%s5491 + $0x70] sm:$0xf]
        %v6600 = vld [vmem:[%s5491 + $0x78] sm:$0xf]
        %v6601 = vld [vmem:[%s5491 + $0x7c] sm:$0xf]
        %v6602 = vld [vmem:[%s5491 + $0x84] sm:$0xf]
        %v6603 = vld [vmem:[%s5491 + $0x88] sm:$0xf]
        %v6604 = vld [vmem:[%s5491 + $0x90] sm:$0xf]
        %v6605 = vld [vmem:[%s5491 + $0x94] sm:$0xf]
        %v6606 = vld [vmem:[%s5491 + $0x9c] sm:$0xf]
        %v6607 = vld [vmem:[%s5491 + $0xa0] sm:$0xf]
        %v6608 = vld [vmem:[%s5491 + $0xa8] sm:$0xf]
        %v6609 = vld [vmem:[%s5491 + $0xac] sm:$0xf]
        %v6610 = vld [vmem:[%s5491 + $0xb4] sm:$0xf]
        %v6611 = vld [vmem:[%s5491 + $0xb8] sm:$0xf]
        %v6644 = vunpack.c.l.b16 %v6580
        %v6645 = vunpack.c.l.b16 %v6581
        %v6646 = vunpack.c.l.b16 %v6582
        %v6647 = vunpack.c.l.b16 %v6583
        %v6648 = vunpack.c.l.b16 %v6584
        %v6649 = vunpack.c.l.b16 %v6585
        %v6650 = vunpack.c.l.b16 %v6586
        %v6651 = vunpack.c.l.b16 %v6587
        %v6652 = vunpack.c.l.b16 %v6588
        %v6653 = vunpack.c.l.b16 %v6589
        %v6654 = vunpack.c.l.b16 %v6590
        %v6655 = vunpack.c.l.b16 %v6591
        %v6656 = vunpack.c.l.b16 %v6592
        %v6657 = vunpack.c.l.b16 %v6593
        %v6658 = vunpack.c.l.b16 %v6594
        %v6659 = vunpack.c.l.b16 %v6595
        %v6660 = vunpack.c.l.b16 %v6596
        %v6661 = vunpack.c.l.b16 %v6597
        %v6662 = vunpack.c.l.b16 %v6598
        %v6663 = vunpack.c.l.b16 %v6599
        %v6664 = vunpack.c.l.b16 %v6600
        %v6665 = vunpack.c.l.b16 %v6601
        %v6666 = vunpack.c.l.b16 %v6602
        %v6667 = vunpack.c.l.b16 %v6603
        %v6668 = vunpack.c.l.b16 %v6604
        %v6669 = vunpack.c.l.b16 %v6605
        %v6670 = vunpack.c.l.b16 %v6606
        %v6671 = vunpack.c.l.b16 %v6607
        %v6672 = vunpack.c.l.b16 %v6608
        %v6673 = vunpack.c.l.b16 %v6609
        %v6674 = vunpack.c.l.b16 %v6610
        %v6675 = vunpack.c.l.b16 %v6611
        %v6676 = vpack.c.b16 %v6645, %v6644
        %v6677 = vpack.c.b16 %v6647, %v6646
        %v6678 = vpack.c.b16 %v6649, %v6648
        %v6679 = vpack.c.b16 %v6651, %v6650
        %v6680 = vpack.c.b16 %v6653, %v6652
        %v6681 = vpack.c.b16 %v6655, %v6654
        %v6682 = vpack.c.b16 %v6657, %v6656
        %v6683 = vpack.c.b16 %v6659, %v6658
        %v6684 = vpack.c.b16 %v6661, %v6660
        %v6685 = vpack.c.b16 %v6663, %v6662
        %v6686 = vpack.c.b16 %v6665, %v6664
        %v6687 = vpack.c.b16 %v6667, %v6666
        %v6688 = vpack.c.b16 %v6669, %v6668
        %v6689 = vpack.c.b16 %v6671, %v6670
        %v6690 = vpack.c.b16 %v6673, %v6672
        %v6691 = vpack.c.b16 %v6675, %v6674
        %6692 = vrot.lane.b32.xlu0 %v6676, 64
        %v6693 = vpop.permute.xlu0 %6692
        %6694 = vrot.lane.b32.xlu0 %v6677, 64
        %v6695 = vpop.permute.xlu0 %6694
        %6696 = vrot.lane.b32.xlu0 %v6678, 64
        %v6697 = vpop.permute.xlu0 %6696
        %6698 = vrot.lane.b32.xlu0 %v6679, 64
        %v6699 = vpop.permute.xlu0 %6698
        %6700 = vrot.lane.b32.xlu0 %v6680, 64
        %v6701 = vpop.permute.xlu0 %6700
        %6702 = vrot.lane.b32.xlu0 %v6681, 64
        %v6703 = vpop.permute.xlu0 %6702
        %6704 = vrot.lane.b32.xlu0 %v6682, 64
        %v6705 = vpop.permute.xlu0 %6704
        %6706 = vrot.lane.b32.xlu0 %v6683, 64
        %v6707 = vpop.permute.xlu0 %6706
        %6708 = vrot.lane.b32.xlu0 %v6684, 64
        %v6709 = vpop.permute.xlu0 %6708
        %6710 = vrot.lane.b32.xlu0 %v6685, 64
        %v6711 = vpop.permute.xlu0 %6710
        %6712 = vrot.lane.b32.xlu0 %v6686, 64
        %v6713 = vpop.permute.xlu0 %6712
        %6714 = vrot.lane.b32.xlu0 %v6687, 64
        %v6715 = vpop.permute.xlu0 %6714
        %6716 = vrot.lane.b32.xlu0 %v6688, 64
        %v6717 = vpop.permute.xlu0 %6716
        %6718 = vrot.lane.b32.xlu0 %v6689, 64
        %v6719 = vpop.permute.xlu0 %6718
        %6720 = vrot.lane.b32.xlu0 %v6690, 64
        %v6721 = vpop.permute.xlu0 %6720
        %6722 = vrot.lane.b32.xlu0 %v6691, 64
        %v6723 = vpop.permute.xlu0 %6722
        %6740 = vst.msk [vmem:[#allocation5 + $0x8] sm:$0xff] %vm1780, %v6693
        %6741 = vst.msk [vmem:[#allocation5 + $0x30] sm:$0xff] %vm1780, %v6695
        %6742 = vst.msk [vmem:[#allocation5 + $0x58] sm:$0xff] %vm1780, %v6697
        %6743 = vst.msk [vmem:[#allocation5 + $0x80] sm:$0xff] %vm1780, %v6699
        %6744 = vst.msk [vmem:[#allocation5 + $0xa8] sm:$0xff] %vm1780, %v6701
        %6745 = vst.msk [vmem:[#allocation5 + $0xd0] sm:$0xff] %vm1780, %v6703
        %6746 = vst.msk [vmem:[#allocation5 + $0xf8] sm:$0xff] %vm1780, %v6705
        %6747 = vst.msk [vmem:[#allocation5 + $0x120] sm:$0xff] %vm1780, %v6707
        %6748 = vst.msk [vmem:[#allocation5 + $0x148] sm:$0xff] %vm1780, %v6709
        %6749 = vst.msk [vmem:[#allocation5 + $0x170] sm:$0xff] %vm1780, %v6711
        %6750 = vst.msk [vmem:[#allocation5 + $0x198] sm:$0xff] %vm1780, %v6713
        %6751 = vst.msk [vmem:[#allocation5 + $0x1c0] sm:$0xff] %vm1780, %v6715
        %6752 = vst.msk [vmem:[#allocation5 + $0x1e8] sm:$0xff] %vm1780, %v6717
        %6753 = vst.msk [vmem:[#allocation5 + $0x210] sm:$0xff] %vm1780, %v6719
        %6754 = vst.msk [vmem:[#allocation5 + $0x238] sm:$0xff] %vm1780, %v6721
        %6755 = vst.msk [vmem:[#allocation5 + $0x260] sm:$0xff] %vm1780, %v6723
        %v6756 = vld [vmem:[%s5491] sm:$0xf]
        %v6757 = vld [vmem:[%s5491 + $0x4] sm:$0xf]
        %v6758 = vld [vmem:[%s5491 + $0x8] sm:$0x1]
        %v6759 = vld [vmem:[%s5491 + $0xc] sm:$0xf]
        %v6760 = vld [vmem:[%s5491 + $0x10] sm:$0xf]
        %v6761 = vld [vmem:[%s5491 + $0x14] sm:$0x1]
        %v6762 = vld [vmem:[%s5491 + $0x18] sm:$0xf]
        %v6763 = vld [vmem:[%s5491 + $0x1c] sm:$0xf]
        %v6764 = vld [vmem:[%s5491 + $0x20] sm:$0x1]
        %v6765 = vld [vmem:[%s5491 + $0x24] sm:$0xf]
        %v6766 = vld [vmem:[%s5491 + $0x28] sm:$0xf]
        %v6767 = vld [vmem:[%s5491 + $0x2c] sm:$0x1]
        %v6768 = vld [vmem:[%s5491 + $0x30] sm:$0xf]
        %v6769 = vld [vmem:[%s5491 + $0x34] sm:$0xf]
        %v6770 = vld [vmem:[%s5491 + $0x38] sm:$0x1]
        %v6771 = vld [vmem:[%s5491 + $0x3c] sm:$0xf]
        %v6772 = vld [vmem:[%s5491 + $0x40] sm:$0xf]
        %v6773 = vld [vmem:[%s5491 + $0x44] sm:$0x1]
        %v6774 = vld [vmem:[%s5491 + $0x48] sm:$0xf]
        %v6775 = vld [vmem:[%s5491 + $0x4c] sm:$0xf]
        %v6776 = vld [vmem:[%s5491 + $0x50] sm:$0x1]
        %v6777 = vld [vmem:[%s5491 + $0x54] sm:$0xf]
        %v6778 = vld [vmem:[%s5491 + $0x58] sm:$0xf]
        %v6779 = vld [vmem:[%s5491 + $0x5c] sm:$0x1]
        %v6780 = vld [vmem:[%s5491 + $0x60] sm:$0xf]
        %v6781 = vld [vmem:[%s5491 + $0x64] sm:$0xf]
        %v6782 = vld [vmem:[%s5491 + $0x68] sm:$0x1]
        %v6783 = vld [vmem:[%s5491 + $0x6c] sm:$0xf]
        %v6784 = vld [vmem:[%s5491 + $0x70] sm:$0xf]
        %v6785 = vld [vmem:[%s5491 + $0x74] sm:$0x1]
        %v6786 = vld [vmem:[%s5491 + $0x78] sm:$0xf]
        %v6787 = vld [vmem:[%s5491 + $0x7c] sm:$0xf]
        %v6788 = vld [vmem:[%s5491 + $0x80] sm:$0x1]
        %v6789 = vld [vmem:[%s5491 + $0x84] sm:$0xf]
        %v6790 = vld [vmem:[%s5491 + $0x88] sm:$0xf]
        %v6791 = vld [vmem:[%s5491 + $0x8c] sm:$0x1]
        %v6792 = vld [vmem:[%s5491 + $0x90] sm:$0xf]
        %v6793 = vld [vmem:[%s5491 + $0x94] sm:$0xf]
        %v6794 = vld [vmem:[%s5491 + $0x98] sm:$0x1]
        %v6795 = vld [vmem:[%s5491 + $0x9c] sm:$0xf]
        %v6796 = vld [vmem:[%s5491 + $0xa0] sm:$0xf]
        %v6797 = vld [vmem:[%s5491 + $0xa4] sm:$0x1]
        %v6798 = vld [vmem:[%s5491 + $0xa8] sm:$0xf]
        %v6799 = vld [vmem:[%s5491 + $0xac] sm:$0xf]
        %v6800 = vld [vmem:[%s5491 + $0xb0] sm:$0x1]
        %v6801 = vld [vmem:[%s5491 + $0xb4] sm:$0xf]
        %v6802 = vld [vmem:[%s5491 + $0xb8] sm:$0xf]
        %v6803 = vld [vmem:[%s5491 + $0xbc] sm:$0x1]
        %v6805 = vshrl.u32 %v6756, 16
        %v6807 = vrot.slane %v6805, 4
        %v6808 = vshll.u32 %v6756, 16
        %v6810 = vrot.slane %v6808, 5
        %v6811 = vor.u32 %v6807, %v6810
        %v6812 = vrot.slane %v6811, 4
        %v6814 = vshll.u32 %v6757, 16
        %v6816 = vrot.slane %v6814, 5
        %v6817 = vsel %vm1299, %v6812, %v6816
        %v6818 = vshrl.u32 %v6757, 16
        %v6820 = vrot.slane %v6818, 4
        %v6821 = vor.u32 %v6820, %v6816
        %v6822 = vrot.slane %v6821, 4
        %v6824 = vshll.u32 %v6758, 16
        %v6826 = vrot.slane %v6824, 5
        %v6827 = vsel %vm1299, %v6822, %v6826
        %v6829 = vshrl.u32 %v6759, 16
        %v6831 = vrot.slane %v6829, 4
        %v6832 = vshll.u32 %v6759, 16
        %v6834 = vrot.slane %v6832, 5
        %v6835 = vor.u32 %v6831, %v6834
        %v6836 = vrot.slane %v6835, 4
        %v6838 = vshll.u32 %v6760, 16
        %v6840 = vrot.slane %v6838, 5
        %v6841 = vsel %vm1299, %v6836, %v6840
        %v6842 = vshrl.u32 %v6760, 16
        %v6844 = vrot.slane %v6842, 4
        %v6845 = vor.u32 %v6844, %v6840
        %v6846 = vrot.slane %v6845, 4
        %v6848 = vshll.u32 %v6761, 16
        %v6850 = vrot.slane %v6848, 5
        %v6851 = vsel %vm1299, %v6846, %v6850
        %v6853 = vshrl.u32 %v6762, 16
        %v6855 = vrot.slane %v6853, 4
        %v6856 = vshll.u32 %v6762, 16
        %v6858 = vrot.slane %v6856, 5
        %v6859 = vor.u32 %v6855, %v6858
        %v6860 = vrot.slane %v6859, 4
        %v6862 = vshll.u32 %v6763, 16
        %v6864 = vrot.slane %v6862, 5
        %v6865 = vsel %vm1299, %v6860, %v6864
        %v6866 = vshrl.u32 %v6763, 16
        %v6868 = vrot.slane %v6866, 4
        %v6869 = vor.u32 %v6868, %v6864
        %v6870 = vrot.slane %v6869, 4
        %v6872 = vshll.u32 %v6764, 16
        %v6874 = vrot.slane %v6872, 5
        %v6875 = vsel %vm1299, %v6870, %v6874
        %v6877 = vshrl.u32 %v6765, 16
        %v6879 = vrot.slane %v6877, 4
        %v6880 = vshll.u32 %v6765, 16
        %v6882 = vrot.slane %v6880, 5
        %v6883 = vor.u32 %v6879, %v6882
        %v6884 = vrot.slane %v6883, 4
        %v6886 = vshll.u32 %v6766, 16
        %v6888 = vrot.slane %v6886, 5
        %v6889 = vsel %vm1299, %v6884, %v6888
        %v6890 = vshrl.u32 %v6766, 16
        %v6892 = vrot.slane %v6890, 4
        %v6893 = vor.u32 %v6892, %v6888
        %v6894 = vrot.slane %v6893, 4
        %v6896 = vshll.u32 %v6767, 16
        %v6898 = vrot.slane %v6896, 5
        %v6899 = vsel %vm1299, %v6894, %v6898
        %v6901 = vshrl.u32 %v6768, 16
        %v6903 = vrot.slane %v6901, 4
        %v6904 = vshll.u32 %v6768, 16
        %v6906 = vrot.slane %v6904, 5
        %v6907 = vor.u32 %v6903, %v6906
        %v6908 = vrot.slane %v6907, 4
        %v6910 = vshll.u32 %v6769, 16
        %v6912 = vrot.slane %v6910, 5
        %v6913 = vsel %vm1299, %v6908, %v6912
        %v6914 = vshrl.u32 %v6769, 16
        %v6916 = vrot.slane %v6914, 4
        %v6917 = vor.u32 %v6916, %v6912
        %v6918 = vrot.slane %v6917, 4
        %v6920 = vshll.u32 %v6770, 16
        %v6922 = vrot.slane %v6920, 5
        %v6923 = vsel %vm1299, %v6918, %v6922
        %v6925 = vshrl.u32 %v6771, 16
        %v6927 = vrot.slane %v6925, 4
        %v6928 = vshll.u32 %v6771, 16
        %v6930 = vrot.slane %v6928, 5
        %v6931 = vor.u32 %v6927, %v6930
        %v6932 = vrot.slane %v6931, 4
        %v6934 = vshll.u32 %v6772, 16
        %v6936 = vrot.slane %v6934, 5
        %v6937 = vsel %vm1299, %v6932, %v6936
        %v6938 = vshrl.u32 %v6772, 16
        %v6940 = vrot.slane %v6938, 4
        %v6941 = vor.u32 %v6940, %v6936
        %v6942 = vrot.slane %v6941, 4
        %v6944 = vshll.u32 %v6773, 16
        %v6946 = vrot.slane %v6944, 5
        %v6947 = vsel %vm1299, %v6942, %v6946
        %v6949 = vshrl.u32 %v6774, 16
        %v6951 = vrot.slane %v6949, 4
        %v6952 = vshll.u32 %v6774, 16
        %v6954 = vrot.slane %v6952, 5
        %v6955 = vor.u32 %v6951, %v6954
        %v6956 = vrot.slane %v6955, 4
        %v6958 = vshll.u32 %v6775, 16
        %v6960 = vrot.slane %v6958, 5
        %v6961 = vsel %vm1299, %v6956, %v6960
        %v6962 = vshrl.u32 %v6775, 16
        %v6964 = vrot.slane %v6962, 4
        %v6965 = vor.u32 %v6964, %v6960
        %v6966 = vrot.slane %v6965, 4
        %v6968 = vshll.u32 %v6776, 16
        %v6970 = vrot.slane %v6968, 5
        %v6971 = vsel %vm1299, %v6966, %v6970
        %v6973 = vshrl.u32 %v6777, 16
        %v6975 = vrot.slane %v6973, 4
        %v6976 = vshll.u32 %v6777, 16
        %v6978 = vrot.slane %v6976, 5
        %v6979 = vor.u32 %v6975, %v6978
        %v6980 = vrot.slane %v6979, 4
        %v6982 = vshll.u32 %v6778, 16
        %v6984 = vrot.slane %v6982, 5
        %v6985 = vsel %vm1299, %v6980, %v6984
        %v6986 = vshrl.u32 %v6778, 16
        %v6988 = vrot.slane %v6986, 4
        %v6989 = vor.u32 %v6988, %v6984
        %v6990 = vrot.slane %v6989, 4
        %v6992 = vshll.u32 %v6779, 16
        %v6994 = vrot.slane %v6992, 5
        %v6995 = vsel %vm1299, %v6990, %v6994
        %v6997 = vshrl.u32 %v6780, 16
        %v6999 = vrot.slane %v6997, 4
        %v7000 = vshll.u32 %v6780, 16
        %v7002 = vrot.slane %v7000, 5
        %v7003 = vor.u32 %v6999, %v7002
        %v7004 = vrot.slane %v7003, 4
        %v7006 = vshll.u32 %v6781, 16
        %v7008 = vrot.slane %v7006, 5
        %v7009 = vsel %vm1299, %v7004, %v7008
        %v7010 = vshrl.u32 %v6781, 16
        %v7012 = vrot.slane %v7010, 4
        %v7013 = vor.u32 %v7012, %v7008
        %v7014 = vrot.slane %v7013, 4
        %v7016 = vshll.u32 %v6782, 16
        %v7018 = vrot.slane %v7016, 5
        %v7019 = vsel %vm1299, %v7014, %v7018
        %v7021 = vshrl.u32 %v6783, 16
        %v7023 = vrot.slane %v7021, 4
        %v7024 = vshll.u32 %v6783, 16
        %v7026 = vrot.slane %v7024, 5
        %v7027 = vor.u32 %v7023, %v7026
        %v7028 = vrot.slane %v7027, 4
        %v7030 = vshll.u32 %v6784, 16
        %v7032 = vrot.slane %v7030, 5
        %v7033 = vsel %vm1299, %v7028, %v7032
        %v7034 = vshrl.u32 %v6784, 16
        %v7036 = vrot.slane %v7034, 4
        %v7037 = vor.u32 %v7036, %v7032
        %v7038 = vrot.slane %v7037, 4
        %v7040 = vshll.u32 %v6785, 16
        %v7042 = vrot.slane %v7040, 5
        %v7043 = vsel %vm1299, %v7038, %v7042
        %v7045 = vshrl.u32 %v6786, 16
        %v7047 = vrot.slane %v7045, 4
        %v7048 = vshll.u32 %v6786, 16
        %v7050 = vrot.slane %v7048, 5
        %v7051 = vor.u32 %v7047, %v7050
        %v7052 = vrot.slane %v7051, 4
        %v7054 = vshll.u32 %v6787, 16
        %v7056 = vrot.slane %v7054, 5
        %v7057 = vsel %vm1299, %v7052, %v7056
        %v7058 = vshrl.u32 %v6787, 16
        %v7060 = vrot.slane %v7058, 4
        %v7061 = vor.u32 %v7060, %v7056
        %v7062 = vrot.slane %v7061, 4
        %v7064 = vshll.u32 %v6788, 16
        %v7066 = vrot.slane %v7064, 5
        %v7067 = vsel %vm1299, %v7062, %v7066
        %v7069 = vshrl.u32 %v6789, 16
        %v7071 = vrot.slane %v7069, 4
        %v7072 = vshll.u32 %v6789, 16
        %v7074 = vrot.slane %v7072, 5
        %v7075 = vor.u32 %v7071, %v7074
        %v7076 = vrot.slane %v7075, 4
        %v7078 = vshll.u32 %v6790, 16
        %v7080 = vrot.slane %v7078, 5
        %v7081 = vsel %vm1299, %v7076, %v7080
        %v7082 = vshrl.u32 %v6790, 16
        %v7084 = vrot.slane %v7082, 4
        %v7085 = vor.u32 %v7084, %v7080
        %v7086 = vrot.slane %v7085, 4
        %v7088 = vshll.u32 %v6791, 16
        %v7090 = vrot.slane %v7088, 5
        %v7091 = vsel %vm1299, %v7086, %v7090
        %v7093 = vshrl.u32 %v6792, 16
        %v7095 = vrot.slane %v7093, 4
        %v7096 = vshll.u32 %v6792, 16
        %v7098 = vrot.slane %v7096, 5
        %v7099 = vor.u32 %v7095, %v7098
        %v7100 = vrot.slane %v7099, 4
        %v7102 = vshll.u32 %v6793, 16
        %v7104 = vrot.slane %v7102, 5
        %v7105 = vsel %vm1299, %v7100, %v7104
        %v7106 = vshrl.u32 %v6793, 16
        %v7108 = vrot.slane %v7106, 4
        %v7109 = vor.u32 %v7108, %v7104
        %v7110 = vrot.slane %v7109, 4
        %v7112 = vshll.u32 %v6794, 16
        %v7114 = vrot.slane %v7112, 5
        %v7115 = vsel %vm1299, %v7110, %v7114
        %v7117 = vshrl.u32 %v6795, 16
        %v7119 = vrot.slane %v7117, 4
        %v7120 = vshll.u32 %v6795, 16
        %v7122 = vrot.slane %v7120, 5
        %v7123 = vor.u32 %v7119, %v7122
        %v7124 = vrot.slane %v7123, 4
        %v7126 = vshll.u32 %v6796, 16
        %v7128 = vrot.slane %v7126, 5
        %v7129 = vsel %vm1299, %v7124, %v7128
        %v7130 = vshrl.u32 %v6796, 16
        %v7132 = vrot.slane %v7130, 4
        %v7133 = vor.u32 %v7132, %v7128
        %v7134 = vrot.slane %v7133, 4
        %v7136 = vshll.u32 %v6797, 16
        %v7138 = vrot.slane %v7136, 5
        %v7139 = vsel %vm1299, %v7134, %v7138
        %v7141 = vshrl.u32 %v6798, 16
        %v7143 = vrot.slane %v7141, 4
        %v7144 = vshll.u32 %v6798, 16
        %v7146 = vrot.slane %v7144, 5
        %v7147 = vor.u32 %v7143, %v7146
        %v7148 = vrot.slane %v7147, 4
        %v7150 = vshll.u32 %v6799, 16
        %v7152 = vrot.slane %v7150, 5
        %v7153 = vsel %vm1299, %v7148, %v7152
        %v7154 = vshrl.u32 %v6799, 16
        %v7156 = vrot.slane %v7154, 4
        %v7157 = vor.u32 %v7156, %v7152
        %v7158 = vrot.slane %v7157, 4
        %v7160 = vshll.u32 %v6800, 16
        %v7162 = vrot.slane %v7160, 5
        %v7163 = vsel %vm1299, %v7158, %v7162
        %v7165 = vshrl.u32 %v6801, 16
        %v7167 = vrot.slane %v7165, 4
        %v7168 = vshll.u32 %v6801, 16
        %v7170 = vrot.slane %v7168, 5
        %v7171 = vor.u32 %v7167, %v7170
        %v7172 = vrot.slane %v7171, 4
        %v7174 = vshll.u32 %v6802, 16
        %v7176 = vrot.slane %v7174, 5
        %v7177 = vsel %vm1299, %v7172, %v7176
        %v7178 = vshrl.u32 %v6802, 16
        %v7180 = vrot.slane %v7178, 4
        %v7181 = vor.u32 %v7180, %v7176
        %v7182 = vrot.slane %v7181, 4
        %v7184 = vshll.u32 %v6803, 16
        %v7186 = vrot.slane %v7184, 5
        %v7187 = vsel %vm1299, %v7182, %v7186
        %v7188 = vunpack.c.l.b16 %v6817
        %v7189 = vunpack.c.l.b16 %v6827
        %v7190 = vunpack.c.l.b16 %v6841
        %v7191 = vunpack.c.l.b16 %v6851
        %v7192 = vunpack.c.l.b16 %v6865
        %v7193 = vunpack.c.l.b16 %v6875
        %v7194 = vunpack.c.l.b16 %v6889
        %v7195 = vunpack.c.l.b16 %v6899
        %v7196 = vunpack.c.l.b16 %v6913
        %v7197 = vunpack.c.l.b16 %v6923
        %v7198 = vunpack.c.l.b16 %v6937
        %v7199 = vunpack.c.l.b16 %v6947
        %v7200 = vunpack.c.l.b16 %v6961
        %v7201 = vunpack.c.l.b16 %v6971
        %v7202 = vunpack.c.l.b16 %v6985
        %v7203 = vunpack.c.l.b16 %v6995
        %v7204 = vunpack.c.l.b16 %v7009
        %v7205 = vunpack.c.l.b16 %v7019
        %v7206 = vunpack.c.l.b16 %v7033
        %v7207 = vunpack.c.l.b16 %v7043
        %v7208 = vunpack.c.l.b16 %v7057
        %v7209 = vunpack.c.l.b16 %v7067
        %v7210 = vunpack.c.l.b16 %v7081
        %v7211 = vunpack.c.l.b16 %v7091
        %v7212 = vunpack.c.l.b16 %v7105
        %v7213 = vunpack.c.l.b16 %v7115
        %v7214 = vunpack.c.l.b16 %v7129
        %v7215 = vunpack.c.l.b16 %v7139
        %v7216 = vunpack.c.l.b16 %v7153
        %v7217 = vunpack.c.l.b16 %v7163
        %v7218 = vunpack.c.l.b16 %v7177
        %v7219 = vunpack.c.l.b16 %v7187
        %v7220 = vpack.c.b16 %v7189, %v7188
        %v7221 = vpack.c.b16 %v7191, %v7190
        %v7222 = vpack.c.b16 %v7193, %v7192
        %v7223 = vpack.c.b16 %v7195, %v7194
        %v7224 = vpack.c.b16 %v7197, %v7196
        %v7225 = vpack.c.b16 %v7199, %v7198
        %v7226 = vpack.c.b16 %v7201, %v7200
        %v7227 = vpack.c.b16 %v7203, %v7202
        %v7228 = vpack.c.b16 %v7205, %v7204
        %v7229 = vpack.c.b16 %v7207, %v7206
        %v7230 = vpack.c.b16 %v7209, %v7208
        %v7231 = vpack.c.b16 %v7211, %v7210
        %v7232 = vpack.c.b16 %v7213, %v7212
        %v7233 = vpack.c.b16 %v7215, %v7214
        %v7234 = vpack.c.b16 %v7217, %v7216
        %v7235 = vpack.c.b16 %v7219, %v7218
        %7252 = vst.msk [vmem:[#allocation5 + $0x10] sm:$0xff] %vm1232, %v7220
        %7253 = vst.msk [vmem:[#allocation5 + $0x38] sm:$0xff] %vm1232, %v7221
        %7254 = vst.msk [vmem:[#allocation5 + $0x60] sm:$0xff] %vm1232, %v7222
        %7255 = vst.msk [vmem:[#allocation5 + $0x88] sm:$0xff] %vm1232, %v7223
        %7256 = vst.msk [vmem:[#allocation5 + $0xb0] sm:$0xff] %vm1232, %v7224
        %7257 = vst.msk [vmem:[#allocation5 + $0xd8] sm:$0xff] %vm1232, %v7225
        %7258 = vst.msk [vmem:[#allocation5 + $0x100] sm:$0xff] %vm1232, %v7226
        %7259 = vst.msk [vmem:[#allocation5 + $0x128] sm:$0xff] %vm1232, %v7227
        %7260 = vst.msk [vmem:[#allocation5 + $0x150] sm:$0xff] %vm1232, %v7228
        %7261 = vst.msk [vmem:[#allocation5 + $0x178] sm:$0xff] %vm1232, %v7229
        %7262 = vst.msk [vmem:[#allocation5 + $0x1a0] sm:$0xff] %vm1232, %v7230
        %7263 = vst.msk [vmem:[#allocation5 + $0x1c8] sm:$0xff] %vm1232, %v7231
        %7264 = vst.msk [vmem:[#allocation5 + $0x1f0] sm:$0xff] %vm1232, %v7232
        %7265 = vst.msk [vmem:[#allocation5 + $0x218] sm:$0xff] %vm1232, %v7233
        %7266 = vst.msk [vmem:[#allocation5 + $0x240] sm:$0xff] %vm1232, %v7234
        %7267 = vst.msk [vmem:[#allocation5 + $0x268] sm:$0xff] %vm1232, %v7235
        %v7268 = vld [vmem:[%s5491] sm:$0xe]
        %v7269 = vld [vmem:[%s5491 + $0x4] sm:$0xf]
        %v7270 = vld [vmem:[%s5491 + $0x8] sm:$0x1]
        %v7271 = vld [vmem:[%s5491 + $0xc] sm:$0xe]
        %v7272 = vld [vmem:[%s5491 + $0x10] sm:$0xf]
        %v7273 = vld [vmem:[%s5491 + $0x14] sm:$0x1]
        %v7274 = vld [vmem:[%s5491 + $0x18] sm:$0xe]
        %v7275 = vld [vmem:[%s5491 + $0x1c] sm:$0xf]
        %v7276 = vld [vmem:[%s5491 + $0x20] sm:$0x1]
        %v7277 = vld [vmem:[%s5491 + $0x24] sm:$0xe]
        %v7278 = vld [vmem:[%s5491 + $0x28] sm:$0xf]
        %v7279 = vld [vmem:[%s5491 + $0x2c] sm:$0x1]
        %v7280 = vld [vmem:[%s5491 + $0x30] sm:$0xe]
        %v7281 = vld [vmem:[%s5491 + $0x34] sm:$0xf]
        %v7282 = vld [vmem:[%s5491 + $0x38] sm:$0x1]
        %v7283 = vld [vmem:[%s5491 + $0x3c] sm:$0xe]
        %v7284 = vld [vmem:[%s5491 + $0x40] sm:$0xf]
        %v7285 = vld [vmem:[%s5491 + $0x44] sm:$0x1]
        %v7286 = vld [vmem:[%s5491 + $0x48] sm:$0xe]
        %v7287 = vld [vmem:[%s5491 + $0x4c] sm:$0xf]
        %v7288 = vld [vmem:[%s5491 + $0x50] sm:$0x1]
        %v7289 = vld [vmem:[%s5491 + $0x54] sm:$0xe]
        %v7290 = vld [vmem:[%s5491 + $0x58] sm:$0xf]
        %v7291 = vld [vmem:[%s5491 + $0x5c] sm:$0x1]
        %v7292 = vld [vmem:[%s5491 + $0x60] sm:$0xe]
        %v7293 = vld [vmem:[%s5491 + $0x64] sm:$0xf]
        %v7294 = vld [vmem:[%s5491 + $0x68] sm:$0x1]
        %v7295 = vld [vmem:[%s5491 + $0x6c] sm:$0xe]
        %v7296 = vld [vmem:[%s5491 + $0x70] sm:$0xf]
        %v7297 = vld [vmem:[%s5491 + $0x74] sm:$0x1]
        %v7298 = vld [vmem:[%s5491 + $0x78] sm:$0xe]
        %v7299 = vld [vmem:[%s5491 + $0x7c] sm:$0xf]
        %v7300 = vld [vmem:[%s5491 + $0x80] sm:$0x1]
        %v7301 = vld [vmem:[%s5491 + $0x84] sm:$0xe]
        %v7302 = vld [vmem:[%s5491 + $0x88] sm:$0xf]
        %v7303 = vld [vmem:[%s5491 + $0x8c] sm:$0x1]
        %v7304 = vld [vmem:[%s5491 + $0x90] sm:$0xe]
        %v7305 = vld [vmem:[%s5491 + $0x94] sm:$0xf]
        %v7306 = vld [vmem:[%s5491 + $0x98] sm:$0x1]
        %v7307 = vld [vmem:[%s5491 + $0x9c] sm:$0xe]
        %v7308 = vld [vmem:[%s5491 + $0xa0] sm:$0xf]
        %v7309 = vld [vmem:[%s5491 + $0xa4] sm:$0x1]
        %v7310 = vld [vmem:[%s5491 + $0xa8] sm:$0xe]
        %v7311 = vld [vmem:[%s5491 + $0xac] sm:$0xf]
        %v7312 = vld [vmem:[%s5491 + $0xb0] sm:$0x1]
        %v7313 = vld [vmem:[%s5491 + $0xb4] sm:$0xe]
        %v7314 = vld [vmem:[%s5491 + $0xb8] sm:$0xf]
        %v7315 = vld [vmem:[%s5491 + $0xbc] sm:$0x1]
        %v7364 = vrot.slane %v7268, 5
        %v7365 = vrot.slane %v7364, 4
        %v7366 = vrot.slane %v7269, 5
        %v7367 = vsel %vm1895, %v7365, %v7366
        %v7368 = vrot.slane %v7366, 4
        %v7369 = vrot.slane %v7270, 5
        %v7370 = vsel %vm1895, %v7368, %v7369
        %v7371 = vrot.slane %v7271, 5
        %v7372 = vrot.slane %v7371, 4
        %v7373 = vrot.slane %v7272, 5
        %v7374 = vsel %vm1895, %v7372, %v7373
        %v7375 = vrot.slane %v7373, 4
        %v7376 = vrot.slane %v7273, 5
        %v7377 = vsel %vm1895, %v7375, %v7376
        %v7378 = vrot.slane %v7274, 5
        %v7379 = vrot.slane %v7378, 4
        %v7380 = vrot.slane %v7275, 5
        %v7381 = vsel %vm1895, %v7379, %v7380
        %v7382 = vrot.slane %v7380, 4
        %v7383 = vrot.slane %v7276, 5
        %v7384 = vsel %vm1895, %v7382, %v7383
        %v7385 = vrot.slane %v7277, 5
        %v7386 = vrot.slane %v7385, 4
        %v7387 = vrot.slane %v7278, 5
        %v7388 = vsel %vm1895, %v7386, %v7387
        %v7389 = vrot.slane %v7387, 4
        %v7390 = vrot.slane %v7279, 5
        %v7391 = vsel %vm1895, %v7389, %v7390
        %v7392 = vrot.slane %v7280, 5
        %v7393 = vrot.slane %v7392, 4
        %v7394 = vrot.slane %v7281, 5
        %v7395 = vsel %vm1895, %v7393, %v7394
        %v7396 = vrot.slane %v7394, 4
        %v7397 = vrot.slane %v7282, 5
        %v7398 = vsel %vm1895, %v7396, %v7397
        %v7399 = vrot.slane %v7283, 5
        %v7400 = vrot.slane %v7399, 4
        %v7401 = vrot.slane %v7284, 5
        %v7402 = vsel %vm1895, %v7400, %v7401
        %v7403 = vrot.slane %v7401, 4
        %v7404 = vrot.slane %v7285, 5
        %v7405 = vsel %vm1895, %v7403, %v7404
        %v7406 = vrot.slane %v7286, 5
        %v7407 = vrot.slane %v7406, 4
        %v7408 = vrot.slane %v7287, 5
        %v7409 = vsel %vm1895, %v7407, %v7408
        %v7410 = vrot.slane %v7408, 4
        %v7411 = vrot.slane %v7288, 5
        %v7412 = vsel %vm1895, %v7410, %v7411
        %v7413 = vrot.slane %v7289, 5
        %v7414 = vrot.slane %v7413, 4
        %v7415 = vrot.slane %v7290, 5
        %v7416 = vsel %vm1895, %v7414, %v7415
        %v7417 = vrot.slane %v7415, 4
        %v7418 = vrot.slane %v7291, 5
        %v7419 = vsel %vm1895, %v7417, %v7418
        %v7420 = vrot.slane %v7292, 5
        %v7421 = vrot.slane %v7420, 4
        %v7422 = vrot.slane %v7293, 5
        %v7423 = vsel %vm1895, %v7421, %v7422
        %v7424 = vrot.slane %v7422, 4
        %v7425 = vrot.slane %v7294, 5
        %v7426 = vsel %vm1895, %v7424, %v7425
        %v7427 = vrot.slane %v7295, 5
        %v7428 = vrot.slane %v7427, 4
        %v7429 = vrot.slane %v7296, 5
        %v7430 = vsel %vm1895, %v7428, %v7429
        %v7431 = vrot.slane %v7429, 4
        %v7432 = vrot.slane %v7297, 5
        %v7433 = vsel %vm1895, %v7431, %v7432
        %v7434 = vrot.slane %v7298, 5
        %v7435 = vrot.slane %v7434, 4
        %v7436 = vrot.slane %v7299, 5
        %v7437 = vsel %vm1895, %v7435, %v7436
        %v7438 = vrot.slane %v7436, 4
        %v7439 = vrot.slane %v7300, 5
        %v7440 = vsel %vm1895, %v7438, %v7439
        %v7441 = vrot.slane %v7301, 5
        %v7442 = vrot.slane %v7441, 4
        %v7443 = vrot.slane %v7302, 5
        %v7444 = vsel %vm1895, %v7442, %v7443
        %v7445 = vrot.slane %v7443, 4
        %v7446 = vrot.slane %v7303, 5
        %v7447 = vsel %vm1895, %v7445, %v7446
        %v7448 = vrot.slane %v7304, 5
        %v7449 = vrot.slane %v7448, 4
        %v7450 = vrot.slane %v7305, 5
        %v7451 = vsel %vm1895, %v7449, %v7450
        %v7452 = vrot.slane %v7450, 4
        %v7453 = vrot.slane %v7306, 5
        %v7454 = vsel %vm1895, %v7452, %v7453
        %v7455 = vrot.slane %v7307, 5
        %v7456 = vrot.slane %v7455, 4
        %v7457 = vrot.slane %v7308, 5
        %v7458 = vsel %vm1895, %v7456, %v7457
        %v7459 = vrot.slane %v7457, 4
        %v7460 = vrot.slane %v7309, 5
        %v7461 = vsel %vm1895, %v7459, %v7460
        %v7462 = vrot.slane %v7310, 5
        %v7463 = vrot.slane %v7462, 4
        %v7464 = vrot.slane %v7311, 5
        %v7465 = vsel %vm1895, %v7463, %v7464
        %v7466 = vrot.slane %v7464, 4
        %v7467 = vrot.slane %v7312, 5
        %v7468 = vsel %vm1895, %v7466, %v7467
        %v7469 = vrot.slane %v7313, 5
        %v7470 = vrot.slane %v7469, 4
        %v7471 = vrot.slane %v7314, 5
        %v7472 = vsel %vm1895, %v7470, %v7471
        %v7473 = vrot.slane %v7471, 4
        %v7474 = vrot.slane %v7315, 5
        %v7475 = vsel %vm1895, %v7473, %v7474
        %v7476 = vunpack.c.l.b16 %v7367
        %v7477 = vunpack.c.l.b16 %v7370
        %v7478 = vunpack.c.l.b16 %v7374
        %v7479 = vunpack.c.l.b16 %v7377
        %v7480 = vunpack.c.l.b16 %v7381
        %v7481 = vunpack.c.l.b16 %v7384
        %v7482 = vunpack.c.l.b16 %v7388
        %v7483 = vunpack.c.l.b16 %v7391
        %v7484 = vunpack.c.l.b16 %v7395
        %v7485 = vunpack.c.l.b16 %v7398
        %v7486 = vunpack.c.l.b16 %v7402
        %v7487 = vunpack.c.l.b16 %v7405
        %v7488 = vunpack.c.l.b16 %v7409
        %v7489 = vunpack.c.l.b16 %v7412
        %v7490 = vunpack.c.l.b16 %v7416
        %v7491 = vunpack.c.l.b16 %v7419
        %v7492 = vunpack.c.l.b16 %v7423
        %v7493 = vunpack.c.l.b16 %v7426
        %v7494 = vunpack.c.l.b16 %v7430
        %v7495 = vunpack.c.l.b16 %v7433
        %v7496 = vunpack.c.l.b16 %v7437
        %v7497 = vunpack.c.l.b16 %v7440
        %v7498 = vunpack.c.l.b16 %v7444
        %v7499 = vunpack.c.l.b16 %v7447
        %v7500 = vunpack.c.l.b16 %v7451
        %v7501 = vunpack.c.l.b16 %v7454
        %v7502 = vunpack.c.l.b16 %v7458
        %v7503 = vunpack.c.l.b16 %v7461
        %v7504 = vunpack.c.l.b16 %v7465
        %v7505 = vunpack.c.l.b16 %v7468
        %v7506 = vunpack.c.l.b16 %v7472
        %v7507 = vunpack.c.l.b16 %v7475
        %v7508 = vpack.c.b16 %v7477, %v7476
        %v7509 = vpack.c.b16 %v7479, %v7478
        %v7510 = vpack.c.b16 %v7481, %v7480
        %v7511 = vpack.c.b16 %v7483, %v7482
        %v7512 = vpack.c.b16 %v7485, %v7484
        %v7513 = vpack.c.b16 %v7487, %v7486
        %v7514 = vpack.c.b16 %v7489, %v7488
        %v7515 = vpack.c.b16 %v7491, %v7490
        %v7516 = vpack.c.b16 %v7493, %v7492
        %v7517 = vpack.c.b16 %v7495, %v7494
        %v7518 = vpack.c.b16 %v7497, %v7496
        %v7519 = vpack.c.b16 %v7499, %v7498
        %v7520 = vpack.c.b16 %v7501, %v7500
        %v7521 = vpack.c.b16 %v7503, %v7502
        %v7522 = vpack.c.b16 %v7505, %v7504
        %v7523 = vpack.c.b16 %v7507, %v7506
        %7524 = vrot.lane.b32.xlu0 %v7508, 64
        %v7525 = vpop.permute.xlu0 %7524
        %7526 = vrot.lane.b32.xlu0 %v7509, 64
        %v7527 = vpop.permute.xlu0 %7526
        %7528 = vrot.lane.b32.xlu0 %v7510, 64
        %v7529 = vpop.permute.xlu0 %7528
        %7530 = vrot.lane.b32.xlu0 %v7511, 64
        %v7531 = vpop.permute.xlu0 %7530
        %7532 = vrot.lane.b32.xlu0 %v7512, 64
        %v7533 = vpop.permute.xlu0 %7532
        %7534 = vrot.lane.b32.xlu0 %v7513, 64
        %v7535 = vpop.permute.xlu0 %7534
        %7536 = vrot.lane.b32.xlu0 %v7514, 64
        %v7537 = vpop.permute.xlu0 %7536
        %7538 = vrot.lane.b32.xlu0 %v7515, 64
        %v7539 = vpop.permute.xlu0 %7538
        %7540 = vrot.lane.b32.xlu0 %v7516, 64
        %v7541 = vpop.permute.xlu0 %7540
        %7542 = vrot.lane.b32.xlu0 %v7517, 64
        %v7543 = vpop.permute.xlu0 %7542
        %7544 = vrot.lane.b32.xlu0 %v7518, 64
        %v7545 = vpop.permute.xlu0 %7544
        %7546 = vrot.lane.b32.xlu0 %v7519, 64
        %v7547 = vpop.permute.xlu0 %7546
        %7548 = vrot.lane.b32.xlu0 %v7520, 64
        %v7549 = vpop.permute.xlu0 %7548
        %7550 = vrot.lane.b32.xlu0 %v7521, 64
        %v7551 = vpop.permute.xlu0 %7550
        %7552 = vrot.lane.b32.xlu0 %v7522, 64
        %v7553 = vpop.permute.xlu0 %7552
        %7554 = vrot.lane.b32.xlu0 %v7523, 64
        %v7555 = vpop.permute.xlu0 %7554
        %7572 = vst.msk [vmem:[#allocation5 + $0x10] sm:$0xff] %vm1780, %v7525
        %7573 = vst.msk [vmem:[#allocation5 + $0x38] sm:$0xff] %vm1780, %v7527
        %7574 = vst.msk [vmem:[#allocation5 + $0x60] sm:$0xff] %vm1780, %v7529
        %7575 = vst.msk [vmem:[#allocation5 + $0x88] sm:$0xff] %vm1780, %v7531
        %7576 = vst.msk [vmem:[#allocation5 + $0xb0] sm:$0xff] %vm1780, %v7533
        %7577 = vst.msk [vmem:[#allocation5 + $0xd8] sm:$0xff] %vm1780, %v7535
        %7578 = vst.msk [vmem:[#allocation5 + $0x100] sm:$0xff] %vm1780, %v7537
        %7579 = vst.msk [vmem:[#allocation5 + $0x128] sm:$0xff] %vm1780, %v7539
        %7580 = vst.msk [vmem:[#allocation5 + $0x150] sm:$0xff] %vm1780, %v7541
        %7581 = vst.msk [vmem:[#allocation5 + $0x178] sm:$0xff] %vm1780, %v7543
        %7582 = vst.msk [vmem:[#allocation5 + $0x1a0] sm:$0xff] %vm1780, %v7545
        %7583 = vst.msk [vmem:[#allocation5 + $0x1c8] sm:$0xff] %vm1780, %v7547
        %7584 = vst.msk [vmem:[#allocation5 + $0x1f0] sm:$0xff] %vm1780, %v7549
        %7585 = vst.msk [vmem:[#allocation5 + $0x218] sm:$0xff] %vm1780, %v7551
        %7586 = vst.msk [vmem:[#allocation5 + $0x240] sm:$0xff] %vm1780, %v7553
        %7587 = vst.msk [vmem:[#allocation5 + $0x268] sm:$0xff] %vm1780, %v7555
        %s7588 = scalar_lea.vmem [#allocation4], 24
        %v7589 = vld [vmem:[%s7588] sm:$0xf]
        %v7590 = vld [vmem:[%s7588 + $0x4] sm:$0xf]
        %v7591 = vld [vmem:[%s7588 + $0xc] sm:$0xf]
        %v7592 = vld [vmem:[%s7588 + $0x10] sm:$0xf]
        %v7593 = vld [vmem:[%s7588 + $0x18] sm:$0xf]
        %v7594 = vld [vmem:[%s7588 + $0x1c] sm:$0xf]
        %v7595 = vld [vmem:[%s7588 + $0x24] sm:$0xf]
        %v7596 = vld [vmem:[%s7588 + $0x28] sm:$0xf]
        %v7597 = vld [vmem:[%s7588 + $0x30] sm:$0xf]
        %v7598 = vld [vmem:[%s7588 + $0x34] sm:$0xf]
        %v7599 = vld [vmem:[%s7588 + $0x3c] sm:$0xf]
        %v7600 = vld [vmem:[%s7588 + $0x40] sm:$0xf]
        %v7601 = vld [vmem:[%s7588 + $0x48] sm:$0xf]
        %v7602 = vld [vmem:[%s7588 + $0x4c] sm:$0xf]
        %v7603 = vld [vmem:[%s7588 + $0x54] sm:$0xf]
        %v7604 = vld [vmem:[%s7588 + $0x58] sm:$0xf]
        %v7605 = vld [vmem:[%s7588 + $0x60] sm:$0xf]
        %v7606 = vld [vmem:[%s7588 + $0x64] sm:$0xf]
        %v7607 = vld [vmem:[%s7588 + $0x6c] sm:$0xf]
        %v7608 = vld [vmem:[%s7588 + $0x70] sm:$0xf]
        %v7609 = vld [vmem:[%s7588 + $0x78] sm:$0xf]
        %v7610 = vld [vmem:[%s7588 + $0x7c] sm:$0xf]
        %v7611 = vld [vmem:[%s7588 + $0x84] sm:$0xf]
        %v7612 = vld [vmem:[%s7588 + $0x88] sm:$0xf]
        %v7613 = vld [vmem:[%s7588 + $0x90] sm:$0xf]
        %v7614 = vld [vmem:[%s7588 + $0x94] sm:$0xf]
        %v7615 = vld [vmem:[%s7588 + $0x9c] sm:$0xf]
        %v7616 = vld [vmem:[%s7588 + $0xa0] sm:$0xf]
        %v7617 = vld [vmem:[%s7588 + $0xa8] sm:$0xf]
        %v7618 = vld [vmem:[%s7588 + $0xac] sm:$0xf]
        %v7619 = vld [vmem:[%s7588 + $0xb4] sm:$0xf]
        %v7620 = vld [vmem:[%s7588 + $0xb8] sm:$0xf]
        %v7653 = vunpack.c.l.b16 %v7589
        %v7654 = vunpack.c.l.b16 %v7590
        %v7655 = vunpack.c.l.b16 %v7591
        %v7656 = vunpack.c.l.b16 %v7592
        %v7657 = vunpack.c.l.b16 %v7593
        %v7658 = vunpack.c.l.b16 %v7594
        %v7659 = vunpack.c.l.b16 %v7595
        %v7660 = vunpack.c.l.b16 %v7596
        %v7661 = vunpack.c.l.b16 %v7597
        %v7662 = vunpack.c.l.b16 %v7598
        %v7663 = vunpack.c.l.b16 %v7599
        %v7664 = vunpack.c.l.b16 %v7600
        %v7665 = vunpack.c.l.b16 %v7601
        %v7666 = vunpack.c.l.b16 %v7602
        %v7667 = vunpack.c.l.b16 %v7603
        %v7668 = vunpack.c.l.b16 %v7604
        %v7669 = vunpack.c.l.b16 %v7605
        %v7670 = vunpack.c.l.b16 %v7606
        %v7671 = vunpack.c.l.b16 %v7607
        %v7672 = vunpack.c.l.b16 %v7608
        %v7673 = vunpack.c.l.b16 %v7609
        %v7674 = vunpack.c.l.b16 %v7610
        %v7675 = vunpack.c.l.b16 %v7611
        %v7676 = vunpack.c.l.b16 %v7612
        %v7677 = vunpack.c.l.b16 %v7613
        %v7678 = vunpack.c.l.b16 %v7614
        %v7679 = vunpack.c.l.b16 %v7615
        %v7680 = vunpack.c.l.b16 %v7616
        %v7681 = vunpack.c.l.b16 %v7617
        %v7682 = vunpack.c.l.b16 %v7618
        %v7683 = vunpack.c.l.b16 %v7619
        %v7684 = vunpack.c.l.b16 %v7620
        %v7685 = vpack.c.b16 %v7654, %v7653
        %v7686 = vpack.c.b16 %v7656, %v7655
        %v7687 = vpack.c.b16 %v7658, %v7657
        %v7688 = vpack.c.b16 %v7660, %v7659
        %v7689 = vpack.c.b16 %v7662, %v7661
        %v7690 = vpack.c.b16 %v7664, %v7663
        %v7691 = vpack.c.b16 %v7666, %v7665
        %v7692 = vpack.c.b16 %v7668, %v7667
        %v7693 = vpack.c.b16 %v7670, %v7669
        %v7694 = vpack.c.b16 %v7672, %v7671
        %v7695 = vpack.c.b16 %v7674, %v7673
        %v7696 = vpack.c.b16 %v7676, %v7675
        %v7697 = vpack.c.b16 %v7678, %v7677
        %v7698 = vpack.c.b16 %v7680, %v7679
        %v7699 = vpack.c.b16 %v7682, %v7681
        %v7700 = vpack.c.b16 %v7684, %v7683
        %7717 = vst.msk [vmem:[#allocation5 + $0x18] sm:$0xff] %vm1232, %v7685
        %7718 = vst.msk [vmem:[#allocation5 + $0x40] sm:$0xff] %vm1232, %v7686
        %7719 = vst.msk [vmem:[#allocation5 + $0x68] sm:$0xff] %vm1232, %v7687
        %7720 = vst.msk [vmem:[#allocation5 + $0x90] sm:$0xff] %vm1232, %v7688
        %7721 = vst.msk [vmem:[#allocation5 + $0xb8] sm:$0xff] %vm1232, %v7689
        %7722 = vst.msk [vmem:[#allocation5 + $0xe0] sm:$0xff] %vm1232, %v7690
        %7723 = vst.msk [vmem:[#allocation5 + $0x108] sm:$0xff] %vm1232, %v7691
        %7724 = vst.msk [vmem:[#allocation5 + $0x130] sm:$0xff] %vm1232, %v7692
        %7725 = vst.msk [vmem:[#allocation5 + $0x158] sm:$0xff] %vm1232, %v7693
        %7726 = vst.msk [vmem:[#allocation5 + $0x180] sm:$0xff] %vm1232, %v7694
        %7727 = vst.msk [vmem:[#allocation5 + $0x1a8] sm:$0xff] %vm1232, %v7695
        %7728 = vst.msk [vmem:[#allocation5 + $0x1d0] sm:$0xff] %vm1232, %v7696
        %7729 = vst.msk [vmem:[#allocation5 + $0x1f8] sm:$0xff] %vm1232, %v7697
        %7730 = vst.msk [vmem:[#allocation5 + $0x220] sm:$0xff] %vm1232, %v7698
        %7731 = vst.msk [vmem:[#allocation5 + $0x248] sm:$0xff] %vm1232, %v7699
        %7732 = vst.msk [vmem:[#allocation5 + $0x270] sm:$0xff] %vm1232, %v7700
        %v7733 = vld [vmem:[%s7588] sm:$0xf]
        %v7734 = vld [vmem:[%s7588 + $0x4] sm:$0xf]
        %v7735 = vld [vmem:[%s7588 + $0x8] sm:$0x1]
        %v7736 = vld [vmem:[%s7588 + $0xc] sm:$0xf]
        %v7737 = vld [vmem:[%s7588 + $0x10] sm:$0xf]
        %v7738 = vld [vmem:[%s7588 + $0x14] sm:$0x1]
        %v7739 = vld [vmem:[%s7588 + $0x18] sm:$0xf]
        %v7740 = vld [vmem:[%s7588 + $0x1c] sm:$0xf]
        %v7741 = vld [vmem:[%s7588 + $0x20] sm:$0x1]
        %v7742 = vld [vmem:[%s7588 + $0x24] sm:$0xf]
        %v7743 = vld [vmem:[%s7588 + $0x28] sm:$0xf]
        %v7744 = vld [vmem:[%s7588 + $0x2c] sm:$0x1]
        %v7745 = vld [vmem:[%s7588 + $0x30] sm:$0xf]
        %v7746 = vld [vmem:[%s7588 + $0x34] sm:$0xf]
        %v7747 = vld [vmem:[%s7588 + $0x38] sm:$0x1]
        %v7748 = vld [vmem:[%s7588 + $0x3c] sm:$0xf]
        %v7749 = vld [vmem:[%s7588 + $0x40] sm:$0xf]
        %v7750 = vld [vmem:[%s7588 + $0x44] sm:$0x1]
        %v7751 = vld [vmem:[%s7588 + $0x48] sm:$0xf]
        %v7752 = vld [vmem:[%s7588 + $0x4c] sm:$0xf]
        %v7753 = vld [vmem:[%s7588 + $0x50] sm:$0x1]
        %v7754 = vld [vmem:[%s7588 + $0x54] sm:$0xf]
        %v7755 = vld [vmem:[%s7588 + $0x58] sm:$0xf]
        %v7756 = vld [vmem:[%s7588 + $0x5c] sm:$0x1]
        %v7757 = vld [vmem:[%s7588 + $0x60] sm:$0xf]
        %v7758 = vld [vmem:[%s7588 + $0x64] sm:$0xf]
        %v7759 = vld [vmem:[%s7588 + $0x68] sm:$0x1]
        %v7760 = vld [vmem:[%s7588 + $0x6c] sm:$0xf]
        %v7761 = vld [vmem:[%s7588 + $0x70] sm:$0xf]
        %v7762 = vld [vmem:[%s7588 + $0x74] sm:$0x1]
        %v7763 = vld [vmem:[%s7588 + $0x78] sm:$0xf]
        %v7764 = vld [vmem:[%s7588 + $0x7c] sm:$0xf]
        %v7765 = vld [vmem:[%s7588 + $0x80] sm:$0x1]
        %v7766 = vld [vmem:[%s7588 + $0x84] sm:$0xf]
        %v7767 = vld [vmem:[%s7588 + $0x88] sm:$0xf]
        %v7768 = vld [vmem:[%s7588 + $0x8c] sm:$0x1]
        %v7769 = vld [vmem:[%s7588 + $0x90] sm:$0xf]
        %v7770 = vld [vmem:[%s7588 + $0x94] sm:$0xf]
        %v7771 = vld [vmem:[%s7588 + $0x98] sm:$0x1]
        %v7772 = vld [vmem:[%s7588 + $0x9c] sm:$0xf]
        %v7773 = vld [vmem:[%s7588 + $0xa0] sm:$0xf]
        %v7774 = vld [vmem:[%s7588 + $0xa4] sm:$0x1]
        %v7775 = vld [vmem:[%s7588 + $0xa8] sm:$0xf]
        %v7776 = vld [vmem:[%s7588 + $0xac] sm:$0xf]
        %v7777 = vld [vmem:[%s7588 + $0xb0] sm:$0x1]
        %v7778 = vld [vmem:[%s7588 + $0xb4] sm:$0xf]
        %v7779 = vld [vmem:[%s7588 + $0xb8] sm:$0xf]
        %v7780 = vld [vmem:[%s7588 + $0xbc] sm:$0x1]
        %v7782 = vshrl.u32 %v7733, 16
        %v7784 = vrot.slane %v7782, 4
        %v7785 = vshll.u32 %v7733, 16
        %v7787 = vrot.slane %v7785, 5
        %v7788 = vor.u32 %v7784, %v7787
        %v7789 = vrot.slane %v7788, 4
        %v7791 = vshll.u32 %v7734, 16
        %v7793 = vrot.slane %v7791, 5
        %v7794 = vsel %vm1299, %v7789, %v7793
        %v7795 = vshrl.u32 %v7734, 16
        %v7797 = vrot.slane %v7795, 4
        %v7798 = vor.u32 %v7797, %v7793
        %v7799 = vrot.slane %v7798, 4
        %v7801 = vshll.u32 %v7735, 16
        %v7803 = vrot.slane %v7801, 5
        %v7804 = vsel %vm1299, %v7799, %v7803
        %v7806 = vshrl.u32 %v7736, 16
        %v7808 = vrot.slane %v7806, 4
        %v7809 = vshll.u32 %v7736, 16
        %v7811 = vrot.slane %v7809, 5
        %v7812 = vor.u32 %v7808, %v7811
        %v7813 = vrot.slane %v7812, 4
        %v7815 = vshll.u32 %v7737, 16
        %v7817 = vrot.slane %v7815, 5
        %v7818 = vsel %vm1299, %v7813, %v7817
        %v7819 = vshrl.u32 %v7737, 16
        %v7821 = vrot.slane %v7819, 4
        %v7822 = vor.u32 %v7821, %v7817
        %v7823 = vrot.slane %v7822, 4
        %v7825 = vshll.u32 %v7738, 16
        %v7827 = vrot.slane %v7825, 5
        %v7828 = vsel %vm1299, %v7823, %v7827
        %v7830 = vshrl.u32 %v7739, 16
        %v7832 = vrot.slane %v7830, 4
        %v7833 = vshll.u32 %v7739, 16
        %v7835 = vrot.slane %v7833, 5
        %v7836 = vor.u32 %v7832, %v7835
        %v7837 = vrot.slane %v7836, 4
        %v7839 = vshll.u32 %v7740, 16
        %v7841 = vrot.slane %v7839, 5
        %v7842 = vsel %vm1299, %v7837, %v7841
        %v7843 = vshrl.u32 %v7740, 16
        %v7845 = vrot.slane %v7843, 4
        %v7846 = vor.u32 %v7845, %v7841
        %v7847 = vrot.slane %v7846, 4
        %v7849 = vshll.u32 %v7741, 16
        %v7851 = vrot.slane %v7849, 5
        %v7852 = vsel %vm1299, %v7847, %v7851
        %v7854 = vshrl.u32 %v7742, 16
        %v7856 = vrot.slane %v7854, 4
        %v7857 = vshll.u32 %v7742, 16
        %v7859 = vrot.slane %v7857, 5
        %v7860 = vor.u32 %v7856, %v7859
        %v7861 = vrot.slane %v7860, 4
        %v7863 = vshll.u32 %v7743, 16
        %v7865 = vrot.slane %v7863, 5
        %v7866 = vsel %vm1299, %v7861, %v7865
        %v7867 = vshrl.u32 %v7743, 16
        %v7869 = vrot.slane %v7867, 4
        %v7870 = vor.u32 %v7869, %v7865
        %v7871 = vrot.slane %v7870, 4
        %v7873 = vshll.u32 %v7744, 16
        %v7875 = vrot.slane %v7873, 5
        %v7876 = vsel %vm1299, %v7871, %v7875
        %v7878 = vshrl.u32 %v7745, 16
        %v7880 = vrot.slane %v7878, 4
        %v7881 = vshll.u32 %v7745, 16
        %v7883 = vrot.slane %v7881, 5
        %v7884 = vor.u32 %v7880, %v7883
        %v7885 = vrot.slane %v7884, 4
        %v7887 = vshll.u32 %v7746, 16
        %v7889 = vrot.slane %v7887, 5
        %v7890 = vsel %vm1299, %v7885, %v7889
        %v7891 = vshrl.u32 %v7746, 16
        %v7893 = vrot.slane %v7891, 4
        %v7894 = vor.u32 %v7893, %v7889
        %v7895 = vrot.slane %v7894, 4
        %v7897 = vshll.u32 %v7747, 16
        %v7899 = vrot.slane %v7897, 5
        %v7900 = vsel %vm1299, %v7895, %v7899
        %v7902 = vshrl.u32 %v7748, 16
        %v7904 = vrot.slane %v7902, 4
        %v7905 = vshll.u32 %v7748, 16
        %v7907 = vrot.slane %v7905, 5
        %v7908 = vor.u32 %v7904, %v7907
        %v7909 = vrot.slane %v7908, 4
        %v7911 = vshll.u32 %v7749, 16
        %v7913 = vrot.slane %v7911, 5
        %v7914 = vsel %vm1299, %v7909, %v7913
        %v7915 = vshrl.u32 %v7749, 16
        %v7917 = vrot.slane %v7915, 4
        %v7918 = vor.u32 %v7917, %v7913
        %v7919 = vrot.slane %v7918, 4
        %v7921 = vshll.u32 %v7750, 16
        %v7923 = vrot.slane %v7921, 5
        %v7924 = vsel %vm1299, %v7919, %v7923
        %v7926 = vshrl.u32 %v7751, 16
        %v7928 = vrot.slane %v7926, 4
        %v7929 = vshll.u32 %v7751, 16
        %v7931 = vrot.slane %v7929, 5
        %v7932 = vor.u32 %v7928, %v7931
        %v7933 = vrot.slane %v7932, 4
        %v7935 = vshll.u32 %v7752, 16
        %v7937 = vrot.slane %v7935, 5
        %v7938 = vsel %vm1299, %v7933, %v7937
        %v7939 = vshrl.u32 %v7752, 16
        %v7941 = vrot.slane %v7939, 4
        %v7942 = vor.u32 %v7941, %v7937
        %v7943 = vrot.slane %v7942, 4
        %v7945 = vshll.u32 %v7753, 16
        %v7947 = vrot.slane %v7945, 5
        %v7948 = vsel %vm1299, %v7943, %v7947
        %v7950 = vshrl.u32 %v7754, 16
        %v7952 = vrot.slane %v7950, 4
        %v7953 = vshll.u32 %v7754, 16
        %v7955 = vrot.slane %v7953, 5
        %v7956 = vor.u32 %v7952, %v7955
        %v7957 = vrot.slane %v7956, 4
        %v7959 = vshll.u32 %v7755, 16
        %v7961 = vrot.slane %v7959, 5
        %v7962 = vsel %vm1299, %v7957, %v7961
        %v7963 = vshrl.u32 %v7755, 16
        %v7965 = vrot.slane %v7963, 4
        %v7966 = vor.u32 %v7965, %v7961
        %v7967 = vrot.slane %v7966, 4
        %v7969 = vshll.u32 %v7756, 16
        %v7971 = vrot.slane %v7969, 5
        %v7972 = vsel %vm1299, %v7967, %v7971
        %v7974 = vshrl.u32 %v7757, 16
        %v7976 = vrot.slane %v7974, 4
        %v7977 = vshll.u32 %v7757, 16
        %v7979 = vrot.slane %v7977, 5
        %v7980 = vor.u32 %v7976, %v7979
        %v7981 = vrot.slane %v7980, 4
        %v7983 = vshll.u32 %v7758, 16
        %v7985 = vrot.slane %v7983, 5
        %v7986 = vsel %vm1299, %v7981, %v7985
        %v7987 = vshrl.u32 %v7758, 16
        %v7989 = vrot.slane %v7987, 4
        %v7990 = vor.u32 %v7989, %v7985
        %v7991 = vrot.slane %v7990, 4
        %v7993 = vshll.u32 %v7759, 16
        %v7995 = vrot.slane %v7993, 5
        %v7996 = vsel %vm1299, %v7991, %v7995
        %v7998 = vshrl.u32 %v7760, 16
        %v8000 = vrot.slane %v7998, 4
        %v8001 = vshll.u32 %v7760, 16
        %v8003 = vrot.slane %v8001, 5
        %v8004 = vor.u32 %v8000, %v8003
        %v8005 = vrot.slane %v8004, 4
        %v8007 = vshll.u32 %v7761, 16
        %v8009 = vrot.slane %v8007, 5
        %v8010 = vsel %vm1299, %v8005, %v8009
        %v8011 = vshrl.u32 %v7761, 16
        %v8013 = vrot.slane %v8011, 4
        %v8014 = vor.u32 %v8013, %v8009
        %v8015 = vrot.slane %v8014, 4
        %v8017 = vshll.u32 %v7762, 16
        %v8019 = vrot.slane %v8017, 5
        %v8020 = vsel %vm1299, %v8015, %v8019
        %v8022 = vshrl.u32 %v7763, 16
        %v8024 = vrot.slane %v8022, 4
        %v8025 = vshll.u32 %v7763, 16
        %v8027 = vrot.slane %v8025, 5
        %v8028 = vor.u32 %v8024, %v8027
        %v8029 = vrot.slane %v8028, 4
        %v8031 = vshll.u32 %v7764, 16
        %v8033 = vrot.slane %v8031, 5
        %v8034 = vsel %vm1299, %v8029, %v8033
        %v8035 = vshrl.u32 %v7764, 16
        %v8037 = vrot.slane %v8035, 4
        %v8038 = vor.u32 %v8037, %v8033
        %v8039 = vrot.slane %v8038, 4
        %v8041 = vshll.u32 %v7765, 16
        %v8043 = vrot.slane %v8041, 5
        %v8044 = vsel %vm1299, %v8039, %v8043
        %v8046 = vshrl.u32 %v7766, 16
        %v8048 = vrot.slane %v8046, 4
        %v8049 = vshll.u32 %v7766, 16
        %v8051 = vrot.slane %v8049, 5
        %v8052 = vor.u32 %v8048, %v8051
        %v8053 = vrot.slane %v8052, 4
        %v8055 = vshll.u32 %v7767, 16
        %v8057 = vrot.slane %v8055, 5
        %v8058 = vsel %vm1299, %v8053, %v8057
        %v8059 = vshrl.u32 %v7767, 16
        %v8061 = vrot.slane %v8059, 4
        %v8062 = vor.u32 %v8061, %v8057
        %v8063 = vrot.slane %v8062, 4
        %v8065 = vshll.u32 %v7768, 16
        %v8067 = vrot.slane %v8065, 5
        %v8068 = vsel %vm1299, %v8063, %v8067
        %v8070 = vshrl.u32 %v7769, 16
        %v8072 = vrot.slane %v8070, 4
        %v8073 = vshll.u32 %v7769, 16
        %v8075 = vrot.slane %v8073, 5
        %v8076 = vor.u32 %v8072, %v8075
        %v8077 = vrot.slane %v8076, 4
        %v8079 = vshll.u32 %v7770, 16
        %v8081 = vrot.slane %v8079, 5
        %v8082 = vsel %vm1299, %v8077, %v8081
        %v8083 = vshrl.u32 %v7770, 16
        %v8085 = vrot.slane %v8083, 4
        %v8086 = vor.u32 %v8085, %v8081
        %v8087 = vrot.slane %v8086, 4
        %v8089 = vshll.u32 %v7771, 16
        %v8091 = vrot.slane %v8089, 5
        %v8092 = vsel %vm1299, %v8087, %v8091
        %v8094 = vshrl.u32 %v7772, 16
        %v8096 = vrot.slane %v8094, 4
        %v8097 = vshll.u32 %v7772, 16
        %v8099 = vrot.slane %v8097, 5
        %v8100 = vor.u32 %v8096, %v8099
        %v8101 = vrot.slane %v8100, 4
        %v8103 = vshll.u32 %v7773, 16
        %v8105 = vrot.slane %v8103, 5
        %v8106 = vsel %vm1299, %v8101, %v8105
        %v8107 = vshrl.u32 %v7773, 16
        %v8109 = vrot.slane %v8107, 4
        %v8110 = vor.u32 %v8109, %v8105
        %v8111 = vrot.slane %v8110, 4
        %v8113 = vshll.u32 %v7774, 16
        %v8115 = vrot.slane %v8113, 5
        %v8116 = vsel %vm1299, %v8111, %v8115
        %v8118 = vshrl.u32 %v7775, 16
        %v8120 = vrot.slane %v8118, 4
        %v8121 = vshll.u32 %v7775, 16
        %v8123 = vrot.slane %v8121, 5
        %v8124 = vor.u32 %v8120, %v8123
        %v8125 = vrot.slane %v8124, 4
        %v8127 = vshll.u32 %v7776, 16
        %v8129 = vrot.slane %v8127, 5
        %v8130 = vsel %vm1299, %v8125, %v8129
        %v8131 = vshrl.u32 %v7776, 16
        %v8133 = vrot.slane %v8131, 4
        %v8134 = vor.u32 %v8133, %v8129
        %v8135 = vrot.slane %v8134, 4
        %v8137 = vshll.u32 %v7777, 16
        %v8139 = vrot.slane %v8137, 5
        %v8140 = vsel %vm1299, %v8135, %v8139
        %v8142 = vshrl.u32 %v7778, 16
        %v8144 = vrot.slane %v8142, 4
        %v8145 = vshll.u32 %v7778, 16
        %v8147 = vrot.slane %v8145, 5
        %v8148 = vor.u32 %v8144, %v8147
        %v8149 = vrot.slane %v8148, 4
        %v8151 = vshll.u32 %v7779, 16
        %v8153 = vrot.slane %v8151, 5
        %v8154 = vsel %vm1299, %v8149, %v8153
        %v8155 = vshrl.u32 %v7779, 16
        %v8157 = vrot.slane %v8155, 4
        %v8158 = vor.u32 %v8157, %v8153
        %v8159 = vrot.slane %v8158, 4
        %v8161 = vshll.u32 %v7780, 16
        %v8163 = vrot.slane %v8161, 5
        %v8164 = vsel %vm1299, %v8159, %v8163
        %v8165 = vunpack.c.l.b16 %v7794
        %v8166 = vunpack.c.l.b16 %v7804
        %v8167 = vunpack.c.l.b16 %v7818
        %v8168 = vunpack.c.l.b16 %v7828
        %v8169 = vunpack.c.l.b16 %v7842
        %v8170 = vunpack.c.l.b16 %v7852
        %v8171 = vunpack.c.l.b16 %v7866
        %v8172 = vunpack.c.l.b16 %v7876
        %v8173 = vunpack.c.l.b16 %v7890
        %v8174 = vunpack.c.l.b16 %v7900
        %v8175 = vunpack.c.l.b16 %v7914
        %v8176 = vunpack.c.l.b16 %v7924
        %v8177 = vunpack.c.l.b16 %v7938
        %v8178 = vunpack.c.l.b16 %v7948
        %v8179 = vunpack.c.l.b16 %v7962
        %v8180 = vunpack.c.l.b16 %v7972
        %v8181 = vunpack.c.l.b16 %v7986
        %v8182 = vunpack.c.l.b16 %v7996
        %v8183 = vunpack.c.l.b16 %v8010
        %v8184 = vunpack.c.l.b16 %v8020
        %v8185 = vunpack.c.l.b16 %v8034
        %v8186 = vunpack.c.l.b16 %v8044
        %v8187 = vunpack.c.l.b16 %v8058
        %v8188 = vunpack.c.l.b16 %v8068
        %v8189 = vunpack.c.l.b16 %v8082
        %v8190 = vunpack.c.l.b16 %v8092
        %v8191 = vunpack.c.l.b16 %v8106
        %v8192 = vunpack.c.l.b16 %v8116
        %v8193 = vunpack.c.l.b16 %v8130
        %v8194 = vunpack.c.l.b16 %v8140
        %v8195 = vunpack.c.l.b16 %v8154
        %v8196 = vunpack.c.l.b16 %v8164
        %v8197 = vpack.c.b16 %v8166, %v8165
        %v8198 = vpack.c.b16 %v8168, %v8167
        %v8199 = vpack.c.b16 %v8170, %v8169
        %v8200 = vpack.c.b16 %v8172, %v8171
        %v8201 = vpack.c.b16 %v8174, %v8173
        %v8202 = vpack.c.b16 %v8176, %v8175
        %v8203 = vpack.c.b16 %v8178, %v8177
        %v8204 = vpack.c.b16 %v8180, %v8179
        %v8205 = vpack.c.b16 %v8182, %v8181
        %v8206 = vpack.c.b16 %v8184, %v8183
        %v8207 = vpack.c.b16 %v8186, %v8185
        %v8208 = vpack.c.b16 %v8188, %v8187
        %v8209 = vpack.c.b16 %v8190, %v8189
        %v8210 = vpack.c.b16 %v8192, %v8191
        %v8211 = vpack.c.b16 %v8194, %v8193
        %v8212 = vpack.c.b16 %v8196, %v8195
        %8213 = vrot.lane.b32.xlu0 %v8197, 64
        %v8214 = vpop.permute.xlu0 %8213
        %8215 = vrot.lane.b32.xlu0 %v8198, 64
        %v8216 = vpop.permute.xlu0 %8215
        %8217 = vrot.lane.b32.xlu0 %v8199, 64
        %v8218 = vpop.permute.xlu0 %8217
        %8219 = vrot.lane.b32.xlu0 %v8200, 64
        %v8220 = vpop.permute.xlu0 %8219
        %8221 = vrot.lane.b32.xlu0 %v8201, 64
        %v8222 = vpop.permute.xlu0 %8221
        %8223 = vrot.lane.b32.xlu0 %v8202, 64
        %v8224 = vpop.permute.xlu0 %8223
        %8225 = vrot.lane.b32.xlu0 %v8203, 64
        %v8226 = vpop.permute.xlu0 %8225
        %8227 = vrot.lane.b32.xlu0 %v8204, 64
        %v8228 = vpop.permute.xlu0 %8227
        %8229 = vrot.lane.b32.xlu0 %v8205, 64
        %v8230 = vpop.permute.xlu0 %8229
        %8231 = vrot.lane.b32.xlu0 %v8206, 64
        %v8232 = vpop.permute.xlu0 %8231
        %8233 = vrot.lane.b32.xlu0 %v8207, 64
        %v8234 = vpop.permute.xlu0 %8233
        %8235 = vrot.lane.b32.xlu0 %v8208, 64
        %v8236 = vpop.permute.xlu0 %8235
        %8237 = vrot.lane.b32.xlu0 %v8209, 64
        %v8238 = vpop.permute.xlu0 %8237
        %8239 = vrot.lane.b32.xlu0 %v8210, 64
        %v8240 = vpop.permute.xlu0 %8239
        %8241 = vrot.lane.b32.xlu0 %v8211, 64
        %v8242 = vpop.permute.xlu0 %8241
        %8243 = vrot.lane.b32.xlu0 %v8212, 64
        %v8244 = vpop.permute.xlu0 %8243
        %8261 = vst.msk [vmem:[#allocation5 + $0x18] sm:$0xff] %vm1780, %v8214
        %8262 = vst.msk [vmem:[#allocation5 + $0x40] sm:$0xff] %vm1780, %v8216
        %8263 = vst.msk [vmem:[#allocation5 + $0x68] sm:$0xff] %vm1780, %v8218
        %8264 = vst.msk [vmem:[#allocation5 + $0x90] sm:$0xff] %vm1780, %v8220
        %8265 = vst.msk [vmem:[#allocation5 + $0xb8] sm:$0xff] %vm1780, %v8222
        %8266 = vst.msk [vmem:[#allocation5 + $0xe0] sm:$0xff] %vm1780, %v8224
        %8267 = vst.msk [vmem:[#allocation5 + $0x108] sm:$0xff] %vm1780, %v8226
        %8268 = vst.msk [vmem:[#allocation5 + $0x130] sm:$0xff] %vm1780, %v8228
        %8269 = vst.msk [vmem:[#allocation5 + $0x158] sm:$0xff] %vm1780, %v8230
        %8270 = vst.msk [vmem:[#allocation5 + $0x180] sm:$0xff] %vm1780, %v8232
        %8271 = vst.msk [vmem:[#allocation5 + $0x1a8] sm:$0xff] %vm1780, %v8234
        %8272 = vst.msk [vmem:[#allocation5 + $0x1d0] sm:$0xff] %vm1780, %v8236
        %8273 = vst.msk [vmem:[#allocation5 + $0x1f8] sm:$0xff] %vm1780, %v8238
        %8274 = vst.msk [vmem:[#allocation5 + $0x220] sm:$0xff] %vm1780, %v8240
        %8275 = vst.msk [vmem:[#allocation5 + $0x248] sm:$0xff] %vm1780, %v8242
        %8276 = vst.msk [vmem:[#allocation5 + $0x270] sm:$0xff] %vm1780, %v8244
        %v8277 = vld [vmem:[%s7588] sm:$0xe]
        %v8278 = vld [vmem:[%s7588 + $0x4] sm:$0xf]
        %v8279 = vld [vmem:[%s7588 + $0x8] sm:$0x1]
        %v8280 = vld [vmem:[%s7588 + $0xc] sm:$0xe]
        %v8281 = vld [vmem:[%s7588 + $0x10] sm:$0xf]
        %v8282 = vld [vmem:[%s7588 + $0x14] sm:$0x1]
        %v8283 = vld [vmem:[%s7588 + $0x18] sm:$0xe]
        %v8284 = vld [vmem:[%s7588 + $0x1c] sm:$0xf]
        %v8285 = vld [vmem:[%s7588 + $0x20] sm:$0x1]
        %v8286 = vld [vmem:[%s7588 + $0x24] sm:$0xe]
        %v8287 = vld [vmem:[%s7588 + $0x28] sm:$0xf]
        %v8288 = vld [vmem:[%s7588 + $0x2c] sm:$0x1]
        %v8289 = vld [vmem:[%s7588 + $0x30] sm:$0xe]
        %v8290 = vld [vmem:[%s7588 + $0x34] sm:$0xf]
        %v8291 = vld [vmem:[%s7588 + $0x38] sm:$0x1]
        %v8292 = vld [vmem:[%s7588 + $0x3c] sm:$0xe]
        %v8293 = vld [vmem:[%s7588 + $0x40] sm:$0xf]
        %v8294 = vld [vmem:[%s7588 + $0x44] sm:$0x1]
        %v8295 = vld [vmem:[%s7588 + $0x48] sm:$0xe]
        %v8296 = vld [vmem:[%s7588 + $0x4c] sm:$0xf]
        %v8297 = vld [vmem:[%s7588 + $0x50] sm:$0x1]
        %v8298 = vld [vmem:[%s7588 + $0x54] sm:$0xe]
        %v8299 = vld [vmem:[%s7588 + $0x58] sm:$0xf]
        %v8300 = vld [vmem:[%s7588 + $0x5c] sm:$0x1]
        %v8301 = vld [vmem:[%s7588 + $0x60] sm:$0xe]
        %v8302 = vld [vmem:[%s7588 + $0x64] sm:$0xf]
        %v8303 = vld [vmem:[%s7588 + $0x68] sm:$0x1]
        %v8304 = vld [vmem:[%s7588 + $0x6c] sm:$0xe]
        %v8305 = vld [vmem:[%s7588 + $0x70] sm:$0xf]
        %v8306 = vld [vmem:[%s7588 + $0x74] sm:$0x1]
        %v8307 = vld [vmem:[%s7588 + $0x78] sm:$0xe]
        %v8308 = vld [vmem:[%s7588 + $0x7c] sm:$0xf]
        %v8309 = vld [vmem:[%s7588 + $0x80] sm:$0x1]
        %v8310 = vld [vmem:[%s7588 + $0x84] sm:$0xe]
        %v8311 = vld [vmem:[%s7588 + $0x88] sm:$0xf]
        %v8312 = vld [vmem:[%s7588 + $0x8c] sm:$0x1]
        %v8313 = vld [vmem:[%s7588 + $0x90] sm:$0xe]
        %v8314 = vld [vmem:[%s7588 + $0x94] sm:$0xf]
        %v8315 = vld [vmem:[%s7588 + $0x98] sm:$0x1]
        %v8316 = vld [vmem:[%s7588 + $0x9c] sm:$0xe]
        %v8317 = vld [vmem:[%s7588 + $0xa0] sm:$0xf]
        %v8318 = vld [vmem:[%s7588 + $0xa4] sm:$0x1]
        %v8319 = vld [vmem:[%s7588 + $0xa8] sm:$0xe]
        %v8320 = vld [vmem:[%s7588 + $0xac] sm:$0xf]
        %v8321 = vld [vmem:[%s7588 + $0xb0] sm:$0x1]
        %v8322 = vld [vmem:[%s7588 + $0xb4] sm:$0xe]
        %v8323 = vld [vmem:[%s7588 + $0xb8] sm:$0xf]
        %v8324 = vld [vmem:[%s7588 + $0xbc] sm:$0x1]
        %v8373 = vrot.slane %v8277, 5
        %v8374 = vrot.slane %v8373, 4
        %v8375 = vrot.slane %v8278, 5
        %v8376 = vsel %vm1895, %v8374, %v8375
        %v8377 = vrot.slane %v8375, 4
        %v8378 = vrot.slane %v8279, 5
        %v8379 = vsel %vm1895, %v8377, %v8378
        %v8380 = vrot.slane %v8280, 5
        %v8381 = vrot.slane %v8380, 4
        %v8382 = vrot.slane %v8281, 5
        %v8383 = vsel %vm1895, %v8381, %v8382
        %v8384 = vrot.slane %v8382, 4
        %v8385 = vrot.slane %v8282, 5
        %v8386 = vsel %vm1895, %v8384, %v8385
        %v8387 = vrot.slane %v8283, 5
        %v8388 = vrot.slane %v8387, 4
        %v8389 = vrot.slane %v8284, 5
        %v8390 = vsel %vm1895, %v8388, %v8389
        %v8391 = vrot.slane %v8389, 4
        %v8392 = vrot.slane %v8285, 5
        %v8393 = vsel %vm1895, %v8391, %v8392
        %v8394 = vrot.slane %v8286, 5
        %v8395 = vrot.slane %v8394, 4
        %v8396 = vrot.slane %v8287, 5
        %v8397 = vsel %vm1895, %v8395, %v8396
        %v8398 = vrot.slane %v8396, 4
        %v8399 = vrot.slane %v8288, 5
        %v8400 = vsel %vm1895, %v8398, %v8399
        %v8401 = vrot.slane %v8289, 5
        %v8402 = vrot.slane %v8401, 4
        %v8403 = vrot.slane %v8290, 5
        %v8404 = vsel %vm1895, %v8402, %v8403
        %v8405 = vrot.slane %v8403, 4
        %v8406 = vrot.slane %v8291, 5
        %v8407 = vsel %vm1895, %v8405, %v8406
        %v8408 = vrot.slane %v8292, 5
        %v8409 = vrot.slane %v8408, 4
        %v8410 = vrot.slane %v8293, 5
        %v8411 = vsel %vm1895, %v8409, %v8410
        %v8412 = vrot.slane %v8410, 4
        %v8413 = vrot.slane %v8294, 5
        %v8414 = vsel %vm1895, %v8412, %v8413
        %v8415 = vrot.slane %v8295, 5
        %v8416 = vrot.slane %v8415, 4
        %v8417 = vrot.slane %v8296, 5
        %v8418 = vsel %vm1895, %v8416, %v8417
        %v8419 = vrot.slane %v8417, 4
        %v8420 = vrot.slane %v8297, 5
        %v8421 = vsel %vm1895, %v8419, %v8420
        %v8422 = vrot.slane %v8298, 5
        %v8423 = vrot.slane %v8422, 4
        %v8424 = vrot.slane %v8299, 5
        %v8425 = vsel %vm1895, %v8423, %v8424
        %v8426 = vrot.slane %v8424, 4
        %v8427 = vrot.slane %v8300, 5
        %v8428 = vsel %vm1895, %v8426, %v8427
        %v8429 = vrot.slane %v8301, 5
        %v8430 = vrot.slane %v8429, 4
        %v8431 = vrot.slane %v8302, 5
        %v8432 = vsel %vm1895, %v8430, %v8431
        %v8433 = vrot.slane %v8431, 4
        %v8434 = vrot.slane %v8303, 5
        %v8435 = vsel %vm1895, %v8433, %v8434
        %v8436 = vrot.slane %v8304, 5
        %v8437 = vrot.slane %v8436, 4
        %v8438 = vrot.slane %v8305, 5
        %v8439 = vsel %vm1895, %v8437, %v8438
        %v8440 = vrot.slane %v8438, 4
        %v8441 = vrot.slane %v8306, 5
        %v8442 = vsel %vm1895, %v8440, %v8441
        %v8443 = vrot.slane %v8307, 5
        %v8444 = vrot.slane %v8443, 4
        %v8445 = vrot.slane %v8308, 5
        %v8446 = vsel %vm1895, %v8444, %v8445
        %v8447 = vrot.slane %v8445, 4
        %v8448 = vrot.slane %v8309, 5
        %v8449 = vsel %vm1895, %v8447, %v8448
        %v8450 = vrot.slane %v8310, 5
        %v8451 = vrot.slane %v8450, 4
        %v8452 = vrot.slane %v8311, 5
        %v8453 = vsel %vm1895, %v8451, %v8452
        %v8454 = vrot.slane %v8452, 4
        %v8455 = vrot.slane %v8312, 5
        %v8456 = vsel %vm1895, %v8454, %v8455
        %v8457 = vrot.slane %v8313, 5
        %v8458 = vrot.slane %v8457, 4
        %v8459 = vrot.slane %v8314, 5
        %v8460 = vsel %vm1895, %v8458, %v8459
        %v8461 = vrot.slane %v8459, 4
        %v8462 = vrot.slane %v8315, 5
        %v8463 = vsel %vm1895, %v8461, %v8462
        %v8464 = vrot.slane %v8316, 5
        %v8465 = vrot.slane %v8464, 4
        %v8466 = vrot.slane %v8317, 5
        %v8467 = vsel %vm1895, %v8465, %v8466
        %v8468 = vrot.slane %v8466, 4
        %v8469 = vrot.slane %v8318, 5
        %v8470 = vsel %vm1895, %v8468, %v8469
        %v8471 = vrot.slane %v8319, 5
        %v8472 = vrot.slane %v8471, 4
        %v8473 = vrot.slane %v8320, 5
        %v8474 = vsel %vm1895, %v8472, %v8473
        %v8475 = vrot.slane %v8473, 4
        %v8476 = vrot.slane %v8321, 5
        %v8477 = vsel %vm1895, %v8475, %v8476
        %v8478 = vrot.slane %v8322, 5
        %v8479 = vrot.slane %v8478, 4
        %v8480 = vrot.slane %v8323, 5
        %v8481 = vsel %vm1895, %v8479, %v8480
        %v8482 = vrot.slane %v8480, 4
        %v8483 = vrot.slane %v8324, 5
        %v8484 = vsel %vm1895, %v8482, %v8483
        %v8485 = vunpack.c.l.b16 %v8376
        %v8486 = vunpack.c.l.b16 %v8379
        %v8487 = vunpack.c.l.b16 %v8383
        %v8488 = vunpack.c.l.b16 %v8386
        %v8489 = vunpack.c.l.b16 %v8390
        %v8490 = vunpack.c.l.b16 %v8393
        %v8491 = vunpack.c.l.b16 %v8397
        %v8492 = vunpack.c.l.b16 %v8400
        %v8493 = vunpack.c.l.b16 %v8404
        %v8494 = vunpack.c.l.b16 %v8407
        %v8495 = vunpack.c.l.b16 %v8411
        %v8496 = vunpack.c.l.b16 %v8414
        %v8497 = vunpack.c.l.b16 %v8418
        %v8498 = vunpack.c.l.b16 %v8421
        %v8499 = vunpack.c.l.b16 %v8425
        %v8500 = vunpack.c.l.b16 %v8428
        %v8501 = vunpack.c.l.b16 %v8432
        %v8502 = vunpack.c.l.b16 %v8435
        %v8503 = vunpack.c.l.b16 %v8439
        %v8504 = vunpack.c.l.b16 %v8442
        %v8505 = vunpack.c.l.b16 %v8446
        %v8506 = vunpack.c.l.b16 %v8449
        %v8507 = vunpack.c.l.b16 %v8453
        %v8508 = vunpack.c.l.b16 %v8456
        %v8509 = vunpack.c.l.b16 %v8460
        %v8510 = vunpack.c.l.b16 %v8463
        %v8511 = vunpack.c.l.b16 %v8467
        %v8512 = vunpack.c.l.b16 %v8470
        %v8513 = vunpack.c.l.b16 %v8474
        %v8514 = vunpack.c.l.b16 %v8477
        %v8515 = vunpack.c.l.b16 %v8481
        %v8516 = vunpack.c.l.b16 %v8484
        %v8517 = vpack.c.b16 %v8486, %v8485
        %v8518 = vpack.c.b16 %v8488, %v8487
        %v8519 = vpack.c.b16 %v8490, %v8489
        %v8520 = vpack.c.b16 %v8492, %v8491
        %v8521 = vpack.c.b16 %v8494, %v8493
        %v8522 = vpack.c.b16 %v8496, %v8495
        %v8523 = vpack.c.b16 %v8498, %v8497
        %v8524 = vpack.c.b16 %v8500, %v8499
        %v8525 = vpack.c.b16 %v8502, %v8501
        %v8526 = vpack.c.b16 %v8504, %v8503
        %v8527 = vpack.c.b16 %v8506, %v8505
        %v8528 = vpack.c.b16 %v8508, %v8507
        %v8529 = vpack.c.b16 %v8510, %v8509
        %v8530 = vpack.c.b16 %v8512, %v8511
        %v8531 = vpack.c.b16 %v8514, %v8513
        %v8532 = vpack.c.b16 %v8516, %v8515
        %8549 = vst.msk [vmem:[#allocation5 + $0x20] sm:$0xff] %vm1232, %v8517
        %8550 = vst.msk [vmem:[#allocation5 + $0x48] sm:$0xff] %vm1232, %v8518
        %8551 = vst.msk [vmem:[#allocation5 + $0x70] sm:$0xff] %vm1232, %v8519
        %8552 = vst.msk [vmem:[#allocation5 + $0x98] sm:$0xff] %vm1232, %v8520
        %8553 = vst.msk [vmem:[#allocation5 + $0xc0] sm:$0xff] %vm1232, %v8521
        %8554 = vst.msk [vmem:[#allocation5 + $0xe8] sm:$0xff] %vm1232, %v8522
        %8555 = vst.msk [vmem:[#allocation5 + $0x110] sm:$0xff] %vm1232, %v8523
        %8556 = vst.msk [vmem:[#allocation5 + $0x138] sm:$0xff] %vm1232, %v8524
        %8557 = vst.msk [vmem:[#allocation5 + $0x160] sm:$0xff] %vm1232, %v8525
        %8558 = vst.msk [vmem:[#allocation5 + $0x188] sm:$0xff] %vm1232, %v8526
        %8559 = vst.msk [vmem:[#allocation5 + $0x1b0] sm:$0xff] %vm1232, %v8527
        %8560 = vst.msk [vmem:[#allocation5 + $0x1d8] sm:$0xff] %vm1232, %v8528
        %8561 = vst.msk [vmem:[#allocation5 + $0x200] sm:$0xff] %vm1232, %v8529
        %8562 = vst.msk [vmem:[#allocation5 + $0x228] sm:$0xff] %vm1232, %v8530
        %8563 = vst.msk [vmem:[#allocation5 + $0x250] sm:$0xff] %vm1232, %v8531
        %8564 = vst.msk [vmem:[#allocation5 + $0x278] sm:$0xff] %vm1232, %v8532
        %v8565 = vld [vmem:[#allocation5] sm:$0xff]
        %v8566 = vld [vmem:[#allocation5 + $0x8] sm:$0xff]
        %v8567 = vld [vmem:[#allocation5 + $0x10] sm:$0xff]
        %v8568 = vld [vmem:[#allocation5 + $0x18] sm:$0xff]
        %v8569 = vld [vmem:[#allocation5 + $0x20] sm:$0xff]
        %v8570 = vld [vmem:[#allocation5 + $0x28] sm:$0xff]
        %v8571 = vld [vmem:[#allocation5 + $0x30] sm:$0xff]
        %v8572 = vld [vmem:[#allocation5 + $0x38] sm:$0xff]
        %v8573 = vld [vmem:[#allocation5 + $0x40] sm:$0xff]
        %v8574 = vld [vmem:[#allocation5 + $0x48] sm:$0xff]
        %v8575 = vld [vmem:[#allocation5 + $0x50] sm:$0xff]
        %v8576 = vld [vmem:[#allocation5 + $0x58] sm:$0xff]
        %v8577 = vld [vmem:[#allocation5 + $0x60] sm:$0xff]
        %v8578 = vld [vmem:[#allocation5 + $0x68] sm:$0xff]
        %v8579 = vld [vmem:[#allocation5 + $0x70] sm:$0xff]
        %v8580 = vld [vmem:[#allocation5 + $0x78] sm:$0xff]
        %v8581 = vld [vmem:[#allocation5 + $0x80] sm:$0xff]
        %v8582 = vld [vmem:[#allocation5 + $0x88] sm:$0xff]
        %v8583 = vld [vmem:[#allocation5 + $0x90] sm:$0xff]
        %v8584 = vld [vmem:[#allocation5 + $0x98] sm:$0xff]
        %v8585 = vld [vmem:[#allocation5 + $0xa0] sm:$0xff]
        %v8586 = vld [vmem:[#allocation5 + $0xa8] sm:$0xff]
        %v8587 = vld [vmem:[#allocation5 + $0xb0] sm:$0xff]
        %v8588 = vld [vmem:[#allocation5 + $0xb8] sm:$0xff]
        %v8589 = vld [vmem:[#allocation5 + $0xc0] sm:$0xff]
        %v8590 = vld [vmem:[#allocation5 + $0xc8] sm:$0xff]
        %v8591 = vld [vmem:[#allocation5 + $0xd0] sm:$0xff]
        %v8592 = vld [vmem:[#allocation5 + $0xd8] sm:$0xff]
        %v8593 = vld [vmem:[#allocation5 + $0xe0] sm:$0xff]
        %v8594 = vld [vmem:[#allocation5 + $0xe8] sm:$0xff]
        %v8595 = vld [vmem:[#allocation5 + $0xf0] sm:$0xff]
        %v8596 = vld [vmem:[#allocation5 + $0xf8] sm:$0xff]
        %v8597 = vld [vmem:[#allocation5 + $0x100] sm:$0xff]
        %v8598 = vld [vmem:[#allocation5 + $0x108] sm:$0xff]
        %v8599 = vld [vmem:[#allocation5 + $0x110] sm:$0xff]
        %v8600 = vld [vmem:[#allocation5 + $0x118] sm:$0xff]
        %v8601 = vld [vmem:[#allocation5 + $0x120] sm:$0xff]
        %v8602 = vld [vmem:[#allocation5 + $0x128] sm:$0xff]
        %v8603 = vld [vmem:[#allocation5 + $0x130] sm:$0xff]
        %v8604 = vld [vmem:[#allocation5 + $0x138] sm:$0xff]
        %v8605 = vld [vmem:[#allocation5 + $0x140] sm:$0xff]
        %v8606 = vld [vmem:[#allocation5 + $0x148] sm:$0xff]
        %v8607 = vld [vmem:[#allocation5 + $0x150] sm:$0xff]
        %v8608 = vld [vmem:[#allocation5 + $0x158] sm:$0xff]
        %v8609 = vld [vmem:[#allocation5 + $0x160] sm:$0xff]
        %v8610 = vld [vmem:[#allocation5 + $0x168] sm:$0xff]
        %v8611 = vld [vmem:[#allocation5 + $0x170] sm:$0xff]
        %v8612 = vld [vmem:[#allocation5 + $0x178] sm:$0xff]
        %v8613 = vld [vmem:[#allocation5 + $0x180] sm:$0xff]
        %v8614 = vld [vmem:[#allocation5 + $0x188] sm:$0xff]
        %v8615 = vld [vmem:[#allocation5 + $0x190] sm:$0xff]
        %v8616 = vld [vmem:[#allocation5 + $0x198] sm:$0xff]
        %v8617 = vld [vmem:[#allocation5 + $0x1a0] sm:$0xff]
        %v8618 = vld [vmem:[#allocation5 + $0x1a8] sm:$0xff]
        %v8619 = vld [vmem:[#allocation5 + $0x1b0] sm:$0xff]
        %v8620 = vld [vmem:[#allocation5 + $0x1b8] sm:$0xff]
        %v8621 = vld [vmem:[#allocation5 + $0x1c0] sm:$0xff]
        %v8622 = vld [vmem:[#allocation5 + $0x1c8] sm:$0xff]
        %v8623 = vld [vmem:[#allocation5 + $0x1d0] sm:$0xff]
        %v8624 = vld [vmem:[#allocation5 + $0x1d8] sm:$0xff]
        %v8625 = vld [vmem:[#allocation5 + $0x1e0] sm:$0xff]
        %v8626 = vld [vmem:[#allocation5 + $0x1e8] sm:$0xff]
        %v8627 = vld [vmem:[#allocation5 + $0x1f0] sm:$0xff]
        %v8628 = vld [vmem:[#allocation5 + $0x1f8] sm:$0xff]
        %v8629 = vld [vmem:[#allocation5 + $0x200] sm:$0xff]
        %v8630 = vld [vmem:[#allocation5 + $0x208] sm:$0xff]
        %v8631 = vld [vmem:[#allocation5 + $0x210] sm:$0xff]
        %v8632 = vld [vmem:[#allocation5 + $0x218] sm:$0xff]
        %v8633 = vld [vmem:[#allocation5 + $0x220] sm:$0xff]
        %v8634 = vld [vmem:[#allocation5 + $0x228] sm:$0xff]
        %v8635 = vld [vmem:[#allocation5 + $0x230] sm:$0xff]
        %v8636 = vld [vmem:[#allocation5 + $0x238] sm:$0xff]
        %v8637 = vld [vmem:[#allocation5 + $0x240] sm:$0xff]
        %v8638 = vld [vmem:[#allocation5 + $0x248] sm:$0xff]
        %v8639 = vld [vmem:[#allocation5 + $0x250] sm:$0xff]
        %v8640 = vld [vmem:[#allocation5 + $0x258] sm:$0xff]
        %v8641 = vld [vmem:[#allocation5 + $0x260] sm:$0xff]
        %v8642 = vld [vmem:[#allocation5 + $0x268] sm:$0xff]
        %v8643 = vld [vmem:[#allocation5 + $0x270] sm:$0xff]
        %v8644 = vld [vmem:[#allocation5 + $0x278] sm:$0xff]
        %v8645 = vld [vmem:[%s5] sm:$0xf]
        %v8646 = vld [vmem:[%s5 + $0x4] sm:$0xf]
        %v8647 = vld [vmem:[%s5 + $0x8] sm:$0xf]
        %v8648 = vld [vmem:[%s5 + $0xc] sm:$0xf]
        %v8649 = vld [vmem:[%s5 + $0x10] sm:$0xf]
        %v8650 = vld [vmem:[%s5 + $0x14] sm:$0xf]
        %v8651 = vld [vmem:[%s5 + $0x18] sm:$0xf]
        %v8652 = vld [vmem:[%s5 + $0x1c] sm:$0xf]
        %v8653 = vld [vmem:[%s5 + $0x20] sm:$0xf]
        %v8654 = vld [vmem:[%s5 + $0x24] sm:$0xf]
        %v8655 = vld [vmem:[%s5 + $0x28] sm:$0xf]
        %v8656 = vld [vmem:[%s5 + $0x2c] sm:$0xf]
        %v8657 = vld [vmem:[%s5 + $0x30] sm:$0xf]
        %v8658 = vld [vmem:[%s5 + $0x34] sm:$0xf]
        %v8659 = vld [vmem:[%s5 + $0x38] sm:$0xf]
        %v8660 = vld [vmem:[%s5 + $0x3c] sm:$0xf]
        %v8661 = vld [vmem:[%s5 + $0x40] sm:$0xf]
        %v8662 = vld [vmem:[%s5 + $0x44] sm:$0xf]
        %v8663 = vld [vmem:[%s5 + $0x48] sm:$0xf]
        %v8664 = vld [vmem:[%s5 + $0x4c] sm:$0xf]
        %v8665 = vld [vmem:[%s5 + $0x50] sm:$0xf]
        %v8666 = vld [vmem:[%s5 + $0x54] sm:$0xf]
        %v8667 = vld [vmem:[%s5 + $0x58] sm:$0xf]
        %v8668 = vld [vmem:[%s5 + $0x5c] sm:$0xf]
        %v8669 = vld [vmem:[%s5 + $0x60] sm:$0xf]
        %v8670 = vld [vmem:[%s5 + $0x64] sm:$0xf]
        %v8671 = vld [vmem:[%s5 + $0x68] sm:$0xf]
        %v8672 = vld [vmem:[%s5 + $0x6c] sm:$0xf]
        %v8673 = vld [vmem:[%s5 + $0x70] sm:$0xf]
        %v8674 = vld [vmem:[%s5 + $0x74] sm:$0xf]
        %v8675 = vld [vmem:[%s5 + $0x78] sm:$0xf]
        %v8676 = vld [vmem:[%s5 + $0x7c] sm:$0xf]
        %v8677 = vld [vmem:[%s5 + $0x80] sm:$0xf]
        %v8678 = vld [vmem:[%s5 + $0x84] sm:$0xf]
        %v8679 = vld [vmem:[%s5 + $0x88] sm:$0xf]
        %v8680 = vld [vmem:[%s5 + $0x8c] sm:$0xf]
        %v8681 = vld [vmem:[%s5 + $0x90] sm:$0xf]
        %v8682 = vld [vmem:[%s5 + $0x94] sm:$0xf]
        %v8683 = vld [vmem:[%s5 + $0x98] sm:$0xf]
        %v8684 = vld [vmem:[%s5 + $0x9c] sm:$0xf]
        %v8685 = vld [vmem:[%s5 + $0xa0] sm:$0xf]
        %v8686 = vld [vmem:[%s5 + $0xa4] sm:$0xf]
        %v8687 = vld [vmem:[%s5 + $0xa8] sm:$0xf]
        %v8688 = vld [vmem:[%s5 + $0xac] sm:$0xf]
        %v8689 = vld [vmem:[%s5 + $0xb0] sm:$0xf]
        %v8690 = vld [vmem:[%s5 + $0xb4] sm:$0xf]
        %v8691 = vld [vmem:[%s5 + $0xb8] sm:$0xf]
        %v8692 = vld [vmem:[%s5 + $0xbc] sm:$0xf]
        %v8693 = vld [vmem:[%s5 + $0xc0] sm:$0xf]
        %v8694 = vld [vmem:[%s5 + $0xc4] sm:$0xf]
        %v8695 = vld [vmem:[%s5 + $0xc8] sm:$0xf]
        %v8696 = vld [vmem:[%s5 + $0xcc] sm:$0xf]
        %v8697 = vld [vmem:[%s5 + $0xd0] sm:$0xf]
        %v8698 = vld [vmem:[%s5 + $0xd4] sm:$0xf]
        %v8699 = vld [vmem:[%s5 + $0xd8] sm:$0xf]
        %v8700 = vld [vmem:[%s5 + $0xdc] sm:$0xf]
        %v8701 = vld [vmem:[%s5 + $0xe0] sm:$0xf]
        %v8702 = vld [vmem:[%s5 + $0xe4] sm:$0xf]
        %v8703 = vld [vmem:[%s5 + $0xe8] sm:$0xf]
        %v8704 = vld [vmem:[%s5 + $0xec] sm:$0xf]
        %v8705 = vld [vmem:[%s5 + $0xf0] sm:$0xf]
        %v8706 = vld [vmem:[%s5 + $0xf4] sm:$0xf]
        %v8707 = vld [vmem:[%s5 + $0xf8] sm:$0xf]
        %v8708 = vld [vmem:[%s5 + $0xfc] sm:$0xf]
        %v8709 = vld [vmem:[%s5 + $0x100] sm:$0xf]
        %v8710 = vld [vmem:[%s5 + $0x104] sm:$0xf]
        %v8711 = vld [vmem:[%s5 + $0x108] sm:$0xf]
        %v8712 = vld [vmem:[%s5 + $0x10c] sm:$0xf]
        %v8713 = vld [vmem:[%s5 + $0x110] sm:$0xf]
        %v8714 = vld [vmem:[%s5 + $0x114] sm:$0xf]
        %v8715 = vld [vmem:[%s5 + $0x118] sm:$0xf]
        %v8716 = vld [vmem:[%s5 + $0x11c] sm:$0xf]
        %v8717 = vld [vmem:[%s249] sm:$0xff]
        %v8718 = vld [vmem:[%s249 + $0x8] sm:$0xff]
        %v8719 = vld [vmem:[%s249 + $0x10] sm:$0xff]
        %v8720 = vld [vmem:[%s249 + $0x18] sm:$0xff]
        %v8721 = vld [vmem:[%s249 + $0x20] sm:$0xff]
        %v8722 = vld [vmem:[%s249 + $0x28] sm:$0xff]
        %v8723 = vld [vmem:[%s249 + $0x30] sm:$0xff]
        %v8724 = vld [vmem:[%s249 + $0x38] sm:$0xff]
        %v8725 = vld [vmem:[%s249 + $0x40] sm:$0xff]
        %v8726 = vld [vmem:[%s249 + $0x48] sm:$0xff]
        %v8727 = vld [vmem:[%s249 + $0x50] sm:$0xff]
        %v8728 = vld [vmem:[%s249 + $0x58] sm:$0xff]
        %v8729 = vld [vmem:[%s249 + $0x60] sm:$0xff]
        %v8730 = vld [vmem:[%s249 + $0x68] sm:$0xff]
        %v8731 = vld [vmem:[%s249 + $0x70] sm:$0xff]
        %v8732 = vld [vmem:[%s249 + $0x78] sm:$0xff]
        %v8733 = vld [vmem:[%s249 + $0x80] sm:$0xff]
        %v8734 = vld [vmem:[%s249 + $0x88] sm:$0xff]
        %v8735 = vld [vmem:[%s249 + $0x90] sm:$0xff]
        %v8736 = vld [vmem:[%s249 + $0x98] sm:$0xff]
        %v8737 = vld [vmem:[%s249 + $0xa0] sm:$0xff]
        %v8738 = vld [vmem:[%s249 + $0xa8] sm:$0xff]
        %v8739 = vld [vmem:[%s249 + $0xb0] sm:$0xff]
        %v8740 = vld [vmem:[%s249 + $0xb8] sm:$0xff]
        %v8741 = vld [vmem:[%s249 + $0xc0] sm:$0xff]
        %v8742 = vld [vmem:[%s249 + $0xc8] sm:$0xff]
        %v8743 = vld [vmem:[%s249 + $0xd0] sm:$0xff]
        %v8744 = vld [vmem:[%s249 + $0xd8] sm:$0xff]
        %v8745 = vld [vmem:[%s249 + $0xe0] sm:$0xff]
        %v8746 = vld [vmem:[%s249 + $0xe8] sm:$0xff]
        %v8747 = vld [vmem:[%s249 + $0xf0] sm:$0xff]
        %v8748 = vld [vmem:[%s249 + $0xf8] sm:$0xff]
        %v8821 = vunpack.c.l.b16 %v8645
        %v8822 = vunpack.c.l.b16 %v8646
        %v8823 = vunpack.c.l.b16 %v8647
        %v8824 = vunpack.c.l.b16 %v8648
        %v8825 = vunpack.c.l.b16 %v8649
        %v8826 = vunpack.c.l.b16 %v8650
        %v8827 = vunpack.c.l.b16 %v8651
        %v8828 = vunpack.c.l.b16 %v8652
        %v8829 = vunpack.c.l.b16 %v8653
        %v8830 = vunpack.c.l.b16 %v8654
        %v8831 = vunpack.c.l.b16 %v8655
        %v8832 = vunpack.c.l.b16 %v8656
        %v8833 = vunpack.c.l.b16 %v8657
        %v8834 = vunpack.c.l.b16 %v8658
        %v8835 = vunpack.c.l.b16 %v8659
        %v8836 = vunpack.c.l.b16 %v8660
        %v8837 = vunpack.c.l.b16 %v8661
        %v8838 = vunpack.c.l.b16 %v8662
        %v8839 = vunpack.c.l.b16 %v8663
        %v8840 = vunpack.c.l.b16 %v8664
        %v8841 = vunpack.c.l.b16 %v8665
        %v8842 = vunpack.c.l.b16 %v8666
        %v8843 = vunpack.c.l.b16 %v8667
        %v8844 = vunpack.c.l.b16 %v8668
        %v8845 = vunpack.c.l.b16 %v8669
        %v8846 = vunpack.c.l.b16 %v8670
        %v8847 = vunpack.c.l.b16 %v8671
        %v8848 = vunpack.c.l.b16 %v8672
        %v8849 = vunpack.c.l.b16 %v8673
        %v8850 = vunpack.c.l.b16 %v8674
        %v8851 = vunpack.c.l.b16 %v8675
        %v8852 = vunpack.c.l.b16 %v8676
        %v8853 = vunpack.c.l.b16 %v8677
        %v8854 = vunpack.c.l.b16 %v8678
        %v8855 = vunpack.c.l.b16 %v8679
        %v8856 = vunpack.c.l.b16 %v8680
        %v8857 = vunpack.c.l.b16 %v8681
        %v8858 = vunpack.c.l.b16 %v8682
        %v8859 = vunpack.c.l.b16 %v8683
        %v8860 = vunpack.c.l.b16 %v8684
        %v8861 = vunpack.c.l.b16 %v8685
        %v8862 = vunpack.c.l.b16 %v8686
        %v8863 = vunpack.c.l.b16 %v8687
        %v8864 = vunpack.c.l.b16 %v8688
        %v8865 = vunpack.c.l.b16 %v8689
        %v8866 = vunpack.c.l.b16 %v8690
        %v8867 = vunpack.c.l.b16 %v8691
        %v8868 = vunpack.c.l.b16 %v8692
        %v8869 = vunpack.c.l.b16 %v8693
        %v8870 = vunpack.c.l.b16 %v8694
        %v8871 = vunpack.c.l.b16 %v8695
        %v8872 = vunpack.c.l.b16 %v8696
        %v8873 = vunpack.c.l.b16 %v8697
        %v8874 = vunpack.c.l.b16 %v8698
        %v8875 = vunpack.c.l.b16 %v8699
        %v8876 = vunpack.c.l.b16 %v8700
        %v8877 = vunpack.c.l.b16 %v8701
        %v8878 = vunpack.c.l.b16 %v8702
        %v8879 = vunpack.c.l.b16 %v8703
        %v8880 = vunpack.c.l.b16 %v8704
        %v8881 = vunpack.c.l.b16 %v8705
        %v8882 = vunpack.c.l.b16 %v8706
        %v8883 = vunpack.c.l.b16 %v8707
        %v8884 = vunpack.c.l.b16 %v8708
        %v8885 = vunpack.c.l.b16 %v8709
        %v8886 = vunpack.c.l.b16 %v8710
        %v8887 = vunpack.c.l.b16 %v8711
        %v8888 = vunpack.c.l.b16 %v8712
        %v8889 = vunpack.c.l.b16 %v8713
        %v8890 = vunpack.c.l.b16 %v8714
        %v8891 = vunpack.c.l.b16 %v8715
        %v8892 = vunpack.c.l.b16 %v8716
        %v8893 = vpack.c.b16 %v8822, %v8821
        %v8894 = vpack.c.b16 %v8824, %v8823
        %v8895 = vpack.c.b16 %v8826, %v8825
        %v8896 = vpack.c.b16 %v8828, %v8827
        %v8897 = vpack.c.b16 %v8830, %v8829
        %v8898 = vpack.c.b16 %v8832, %v8831
        %v8899 = vpack.c.b16 %v8834, %v8833
        %v8900 = vpack.c.b16 %v8836, %v8835
        %v8901 = vpack.c.b16 %v8838, %v8837
        %v8902 = vpack.c.b16 %v8840, %v8839
        %v8903 = vpack.c.b16 %v8842, %v8841
        %v8904 = vpack.c.b16 %v8844, %v8843
        %v8905 = vpack.c.b16 %v8846, %v8845
        %v8906 = vpack.c.b16 %v8848, %v8847
        %v8907 = vpack.c.b16 %v8850, %v8849
        %v8908 = vpack.c.b16 %v8852, %v8851
        %v8909 = vpack.c.b16 %v8854, %v8853
        %v8910 = vpack.c.b16 %v8856, %v8855
        %v8911 = vpack.c.b16 %v8858, %v8857
        %v8912 = vpack.c.b16 %v8860, %v8859
        %v8913 = vpack.c.b16 %v8862, %v8861
        %v8914 = vpack.c.b16 %v8864, %v8863
        %v8915 = vpack.c.b16 %v8866, %v8865
        %v8916 = vpack.c.b16 %v8868, %v8867
        %v8917 = vpack.c.b16 %v8870, %v8869
        %v8918 = vpack.c.b16 %v8872, %v8871
        %v8919 = vpack.c.b16 %v8874, %v8873
        %v8920 = vpack.c.b16 %v8876, %v8875
        %v8921 = vpack.c.b16 %v8878, %v8877
        %v8922 = vpack.c.b16 %v8880, %v8879
        %v8923 = vpack.c.b16 %v8882, %v8881
        %v8924 = vpack.c.b16 %v8884, %v8883
        %v8925 = vpack.c.b16 %v8886, %v8885
        %v8926 = vpack.c.b16 %v8888, %v8887
        %v8927 = vpack.c.b16 %v8890, %v8889
        %v8928 = vpack.c.b16 %v8892, %v8891
        %v8966 = vsel %vm1232, %v8569, 0
        %v8969 = vsel %vm1232, %v8574, 0
        %v8972 = vsel %vm1232, %v8579, 0
        %v8975 = vsel %vm1232, %v8584, 0
        %v8978 = vsel %vm1232, %v8589, 0
        %v8981 = vsel %vm1232, %v8594, 0
        %v8984 = vsel %vm1232, %v8599, 0
        %v8987 = vsel %vm1232, %v8604, 0
        %v8990 = vsel %vm1232, %v8609, 0
        %v8993 = vsel %vm1232, %v8614, 0
        %v8996 = vsel %vm1232, %v8619, 0
        %v8999 = vsel %vm1232, %v8624, 0
        %v9002 = vsel %vm1232, %v8629, 0
        %v9005 = vsel %vm1232, %v8634, 0
        %v9008 = vsel %vm1232, %v8639, 0
        %v9011 = vsel %vm1232, %v8644, 0
        %9013 = vmatprep.subr.bf16.mxu0 0
        %9014 = vmatpush1.bf16.msra.mxu0 %v8893
        %9015 = vmatprep.subr.bf16.mxu0 0
        %9016 = vmatpush1.bf16.msra.mxu0 %v8894
        %9017 = vmatprep.subr.bf16.mxu0 0
        %9018 = vmatpush1.bf16.msra.mxu0 %v8895
        %9019 = vmatprep.subr.bf16.mxu0 0
        %9020 = vmatpush1.bf16.msra.mxu0 %v8896
        %9021 = vmatprep.subr.bf16.mxu0 0
        %9022 = vmatpush1.bf16.msra.mxu0 %v8897
        %9023 = vmatprep.subr.bf16.mxu0 0
        %9024 = vmatpush1.bf16.msra.mxu0 %v8898
        %9025 = vmatprep.subr.bf16.mxu0 0
        %9026 = vmatpush1.bf16.msra.mxu0 %v8899
        %9027 = vmatprep.subr.bf16.mxu0 0
        %9028 = vmatpush1.bf16.msra.mxu0 %v8900
        %9029 = vmatprep.subr.bf16.mxu0 0
        %9030 = vmatpush1.bf16.msra.mxu0 %v8901
        %9031 = vmatprep.subr.bf16.mxu0 0
        %9032 = vmatpush1.bf16.msra.mxu0 %v8902
        %9033 = vmatprep.subr.bf16.mxu0 0
        %9034 = vmatpush1.bf16.msra.mxu0 %v8903
        %9035 = vmatprep.subr.bf16.mxu0 0
        %9036 = vmatpush1.bf16.msra.mxu0 %v8904
        %9037 = vmatprep.subr.bf16.mxu0 0
        %9038 = vmatpush1.bf16.msra.mxu0 %v8905
        %9039 = vmatprep.subr.bf16.mxu0 0
        %9040 = vmatpush1.bf16.msra.mxu0 %v8906
        %9041 = vmatprep.subr.bf16.mxu0 0
        %9042 = vmatpush1.bf16.msra.mxu0 %v8907
        %9043 = vmatprep.subr.bf16.mxu0 0
        %9044 = vmatpush1.bf16.msra.mxu0 %v8908
        %9045 = vmatprep.mubr.bf16.mxu0 %v8566
        %9046 = vmatmul.mubr.bf16.gmra.mrb[0].mxu0 %v8565
        %v9047 = vpop.f32.mrb[0].mxu0
        %v9048 = vadd.f32 %v8717, %v9047
        %v9049 = vpop.f32.mrb[0].mxu0
        %v9050 = vpop.f32.mrb[0].mxu0
        %v9051 = vadd.f32 %v8718, %v9050
        %v9052 = vpop.f32.mrb[0].mxu0
        %9053 = vmatprep.mubr.bf16.mxu0 %v8571
        %9054 = vmatmul.mubr.bf16.gmra.mrb[0].mxu0 %v8570
        %v9055 = vpop.f32.mrb[0].mxu0
        %v9056 = vadd.f32 %v8719, %v9055
        %v9057 = vpop.f32.mrb[0].mxu0
        %v9058 = vpop.f32.mrb[0].mxu0
        %v9059 = vadd.f32 %v8720, %v9058
        %v9060 = vpop.f32.mrb[0].mxu0
        %9061 = vmatprep.mubr.bf16.mxu0 %v8576
        %9062 = vmatmul.mubr.bf16.gmra.mrb[0].mxu0 %v8575
        %v9063 = vpop.f32.mrb[0].mxu0
        %v9064 = vadd.f32 %v8721, %v9063
        %v9065 = vpop.f32.mrb[0].mxu0
        %v9066 = vpop.f32.mrb[0].mxu0
        %v9067 = vadd.f32 %v8722, %v9066
        %v9068 = vpop.f32.mrb[0].mxu0
        %9069 = vmatprep.mubr.bf16.mxu0 %v8581
        %9070 = vmatmul.mubr.bf16.gmra.mrb[0].mxu0 %v8580
        %v9071 = vpop.f32.mrb[0].mxu0
        %v9072 = vadd.f32 %v8723, %v9071
        %v9073 = vpop.f32.mrb[0].mxu0
        %v9074 = vpop.f32.mrb[0].mxu0
        %v9075 = vadd.f32 %v8724, %v9074
        %v9076 = vpop.f32.mrb[0].mxu0
        %9077 = vmatprep.mubr.bf16.mxu0 %v8586
        %9078 = vmatmul.mubr.bf16.gmra.mrb[0].mxu0 %v8585
        %v9079 = vpop.f32.mrb[0].mxu0
        %v9080 = vadd.f32 %v8725, %v9079
        %v9081 = vpop.f32.mrb[0].mxu0
        %v9082 = vpop.f32.mrb[0].mxu0
        %v9083 = vadd.f32 %v8726, %v9082
        %v9084 = vpop.f32.mrb[0].mxu0
        %9085 = vmatprep.mubr.bf16.mxu0 %v8591
        %9086 = vmatmul.mubr.bf16.gmra.mrb[0].mxu0 %v8590
        %v9087 = vpop.f32.mrb[0].mxu0
        %v9088 = vadd.f32 %v8727, %v9087
        %v9089 = vpop.f32.mrb[0].mxu0
        %v9090 = vpop.f32.mrb[0].mxu0
        %v9091 = vadd.f32 %v8728, %v9090
        %v9092 = vpop.f32.mrb[0].mxu0
        %9093 = vmatprep.mubr.bf16.mxu0 %v8596
        %9094 = vmatmul.mubr.bf16.gmra.mrb[0].mxu0 %v8595
        %v9095 = vpop.f32.mrb[0].mxu0
        %v9096 = vadd.f32 %v8729, %v9095
        %v9097 = vpop.f32.mrb[0].mxu0
        %v9098 = vpop.f32.mrb[0].mxu0
        %v9099 = vadd.f32 %v8730, %v9098
        %v9100 = vpop.f32.mrb[0].mxu0
        %9101 = vmatprep.mubr.bf16.mxu0 %v8601
        %9102 = vmatmul.mubr.bf16.gmra.mrb[0].mxu0 %v8600
        %v9103 = vpop.f32.mrb[0].mxu0
        %v9104 = vadd.f32 %v8731, %v9103
        %v9105 = vpop.f32.mrb[0].mxu0
        %v9106 = vpop.f32.mrb[0].mxu0
        %v9107 = vadd.f32 %v8732, %v9106
        %v9108 = vpop.f32.mrb[0].mxu0
        %9109 = vmatprep.mubr.bf16.mxu0 %v8606
        %9110 = vmatmul.mubr.bf16.gmra.mrb[0].mxu0 %v8605
        %v9111 = vpop.f32.mrb[0].mxu0
        %v9112 = vadd.f32 %v8733, %v9111
        %v9113 = vpop.f32.mrb[0].mxu0
        %v9114 = vpop.f32.mrb[0].mxu0
        %v9115 = vadd.f32 %v8734, %v9114
        %v9116 = vpop.f32.mrb[0].mxu0
        %9117 = vmatprep.mubr.bf16.mxu0 %v8611
        %9118 = vmatmul.mubr.bf16.gmra.mrb[0].mxu0 %v8610
        %v9119 = vpop.f32.mrb[0].mxu0
        %v9120 = vadd.f32 %v8735, %v9119
        %v9121 = vpop.f32.mrb[0].mxu0
        %v9122 = vpop.f32.mrb[0].mxu0
        %v9123 = vadd.f32 %v8736, %v9122
        %v9124 = vpop.f32.mrb[0].mxu0
        %9125 = vmatprep.mubr.bf16.mxu0 %v8616
        %9126 = vmatmul.mubr.bf16.gmra.mrb[0].mxu0 %v8615
        %v9127 = vpop.f32.mrb[0].mxu0
        %v9128 = vadd.f32 %v8737, %v9127
        %v9129 = vpop.f32.mrb[0].mxu0
        %v9130 = vpop.f32.mrb[0].mxu0
        %v9131 = vadd.f32 %v8738, %v9130
        %v9132 = vpop.f32.mrb[0].mxu0
        %9133 = vmatprep.mubr.bf16.mxu0 %v8621
        %9134 = vmatmul.mubr.bf16.gmra.mrb[0].mxu0 %v8620
        %v9135 = vpop.f32.mrb[0].mxu0
        %v9136 = vadd.f32 %v8739, %v9135
        %v9137 = vpop.f32.mrb[0].mxu0
        %v9138 = vpop.f32.mrb[0].mxu0
        %v9139 = vadd.f32 %v8740, %v9138
        %v9140 = vpop.f32.mrb[0].mxu0
        %9141 = vmatprep.mubr.bf16.mxu0 %v8626
        %9142 = vmatmul.mubr.bf16.gmra.mrb[0].mxu0 %v8625
        %v9143 = vpop.f32.mrb[0].mxu0
        %v9144 = vadd.f32 %v8741, %v9143
        %v9145 = vpop.f32.mrb[0].mxu0
        %v9146 = vpop.f32.mrb[0].mxu0
        %v9147 = vadd.f32 %v8742, %v9146
        %v9148 = vpop.f32.mrb[0].mxu0
        %9149 = vmatprep.mubr.bf16.mxu0 %v8631
        %9150 = vmatmul.mubr.bf16.gmra.mrb[0].mxu0 %v8630
        %v9151 = vpop.f32.mrb[0].mxu0
        %v9152 = vadd.f32 %v8743, %v9151
        %v9153 = vpop.f32.mrb[0].mxu0
        %v9154 = vpop.f32.mrb[0].mxu0
        %v9155 = vadd.f32 %v8744, %v9154
        %v9156 = vpop.f32.mrb[0].mxu0
        %9157 = vmatprep.mubr.bf16.mxu0 %v8636
        %9158 = vmatmul.mubr.bf16.gmra.mrb[0].mxu0 %v8635
        %v9159 = vpop.f32.mrb[0].mxu0
        %v9160 = vadd.f32 %v8745, %v9159
        %v9161 = vpop.f32.mrb[0].mxu0
        %v9162 = vpop.f32.mrb[0].mxu0
        %v9163 = vadd.f32 %v8746, %v9162
        %v9164 = vpop.f32.mrb[0].mxu0
        %9165 = vmatprep.mubr.bf16.mxu0 %v8641
        %9166 = vmatmul.mubr.bf16.gmra.mrb[0].mxu0 %v8640
        %v9167 = vpop.f32.mrb[0].mxu0
        %v9168 = vadd.f32 %v8747, %v9167
        %v9169 = vpop.f32.mrb[0].mxu0
        %v9170 = vpop.f32.mrb[0].mxu0
        %v9171 = vadd.f32 %v8748, %v9170
        %v9172 = vpop.f32.mrb[0].mxu0
        %9173 = vdwg.mxu0
        %9174 = vmatprep.subr.bf16.mxu0 0
        %9175 = vmatpush1.bf16.msra.mxu0 %v8909
        %9176 = vmatprep.subr.bf16.mxu0 0
        %9177 = vmatpush1.bf16.msra.mxu0 %v8910
        %9178 = vmatprep.subr.bf16.mxu0 0
        %9179 = vmatpush1.bf16.msra.mxu0 %v8911
        %9180 = vmatprep.subr.bf16.mxu0 0
        %9181 = vmatpush1.bf16.msra.mxu0 %v8912
        %9182 = vmatprep.subr.bf16.mxu0 0
        %9183 = vmatpush1.bf16.msra.mxu0 %v8913
        %9184 = vmatprep.subr.bf16.mxu0 0
        %9185 = vmatpush1.bf16.msra.mxu0 %v8914
        %9186 = vmatprep.subr.bf16.mxu0 0
        %9187 = vmatpush1.bf16.msra.mxu0 %v8915
        %9188 = vmatprep.subr.bf16.mxu0 0
        %9189 = vmatpush1.bf16.msra.mxu0 %v8916
        %9190 = vmatprep.subr.bf16.mxu0 0
        %9191 = vmatpush1.bf16.msra.mxu0 %v8917
        %9192 = vmatprep.subr.bf16.mxu0 0
        %9193 = vmatpush1.bf16.msra.mxu0 %v8918
        %9194 = vmatprep.subr.bf16.mxu0 0
        %9195 = vmatpush1.bf16.msra.mxu0 %v8919
        %9196 = vmatprep.subr.bf16.mxu0 0
        %9197 = vmatpush1.bf16.msra.mxu0 %v8920
        %9198 = vmatprep.subr.bf16.mxu0 0
        %9199 = vmatpush1.bf16.msra.mxu0 %v8921
        %9200 = vmatprep.subr.bf16.mxu0 0
        %9201 = vmatpush1.bf16.msra.mxu0 %v8922
        %9202 = vmatprep.subr.bf16.mxu0 0
        %9203 = vmatpush1.bf16.msra.mxu0 %v8923
        %9204 = vmatprep.subr.bf16.mxu0 0
        %9205 = vmatpush1.bf16.msra.mxu0 %v8924
        %9206 = vmatprep.mubr.bf16.mxu0 %v8568
        %9207 = vmatmul.mubr.bf16.gmra.mrb[0].mxu0 %v8567
        %v9208 = vpop.f32.mrb[0].mxu0
        %v9209 = vadd.f32 %v9048, %v9208
        %v9210 = vpop.f32.mrb[0].mxu0
        %v9211 = vpop.f32.mrb[0].mxu0
        %v9212 = vadd.f32 %v9051, %v9211
        %v9213 = vpop.f32.mrb[0].mxu0
        %9214 = vmatprep.mubr.bf16.mxu0 %v8573
        %9215 = vmatmul.mubr.bf16.gmra.mrb[0].mxu0 %v8572
        %v9216 = vpop.f32.mrb[0].mxu0
        %v9217 = vadd.f32 %v9056, %v9216
        %v9218 = vpop.f32.mrb[0].mxu0
        %v9219 = vpop.f32.mrb[0].mxu0
        %v9220 = vadd.f32 %v9059, %v9219
        %v9221 = vpop.f32.mrb[0].mxu0
        %9222 = vmatprep.mubr.bf16.mxu0 %v8578
        %9223 = vmatmul.mubr.bf16.gmra.mrb[0].mxu0 %v8577
        %v9224 = vpop.f32.mrb[0].mxu0
        %v9225 = vadd.f32 %v9064, %v9224
        %v9226 = vpop.f32.mrb[0].mxu0
        %v9227 = vpop.f32.mrb[0].mxu0
        %v9228 = vadd.f32 %v9067, %v9227
        %v9229 = vpop.f32.mrb[0].mxu0
        %9230 = vmatprep.mubr.bf16.mxu0 %v8583
        %9231 = vmatmul.mubr.bf16.gmra.mrb[0].mxu0 %v8582
        %v9232 = vpop.f32.mrb[0].mxu0
        %v9233 = vadd.f32 %v9072, %v9232
        %v9234 = vpop.f32.mrb[0].mxu0
        %v9235 = vpop.f32.mrb[0].mxu0
        %v9236 = vadd.f32 %v9075, %v9235
        %v9237 = vpop.f32.mrb[0].mxu0
        %9238 = vmatprep.mubr.bf16.mxu0 %v8588
        %9239 = vmatmul.mubr.bf16.gmra.mrb[0].mxu0 %v8587
        %v9240 = vpop.f32.mrb[0].mxu0
        %v9241 = vadd.f32 %v9080, %v9240
        %v9242 = vpop.f32.mrb[0].mxu0
        %v9243 = vpop.f32.mrb[0].mxu0
        %v9244 = vadd.f32 %v9083, %v9243
        %v9245 = vpop.f32.mrb[0].mxu0
        %9246 = vmatprep.mubr.bf16.mxu0 %v8593
        %9247 = vmatmul.mubr.bf16.gmra.mrb[0].mxu0 %v8592
        %v9248 = vpop.f32.mrb[0].mxu0
        %v9249 = vadd.f32 %v9088, %v9248
        %v9250 = vpop.f32.mrb[0].mxu0
        %v9251 = vpop.f32.mrb[0].mxu0
        %v9252 = vadd.f32 %v9091, %v9251
        %v9253 = vpop.f32.mrb[0].mxu0
        %9254 = vmatprep.mubr.bf16.mxu0 %v8598
        %9255 = vmatmul.mubr.bf16.gmra.mrb[0].mxu0 %v8597
        %v9256 = vpop.f32.mrb[0].mxu0
        %v9257 = vadd.f32 %v9096, %v9256
        %v9258 = vpop.f32.mrb[0].mxu0
        %v9259 = vpop.f32.mrb[0].mxu0
        %v9260 = vadd.f32 %v9099, %v9259
        %v9261 = vpop.f32.mrb[0].mxu0
        %9262 = vmatprep.mubr.bf16.mxu0 %v8603
        %9263 = vmatmul.mubr.bf16.gmra.mrb[0].mxu0 %v8602
        %v9264 = vpop.f32.mrb[0].mxu0
        %v9265 = vadd.f32 %v9104, %v9264
        %v9266 = vpop.f32.mrb[0].mxu0
        %v9267 = vpop.f32.mrb[0].mxu0
        %v9268 = vadd.f32 %v9107, %v9267
        %v9269 = vpop.f32.mrb[0].mxu0
        %9270 = vmatprep.mubr.bf16.mxu0 %v8608
        %9271 = vmatmul.mubr.bf16.gmra.mrb[0].mxu0 %v8607
        %v9272 = vpop.f32.mrb[0].mxu0
        %v9273 = vadd.f32 %v9112, %v9272
        %v9274 = vpop.f32.mrb[0].mxu0
        %v9275 = vpop.f32.mrb[0].mxu0
        %v9276 = vadd.f32 %v9115, %v9275
        %v9277 = vpop.f32.mrb[0].mxu0
        %9278 = vmatprep.mubr.bf16.mxu0 %v8613
        %9279 = vmatmul.mubr.bf16.gmra.mrb[0].mxu0 %v8612
        %v9280 = vpop.f32.mrb[0].mxu0
        %v9281 = vadd.f32 %v9120, %v9280
        %v9282 = vpop.f32.mrb[0].mxu0
        %v9283 = vpop.f32.mrb[0].mxu0
        %v9284 = vadd.f32 %v9123, %v9283
        %v9285 = vpop.f32.mrb[0].mxu0
        %9286 = vmatprep.mubr.bf16.mxu0 %v8618
        %9287 = vmatmul.mubr.bf16.gmra.mrb[0].mxu0 %v8617
        %v9288 = vpop.f32.mrb[0].mxu0
        %v9289 = vadd.f32 %v9128, %v9288
        %v9290 = vpop.f32.mrb[0].mxu0
        %v9291 = vpop.f32.mrb[0].mxu0
        %v9292 = vadd.f32 %v9131, %v9291
        %v9293 = vpop.f32.mrb[0].mxu0
        %9294 = vmatprep.mubr.bf16.mxu0 %v8623
        %9295 = vmatmul.mubr.bf16.gmra.mrb[0].mxu0 %v8622
        %v9296 = vpop.f32.mrb[0].mxu0
        %v9297 = vadd.f32 %v9136, %v9296
        %v9298 = vpop.f32.mrb[0].mxu0
        %v9299 = vpop.f32.mrb[0].mxu0
        %v9300 = vadd.f32 %v9139, %v9299
        %v9301 = vpop.f32.mrb[0].mxu0
        %9302 = vmatprep.mubr.bf16.mxu0 %v8628
        %9303 = vmatmul.mubr.bf16.gmra.mrb[0].mxu0 %v8627
        %v9304 = vpop.f32.mrb[0].mxu0
        %v9305 = vadd.f32 %v9144, %v9304
        %v9306 = vpop.f32.mrb[0].mxu0
        %v9307 = vpop.f32.mrb[0].mxu0
        %v9308 = vadd.f32 %v9147, %v9307
        %v9309 = vpop.f32.mrb[0].mxu0
        %9310 = vmatprep.mubr.bf16.mxu0 %v8633
        %9311 = vmatmul.mubr.bf16.gmra.mrb[0].mxu0 %v8632
        %v9312 = vpop.f32.mrb[0].mxu0
        %v9313 = vadd.f32 %v9152, %v9312
        %v9314 = vpop.f32.mrb[0].mxu0
        %v9315 = vpop.f32.mrb[0].mxu0
        %v9316 = vadd.f32 %v9155, %v9315
        %v9317 = vpop.f32.mrb[0].mxu0
        %9318 = vmatprep.mubr.bf16.mxu0 %v8638
        %9319 = vmatmul.mubr.bf16.gmra.mrb[0].mxu0 %v8637
        %v9320 = vpop.f32.mrb[0].mxu0
        %v9321 = vadd.f32 %v9160, %v9320
        %v9322 = vpop.f32.mrb[0].mxu0
        %v9323 = vpop.f32.mrb[0].mxu0
        %v9324 = vadd.f32 %v9163, %v9323
        %v9325 = vpop.f32.mrb[0].mxu0
        %9326 = vmatprep.mubr.bf16.mxu0 %v8643
        %9327 = vmatmul.mubr.bf16.gmra.mrb[0].mxu0 %v8642
        %v9328 = vpop.f32.mrb[0].mxu0
        %v9329 = vadd.f32 %v9168, %v9328
        %v9330 = vpop.f32.mrb[0].mxu0
        %v9331 = vpop.f32.mrb[0].mxu0
        %v9332 = vadd.f32 %v9171, %v9331
        %v9333 = vpop.f32.mrb[0].mxu0
        %9334 = vdwg.mxu0
        %9335 = vmatprep.subr.bf16.mxu0 0
        %9336 = vmatpush1.bf16.msra.mxu0 %v8925
        %9337 = vmatprep.subr.bf16.mxu0 0
        %9338 = vmatpush1.bf16.msra.mxu0 %v8926
        %9339 = vmatprep.subr.bf16.mxu0 0
        %9340 = vmatpush1.bf16.msra.mxu0 %v8927
        %9341 = vmatprep.subr.bf16.mxu0 0
        %9342 = vmatpush1.bf16.msra.mxu0 %v8928
        %9343 = vmatprep.subr.bf16.mxu0 0
        %9344 = vmatpush1.bf16.msra.mxu0 0
        %9345 = vmatprep.subr.bf16.mxu0 0
        %9346 = vmatpush1.bf16.msra.mxu0 0
        %9347 = vmatprep.subr.bf16.mxu0 0
        %9348 = vmatpush1.bf16.msra.mxu0 0
        %9349 = vmatprep.subr.bf16.mxu0 0
        %9350 = vmatpush1.bf16.msra.mxu0 0
        %9351 = vmatprep.subr.bf16.mxu0 0
        %9352 = vmatpush1.bf16.msra.mxu0 0
        %9353 = vmatprep.subr.bf16.mxu0 0
        %9354 = vmatpush1.bf16.msra.mxu0 0
        %9355 = vmatprep.subr.bf16.mxu0 0
        %9356 = vmatpush1.bf16.msra.mxu0 0
        %9357 = vmatprep.subr.bf16.mxu0 0
        %9358 = vmatpush1.bf16.msra.mxu0 0
        %9359 = vmatprep.subr.bf16.mxu0 0
        %9360 = vmatpush1.bf16.msra.mxu0 0
        %9361 = vmatprep.subr.bf16.mxu0 0
        %9362 = vmatpush1.bf16.msra.mxu0 0
        %9363 = vmatprep.subr.bf16.mxu0 0
        %9364 = vmatpush1.bf16.msra.mxu0 0
        %9365 = vmatprep.subr.bf16.mxu0 0
        %9366 = vmatpush1.bf16.msra.mxu0 0
        %9367 = vmatprep.mubr.bf16.mxu0 0
        %9368 = vmatmul.mubr.bf16.gmra.mrb[0].mxu0 %v8966
        %v9369 = vpop.f32.mrb[0].mxu0
        %v9370 = vadd.f32 %v9209, %v9369
        %v9371 = vpop.f32.mrb[0].mxu0
        %v9372 = vpop.f32.mrb[0].mxu0
        %v9373 = vadd.f32 %v9212, %v9372
        %v9374 = vpop.f32.mrb[0].mxu0
        %9375 = vmatprep.mubr.bf16.mxu0 0
        %9376 = vmatmul.mubr.bf16.gmra.mrb[0].mxu0 %v8969
        %v9377 = vpop.f32.mrb[0].mxu0
        %v9378 = vadd.f32 %v9217, %v9377
        %v9379 = vpop.f32.mrb[0].mxu0
        %v9380 = vpop.f32.mrb[0].mxu0
        %v9381 = vadd.f32 %v9220, %v9380
        %v9382 = vpop.f32.mrb[0].mxu0
        %9383 = vmatprep.mubr.bf16.mxu0 0
        %9384 = vmatmul.mubr.bf16.gmra.mrb[0].mxu0 %v8972
        %v9385 = vpop.f32.mrb[0].mxu0
        %v9386 = vadd.f32 %v9225, %v9385
        %v9387 = vpop.f32.mrb[0].mxu0
        %v9388 = vpop.f32.mrb[0].mxu0
        %v9389 = vadd.f32 %v9228, %v9388
        %v9390 = vpop.f32.mrb[0].mxu0
        %9391 = vmatprep.mubr.bf16.mxu0 0
        %9392 = vmatmul.mubr.bf16.gmra.mrb[0].mxu0 %v8975
        %v9393 = vpop.f32.mrb[0].mxu0
        %v9394 = vadd.f32 %v9233, %v9393
        %v9395 = vpop.f32.mrb[0].mxu0
        %v9396 = vpop.f32.mrb[0].mxu0
        %v9397 = vadd.f32 %v9236, %v9396
        %v9398 = vpop.f32.mrb[0].mxu0
        %9399 = vmatprep.mubr.bf16.mxu0 0
        %9400 = vmatmul.mubr.bf16.gmra.mrb[0].mxu0 %v8978
        %v9401 = vpop.f32.mrb[0].mxu0
        %v9402 = vadd.f32 %v9241, %v9401
        %v9403 = vpop.f32.mrb[0].mxu0
        %v9404 = vpop.f32.mrb[0].mxu0
        %v9405 = vadd.f32 %v9244, %v9404
        %v9406 = vpop.f32.mrb[0].mxu0
        %9407 = vmatprep.mubr.bf16.mxu0 0
        %9408 = vmatmul.mubr.bf16.gmra.mrb[0].mxu0 %v8981
        %v9409 = vpop.f32.mrb[0].mxu0
        %v9410 = vadd.f32 %v9249, %v9409
        %v9411 = vpop.f32.mrb[0].mxu0
        %v9412 = vpop.f32.mrb[0].mxu0
        %v9413 = vadd.f32 %v9252, %v9412
        %v9414 = vpop.f32.mrb[0].mxu0
        %9415 = vmatprep.mubr.bf16.mxu0 0
        %9416 = vmatmul.mubr.bf16.gmra.mrb[0].mxu0 %v8984
        %v9417 = vpop.f32.mrb[0].mxu0
        %v9418 = vadd.f32 %v9257, %v9417
        %v9419 = vpop.f32.mrb[0].mxu0
        %v9420 = vpop.f32.mrb[0].mxu0
        %v9421 = vadd.f32 %v9260, %v9420
        %v9422 = vpop.f32.mrb[0].mxu0
        %9423 = vmatprep.mubr.bf16.mxu0 0
        %9424 = vmatmul.mubr.bf16.gmra.mrb[0].mxu0 %v8987
        %v9425 = vpop.f32.mrb[0].mxu0
        %v9426 = vadd.f32 %v9265, %v9425
        %v9427 = vpop.f32.mrb[0].mxu0
        %v9428 = vpop.f32.mrb[0].mxu0
        %v9429 = vadd.f32 %v9268, %v9428
        %v9430 = vpop.f32.mrb[0].mxu0
        %9431 = vmatprep.mubr.bf16.mxu0 0
        %9432 = vmatmul.mubr.bf16.gmra.mrb[0].mxu0 %v8990
        %v9433 = vpop.f32.mrb[0].mxu0
        %v9434 = vadd.f32 %v9273, %v9433
        %v9435 = vpop.f32.mrb[0].mxu0
        %v9436 = vpop.f32.mrb[0].mxu0
        %v9437 = vadd.f32 %v9276, %v9436
        %v9438 = vpop.f32.mrb[0].mxu0
        %9439 = vmatprep.mubr.bf16.mxu0 0
        %9440 = vmatmul.mubr.bf16.gmra.mrb[0].mxu0 %v8993
        %v9441 = vpop.f32.mrb[0].mxu0
        %v9442 = vadd.f32 %v9281, %v9441
        %v9443 = vpop.f32.mrb[0].mxu0
        %v9444 = vpop.f32.mrb[0].mxu0
        %v9445 = vadd.f32 %v9284, %v9444
        %v9446 = vpop.f32.mrb[0].mxu0
        %9447 = vmatprep.mubr.bf16.mxu0 0
        %9448 = vmatmul.mubr.bf16.gmra.mrb[0].mxu0 %v8996
        %v9449 = vpop.f32.mrb[0].mxu0
        %v9450 = vadd.f32 %v9289, %v9449
        %v9451 = vpop.f32.mrb[0].mxu0
        %v9452 = vpop.f32.mrb[0].mxu0
        %v9453 = vadd.f32 %v9292, %v9452
        %v9454 = vpop.f32.mrb[0].mxu0
        %9455 = vmatprep.mubr.bf16.mxu0 0
        %9456 = vmatmul.mubr.bf16.gmra.mrb[0].mxu0 %v8999
        %v9457 = vpop.f32.mrb[0].mxu0
        %v9458 = vadd.f32 %v9297, %v9457
        %v9459 = vpop.f32.mrb[0].mxu0
        %v9460 = vpop.f32.mrb[0].mxu0
        %v9461 = vadd.f32 %v9300, %v9460
        %v9462 = vpop.f32.mrb[0].mxu0
        %9463 = vmatprep.mubr.bf16.mxu0 0
        %9464 = vmatmul.mubr.bf16.gmra.mrb[0].mxu0 %v9002
        %v9465 = vpop.f32.mrb[0].mxu0
        %v9466 = vadd.f32 %v9305, %v9465
        %v9467 = vpop.f32.mrb[0].mxu0
        %v9468 = vpop.f32.mrb[0].mxu0
        %v9469 = vadd.f32 %v9308, %v9468
        %v9470 = vpop.f32.mrb[0].mxu0
        %9471 = vmatprep.mubr.bf16.mxu0 0
        %9472 = vmatmul.mubr.bf16.gmra.mrb[0].mxu0 %v9005
        %v9473 = vpop.f32.mrb[0].mxu0
        %v9474 = vadd.f32 %v9313, %v9473
        %v9475 = vpop.f32.mrb[0].mxu0
        %v9476 = vpop.f32.mrb[0].mxu0
        %v9477 = vadd.f32 %v9316, %v9476
        %v9478 = vpop.f32.mrb[0].mxu0
        %9479 = vmatprep.mubr.bf16.mxu0 0
        %9480 = vmatmul.mubr.bf16.gmra.mrb[0].mxu0 %v9008
        %v9481 = vpop.f32.mrb[0].mxu0
        %v9482 = vadd.f32 %v9321, %v9481
        %v9483 = vpop.f32.mrb[0].mxu0
        %v9484 = vpop.f32.mrb[0].mxu0
        %v9485 = vadd.f32 %v9324, %v9484
        %v9486 = vpop.f32.mrb[0].mxu0
        %9487 = vmatprep.mubr.bf16.mxu0 0
        %9488 = vmatmul.mubr.bf16.gmra.mrb[0].mxu0 %v9011
        %v9489 = vpop.f32.mrb[0].mxu0
        %v9490 = vadd.f32 %v9329, %v9489
        %v9491 = vpop.f32.mrb[0].mxu0
        %v9492 = vpop.f32.mrb[0].mxu0
        %v9493 = vadd.f32 %v9332, %v9492
        %v9494 = vpop.f32.mrb[0].mxu0
        %9495 = vdwg.mxu0
        %9496 = vst.msk [vmem:[%s244] sm:$0xff] %vm1232, %v9370
        %9497 = vst.msk [vmem:[%s244 + $0x8] sm:$0xff] %vm1232, %v9373
        %9498 = vst.msk [vmem:[%s244 + $0x10] sm:$0xff] %vm1232, %v9378
        %9499 = vst.msk [vmem:[%s244 + $0x18] sm:$0xff] %vm1232, %v9381
        %9500 = vst.msk [vmem:[%s244 + $0x20] sm:$0xff] %vm1232, %v9386
        %9501 = vst.msk [vmem:[%s244 + $0x28] sm:$0xff] %vm1232, %v9389
        %9502 = vst.msk [vmem:[%s244 + $0x30] sm:$0xff] %vm1232, %v9394
        %9503 = vst.msk [vmem:[%s244 + $0x38] sm:$0xff] %vm1232, %v9397
        %9504 = vst.msk [vmem:[%s244 + $0x40] sm:$0xff] %vm1232, %v9402
        %9505 = vst.msk [vmem:[%s244 + $0x48] sm:$0xff] %vm1232, %v9405
        %9506 = vst.msk [vmem:[%s244 + $0x50] sm:$0xff] %vm1232, %v9410
        %9507 = vst.msk [vmem:[%s244 + $0x58] sm:$0xff] %vm1232, %v9413
        %9508 = vst.msk [vmem:[%s244 + $0x60] sm:$0xff] %vm1232, %v9418
        %9509 = vst.msk [vmem:[%s244 + $0x68] sm:$0xff] %vm1232, %v9421
        %9510 = vst.msk [vmem:[%s244 + $0x70] sm:$0xff] %vm1232, %v9426
        %9511 = vst.msk [vmem:[%s244 + $0x78] sm:$0xff] %vm1232, %v9429
        %9512 = vst.msk [vmem:[%s244 + $0x80] sm:$0xff] %vm1232, %v9434
        %9513 = vst.msk [vmem:[%s244 + $0x88] sm:$0xff] %vm1232, %v9437
        %9514 = vst.msk [vmem:[%s244 + $0x90] sm:$0xff] %vm1232, %v9442
        %9515 = vst.msk [vmem:[%s244 + $0x98] sm:$0xff] %vm1232, %v9445
        %9516 = vst.msk [vmem:[%s244 + $0xa0] sm:$0xff] %vm1232, %v9450
        %9517 = vst.msk [vmem:[%s244 + $0xa8] sm:$0xff] %vm1232, %v9453
        %9518 = vst.msk [vmem:[%s244 + $0xb0] sm:$0xff] %vm1232, %v9458
        %9519 = vst.msk [vmem:[%s244 + $0xb8] sm:$0xff] %vm1232, %v9461
        %9520 = vst.msk [vmem:[%s244 + $0xc0] sm:$0xff] %vm1232, %v9466
        %9521 = vst.msk [vmem:[%s244 + $0xc8] sm:$0xff] %vm1232, %v9469
        %9522 = vst.msk [vmem:[%s244 + $0xd0] sm:$0xff] %vm1232, %v9474
        %9523 = vst.msk [vmem:[%s244 + $0xd8] sm:$0xff] %vm1232, %v9477
        %9524 = vst.msk [vmem:[%s244 + $0xe0] sm:$0xff] %vm1232, %v9482
        %9525 = vst.msk [vmem:[%s244 + $0xe8] sm:$0xff] %vm1232, %v9485
        %9526 = vst.msk [vmem:[%s244 + $0xf0] sm:$0xff] %vm1232, %v9490
        %9527 = vst.msk [vmem:[%s244 + $0xf8] sm:$0xff] %vm1232, %v9493
        %s9528 = sand.u32 %s159, 1
        %s9529 = scalar_lea.sflag [#allocation7], %s9528
        %s9530 = sand.u32 %s159, 1
        %s9531 = smul.addr %s9530, 256
        %s9532 = scalar_lea.vmem [#allocation6], %s9531
        // Predicated region
        $region45: #{basic_block_forward.1} parent=43 // pred_check
          %p9533 = pneg %p169
        $region46: #{basic_block_forward.1} parent=43 // pred_check_branch
          %9535 = sbr.rel (%p9533) target = $region48
        $region47: #{basic_block_forward.1} parent=43 // pred_region
          %s9537 = ssub.s32 4096, 4096
          %9538 = vsyncadd %s9529, %s9537
          %s9539 = smul.addr %s20, 32
          %s9540 = smul.addr %s9539, 128
          %s9541 = scalar_lea.hbm %s6, %s9540
          %s9542 = sshll.u32 %s9532, 4
          %s9543 = int_to_ptr.vmem [resolvable:$true] %s9542
          %9548 = dma.vmem_to_hbm [thread:$0]  %s9543, 4096, %s9541, %s9529, 128, 128, 8
        $region48: #{basic_block_forward.1} parent=43 // pred_fallthru
          _
      $region44: #{basic_block_forward.1} parent=5 // pred_fallthru
        _
      %p9549 = scmp.le.s32.totalorder 2, %s15
      // Predicated region
      $region49: #{basic_block_forward.1} parent=5 // pred_check
        %p9550 = pneg %p9549
      $region50: #{basic_block_forward.1} parent=5 // pred_check_branch
        %9552 = sbr.rel (%p9550) target = $region52
      $region51: #{basic_block_forward.1} parent=5 // pred_region
        %s9553 = ssub.s32 %s15, 2
        // Predicated region
        $region53: #{basic_block_forward.1} parent=51 // pred_check
          %p9554 = pneg %p175
        $region54: #{basic_block_forward.1} parent=51 // pred_check_branch
          %9556 = sbr.rel (%p9554) target = $region56
        $region55: #{basic_block_forward.1} parent=51 // pred_region
          %s9557 = sand.u32 %s160, 1
          %s9558 = scalar_lea.sflag [#allocation7], %s9557
          %s9559 = sand.u32 %s160, 1
          %s9560 = smul.addr %s9559, 256
          %s9561 = scalar_lea.vmem [#allocation6], %s9560
          %9562 = dma.done %s9558, 4096
        $region56: #{basic_block_forward.1} parent=51 // pred_fallthru
          _
      $region52: #{basic_block_forward.1} parent=5 // pred_fallthru
        _
    $region6: #{basic_block_forward.1} parent=1 // loop_footer
      %s19 = sadd.s32 1, %s15
    $region7: #{basic_block_forward.1} parent=1 // loop_footer_branch
      %14 = sbr.rel target = $region3
    $region8: #{basic_block_forward.1} parent=1 // loop_exit
      _
    %9563 = vsyncpa [#allocation7], 1
    %s9564 = scalar_lea.sflag [#allocation7], 1
    %9565 = vsyncpa %s9564, 1

</llo_original>
